<compile_context>
chip_gen: v7x
topology: tpu7x:2x2x1
jax: 0.10.0
libtpu: 0.0.40
codegen_flags: <defaults>
</compile_context>

<pallas_src>
import functools
import numpy as np

import jax
import jax.numpy as jnp
from jax import lax
from jax.experimental import pallas as pl
from jax.experimental.pallas import tpu as pltpu


def _round_up(x, m):
    return ((x + m - 1) // m) * m


def _largest_divisor_leq(n, cap):
    best = 1
    for d in range(1, min(n, cap) + 1):
        if n % d == 0:
            best = d
    return best


# ----------------------------------------------------------------------------
# Fused dense kernel:  [LN] -> x @ W + b -> [GELU] -> [+ residual]
# ----------------------------------------------------------------------------

def _dense_kernel(*refs, activation, has_ln, has_res, eps):
    it = iter(refs)
    x_ref = next(it)
    w_ref = next(it)
    b_ref = next(it)
    g_ref = next(it) if has_ln else None
    bb_ref = next(it) if has_ln else None
    r_ref = next(it) if has_res else None
    o_ref = next(it)
    acc_ref = next(it)

    k = pl.program_id(2)
    nk = pl.num_programs(2)

    @pl.when(k == 0)
    def _init():
        acc_ref[...] = jnp.zeros_like(acc_ref)

    x = x_ref[...]
    if has_ln:
        # LayerNorm fused in front of the matmul (K is un-tiled in this mode).
        xf = x.astype(jnp.float32)
        mu = jnp.mean(xf, axis=-1, keepdims=True)
        var = jnp.mean(jnp.square(xf - mu), axis=-1, keepdims=True)
        xf = (xf - mu) * lax.rsqrt(var + eps)
        x = (xf * g_ref[...] + bb_ref[...]).astype(x_ref.dtype)

    acc_ref[...] += jnp.dot(x, w_ref[...], preferred_element_type=jnp.float32)

    @pl.when(k == nk - 1)
    def _finalize():
        y = acc_ref[...] + b_ref[...]
        if activation == "gelu":
            # TODO(synk): PyTorch nn.GELU defaults to exact erf; tanh approximation used here.
            y = jax.nn.gelu(y, approximate=True)
        if has_res:
            y = y + r_ref[...].astype(jnp.float32)
        o_ref[...] = y.astype(o_ref.dtype)


def dense(x, w, b, *, activation=None, ln=None, residual=None,
          out_dtype=jnp.bfloat16, tm=256, tn=256, tk=512):
    """y = [optional residual +] [GELU]( [LN](x) @ w + b ).

    x: (..., K), w: (K, N), b: (N,).  bf16 operands on the MXU, fp32 accumulation.
    """
    lead = x.shape[:-1]
    K = x.shape[-1]
    N = w.shape[-1]
    M = int(np.prod(lead))
    has_ln = ln is not None
    has_res = residual is not None

    tm = min(tm, _round_up(M, 8))
    tn = min(tn, _round_up(N, 128))
    Mp = _round_up(M, tm)
    Np = _round_up(N, tn)
    if has_ln:
        # LN needs the full feature row; keep K un-tiled (fits VMEM for hidden/mlp sizes).
        tk_ = K
        Kp = K
    else:
        tk_ = min(tk, _round_up(K, 128))
        Kp = _round_up(K, tk_)
    nk = Kp // tk_

    x2 = x.reshape(M, K).astype(jnp.bfloat16)
    w2 = w.astype(jnp.bfloat16)
    b2 = b.reshape(1, N).astype(jnp.float32)
    if Mp != M or Kp != K:
        x2 = jnp.pad(x2, ((0, Mp - M), (0, Kp - K)))
    if Kp != K or Np != N:
        w2 = jnp.pad(w2, ((0, Kp - K), (0, Np - N)))
    if Np != N:
        b2 = jnp.pad(b2, ((0, 0), (0, Np - N)))

    args = [x2, w2, b2]
    in_specs = [
        pl.BlockSpec((tm, tk_), lambda i, j, k: (i, k)),
        pl.BlockSpec((tk_, tn), lambda i, j, k: (k, j)),
        pl.BlockSpec((1, tn), lambda i, j, k: (0, j)),       # constant over k -> fetched once
    ]
    if has_ln:
        g, be = ln
        args += [g.reshape(1, K).astype(jnp.float32),
                 be.reshape(1, K).astype(jnp.float32)]
        in_specs += [pl.BlockSpec((1, K), lambda i, j, k: (0, 0)),
                     pl.BlockSpec((1, K), lambda i, j, k: (0, 0))]
    if has_res:
        r2 = residual.reshape(M, N).astype(jnp.bfloat16)
        if Mp != M or Np != N:
            r2 = jnp.pad(r2, ((0, Mp - M), (0, Np - N)))
        args.append(r2)
        in_specs.append(pl.BlockSpec((tm, tn), lambda i, j, k: (i, j)))  # constant over k

    flops = 2 * Mp * Np * Kp
    bytes_accessed = 2 * (Mp * Kp + Kp * Np) + Mp * Np * (2 + (2 if has_res else 0))

    out = pl.pallas_call(
        functools.partial(_dense_kernel, activation=activation,
                          has_ln=has_ln, has_res=has_res, eps=1e-5),
        out_shape=jax.ShapeDtypeStruct((Mp, Np), out_dtype),
        grid=(Mp // tm, Np // tn, nk),
        in_specs=in_specs,
        out_specs=pl.BlockSpec((tm, tn), lambda i, j, k: (i, j)),
        scratch_shapes=[pltpu.VMEM((tm, tn), jnp.float32)],
        compiler_params=pltpu.CompilerParams(
            dimension_semantics=("parallel", "parallel", "arbitrary")),
        cost_estimate=pl.CostEstimate(flops=int(flops), transcendentals=0,
                                      bytes_accessed=int(bytes_accessed)),
    )(*args)

    out = out[:M, :N]
    return out.reshape(*lead, N)


# ----------------------------------------------------------------------------
# Flash-style causal multi-head attention (G heads per block)
# ----------------------------------------------------------------------------

def _flash_attn_kernel(q_ref, k_ref, v_ref, o_ref, m_sc, l_sc, acc_sc, *, t):
    qi = pl.program_id(1)
    ki = pl.program_id(2)
    nk = pl.num_programs(2)

    @pl.when(ki == 0)
    def _init():
        m_sc[...] = jnp.full_like(m_sc, -jnp.inf)
        l_sc[...] = jnp.zeros_like(l_sc)
        acc_sc[...] = jnp.zeros_like(acc_sc)

    # Skip KV tiles that are entirely in the future of this Q tile (fully masked).
    @pl.when(ki <= qi)
    def _compute():
        q = q_ref[...]                                     # (G, t, Dh) bf16, scale in Wq
        k = k_ref[...]                                     # (G, t, Dh) bf16
        s = jnp.einsum('gqd,gkd->gqk', q, k,
                       preferred_element_type=jnp.float32)  # (G, t, t) fp32
        row = qi * t + lax.broadcasted_iota(jnp.int32, (t, t), 0)
        col = ki * t + lax.broadcasted_iota(jnp.int32, (t, t), 1)
        s = jnp.where((col <= row)[None], s, -jnp.inf)

        m_prev = m_sc[...]                                  # (G, t, 1)
        m_new = jnp.maximum(m_prev, jnp.max(s, axis=-1, keepdims=True))
        alpha = jnp.exp(m_prev - m_new)
        p = jnp.exp(s - m_new)                              # unnormalized probs, fp32
        l_sc[...] = alpha * l_sc[...] + jnp.sum(p, axis=-1, keepdims=True)
        acc_sc[...] = alpha * acc_sc[...] + jnp.einsum(
            'gqk,gkd->gqd', p.astype(v_ref.dtype), v_ref[...],
            preferred_element_type=jnp.float32)
        m_sc[...] = m_new

    @pl.when(ki == nk - 1)
    def _finalize():
        o_ref[...] = (acc_sc[...] *
                      pl.reciprocal(l_sc[...], approx=True)).astype(o_ref.dtype)


def causal_attention(q, k, v, *, tile=128, max_group=8):
    """q, k, v: (B*nH, L, Dh) bf16 -> (B*nH, L, Dh) bf16.  Online-softmax causal attention."""
    BnH, L, Dh = q.shape
    q = q.astype(jnp.bfloat16)
    k = k.astype(jnp.bfloat16)
    v = v.astype(jnp.bfloat16)
    t = min(tile, _round_up(L, 8))
    Lp = _round_up(L, t)
    if Lp != L:
        pad = ((0, 0), (0, Lp - L), (0, 0))
        q = jnp.pad(q, pad)
        k = jnp.pad(k, pad)
        v = jnp.pad(v, pad)
    nq = Lp // t
    nkv = Lp // t
    G = _largest_divisor_leq(BnH, max_group)   # heads per block (amortize grid overhead)

    # KV blocks for fully-masked (future) tiles map to the same block index as the diagonal
    # tile, so the pipeline skips their DMA entirely.
    def kv_map(b, i, j):
        return (b, lax.min(i, j), 0)

    flops = 4 * BnH * Lp * Lp * Dh // 2                 # two matmuls, ~half skipped (causal)
    transcendentals = BnH * Lp * Lp // 2
    bytes_accessed = 4 * BnH * Lp * Dh * 2

    out = pl.pallas_call(
        functools.partial(_flash_attn_kernel, t=t),
        out_shape=jax.ShapeDtypeStruct((BnH, Lp, Dh), jnp.bfloat16),
        grid=(BnH // G, nq, nkv),
        in_specs=[
            pl.BlockSpec((G, t, Dh), lambda b, i, j: (b, i, 0)),
            pl.BlockSpec((G, t, Dh), kv_map),
            pl.BlockSpec((G, t, Dh), kv_map),
        ],
        out_specs=pl.BlockSpec((G, t, Dh), lambda b, i, j: (b, i, 0)),
        scratch_shapes=[pltpu.VMEM((G, t, 1), jnp.float32),
                        pltpu.VMEM((G, t, 1), jnp.float32),
                        pltpu.VMEM((G, t, Dh), jnp.float32)],
        compiler_params=pltpu.CompilerParams(
            dimension_semantics=("parallel", "parallel", "arbitrary")),
        cost_estimate=pl.CostEstimate(flops=int(flops),
                                      transcendentals=int(transcendentals),
                                      bytes_accessed=int(bytes_accessed)),
    )(q, k, v)
    return out[:, :L, :]


# ----------------------------------------------------------------------------
# Parameter construction (deterministic synthetic init, mirrors module shapes)
# ----------------------------------------------------------------------------

def init_params(key, *, ae_dim, hidden, heads, mlp_dim, n_layers, out_dim,
                n_classes, num_tokens):
    def d_init(k, din, dout):
        return (0.02 * jax.random.normal(k, (din, dout), jnp.float32),
                jnp.zeros((dout,), jnp.float32))

    keys = iter(jax.random.split(key, 6 + 8 * n_layers))
    params = {}
    params["in_w"], params["in_b"] = d_init(next(keys), ae_dim, hidden)
    params["sos"] = 0.02 * jax.random.normal(next(keys), (1, 1, hidden), jnp.float32)
    params["pos_emb"] = 0.02 * jax.random.normal(next(keys), (num_tokens, hidden), jnp.float32)
    params["label_w"], params["label_b"] = d_init(next(keys), n_classes, hidden)
    params["lnf_g"] = jnp.ones((hidden,), jnp.float32)
    params["lnf_b"] = jnp.zeros((hidden,), jnp.float32)
    params["out_w"], params["out_b"] = d_init(next(keys), hidden, out_dim)

    layers = []
    for _ in range(n_layers):
        lp = {}
        lp["ln1_g"] = jnp.ones((hidden,), jnp.float32)
        lp["ln1_b"] = jnp.zeros((hidden,), jnp.float32)
        lp["wq"], lp["bq"] = d_init(next(keys), hidden, hidden)
        lp["wk"], lp["bk"] = d_init(next(keys), hidden, hidden)
        lp["wv"], lp["bv"] = d_init(next(keys), hidden, hidden)
        lp["wo"], lp["bo"] = d_init(next(keys), hidden, hidden)
        lp["ln2_g"] = jnp.ones((hidden,), jnp.float32)
        lp["ln2_b"] = jnp.zeros((hidden,), jnp.float32)
        lp["w1"], lp["b1"] = d_init(next(keys), hidden, mlp_dim)
        lp["w2"], lp["b2"] = d_init(next(keys), mlp_dim, hidden)
        layers.append(lp)
    params["layers"] = layers
    return params


def prepare_params(params, heads):
    """One-time (outside jit) weight preprocessing: fuse QKV, fold 1/sqrt(Dh) into Wq,
    cast matmul weights to bf16.  Avoids per-forward-call concats / casts."""
    hidden = params["in_w"].shape[-1]
    dh = hidden // heads
    scale = 1.0 / float(np.sqrt(dh))

    p = {
        "in_w": params["in_w"].astype(jnp.bfloat16), "in_b": params["in_b"],
        "sos": params["sos"].astype(jnp.bfloat16),
        "pos_emb": params["pos_emb"].astype(jnp.bfloat16),
        "label_w": params["label_w"].astype(jnp.bfloat16), "label_b": params["label_b"],
        "lnf_g": params["lnf_g"], "lnf_b": params["lnf_b"],
        "out_w": params["out_w"].astype(jnp.bfloat16), "out_b": params["out_b"],
    }
    layers = []
    for lp in params["layers"]:
        wqkv = jnp.concatenate([lp["wq"] * scale, lp["wk"], lp["wv"]], axis=1)
        bqkv = jnp.concatenate([lp["bq"] * scale, lp["bk"], lp["bv"]], axis=0)
        layers.append({
            "ln1_g": lp["ln1_g"], "ln1_b": lp["ln1_b"],
            "wqkv": wqkv.astype(jnp.bfloat16), "bqkv": bqkv,
            "wo": lp["wo"].astype(jnp.bfloat16), "bo": lp["bo"],
            "ln2_g": lp["ln2_g"], "ln2_b": lp["ln2_b"],
            "w1": lp["w1"].astype(jnp.bfloat16), "b1": lp["b1"],
            "w2": lp["w2"].astype(jnp.bfloat16), "b2": lp["b2"],
        })
    p["layers"] = layers
    return p


# ----------------------------------------------------------------------------
# VideoGPT forward (Transformer over latent token grid)
# ----------------------------------------------------------------------------

def videogpt_forward(params, embeddings, *, heads, label=None, class_cond=False,
                     n_classes=None, decode_step=None, decode_idx=None, training=False):
    """embeddings: (B, T, H, W, ae_embed_dim) -> logits (B, T, H, W, out_dim)."""
    # TODO(synk): decode_step/decode_idx KV-cache single-token decode and dropout are not
    #             implemented; full-sequence forward only.
    if class_cond:
        assert label is not None, "label is required for class conditioned model"
        label = jax.nn.one_hot(label.astype(jnp.int32), n_classes).astype(jnp.float32)

    B, T, H, W, Dae = embeddings.shape
    L = T * H * W
    hidden = params["in_w"].shape[-1]
    dh = hidden // heads

    # input projection (tiled matmul kernel) -> (B, L, hidden) bf16
    x = dense(embeddings.reshape(B, L, Dae), params["in_w"], params["in_b"])

    # TODO(synk): right-shift/SOS + pos-emb + class-cond prologue stays in XLA (one-time
    #             memory-bound passes); could be fused into the first layer's QKV kernel.
    sos = jnp.broadcast_to(params["sos"], (B, 1, hidden))
    x = jnp.concatenate([sos, x[:, :-1]], axis=1)
    x = x + params["pos_emb"][None]
    if class_cond:
        cond = dense(label, params["label_w"], params["label_b"])       # (B, hidden)
        x = x + cond[:, None, :]

    for lp in params["layers"]:
        # --- fused LN1 + QKV projection (attention scale pre-folded into Wq / bq) ---
        qkv = dense(x, lp["wqkv"], lp["bqkv"], ln=(lp["ln1_g"], lp["ln1_b"]))  # (B, L, 3*hidden)
        q, k, v = jnp.split(qkv, 3, axis=-1)

        def to_heads(t):
            return t.reshape(B, L, heads, dh).transpose(0, 2, 1, 3).reshape(B * heads, L, dh)

        a = causal_attention(to_heads(q), to_heads(k), to_heads(v))     # (B*nH, L, dh)
        a = a.reshape(B, heads, L, dh).transpose(0, 2, 1, 3).reshape(B, L, hidden)

        # --- fused output projection + residual add ---
        x = dense(a, lp["wo"], lp["bo"], residual=x)
        # --- fused LN2 + MLP up + GELU ---
        h = dense(x, lp["w1"], lp["b1"], activation="gelu", ln=(lp["ln2_g"], lp["ln2_b"]))
        # --- fused MLP down + residual add ---
        x = dense(h, lp["w2"], lp["b2"], residual=x)

    # fused final LN + output projection, fp32 logits
    logits = dense(x, params["out_w"], params["out_b"],
                   ln=(params["lnf_g"], params["lnf_b"]), out_dtype=jnp.float32)
    return logits.reshape(B, T, H, W, -1)


# ----------------------------------------------------------------------------
# main
# ----------------------------------------------------------------------------

if __name__ == "__main__":
    # small config consistent with the module:
    #   shape = (seq_len, *ae.latent_shape(image_size)), out_dim = ae.n_embed
    B, T, H, W = 2, 4, 4, 4
    ae_embed_dim = 16       # config.ae['embed_dim']
    n_embed = 64            # ae.n_embed (output vocabulary size)
    hidden, heads, mlp_dim, n_layers = 64, 2, 128, 2
    n_classes = 4
    class_cond = True

    key = jax.random.PRNGKey(0)
    kp, ke, kl = jax.random.split(key, 3)

    raw_params = init_params(
        kp, ae_dim=ae_embed_dim, hidden=hidden, heads=heads, mlp_dim=mlp_dim,
        n_layers=n_layers, out_dim=n_embed, n_classes=n_classes,
        num_tokens=T * H * W)
    params = prepare_params(raw_params, heads)      # one-time QKV fusion / bf16 cast

    embeddings = jax.random.normal(ke, (B, T, H, W, ae_embed_dim), jnp.float32)
    label = jax.random.randint(kl, (B,), 0, n_classes, dtype=jnp.int32)

    fwd = jax.jit(functools.partial(
        videogpt_forward, heads=heads, class_cond=class_cond,
        n_classes=n_classes, training=False))
    logits = fwd(params, embeddings, label=label)
    logits = jax.block_until_ready(logits)

    assert logits.shape == (B, T, H, W, n_embed), logits.shape
    assert bool(jnp.all(jnp.isfinite(logits)))
    print("KERNEL_OK")
</pallas_src>

<mosaic_0001>
module attributes {stable_mosaic.version = 11 : i64} {
  func.func @_dense_kernel(%arg0: i32, %arg1: i32, %arg2: i32, %arg3: memref<128x128xbf16, #tpu.memory_space<vmem>>, %arg4: memref<128x128xbf16, #tpu.memory_space<vmem>>, %arg5: memref<1x128xf32, #tpu.memory_space<vmem>>, %arg6: memref<128x128xbf16, #tpu.memory_space<vmem>>, %arg7: memref<128x128xf32, #tpu.memory_space<vmem>>) attributes {dimension_semantics = [#tpu.dimension_semantics<parallel>, #tpu.dimension_semantics<parallel>, #tpu.dimension_semantics<arbitrary>], iteration_bounds = array<i64: 1, 1, 1>, scalar_prefetch = 0 : i64, scratch_operands = 1 : i64, tpu.core_type = #tpu.core_type<tc>, window_params = [{transform_indices = @transform_0, window_bounds = array<i64: 128, 128>}, {transform_indices = @transform_1, window_bounds = array<i64: 128, 128>}, {transform_indices = @transform_2, window_bounds = array<i64: 1, 128>}, {transform_indices = @transform_3, window_bounds = array<i64: 128, 128>}]} {
    %c0_i32 = arith.constant 0 : i32
    %0 = arith.cmpi eq, %arg2, %c0_i32 : i32
    %1 = arith.extui %0 : i1 to i32
    %c0_i32_0 = arith.constant 0 : i32
    %2 = arith.cmpi ne, %1, %c0_i32_0 : i32
    scf.if %2 {
      %cst_10 = arith.constant 0.000000e+00 : f32
      %12 = vector.broadcast %cst_10 : f32 to vector<128x128xf32>
      %c0_11 = arith.constant 0 : index
      %c0_12 = arith.constant 0 : index
      %13 = vector.load %arg7[%c0_11, %c0_12] : memref<128x128xf32, #tpu.memory_space<vmem>>, vector<128x128xf32>
      tpu.vector_store %arg7[%c0_11, %c0_12], %12 {strides = array<i32>} : memref<128x128xf32, #tpu.memory_space<vmem>>, vector<128x128xf32>,
    } else {
    }
    %c0 = arith.constant 0 : index
    %c0_1 = arith.constant 0 : index
    %3 = vector.load %arg3[%c0, %c0_1] : memref<128x128xbf16, #tpu.memory_space<vmem>>, vector<128x128xbf16>
    %c0_2 = arith.constant 0 : index
    %c0_3 = arith.constant 0 : index
    %4 = vector.load %arg7[%c0_2, %c0_3] : memref<128x128xf32, #tpu.memory_space<vmem>>, vector<128x128xf32>
    %c0_4 = arith.constant 0 : index
    %c0_5 = arith.constant 0 : index
    %5 = vector.load %arg4[%c0_4, %c0_5] : memref<128x128xbf16, #tpu.memory_space<vmem>>, vector<128x128xbf16>
    %cst = arith.constant dense<0.000000e+00> : vector<128x128xf32>
    %6 = tpu.matmul %3, %5, %cst {dimension_numbers = #tpu.dot_dimension_numbers<[1], [0], [0], [1], [0, 0, 1, 1], [], []>} : vector<128x128xbf16>, vector<128x128xbf16>, vector<128x128xf32> -> vector<128x128xf32>
    %7 = arith.addf %4, %6 : vector<128x128xf32>
    %c0_6 = arith.constant 0 : index
    %c0_7 = arith.constant 0 : index
    %8 = vector.load %arg7[%c0_6, %c0_7] : memref<128x128xf32, #tpu.memory_space<vmem>>, vector<128x128xf32>
    tpu.vector_store %arg7[%c0_6, %c0_7], %7 {strides = array<i32>} : memref<128x128xf32, #tpu.memory_space<vmem>>, vector<128x128xf32>,
    %c0_i32_8 = arith.constant 0 : i32
    %9 = arith.cmpi eq, %arg2, %c0_i32_8 : i32
    %10 = arith.extui %9 : i1 to i32
    %c0_i32_9 = arith.constant 0 : i32
    %11 = arith.cmpi ne, %10, %c0_i32_9 : i32
    scf.if %11 {
      %c0_10 = arith.constant 0 : index
      %c0_11 = arith.constant 0 : index
      %12 = vector.load %arg7[%c0_10, %c0_11] : memref<128x128xf32, #tpu.memory_space<vmem>>, vector<128x128xf32>
      %c0_12 = arith.constant 0 : index
      %c0_13 = arith.constant 0 : index
      %13 = vector.load %arg5[%c0_12, %c0_13] : memref<1x128xf32, #tpu.memory_space<vmem>>, vector<1x128xf32>
      %14 = vector.broadcast %13 : vector<1x128xf32> to vector<128x128xf32>
      %15 = arith.addf %12, %14 : vector<128x128xf32>
      %16 = arith.truncf %15 : vector<128x128xf32> to vector<128x128xbf16>
      %c0_14 = arith.constant 0 : index
      %c0_15 = arith.constant 0 : index
      %17 = vector.load %arg6[%c0_14, %c0_15] : memref<128x128xbf16, #tpu.memory_space<vmem>>, vector<128x128xbf16>
      tpu.vector_store %arg6[%c0_14, %c0_15], %16 {strides = array<i32>} : memref<128x128xbf16, #tpu.memory_space<vmem>>, vector<128x128xbf16>,
    } else {
    }
    return
  }
  func.func @transform_0(%arg0: i32, %arg1: i32, %arg2: i32) -> (i32, i32) {
    %c0_i32 = arith.constant 0 : i32
    return %arg0, %arg2 : i32, i32
  }
  func.func @transform_1(%arg0: i32, %arg1: i32, %arg2: i32) -> (i32, i32) {
    %c0_i32 = arith.constant 0 : i32
    return %arg2, %arg1 : i32, i32
  }
  func.func @transform_2(%arg0: i32, %arg1: i32, %arg2: i32) -> (i32, i32) {
    %c0_i32 = arith.constant 0 : i32
    %c0_i32_0 = arith.constant 0 : i32
    return %c0_i32, %arg1 : i32, i32
  }
  func.func @transform_3(%arg0: i32, %arg1: i32, %arg2: i32) -> (i32, i32) {
    %c0_i32 = arith.constant 0 : i32
    return %arg0, %arg1 : i32, i32
  }
}

module attributes {stable_mosaic.version = 11 : i64} {
  func.func @_dense_kernel(%arg0: i32, %arg1: i32, %arg2: i32, %arg3: memref<8x128xbf16, #tpu.memory_space<vmem>>, %arg4: memref<128x128xbf16, #tpu.memory_space<vmem>>, %arg5: memref<1x128xf32, #tpu.memory_space<vmem>>, %arg6: memref<8x128xbf16, #tpu.memory_space<vmem>>, %arg7: memref<8x128xf32, #tpu.memory_space<vmem>>) attributes {dimension_semantics = [#tpu.dimension_semantics<parallel>, #tpu.dimension_semantics<parallel>, #tpu.dimension_semantics<arbitrary>], iteration_bounds = array<i64: 1, 1, 1>, scalar_prefetch = 0 : i64, scratch_operands = 1 : i64, tpu.core_type = #tpu.core_type<tc>, window_params = [{transform_indices = @transform_0, window_bounds = array<i64: 8, 128>}, {transform_indices = @transform_1, window_bounds = array<i64: 128, 128>}, {transform_indices = @transform_2, window_bounds = array<i64: 1, 128>}, {transform_indices = @transform_3, window_bounds = array<i64: 8, 128>}]} {
    %c0_i32 = arith.constant 0 : i32
    %0 = arith.cmpi eq, %arg2, %c0_i32 : i32
    %1 = arith.extui %0 : i1 to i32
    %c0_i32_0 = arith.constant 0 : i32
    %2 = arith.cmpi ne, %1, %c0_i32_0 : i32
    scf.if %2 {
      %cst_10 = arith.constant 0.000000e+00 : f32
      %12 = vector.broadcast %cst_10 : f32 to vector<8x128xf32>
      %c0_11 = arith.constant 0 : index
      %c0_12 = arith.constant 0 : index
      %13 = vector.load %arg7[%c0_11, %c0_12] : memref<8x128xf32, #tpu.memory_space<vmem>>, vector<8x128xf32>
      tpu.vector_store %arg7[%c0_11, %c0_12], %12 {strides = array<i32>} : memref<8x128xf32, #tpu.memory_space<vmem>>, vector<8x128xf32>,
    } else {
    }
    %c0 = arith.constant 0 : index
    %c0_1 = arith.constant 0 : index
    %3 = vector.load %arg3[%c0, %c0_1] : memref<8x128xbf16, #tpu.memory_space<vmem>>, vector<8x128xbf16>
    %c0_2 = arith.constant 0 : index
    %c0_3 = arith.constant 0 : index
    %4 = vector.load %arg7[%c0_2, %c0_3] : memref<8x128xf32, #tpu.memory_space<vmem>>, vector<8x128xf32>
    %c0_4 = arith.constant 0 : index
    %c0_5 = arith.constant 0 : index
    %5 = vector.load %arg4[%c0_4, %c0_5] : memref<128x128xbf16, #tpu.memory_space<vmem>>, vector<128x128xbf16>
    %cst = arith.constant dense<0.000000e+00> : vector<8x128xf32>
    %6 = tpu.matmul %3, %5, %cst {dimension_numbers = #tpu.dot_dimension_numbers<[1], [0], [0], [1], [0, 0, 1, 1], [], []>} : vector<8x128xbf16>, vector<128x128xbf16>, vector<8x128xf32> -> vector<8x128xf32>
    %7 = arith.addf %4, %6 : vector<8x128xf32>
    %c0_6 = arith.constant 0 : index
    %c0_7 = arith.constant 0 : index
    %8 = vector.load %arg7[%c0_6, %c0_7] : memref<8x128xf32, #tpu.memory_space<vmem>>, vector<8x128xf32>
    tpu.vector_store %arg7[%c0_6, %c0_7], %7 {strides = array<i32>} : memref<8x128xf32, #tpu.memory_space<vmem>>, vector<8x128xf32>,
    %c0_i32_8 = arith.constant 0 : i32
    %9 = arith.cmpi eq, %arg2, %c0_i32_8 : i32
    %10 = arith.extui %9 : i1 to i32
    %c0_i32_9 = arith.constant 0 : i32
    %11 = arith.cmpi ne, %10, %c0_i32_9 : i32
    scf.if %11 {
      %c0_10 = arith.constant 0 : index
      %c0_11 = arith.constant 0 : index
      %12 = vector.load %arg7[%c0_10, %c0_11] : memref<8x128xf32, #tpu.memory_space<vmem>>, vector<8x128xf32>
      %c0_12 = arith.constant 0 : index
      %c0_13 = arith.constant 0 : index
      %13 = vector.load %arg5[%c0_12, %c0_13] : memref<1x128xf32, #tpu.memory_space<vmem>>, vector<1x128xf32>
      %14 = vector.broadcast %13 : vector<1x128xf32> to vector<8x128xf32>
      %15 = arith.addf %12, %14 : vector<8x128xf32>
      %16 = arith.truncf %15 : vector<8x128xf32> to vector<8x128xbf16>
      %c0_14 = arith.constant 0 : index
      %c0_15 = arith.constant 0 : index
      %17 = vector.load %arg6[%c0_14, %c0_15] : memref<8x128xbf16, #tpu.memory_space<vmem>>, vector<8x128xbf16>
      tpu.vector_store %arg6[%c0_14, %c0_15], %16 {strides = array<i32>} : memref<8x128xbf16, #tpu.memory_space<vmem>>, vector<8x128xbf16>,
    } else {
    }
    return
  }
  func.func @transform_0(%arg0: i32, %arg1: i32, %arg2: i32) -> (i32, i32) {
    %c0_i32 = arith.constant 0 : i32
    return %arg0, %arg2 : i32, i32
  }
  func.func @transform_1(%arg0: i32, %arg1: i32, %arg2: i32) -> (i32, i32) {
    %c0_i32 = arith.constant 0 : i32
    return %arg2, %arg1 : i32, i32
  }
  func.func @transform_2(%arg0: i32, %arg1: i32, %arg2: i32) -> (i32, i32) {
    %c0_i32 = arith.constant 0 : i32
    %c0_i32_0 = arith.constant 0 : i32
    return %c0_i32, %arg1 : i32, i32
  }
  func.func @transform_3(%arg0: i32, %arg1: i32, %arg2: i32) -> (i32, i32) {
    %c0_i32 = arith.constant 0 : i32
    return %arg0, %arg1 : i32, i32
  }
}

module attributes {stable_mosaic.version = 11 : i64} {
  func.func @_dense_kernel(%arg0: i32, %arg1: i32, %arg2: i32, %arg3: memref<128x64xbf16, #tpu.memory_space<vmem>>, %arg4: memref<64x256xbf16, #tpu.memory_space<vmem>>, %arg5: memref<1x256xf32, #tpu.memory_space<vmem>>, %arg6: memref<1x64xf32, #tpu.memory_space<vmem>>, %arg7: memref<1x64xf32, #tpu.memory_space<vmem>>, %arg8: memref<128x256xbf16, #tpu.memory_space<vmem>>, %arg9: memref<128x256xf32, #tpu.memory_space<vmem>>) attributes {dimension_semantics = [#tpu.dimension_semantics<parallel>, #tpu.dimension_semantics<parallel>, #tpu.dimension_semantics<arbitrary>], iteration_bounds = array<i64: 1, 1, 1>, scalar_prefetch = 0 : i64, scratch_operands = 1 : i64, tpu.core_type = #tpu.core_type<tc>, window_params = [{transform_indices = @transform_0, window_bounds = array<i64: 128, 64>}, {transform_indices = @transform_1, window_bounds = array<i64: 64, 256>}, {transform_indices = @transform_2, window_bounds = array<i64: 1, 256>}, {pipeline_mode = #tpu.pipeline_mode<synchronous>, transform_indices = @transform_3, window_bounds = array<i64: 1, 64>}, {pipeline_mode = #tpu.pipeline_mode<synchronous>, transform_indices = @transform_4, window_bounds = array<i64: 1, 64>}, {transform_indices = @transform_5, window_bounds = array<i64: 128, 256>}]} {
    %c0_i32 = arith.constant 0 : i32
    %0 = arith.cmpi eq, %arg2, %c0_i32 : i32
    %1 = arith.extui %0 : i1 to i32
    %c0_i32_0 = arith.constant 0 : i32
    %2 = arith.cmpi ne, %1, %c0_i32_0 : i32
    scf.if %2 {
      %cst_19 = arith.constant 0.000000e+00 : f32
      %38 = vector.broadcast %cst_19 : f32 to vector<128x256xf32>
      %c0_20 = arith.constant 0 : index
      %c0_21 = arith.constant 0 : index
      %39 = vector.load %arg9[%c0_20, %c0_21] : memref<128x256xf32, #tpu.memory_space<vmem>>, vector<128x256xf32>
      tpu.vector_store %arg9[%c0_20, %c0_21], %38 {strides = array<i32>} : memref<128x256xf32, #tpu.memory_space<vmem>>, vector<128x256xf32>,
    } else {
    }
    %c0 = arith.constant 0 : index
    %c0_1 = arith.constant 0 : index
    %3 = vector.load %arg3[%c0, %c0_1] : memref<128x64xbf16, #tpu.memory_space<vmem>>, vector<128x64xbf16>
    %4 = arith.extf %3 : vector<128x64xbf16> to vector<128x64xf32>
    %cst = arith.constant dense<0.000000e+00> : vector<128xf32>
    %5 = vector.multi_reduction <add>, %4, %cst [1] : vector<128x64xf32> to vector<128xf32>
    %6 = vector.shape_cast %5 : vector<128xf32> to vector<128x1xf32>
    %cst_2 = arith.constant 6.400000e+01 : f32
    %7 = vector.broadcast %cst_2 : f32 to vector<128x1xf32>
    %8 = arith.divf %6, %7 : vector<128x1xf32>
    %9 = vector.broadcast %8 : vector<128x1xf32> to vector<128x64xf32>
    %10 = arith.subf %4, %9 : vector<128x64xf32>
    %11 = arith.mulf %10, %10 : vector<128x64xf32>
    %cst_3 = arith.constant dense<0.000000e+00> : vector<128xf32>
    %12 = vector.multi_reduction <add>, %11, %cst_3 [1] : vector<128x64xf32> to vector<128xf32>
    %13 = vector.shape_cast %12 : vector<128xf32> to vector<128x1xf32>
    %cst_4 = arith.constant 6.400000e+01 : f32
    %14 = vector.broadcast %cst_4 : f32 to vector<128x1xf32>
    %15 = arith.divf %13, %14 : vector<128x1xf32>
    %16 = vector.broadcast %8 : vector<128x1xf32> to vector<128x64xf32>
    %17 = arith.subf %4, %16 : vector<128x64xf32>
    %cst_5 = arith.constant 9.99999974E-6 : f32
    %18 = vector.broadcast %cst_5 : f32 to vector<128x1xf32>
    %19 = arith.addf %15, %18 : vector<128x1xf32>
    %20 = math.rsqrt %19 : vector<128x1xf32>
    %21 = vector.broadcast %20 : vector<128x1xf32> to vector<128x64xf32>
    %22 = arith.mulf %17, %21 : vector<128x64xf32>
    %c0_6 = arith.constant 0 : index
    %c0_7 = arith.constant 0 : index
    %23 = vector.load %arg6[%c0_6, %c0_7] : memref<1x64xf32, #tpu.memory_space<vmem>>, vector<1x64xf32>
    %24 = vector.broadcast %23 : vector<1x64xf32> to vector<128x64xf32>
    %25 = arith.mulf %22, %24 : vector<128x64xf32>
    %c0_8 = arith.constant 0 : index
    %c0_9 = arith.constant 0 : index
    %26 = vector.load %arg7[%c0_8, %c0_9] : memref<1x64xf32, #tpu.memory_space<vmem>>, vector<1x64xf32>
    %27 = vector.broadcast %26 : vector<1x64xf32> to vector<128x64xf32>
    %28 = arith.addf %25, %27 : vector<128x64xf32>
    %29 = arith.truncf %28 : vector<128x64xf32> to vector<128x64xbf16>
    %c0_10 = arith.constant 0 : index
    %c0_11 = arith.constant 0 : index
    %30 = vector.load %arg9[%c0_10, %c0_11] : memref<128x256xf32, #tpu.memory_space<vmem>>, vector<128x256xf32>
    %c0_12 = arith.constant 0 : index
    %c0_13 = arith.constant 0 : index
    %31 = vector.load %arg4[%c0_12, %c0_13] : memref<64x256xbf16, #tpu.memory_space<vmem>>, vector<64x256xbf16>
    %cst_14 = arith.constant dense<0.000000e+00> : vector<128x256xf32>
    %32 = tpu.matmul %29, %31, %cst_14 {dimension_numbers = #tpu.dot_dimension_numbers<[1], [0], [0], [1], [0, 0, 1, 1], [], []>} : vector<128x64xbf16>, vector<64x256xbf16>, vector<128x256xf32> -> vector<128x256xf32>
    %33 = arith.addf %30, %32 : vector<128x256xf32>
    %c0_15 = arith.constant 0 : index
    %c0_16 = arith.constant 0 : index
    %34 = vector.load %arg9[%c0_15, %c0_16] : memref<128x256xf32, #tpu.memory_space<vmem>>, vector<128x256xf32>
    tpu.vector_store %arg9[%c0_15, %c0_16], %33 {strides = array<i32>} : memref<128x256xf32, #tpu.memory_space<vmem>>, vector<128x256xf32>,
    %c0_i32_17 = arith.constant 0 : i32
    %35 = arith.cmpi eq, %arg2, %c0_i32_17 : i32
    %36 = arith.extui %35 : i1 to i32
    %c0_i32_18 = arith.constant 0 : i32
    %37 = arith.cmpi ne, %36, %c0_i32_18 : i32
    scf.if %37 {
      %c0_19 = arith.constant 0 : index
      %c0_20 = arith.constant 0 : index
      %38 = vector.load %arg9[%c0_19, %c0_20] : memref<128x256xf32, #tpu.memory_space<vmem>>, vector<128x256xf32>
      %c0_21 = arith.constant 0 : index
      %c0_22 = arith.constant 0 : index
      %39 = vector.load %arg5[%c0_21, %c0_22] : memref<1x256xf32, #tpu.memory_space<vmem>>, vector<1x256xf32>
      %40 = vector.broadcast %39 : vector<1x256xf32> to vector<128x256xf32>
      %41 = arith.addf %38, %40 : vector<128x256xf32>
      %42 = arith.truncf %41 : vector<128x256xf32> to vector<128x256xbf16>
      %c0_23 = arith.constant 0 : index
      %c0_24 = arith.constant 0 : index
      %43 = vector.load %arg8[%c0_23, %c0_24] : memref<128x256xbf16, #tpu.memory_space<vmem>>, vector<128x256xbf16>
      tpu.vector_store %arg8[%c0_23, %c0_24], %42 {strides = array<i32>} : memref<128x256xbf16, #tpu.memory_space<vmem>>, vector<128x256xbf16>,
    } else {
    }
    return
  }
  func.func @transform_0(%arg0: i32, %arg1: i32, %arg2: i32) -> (i32, i32) {
    %c0_i32 = arith.constant 0 : i32
    return %arg0, %arg2 : i32, i32
  }
  func.func @transform_1(%arg0: i32, %arg1: i32, %arg2: i32) -> (i32, i32) {
    %c0_i32 = arith.constant 0 : i32
    return %arg2, %arg1 : i32, i32
  }
  func.func @transform_2(%arg0: i32, %arg1: i32, %arg2: i32) -> (i32, i32) {
    %c0_i32 = arith.constant 0 : i32
    %c0_i32_0 = arith.constant 0 : i32
    return %c0_i32, %arg1 : i32, i32
  }
  func.func @transform_3(%arg0: i32, %arg1: i32, %arg2: i32) -> (i32, i32) {
    %c0_i32 = arith.constant 0 : i32
    %c0_i32_0 = arith.constant 0 : i32
    %c0_i32_1 = arith.constant 0 : i32
    return %c0_i32, %c0_i32_0 : i32, i32
  }
  func.func @transform_4(%arg0: i32, %arg1: i32, %arg2: i32) -> (i32, i32) {
    %c0_i32 = arith.constant 0 : i32
    %c0_i32_0 = arith.constant 0 : i32
    %c0_i32_1 = arith.constant 0 : i32
    return %c0_i32, %c0_i32_0 : i32, i32
  }
  func.func @transform_5(%arg0: i32, %arg1: i32, %arg2: i32) -> (i32, i32) {
    %c0_i32 = arith.constant 0 : i32
    return %arg0, %arg1 : i32, i32
  }
}

module attributes {stable_mosaic.version = 11 : i64} {
  func.func @_flash_attn_kernel(%arg0: i32, %arg1: i32, %arg2: i32, %arg3: memref<4x64x32xbf16, #tpu.memory_space<vmem>>, %arg4: memref<4x64x32xbf16, #tpu.memory_space<vmem>>, %arg5: memref<4x64x32xbf16, #tpu.memory_space<vmem>>, %arg6: memref<4x64x32xbf16, #tpu.memory_space<vmem>>, %arg7: memref<4x64x1xf32, #tpu.memory_space<vmem>>, %arg8: memref<4x64x1xf32, #tpu.memory_space<vmem>>, %arg9: memref<4x64x32xf32, #tpu.memory_space<vmem>>) attributes {dimension_semantics = [#tpu.dimension_semantics<parallel>, #tpu.dimension_semantics<parallel>, #tpu.dimension_semantics<arbitrary>], iteration_bounds = array<i64: 1, 1, 1>, scalar_prefetch = 0 : i64, scratch_operands = 3 : i64, tpu.core_type = #tpu.core_type<tc>, window_params = [{transform_indices = @transform_0, window_bounds = array<i64: 4, 64, 32>}, {transform_indices = @transform_1, window_bounds = array<i64: 4, 64, 32>}, {transform_indices = @transform_2, window_bounds = array<i64: 4, 64, 32>}, {transform_indices = @transform_3, window_bounds = array<i64: 4, 64, 32>}]} {
    %c0_i32 = arith.constant 0 : i32
    %0 = arith.cmpi eq, %arg2, %c0_i32 : i32
    %1 = arith.extui %0 : i1 to i32
    %c0_i32_0 = arith.constant 0 : i32
    %2 = arith.cmpi ne, %1, %c0_i32_0 : i32
    scf.if %2 {
      %cst = arith.constant 0xFF800000 : f32
      %9 = vector.broadcast %cst : f32 to vector<4x64x1xf32>
      %c0 = arith.constant 0 : index
      %c0_4 = arith.constant 0 : index
      %c0_5 = arith.constant 0 : index
      %10 = vector.load %arg7[%c0, %c0_4, %c0_5] : memref<4x64x1xf32, #tpu.memory_space<vmem>>, vector<4x64x1xf32>
      tpu.vector_store %arg7[%c0, %c0_4, %c0_5], %9 {strides = array<i32>} : memref<4x64x1xf32, #tpu.memory_space<vmem>>, vector<4x64x1xf32>,
      %cst_6 = arith.constant 0.000000e+00 : f32
      %11 = vector.broadcast %cst_6 : f32 to vector<4x64x1xf32>
      %c0_7 = arith.constant 0 : index
      %c0_8 = arith.constant 0 : index
      %c0_9 = arith.constant 0 : index
      %12 = vector.load %arg8[%c0_7, %c0_8, %c0_9] : memref<4x64x1xf32, #tpu.memory_space<vmem>>, vector<4x64x1xf32>
      tpu.vector_store %arg8[%c0_7, %c0_8, %c0_9], %11 {strides = array<i32>} : memref<4x64x1xf32, #tpu.memory_space<vmem>>, vector<4x64x1xf32>,
      %cst_10 = arith.constant 0.000000e+00 : f32
      %13 = vector.broadcast %cst_10 : f32 to vector<4x64x32xf32>
      %c0_11 = arith.constant 0 : index
      %c0_12 = arith.constant 0 : index
      %c0_13 = arith.constant 0 : index
      %14 = vector.load %arg9[%c0_11, %c0_12, %c0_13] : memref<4x64x32xf32, #tpu.memory_space<vmem>>, vector<4x64x32xf32>
      tpu.vector_store %arg9[%c0_11, %c0_12, %c0_13], %13 {strides = array<i32>} : memref<4x64x32xf32, #tpu.memory_space<vmem>>, vector<4x64x32xf32>,
    } else {
    }
    %3 = arith.cmpi sle, %arg2, %arg1 : i32
    %4 = arith.extui %3 : i1 to i32
    %c0_i32_1 = arith.constant 0 : i32
    %5 = arith.cmpi ne, %4, %c0_i32_1 : i32
    scf.if %5 {
      %c0 = arith.constant 0 : index
      %c0_4 = arith.constant 0 : index
      %c0_5 = arith.constant 0 : index
      %9 = vector.load %arg3[%c0, %c0_4, %c0_5] : memref<4x64x32xbf16, #tpu.memory_space<vmem>>, vector<4x64x32xbf16>
      %c0_6 = arith.constant 0 : index
      %c0_7 = arith.constant 0 : index
      %c0_8 = arith.constant 0 : index
      %10 = vector.load %arg4[%c0_6, %c0_7, %c0_8] : memref<4x64x32xbf16, #tpu.memory_space<vmem>>, vector<4x64x32xbf16>
      "tpu.trace_start"() <{level = 10 : i32, message = "gqd,gkd->gqk"}> : () -> ()
      %cst = arith.constant dense<0.000000e+00> : vector<4x64x64xf32>
      %11 = tpu.matmul %9, %10, %cst {dimension_numbers = #tpu.dot_dimension_numbers<[2], [2], [1], [1], [0, 0, 0, 1, 1, 1], [0], [0]>} : vector<4x64x32xbf16>, vector<4x64x32xbf16>, vector<4x64x64xf32> -> vector<4x64x64xf32>
      "tpu.trace_stop"() : () -> ()
      %c64_i32 = arith.constant 64 : i32
      %12 = arith.muli %arg1, %c64_i32 : i32
      %13 = tpu.iota {dimensions = array<i32: 0>} : vector<64x64xi32>
      %14 = vector.broadcast %12 : i32 to vector<64x64xi32>
      %15 = arith.addi %14, %13 : vector<64x64xi32>
      %c64_i32_9 = arith.constant 64 : i32
      %16 = arith.muli %arg2, %c64_i32_9 : i32
      %17 = tpu.iota {dimensions = array<i32: 1>} : vector<64x64xi32>
      %18 = vector.broadcast %16 : i32 to vector<64x64xi32>
      %19 = arith.addi %18, %17 : vector<64x64xi32>
      %20 = arith.cmpi sle, %19, %15 : vector<64x64xi32>
      %21 = vector.shape_cast %20 : vector<64x64xi1> to vector<1x64x64xi1>
      %cst_10 = arith.constant 0xFF800000 : f32
      %22 = vector.shape_cast %21 : vector<1x64x64xi1> to vector<1x64x64xi1>
      %23 = vector.broadcast %22 : vector<1x64x64xi1> to vector<4x64x64xi1>
      %24 = vector.broadcast %cst_10 : f32 to vector<4x64x64xf32>
      %25 = arith.select %23, %11, %24 : vector<4x64x64xi1>, vector<4x64x64xf32>
      %c0_11 = arith.constant 0 : index
      %c0_12 = arith.constant 0 : index
      %c0_13 = arith.constant 0 : index
      %26 = vector.load %arg7[%c0_11, %c0_12, %c0_13] : memref<4x64x1xf32, #tpu.memory_space<vmem>>, vector<4x64x1xf32>
      %cst_14 = arith.constant dense<0xFF800000> : vector<4x64xf32>
      %27 = vector.multi_reduction <maximumf>, %25, %cst_14 [2] : vector<4x64x64xf32> to vector<4x64xf32>
      %28 = vector.shape_cast %27 : vector<4x64xf32> to vector<4x64x1xf32>
      %29 = arith.maximumf %26, %28 : vector<4x64x1xf32>
      %30 = arith.subf %26, %29 : vector<4x64x1xf32>
      %31 = math.exp %30 : vector<4x64x1xf32>
      %32 = vector.broadcast %29 : vector<4x64x1xf32> to vector<4x64x64xf32>
      %33 = arith.subf %25, %32 : vector<4x64x64xf32>
      %34 = math.exp %33 : vector<4x64x64xf32>
      %c0_15 = arith.constant 0 : index
      %c0_16 = arith.constant 0 : index
      %c0_17 = arith.constant 0 : index
      %35 = vector.load %arg8[%c0_15, %c0_16, %c0_17] : memref<4x64x1xf32, #tpu.memory_space<vmem>>, vector<4x64x1xf32>
      %36 = arith.mulf %31, %35 : vector<4x64x1xf32>
      %cst_18 = arith.constant dense<0.000000e+00> : vector<4x64xf32>
      %37 = vector.multi_reduction <add>, %34, %cst_18 [2] : vector<4x64x64xf32> to vector<4x64xf32>
      %38 = vector.shape_cast %37 : vector<4x64xf32> to vector<4x64x1xf32>
      %39 = arith.addf %36, %38 : vector<4x64x1xf32>
      %c0_19 = arith.constant 0 : index
      %c0_20 = arith.constant 0 : index
      %c0_21 = arith.constant 0 : index
      %40 = vector.load %arg8[%c0_19, %c0_20, %c0_21] : memref<4x64x1xf32, #tpu.memory_space<vmem>>, vector<4x64x1xf32>
      tpu.vector_store %arg8[%c0_19, %c0_20, %c0_21], %39 {strides = array<i32>} : memref<4x64x1xf32, #tpu.memory_space<vmem>>, vector<4x64x1xf32>,
      %c0_22 = arith.constant 0 : index
      %c0_23 = arith.constant 0 : index
      %c0_24 = arith.constant 0 : index
      %41 = vector.load %arg9[%c0_22, %c0_23, %c0_24] : memref<4x64x32xf32, #tpu.memory_space<vmem>>, vector<4x64x32xf32>
      %42 = vector.broadcast %31 : vector<4x64x1xf32> to vector<4x64x32xf32>
      %43 = arith.mulf %42, %41 : vector<4x64x32xf32>
      %44 = arith.truncf %34 : vector<4x64x64xf32> to vector<4x64x64xbf16>
      %c0_25 = arith.constant 0 : index
      %c0_26 = arith.constant 0 : index
      %c0_27 = arith.constant 0 : index
      %45 = vector.load %arg5[%c0_25, %c0_26, %c0_27] : memref<4x64x32xbf16, #tpu.memory_space<vmem>>, vector<4x64x32xbf16>
      "tpu.trace_start"() <{level = 10 : i32, message = "gqk,gkd->gqd"}> : () -> ()
      %cst_28 = arith.constant dense<0.000000e+00> : vector<4x64x32xf32>
      %46 = tpu.matmul %44, %45, %cst_28 {dimension_numbers = #tpu.dot_dimension_numbers<[2], [1], [1], [2], [0, 0, 0, 1, 1, 2], [0], [0]>} : vector<4x64x64xbf16>, vector<4x64x32xbf16>, vector<4x64x32xf32> -> vector<4x64x32xf32>
      "tpu.trace_stop"() : () -> ()
      %47 = arith.addf %43, %46 : vector<4x64x32xf32>
      %c0_29 = arith.constant 0 : index
      %c0_30 = arith.constant 0 : index
      %c0_31 = arith.constant 0 : index
      %48 = vector.load %arg9[%c0_29, %c0_30, %c0_31] : memref<4x64x32xf32, #tpu.memory_space<vmem>>, vector<4x64x32xf32>
      tpu.vector_store %arg9[%c0_29, %c0_30, %c0_31], %47 {strides = array<i32>} : memref<4x64x32xf32, #tpu.memory_space<vmem>>, vector<4x64x32xf32>,
      %c0_32 = arith.constant 0 : index
      %c0_33 = arith.constant 0 : index
      %c0_34 = arith.constant 0 : index
      %49 = vector.load %arg7[%c0_32, %c0_33, %c0_34] : memref<4x64x1xf32, #tpu.memory_space<vmem>>, vector<4x64x1xf32>
      tpu.vector_store %arg7[%c0_32, %c0_33, %c0_34], %29 {strides = array<i32>} : memref<4x64x1xf32, #tpu.memory_space<vmem>>, vector<4x64x1xf32>,
    } else {
    }
    %c0_i32_2 = arith.constant 0 : i32
    %6 = arith.cmpi eq, %arg2, %c0_i32_2 : i32
    %7 = arith.extui %6 : i1 to i32
    %c0_i32_3 = arith.constant 0 : i32
    %8 = arith.cmpi ne, %7, %c0_i32_3 : i32
    scf.if %8 {
      %c0 = arith.constant 0 : index
      %c0_4 = arith.constant 0 : index
      %c0_5 = arith.constant 0 : index
      %9 = vector.load %arg9[%c0, %c0_4, %c0_5] : memref<4x64x32xf32, #tpu.memory_space<vmem>>, vector<4x64x32xf32>
      %c0_6 = arith.constant 0 : index
      %c0_7 = arith.constant 0 : index
      %c0_8 = arith.constant 0 : index
      %10 = vector.load %arg8[%c0_6, %c0_7, %c0_8] : memref<4x64x1xf32, #tpu.memory_space<vmem>>, vector<4x64x1xf32>
      %11 = tpu.reciprocal %10 {approx = true} : vector<4x64x1xf32> -> vector<4x64x1xf32>
      %12 = vector.broadcast %11 : vector<4x64x1xf32> to vector<4x64x32xf32>
      %13 = arith.mulf %9, %12 : vector<4x64x32xf32>
      %14 = arith.truncf %13 : vector<4x64x32xf32> to vector<4x64x32xbf16>
      %c0_9 = arith.constant 0 : index
      %c0_10 = arith.constant 0 : index
      %c0_11 = arith.constant 0 : index
      %15 = vector.load %arg6[%c0_9, %c0_10, %c0_11] : memref<4x64x32xbf16, #tpu.memory_space<vmem>>, vector<4x64x32xbf16>
      tpu.vector_store %arg6[%c0_9, %c0_10, %c0_11], %14 {strides = array<i32>} : memref<4x64x32xbf16, #tpu.memory_space<vmem>>, vector<4x64x32xbf16>,
    } else {
    }
    return
  }
  func.func @transform_0(%arg0: i32, %arg1: i32, %arg2: i32) -> (i32, i32, i32) {
    %c0_i32 = arith.constant 0 : i32
    %c0_i32_0 = arith.constant 0 : i32
    return %arg0, %arg1, %c0_i32 : i32, i32, i32
  }
  func.func @transform_1(%arg0: i32, %arg1: i32, %arg2: i32) -> (i32, i32, i32) {
    %0 = arith.minsi %arg1, %arg2 : i32
    %c0_i32 = arith.constant 0 : i32
    %c0_i32_0 = arith.constant 0 : i32
    return %arg0, %0, %c0_i32 : i32, i32, i32
  }
  func.func @transform_2(%arg0: i32, %arg1: i32, %arg2: i32) -> (i32, i32, i32) {
    %0 = arith.minsi %arg1, %arg2 : i32
    %c0_i32 = arith.constant 0 : i32
    %c0_i32_0 = arith.constant 0 : i32
    return %arg0, %0, %c0_i32 : i32, i32, i32
  }
  func.func @transform_3(%arg0: i32, %arg1: i32, %arg2: i32) -> (i32, i32, i32) {
    %c0_i32 = arith.constant 0 : i32
    %c0_i32_0 = arith.constant 0 : i32
    return %arg0, %arg1, %c0_i32 : i32, i32, i32
  }
}

module attributes {stable_mosaic.version = 11 : i64} {
  func.func @_dense_kernel(%arg0: i32, %arg1: i32, %arg2: i32, %arg3: memref<128x128xbf16, #tpu.memory_space<vmem>>, %arg4: memref<128x128xbf16, #tpu.memory_space<vmem>>, %arg5: memref<1x128xf32, #tpu.memory_space<vmem>>, %arg6: memref<128x128xbf16, #tpu.memory_space<vmem>>, %arg7: memref<128x128xbf16, #tpu.memory_space<vmem>>, %arg8: memref<128x128xf32, #tpu.memory_space<vmem>>) attributes {dimension_semantics = [#tpu.dimension_semantics<parallel>, #tpu.dimension_semantics<parallel>, #tpu.dimension_semantics<arbitrary>], iteration_bounds = array<i64: 1, 1, 1>, scalar_prefetch = 0 : i64, scratch_operands = 1 : i64, tpu.core_type = #tpu.core_type<tc>, window_params = [{transform_indices = @transform_0, window_bounds = array<i64: 128, 128>}, {transform_indices = @transform_1, window_bounds = array<i64: 128, 128>}, {transform_indices = @transform_2, window_bounds = array<i64: 1, 128>}, {transform_indices = @transform_3, window_bounds = array<i64: 128, 128>}, {transform_indices = @transform_4, window_bounds = array<i64: 128, 128>}]} {
    %c0_i32 = arith.constant 0 : i32
    %0 = arith.cmpi eq, %arg2, %c0_i32 : i32
    %1 = arith.extui %0 : i1 to i32
    %c0_i32_0 = arith.constant 0 : i32
    %2 = arith.cmpi ne, %1, %c0_i32_0 : i32
    scf.if %2 {
      %cst_10 = arith.constant 0.000000e+00 : f32
      %12 = vector.broadcast %cst_10 : f32 to vector<128x128xf32>
      %c0_11 = arith.constant 0 : index
      %c0_12 = arith.constant 0 : index
      %13 = vector.load %arg8[%c0_11, %c0_12] : memref<128x128xf32, #tpu.memory_space<vmem>>, vector<128x128xf32>
      tpu.vector_store %arg8[%c0_11, %c0_12], %12 {strides = array<i32>} : memref<128x128xf32, #tpu.memory_space<vmem>>, vector<128x128xf32>,
    } else {
    }
    %c0 = arith.constant 0 : index
    %c0_1 = arith.constant 0 : index
    %3 = vector.load %arg3[%c0, %c0_1] : memref<128x128xbf16, #tpu.memory_space<vmem>>, vector<128x128xbf16>
    %c0_2 = arith.constant 0 : index
    %c0_3 = arith.constant 0 : index
    %4 = vector.load %arg8[%c0_2, %c0_3] : memref<128x128xf32, #tpu.memory_space<vmem>>, vector<128x128xf32>
    %c0_4 = arith.constant 0 : index
    %c0_5 = arith.constant 0 : index
    %5 = vector.load %arg4[%c0_4, %c0_5] : memref<128x128xbf16, #tpu.memory_space<vmem>>, vector<128x128xbf16>
    %cst = arith.constant dense<0.000000e+00> : vector<128x128xf32>
    %6 = tpu.matmul %3, %5, %cst {dimension_numbers = #tpu.dot_dimension_numbers<[1], [0], [0], [1], [0, 0, 1, 1], [], []>} : vector<128x128xbf16>, vector<128x128xbf16>, vector<128x128xf32> -> vector<128x128xf32>
    %7 = arith.addf %4, %6 : vector<128x128xf32>
    %c0_6 = arith.constant 0 : index
    %c0_7 = arith.constant 0 : index
    %8 = vector.load %arg8[%c0_6, %c0_7] : memref<128x128xf32, #tpu.memory_space<vmem>>, vector<128x128xf32>
    tpu.vector_store %arg8[%c0_6, %c0_7], %7 {strides = array<i32>} : memref<128x128xf32, #tpu.memory_space<vmem>>, vector<128x128xf32>,
    %c0_i32_8 = arith.constant 0 : i32
    %9 = arith.cmpi eq, %arg2, %c0_i32_8 : i32
    %10 = arith.extui %9 : i1 to i32
    %c0_i32_9 = arith.constant 0 : i32
    %11 = arith.cmpi ne, %10, %c0_i32_9 : i32
    scf.if %11 {
      %c0_10 = arith.constant 0 : index
      %c0_11 = arith.constant 0 : index
      %12 = vector.load %arg8[%c0_10, %c0_11] : memref<128x128xf32, #tpu.memory_space<vmem>>, vector<128x128xf32>
      %c0_12 = arith.constant 0 : index
      %c0_13 = arith.constant 0 : index
      %13 = vector.load %arg5[%c0_12, %c0_13] : memref<1x128xf32, #tpu.memory_space<vmem>>, vector<1x128xf32>
      %14 = vector.broadcast %13 : vector<1x128xf32> to vector<128x128xf32>
      %15 = arith.addf %12, %14 : vector<128x128xf32>
      %c0_14 = arith.constant 0 : index
      %c0_15 = arith.constant 0 : index
      %16 = vector.load %arg6[%c0_14, %c0_15] : memref<128x128xbf16, #tpu.memory_space<vmem>>, vector<128x128xbf16>
      %17 = arith.extf %16 : vector<128x128xbf16> to vector<128x128xf32>
      %18 = arith.addf %15, %17 : vector<128x128xf32>
      %19 = arith.truncf %18 : vector<128x128xf32> to vector<128x128xbf16>
      %c0_16 = arith.constant 0 : index
      %c0_17 = arith.constant 0 : index
      %20 = vector.load %arg7[%c0_16, %c0_17] : memref<128x128xbf16, #tpu.memory_space<vmem>>, vector<128x128xbf16>
      tpu.vector_store %arg7[%c0_16, %c0_17], %19 {strides = array<i32>} : memref<128x128xbf16, #tpu.memory_space<vmem>>, vector<128x128xbf16>,
    } else {
    }
    return
  }
  func.func @transform_0(%arg0: i32, %arg1: i32, %arg2: i32) -> (i32, i32) {
    %c0_i32 = arith.constant 0 : i32
    return %arg0, %arg2 : i32, i32
  }
  func.func @transform_1(%arg0: i32, %arg1: i32, %arg2: i32) -> (i32, i32) {
    %c0_i32 = arith.constant 0 : i32
    return %arg2, %arg1 : i32, i32
  }
  func.func @transform_2(%arg0: i32, %arg1: i32, %arg2: i32) -> (i32, i32) {
    %c0_i32 = arith.constant 0 : i32
    %c0_i32_0 = arith.constant 0 : i32
    return %c0_i32, %arg1 : i32, i32
  }
  func.func @transform_3(%arg0: i32, %arg1: i32, %arg2: i32) -> (i32, i32) {
    %c0_i32 = arith.constant 0 : i32
    return %arg0, %arg1 : i32, i32
  }
  func.func @transform_4(%arg0: i32, %arg1: i32, %arg2: i32) -> (i32, i32) {
    %c0_i32 = arith.constant 0 : i32
    return %arg0, %arg1 : i32, i32
  }
}

module attributes {stable_mosaic.version = 11 : i64} {
  func.func @_dense_kernel(%arg0: i32, %arg1: i32, %arg2: i32, %arg3: memref<128x64xbf16, #tpu.memory_space<vmem>>, %arg4: memref<64x128xbf16, #tpu.memory_space<vmem>>, %arg5: memref<1x128xf32, #tpu.memory_space<vmem>>, %arg6: memref<1x64xf32, #tpu.memory_space<vmem>>, %arg7: memref<1x64xf32, #tpu.memory_space<vmem>>, %arg8: memref<128x128xbf16, #tpu.memory_space<vmem>>, %arg9: memref<128x128xf32, #tpu.memory_space<vmem>>) attributes {dimension_semantics = [#tpu.dimension_semantics<parallel>, #tpu.dimension_semantics<parallel>, #tpu.dimension_semantics<arbitrary>], iteration_bounds = array<i64: 1, 1, 1>, scalar_prefetch = 0 : i64, scratch_operands = 1 : i64, tpu.core_type = #tpu.core_type<tc>, window_params = [{transform_indices = @transform_0, window_bounds = array<i64: 128, 64>}, {transform_indices = @transform_1, window_bounds = array<i64: 64, 128>}, {transform_indices = @transform_2, window_bounds = array<i64: 1, 128>}, {pipeline_mode = #tpu.pipeline_mode<synchronous>, transform_indices = @transform_3, window_bounds = array<i64: 1, 64>}, {pipeline_mode = #tpu.pipeline_mode<synchronous>, transform_indices = @transform_4, window_bounds = array<i64: 1, 64>}, {transform_indices = @transform_5, window_bounds = array<i64: 128, 128>}]} {
    %c0_i32 = arith.constant 0 : i32
    %0 = arith.cmpi eq, %arg2, %c0_i32 : i32
    %1 = arith.extui %0 : i1 to i32
    %c0_i32_0 = arith.constant 0 : i32
    %2 = arith.cmpi ne, %1, %c0_i32_0 : i32
    scf.if %2 {
      %cst_19 = arith.constant 0.000000e+00 : f32
      %38 = vector.broadcast %cst_19 : f32 to vector<128x128xf32>
      %c0_20 = arith.constant 0 : index
      %c0_21 = arith.constant 0 : index
      %39 = vector.load %arg9[%c0_20, %c0_21] : memref<128x128xf32, #tpu.memory_space<vmem>>, vector<128x128xf32>
      tpu.vector_store %arg9[%c0_20, %c0_21], %38 {strides = array<i32>} : memref<128x128xf32, #tpu.memory_space<vmem>>, vector<128x128xf32>,
    } else {
    }
    %c0 = arith.constant 0 : index
    %c0_1 = arith.constant 0 : index
    %3 = vector.load %arg3[%c0, %c0_1] : memref<128x64xbf16, #tpu.memory_space<vmem>>, vector<128x64xbf16>
    %4 = arith.extf %3 : vector<128x64xbf16> to vector<128x64xf32>
    %cst = arith.constant dense<0.000000e+00> : vector<128xf32>
    %5 = vector.multi_reduction <add>, %4, %cst [1] : vector<128x64xf32> to vector<128xf32>
    %6 = vector.shape_cast %5 : vector<128xf32> to vector<128x1xf32>
    %cst_2 = arith.constant 6.400000e+01 : f32
    %7 = vector.broadcast %cst_2 : f32 to vector<128x1xf32>
    %8 = arith.divf %6, %7 : vector<128x1xf32>
    %9 = vector.broadcast %8 : vector<128x1xf32> to vector<128x64xf32>
    %10 = arith.subf %4, %9 : vector<128x64xf32>
    %11 = arith.mulf %10, %10 : vector<128x64xf32>
    %cst_3 = arith.constant dense<0.000000e+00> : vector<128xf32>
    %12 = vector.multi_reduction <add>, %11, %cst_3 [1] : vector<128x64xf32> to vector<128xf32>
    %13 = vector.shape_cast %12 : vector<128xf32> to vector<128x1xf32>
    %cst_4 = arith.constant 6.400000e+01 : f32
    %14 = vector.broadcast %cst_4 : f32 to vector<128x1xf32>
    %15 = arith.divf %13, %14 : vector<128x1xf32>
    %16 = vector.broadcast %8 : vector<128x1xf32> to vector<128x64xf32>
    %17 = arith.subf %4, %16 : vector<128x64xf32>
    %cst_5 = arith.constant 9.99999974E-6 : f32
    %18 = vector.broadcast %cst_5 : f32 to vector<128x1xf32>
    %19 = arith.addf %15, %18 : vector<128x1xf32>
    %20 = math.rsqrt %19 : vector<128x1xf32>
    %21 = vector.broadcast %20 : vector<128x1xf32> to vector<128x64xf32>
    %22 = arith.mulf %17, %21 : vector<128x64xf32>
    %c0_6 = arith.constant 0 : index
    %c0_7 = arith.constant 0 : index
    %23 = vector.load %arg6[%c0_6, %c0_7] : memref<1x64xf32, #tpu.memory_space<vmem>>, vector<1x64xf32>
    %24 = vector.broadcast %23 : vector<1x64xf32> to vector<128x64xf32>
    %25 = arith.mulf %22, %24 : vector<128x64xf32>
    %c0_8 = arith.constant 0 : index
    %c0_9 = arith.constant 0 : index
    %26 = vector.load %arg7[%c0_8, %c0_9] : memref<1x64xf32, #tpu.memory_space<vmem>>, vector<1x64xf32>
    %27 = vector.broadcast %26 : vector<1x64xf32> to vector<128x64xf32>
    %28 = arith.addf %25, %27 : vector<128x64xf32>
    %29 = arith.truncf %28 : vector<128x64xf32> to vector<128x64xbf16>
    %c0_10 = arith.constant 0 : index
    %c0_11 = arith.constant 0 : index
    %30 = vector.load %arg9[%c0_10, %c0_11] : memref<128x128xf32, #tpu.memory_space<vmem>>, vector<128x128xf32>
    %c0_12 = arith.constant 0 : index
    %c0_13 = arith.constant 0 : index
    %31 = vector.load %arg4[%c0_12, %c0_13] : memref<64x128xbf16, #tpu.memory_space<vmem>>, vector<64x128xbf16>
    %cst_14 = arith.constant dense<0.000000e+00> : vector<128x128xf32>
    %32 = tpu.matmul %29, %31, %cst_14 {dimension_numbers = #tpu.dot_dimension_numbers<[1], [0], [0], [1], [0, 0, 1, 1], [], []>} : vector<128x64xbf16>, vector<64x128xbf16>, vector<128x128xf32> -> vector<128x128xf32>
    %33 = arith.addf %30, %32 : vector<128x128xf32>
    %c0_15 = arith.constant 0 : index
    %c0_16 = arith.constant 0 : index
    %34 = vector.load %arg9[%c0_15, %c0_16] : memref<128x128xf32, #tpu.memory_space<vmem>>, vector<128x128xf32>
    tpu.vector_store %arg9[%c0_15, %c0_16], %33 {strides = array<i32>} : memref<128x128xf32, #tpu.memory_space<vmem>>, vector<128x128xf32>,
    %c0_i32_17 = arith.constant 0 : i32
    %35 = arith.cmpi eq, %arg2, %c0_i32_17 : i32
    %36 = arith.extui %35 : i1 to i32
    %c0_i32_18 = arith.constant 0 : i32
    %37 = arith.cmpi ne, %36, %c0_i32_18 : i32
    scf.if %37 {
      %c0_19 = arith.constant 0 : index
      %c0_20 = arith.constant 0 : index
      %38 = vector.load %arg9[%c0_19, %c0_20] : memref<128x128xf32, #tpu.memory_space<vmem>>, vector<128x128xf32>
      %c0_21 = arith.constant 0 : index
      %c0_22 = arith.constant 0 : index
      %39 = vector.load %arg5[%c0_21, %c0_22] : memref<1x128xf32, #tpu.memory_space<vmem>>, vector<1x128xf32>
      %40 = vector.broadcast %39 : vector<1x128xf32> to vector<128x128xf32>
      %41 = arith.addf %38, %40 : vector<128x128xf32>
      %42 = arith.mulf %41, %41 : vector<128x128xf32>
      %43 = arith.mulf %41, %42 : vector<128x128xf32>
      %cst_23 = arith.constant 4.471500e-02 : f32
      %44 = vector.broadcast %cst_23 : f32 to vector<128x128xf32>
      %45 = arith.mulf %44, %43 : vector<128x128xf32>
      %46 = arith.addf %41, %45 : vector<128x128xf32>
      %cst_24 = arith.constant 0.797884583 : f32
      %47 = vector.broadcast %cst_24 : f32 to vector<128x128xf32>
      %48 = arith.mulf %47, %46 : vector<128x128xf32>
      %49 = math.tanh %48 : vector<128x128xf32>
      %cst_25 = arith.constant 1.000000e+00 : f32
      %50 = vector.broadcast %cst_25 : f32 to vector<128x128xf32>
      %51 = arith.addf %50, %49 : vector<128x128xf32>
      %cst_26 = arith.constant 5.000000e-01 : f32
      %52 = vector.broadcast %cst_26 : f32 to vector<128x128xf32>
      %53 = arith.mulf %52, %51 : vector<128x128xf32>
      %54 = arith.mulf %41, %53 : vector<128x128xf32>
      %55 = arith.truncf %54 : vector<128x128xf32> to vector<128x128xbf16>
      %c0_27 = arith.constant 0 : index
      %c0_28 = arith.constant 0 : index
      %56 = vector.load %arg8[%c0_27, %c0_28] : memref<128x128xbf16, #tpu.memory_space<vmem>>, vector<128x128xbf16>
      tpu.vector_store %arg8[%c0_27, %c0_28], %55 {strides = array<i32>} : memref<128x128xbf16, #tpu.memory_space<vmem>>, vector<128x128xbf16>,
    } else {
    }
    return
  }
  func.func @transform_0(%arg0: i32, %arg1: i32, %arg2: i32) -> (i32, i32) {
    %c0_i32 = arith.constant 0 : i32
    return %arg0, %arg2 : i32, i32
  }
  func.func @transform_1(%arg0: i32, %arg1: i32, %arg2: i32) -> (i32, i32) {
    %c0_i32 = arith.constant 0 : i32
    return %arg2, %arg1 : i32, i32
  }
  func.func @transform_2(%arg0: i32, %arg1: i32, %arg2: i32) -> (i32, i32) {
    %c0_i32 = arith.constant 0 : i32
    %c0_i32_0 = arith.constant 0 : i32
    return %c0_i32, %arg1 : i32, i32
  }
  func.func @transform_3(%arg0: i32, %arg1: i32, %arg2: i32) -> (i32, i32) {
    %c0_i32 = arith.constant 0 : i32
    %c0_i32_0 = arith.constant 0 : i32
    %c0_i32_1 = arith.constant 0 : i32
    return %c0_i32, %c0_i32_0 : i32, i32
  }
  func.func @transform_4(%arg0: i32, %arg1: i32, %arg2: i32) -> (i32, i32) {
    %c0_i32 = arith.constant 0 : i32
    %c0_i32_0 = arith.constant 0 : i32
    %c0_i32_1 = arith.constant 0 : i32
    return %c0_i32, %c0_i32_0 : i32, i32
  }
  func.func @transform_5(%arg0: i32, %arg1: i32, %arg2: i32) -> (i32, i32) {
    %c0_i32 = arith.constant 0 : i32
    return %arg0, %arg1 : i32, i32
  }
}

module attributes {stable_mosaic.version = 11 : i64} {
  func.func @_dense_kernel(%arg0: i32, %arg1: i32, %arg2: i32, %arg3: memref<128x64xbf16, #tpu.memory_space<vmem>>, %arg4: memref<64x128xbf16, #tpu.memory_space<vmem>>, %arg5: memref<1x128xf32, #tpu.memory_space<vmem>>, %arg6: memref<1x64xf32, #tpu.memory_space<vmem>>, %arg7: memref<1x64xf32, #tpu.memory_space<vmem>>, %arg8: memref<128x128xf32, #tpu.memory_space<vmem>>, %arg9: memref<128x128xf32, #tpu.memory_space<vmem>>) attributes {dimension_semantics = [#tpu.dimension_semantics<parallel>, #tpu.dimension_semantics<parallel>, #tpu.dimension_semantics<arbitrary>], iteration_bounds = array<i64: 1, 1, 1>, scalar_prefetch = 0 : i64, scratch_operands = 1 : i64, tpu.core_type = #tpu.core_type<tc>, window_params = [{transform_indices = @transform_0, window_bounds = array<i64: 128, 64>}, {transform_indices = @transform_1, window_bounds = array<i64: 64, 128>}, {transform_indices = @transform_2, window_bounds = array<i64: 1, 128>}, {pipeline_mode = #tpu.pipeline_mode<synchronous>, transform_indices = @transform_3, window_bounds = array<i64: 1, 64>}, {pipeline_mode = #tpu.pipeline_mode<synchronous>, transform_indices = @transform_4, window_bounds = array<i64: 1, 64>}, {transform_indices = @transform_5, window_bounds = array<i64: 128, 128>}]} {
    %c0_i32 = arith.constant 0 : i32
    %0 = arith.cmpi eq, %arg2, %c0_i32 : i32
    %1 = arith.extui %0 : i1 to i32
    %c0_i32_0 = arith.constant 0 : i32
    %2 = arith.cmpi ne, %1, %c0_i32_0 : i32
    scf.if %2 {
      %cst_19 = arith.constant 0.000000e+00 : f32
      %38 = vector.broadcast %cst_19 : f32 to vector<128x128xf32>
      %c0_20 = arith.constant 0 : index
      %c0_21 = arith.constant 0 : index
      %39 = vector.load %arg9[%c0_20, %c0_21] : memref<128x128xf32, #tpu.memory_space<vmem>>, vector<128x128xf32>
      tpu.vector_store %arg9[%c0_20, %c0_21], %38 {strides = array<i32>} : memref<128x128xf32, #tpu.memory_space<vmem>>, vector<128x128xf32>,
    } else {
    }
    %c0 = arith.constant 0 : index
    %c0_1 = arith.constant 0 : index
    %3 = vector.load %arg3[%c0, %c0_1] : memref<128x64xbf16, #tpu.memory_space<vmem>>, vector<128x64xbf16>
    %4 = arith.extf %3 : vector<128x64xbf16> to vector<128x64xf32>
    %cst = arith.constant dense<0.000000e+00> : vector<128xf32>
    %5 = vector.multi_reduction <add>, %4, %cst [1] : vector<128x64xf32> to vector<128xf32>
    %6 = vector.shape_cast %5 : vector<128xf32> to vector<128x1xf32>
    %cst_2 = arith.constant 6.400000e+01 : f32
    %7 = vector.broadcast %cst_2 : f32 to vector<128x1xf32>
    %8 = arith.divf %6, %7 : vector<128x1xf32>
    %9 = vector.broadcast %8 : vector<128x1xf32> to vector<128x64xf32>
    %10 = arith.subf %4, %9 : vector<128x64xf32>
    %11 = arith.mulf %10, %10 : vector<128x64xf32>
    %cst_3 = arith.constant dense<0.000000e+00> : vector<128xf32>
    %12 = vector.multi_reduction <add>, %11, %cst_3 [1] : vector<128x64xf32> to vector<128xf32>
    %13 = vector.shape_cast %12 : vector<128xf32> to vector<128x1xf32>
    %cst_4 = arith.constant 6.400000e+01 : f32
    %14 = vector.broadcast %cst_4 : f32 to vector<128x1xf32>
    %15 = arith.divf %13, %14 : vector<128x1xf32>
    %16 = vector.broadcast %8 : vector<128x1xf32> to vector<128x64xf32>
    %17 = arith.subf %4, %16 : vector<128x64xf32>
    %cst_5 = arith.constant 9.99999974E-6 : f32
    %18 = vector.broadcast %cst_5 : f32 to vector<128x1xf32>
    %19 = arith.addf %15, %18 : vector<128x1xf32>
    %20 = math.rsqrt %19 : vector<128x1xf32>
    %21 = vector.broadcast %20 : vector<128x1xf32> to vector<128x64xf32>
    %22 = arith.mulf %17, %21 : vector<128x64xf32>
    %c0_6 = arith.constant 0 : index
    %c0_7 = arith.constant 0 : index
    %23 = vector.load %arg6[%c0_6, %c0_7] : memref<1x64xf32, #tpu.memory_space<vmem>>, vector<1x64xf32>
    %24 = vector.broadcast %23 : vector<1x64xf32> to vector<128x64xf32>
    %25 = arith.mulf %22, %24 : vector<128x64xf32>
    %c0_8 = arith.constant 0 : index
    %c0_9 = arith.constant 0 : index
    %26 = vector.load %arg7[%c0_8, %c0_9] : memref<1x64xf32, #tpu.memory_space<vmem>>, vector<1x64xf32>
    %27 = vector.broadcast %26 : vector<1x64xf32> to vector<128x64xf32>
    %28 = arith.addf %25, %27 : vector<128x64xf32>
    %29 = arith.truncf %28 : vector<128x64xf32> to vector<128x64xbf16>
    %c0_10 = arith.constant 0 : index
    %c0_11 = arith.constant 0 : index
    %30 = vector.load %arg9[%c0_10, %c0_11] : memref<128x128xf32, #tpu.memory_space<vmem>>, vector<128x128xf32>
    %c0_12 = arith.constant 0 : index
    %c0_13 = arith.constant 0 : index
    %31 = vector.load %arg4[%c0_12, %c0_13] : memref<64x128xbf16, #tpu.memory_space<vmem>>, vector<64x128xbf16>
    %cst_14 = arith.constant dense<0.000000e+00> : vector<128x128xf32>
    %32 = tpu.matmul %29, %31, %cst_14 {dimension_numbers = #tpu.dot_dimension_numbers<[1], [0], [0], [1], [0, 0, 1, 1], [], []>} : vector<128x64xbf16>, vector<64x128xbf16>, vector<128x128xf32> -> vector<128x128xf32>
    %33 = arith.addf %30, %32 : vector<128x128xf32>
    %c0_15 = arith.constant 0 : index
    %c0_16 = arith.constant 0 : index
    %34 = vector.load %arg9[%c0_15, %c0_16] : memref<128x128xf32, #tpu.memory_space<vmem>>, vector<128x128xf32>
    tpu.vector_store %arg9[%c0_15, %c0_16], %33 {strides = array<i32>} : memref<128x128xf32, #tpu.memory_space<vmem>>, vector<128x128xf32>,
    %c0_i32_17 = arith.constant 0 : i32
    %35 = arith.cmpi eq, %arg2, %c0_i32_17 : i32
    %36 = arith.extui %35 : i1 to i32
    %c0_i32_18 = arith.constant 0 : i32
    %37 = arith.cmpi ne, %36, %c0_i32_18 : i32
    scf.if %37 {
      %c0_19 = arith.constant 0 : index
      %c0_20 = arith.constant 0 : index
      %38 = vector.load %arg9[%c0_19, %c0_20] : memref<128x128xf32, #tpu.memory_space<vmem>>, vector<128x128xf32>
      %c0_21 = arith.constant 0 : index
      %c0_22 = arith.constant 0 : index
      %39 = vector.load %arg5[%c0_21, %c0_22] : memref<1x128xf32, #tpu.memory_space<vmem>>, vector<1x128xf32>
      %40 = vector.broadcast %39 : vector<1x128xf32> to vector<128x128xf32>
      %41 = arith.addf %38, %40 : vector<128x128xf32>
      %c0_23 = arith.constant 0 : index
      %c0_24 = arith.constant 0 : index
      %42 = vector.load %arg8[%c0_23, %c0_24] : memref<128x128xf32, #tpu.memory_space<vmem>>, vector<128x128xf32>
      tpu.vector_store %arg8[%c0_23, %c0_24], %41 {strides = array<i32>} : memref<128x128xf32, #tpu.memory_space<vmem>>, vector<128x128xf32>,
    } else {
    }
    return
  }
  func.func @transform_0(%arg0: i32, %arg1: i32, %arg2: i32) -> (i32, i32) {
    %c0_i32 = arith.constant 0 : i32
    return %arg0, %arg2 : i32, i32
  }
  func.func @transform_1(%arg0: i32, %arg1: i32, %arg2: i32) -> (i32, i32) {
    %c0_i32 = arith.constant 0 : i32
    return %arg2, %arg1 : i32, i32
  }
  func.func @transform_2(%arg0: i32, %arg1: i32, %arg2: i32) -> (i32, i32) {
    %c0_i32 = arith.constant 0 : i32
    %c0_i32_0 = arith.constant 0 : i32
    return %c0_i32, %arg1 : i32, i32
  }
  func.func @transform_3(%arg0: i32, %arg1: i32, %arg2: i32) -> (i32, i32) {
    %c0_i32 = arith.constant 0 : i32
    %c0_i32_0 = arith.constant 0 : i32
    %c0_i32_1 = arith.constant 0 : i32
    return %c0_i32, %c0_i32_0 : i32, i32
  }
  func.func @transform_4(%arg0: i32, %arg1: i32, %arg2: i32) -> (i32, i32) {
    %c0_i32 = arith.constant 0 : i32
    %c0_i32_0 = arith.constant 0 : i32
    %c0_i32_1 = arith.constant 0 : i32
    return %c0_i32, %c0_i32_0 : i32, i32
  }
  func.func @transform_5(%arg0: i32, %arg1: i32, %arg2: i32) -> (i32, i32) {
    %c0_i32 = arith.constant 0 : i32
    return %arg0, %arg1 : i32, i32
  }
}

</mosaic_0001>

<llo_original>
// kernel: videogpt_forward.14
$region0: #{videogpt_forward.14}
  #allocation0 [shape = 'u32[]', space=smem, size = 0x4, offset = 0x4, fixed_abs, tag = 'smem constant byte address 0x4 - core index']
  #allocation1 [shape = 'u32[144,128]{1,0:T(1,128)}', space=vmem, size = 0x12000, scoped, tag = 'internal scratch']
  #allocation2 [shape = 'f32[8,128]{1,0:T(8,128)}', space=vmem, size = 0x1000, scoped, tag = 'scratch operand']
  %s0 = inlined_call_operand.vmem [shape: bf16[8,128], index: 0, kind: input, shape index: {}]
  %s1 = inlined_call_operand.vmem [shape: bf16[128,128], index: 1, kind: input, shape index: {}]
  %s2 = inlined_call_operand.vmem [shape: f32[1,128], index: 2, kind: input, shape index: {}]
  %s3 = inlined_call_operand.vmem [shape: bf16[8,128], index: 3, kind: output, shape index: {}]
  %s4 = sld [smem:[#allocation0]]
  $region30: #{videogpt_forward.14} parent=0
    _
  %s6 = ssub.s32 1, %s4
  %s7 = scalar_select 0, %s6, %s4
  // Predicated region
  $region2: #{videogpt_forward.14} parent=0 // pred_check
    _
  $region3: #{videogpt_forward.14} parent=0 // pred_check_branch
    %9 = sbr.rel (0) target = $region5
  $region4: #{videogpt_forward.14} parent=0 // pred_region
    _
  $region5: #{videogpt_forward.14} parent=0 // pred_fallthru
    _
  // Predicated region
  $region6: #{videogpt_forward.14} parent=0 // pred_check
    _
  $region7: #{videogpt_forward.14} parent=0 // pred_check_branch
    %11 = sbr.rel (0) target = $region9
  $region8: #{videogpt_forward.14} parent=0 // pred_region
    _
  $region9: #{videogpt_forward.14} parent=0 // pred_fallthru
    _
  // Predicated region
  $region10: #{videogpt_forward.14} parent=0 // pred_check
    _
  $region11: #{videogpt_forward.14} parent=0 // pred_check_branch
    %13 = sbr.rel (0) target = $region13
  $region12: #{videogpt_forward.14} parent=0 // pred_region
    _
  $region13: #{videogpt_forward.14} parent=0 // pred_fallthru
    _
  %p15 = scmp.eq.s32.totalorder 0, 0
  // Predicated region
  $region14: #{videogpt_forward.14} parent=0 // pred_check
    %p16 = pneg %p15
  $region15: #{videogpt_forward.14} parent=0 // pred_check_branch
    %18 = sbr.rel (%p16) target = $region17
  $region16: #{videogpt_forward.14} parent=0 // pred_region
    %19 = vst [vmem:[#allocation2] sm:$0xff] 0.0
  $region17: #{videogpt_forward.14} parent=0 // pred_fallthru
    _
  %v20 = vld [vmem:[%s0] sm:$0xf]
  %v21 = vld [vmem:[#allocation2] sm:$0xff]
  %v22 = vld [vmem:[%s1] sm:$0xf]
  %v23 = vld [vmem:[%s1 + $0x4] sm:$0xf]
  %v24 = vld [vmem:[%s1 + $0x8] sm:$0xf]
  %v25 = vld [vmem:[%s1 + $0xc] sm:$0xf]
  %v26 = vld [vmem:[%s1 + $0x10] sm:$0xf]
  %v27 = vld [vmem:[%s1 + $0x14] sm:$0xf]
  %v28 = vld [vmem:[%s1 + $0x18] sm:$0xf]
  %v29 = vld [vmem:[%s1 + $0x1c] sm:$0xf]
  %v30 = vld [vmem:[%s1 + $0x20] sm:$0xf]
  %v31 = vld [vmem:[%s1 + $0x24] sm:$0xf]
  %v32 = vld [vmem:[%s1 + $0x28] sm:$0xf]
  %v33 = vld [vmem:[%s1 + $0x2c] sm:$0xf]
  %v34 = vld [vmem:[%s1 + $0x30] sm:$0xf]
  %v35 = vld [vmem:[%s1 + $0x34] sm:$0xf]
  %v36 = vld [vmem:[%s1 + $0x38] sm:$0xf]
  %v37 = vld [vmem:[%s1 + $0x3c] sm:$0xf]
  %v54 = vunpack.c.l.b16 %v22
  %v55 = vunpack.c.l.b16 %v23
  %v56 = vunpack.c.l.b16 %v24
  %v57 = vunpack.c.l.b16 %v25
  %v58 = vunpack.c.l.b16 %v26
  %v59 = vunpack.c.l.b16 %v27
  %v60 = vunpack.c.l.b16 %v28
  %v61 = vunpack.c.l.b16 %v29
  %v62 = vunpack.c.l.b16 %v30
  %v63 = vunpack.c.l.b16 %v31
  %v64 = vunpack.c.l.b16 %v32
  %v65 = vunpack.c.l.b16 %v33
  %v66 = vunpack.c.l.b16 %v34
  %v67 = vunpack.c.l.b16 %v35
  %v68 = vunpack.c.l.b16 %v36
  %v69 = vunpack.c.l.b16 %v37
  %v70 = vpack.c.b16 %v55, %v54
  %v71 = vpack.c.b16 %v57, %v56
  %v72 = vpack.c.b16 %v59, %v58
  %v73 = vpack.c.b16 %v61, %v60
  %v74 = vpack.c.b16 %v63, %v62
  %v75 = vpack.c.b16 %v65, %v64
  %v76 = vpack.c.b16 %v67, %v66
  %v77 = vpack.c.b16 %v69, %v68
  %86 = vmatprep.subr.bf16.mxu0 0
  %87 = vmatpush1.bf16.msra.mxu0 %v70
  %88 = vmatprep.subr.bf16.mxu0 0
  %89 = vmatpush1.bf16.msra.mxu0 %v71
  %90 = vmatprep.subr.bf16.mxu0 0
  %91 = vmatpush1.bf16.msra.mxu0 %v72
  %92 = vmatprep.subr.bf16.mxu0 0
  %93 = vmatpush1.bf16.msra.mxu0 %v73
  %94 = vmatprep.subr.bf16.mxu0 0
  %95 = vmatpush1.bf16.msra.mxu0 %v74
  %96 = vmatprep.subr.bf16.mxu0 0
  %97 = vmatpush1.bf16.msra.mxu0 %v75
  %98 = vmatprep.subr.bf16.mxu0 0
  %99 = vmatpush1.bf16.msra.mxu0 %v76
  %100 = vmatprep.subr.bf16.mxu0 0
  %101 = vmatpush1.bf16.msra.mxu0 %v77
  %102 = vmatprep.subr.bf16.mxu0 0
  %103 = vmatpush1.bf16.msra.mxu0 0
  %104 = vmatprep.subr.bf16.mxu0 0
  %105 = vmatpush1.bf16.msra.mxu0 0
  %106 = vmatprep.subr.bf16.mxu0 0
  %107 = vmatpush1.bf16.msra.mxu0 0
  %108 = vmatprep.subr.bf16.mxu0 0
  %109 = vmatpush1.bf16.msra.mxu0 0
  %110 = vmatprep.subr.bf16.mxu0 0
  %111 = vmatpush1.bf16.msra.mxu0 0
  %112 = vmatprep.subr.bf16.mxu0 0
  %113 = vmatpush1.bf16.msra.mxu0 0
  %114 = vmatprep.subr.bf16.mxu0 0
  %115 = vmatpush1.bf16.msra.mxu0 0
  %116 = vmatprep.subr.bf16.mxu0 0
  %117 = vmatpush1.bf16.msra.mxu0 0
  %118 = vmatprep.mubr.bf16.mxu0 0
  %119 = vmatmul.mubr.bf16.gmra.mrb[0].mxu0 %v20
  %v120 = vpop.f32.mrb[0].mxu0
  %v121 = vadd.f32 0.0, %v120
  %v122 = vpop.f32.mrb[0].mxu0
  %v123 = vpop.f32.mrb[0].mxu0
  %v124 = vpop.f32.mrb[0].mxu0
  %125 = vdwg.mxu0
  %v126 = vadd.f32 %v21, %v121
  %127 = vst [vmem:[#allocation2] sm:$0xff] %v126
  // Predicated region
  $region18: #{videogpt_forward.14} parent=0 // pred_check
    %p128 = pneg %p15
  $region19: #{videogpt_forward.14} parent=0 // pred_check_branch
    %130 = sbr.rel (%p128) target = $region21
  $region20: #{videogpt_forward.14} parent=0 // pred_region
    %v131 = vld [vmem:[#allocation2] sm:$0xff]
    %v132 = vld [vmem:[%s2] sm:$0x1]
    %v134 = vlaneseq
    %v135 = vshrl.u32 %v134, 7
    %v136 = vsub.s32 0, %v135
    %v137 = vrot.slane %v132, %v136
    %v139 = vadd.f32 %v131, %v137
    %v140 = vpack.c.bf16 %v139, %v139
    %141 = vst [vmem:[%s3] sm:$0xf] %v140
  $region21: #{videogpt_forward.14} parent=0 // pred_fallthru
    _
  // Predicated region
  $region22: #{videogpt_forward.14} parent=0 // pred_check
    _
  $region23: #{videogpt_forward.14} parent=0 // pred_check_branch
    %143 = sbr.rel (0) target = $region25
  $region24: #{videogpt_forward.14} parent=0 // pred_region
    _
  $region25: #{videogpt_forward.14} parent=0 // pred_fallthru
    _
  // Predicated region
  $region26: #{videogpt_forward.14} parent=0 // pred_check
    _
  $region27: #{videogpt_forward.14} parent=0 // pred_check_branch
    %145 = sbr.rel (0) target = $region29
  $region28: #{videogpt_forward.14} parent=0 // pred_region
    _
  $region29: #{videogpt_forward.14} parent=0 // pred_fallthru
    _

// kernel: videogpt_forward.13
$region0: #{videogpt_forward.13}
  #allocation0 [shape = 'u32[]', space=smem, size = 0x4, offset = 0x4, fixed_abs, tag = 'smem constant byte address 0x4 - core index']
  #allocation1 [shape = 'u32[144,128]{1,0:T(1,128)}', space=vmem, size = 0x12000, scoped, tag = 'internal scratch']
  #allocation2 [shape = 'f32[128,128]{1,0:T(8,128)}', space=vmem, size = 0x10000, scoped, tag = 'scratch operand']
  %s0 = inlined_call_operand.vmem [shape: bf16[128,128], index: 0, kind: input, shape index: {}]
  %s1 = inlined_call_operand.vmem [shape: bf16[128,128], index: 1, kind: input, shape index: {}]
  %s2 = inlined_call_operand.vmem [shape: f32[1,128], index: 2, kind: input, shape index: {}]
  %s3 = inlined_call_operand.vmem [shape: bf16[128,128], index: 3, kind: output, shape index: {}]
  %s4 = sld [smem:[#allocation0]]
  $region30: #{videogpt_forward.13} parent=0
    _
  %s6 = ssub.s32 1, %s4
  %s7 = scalar_select 0, %s6, %s4
  // Predicated region
  $region2: #{videogpt_forward.13} parent=0 // pred_check
    _
  $region3: #{videogpt_forward.13} parent=0 // pred_check_branch
    %9 = sbr.rel (0) target = $region5
  $region4: #{videogpt_forward.13} parent=0 // pred_region
    _
  $region5: #{videogpt_forward.13} parent=0 // pred_fallthru
    _
  // Predicated region
  $region6: #{videogpt_forward.13} parent=0 // pred_check
    _
  $region7: #{videogpt_forward.13} parent=0 // pred_check_branch
    %11 = sbr.rel (0) target = $region9
  $region8: #{videogpt_forward.13} parent=0 // pred_region
    _
  $region9: #{videogpt_forward.13} parent=0 // pred_fallthru
    _
  // Predicated region
  $region10: #{videogpt_forward.13} parent=0 // pred_check
    _
  $region11: #{videogpt_forward.13} parent=0 // pred_check_branch
    %13 = sbr.rel (0) target = $region13
  $region12: #{videogpt_forward.13} parent=0 // pred_region
    _
  $region13: #{videogpt_forward.13} parent=0 // pred_fallthru
    _
  %p15 = scmp.eq.s32.totalorder 0, 0
  // Predicated region
  $region14: #{videogpt_forward.13} parent=0 // pred_check
    %p16 = pneg %p15
  $region15: #{videogpt_forward.13} parent=0 // pred_check_branch
    %18 = sbr.rel (%p16) target = $region17
  $region16: #{videogpt_forward.13} parent=0 // pred_region
    %19 = vst [vmem:[#allocation2] sm:$0xff] 0.0
    %20 = vst [vmem:[#allocation2 + $0x8] sm:$0xff] 0.0
    %21 = vst [vmem:[#allocation2 + $0x10] sm:$0xff] 0.0
    %22 = vst [vmem:[#allocation2 + $0x18] sm:$0xff] 0.0
    %23 = vst [vmem:[#allocation2 + $0x20] sm:$0xff] 0.0
    %24 = vst [vmem:[#allocation2 + $0x28] sm:$0xff] 0.0
    %25 = vst [vmem:[#allocation2 + $0x30] sm:$0xff] 0.0
    %26 = vst [vmem:[#allocation2 + $0x38] sm:$0xff] 0.0
    %27 = vst [vmem:[#allocation2 + $0x40] sm:$0xff] 0.0
    %28 = vst [vmem:[#allocation2 + $0x48] sm:$0xff] 0.0
    %29 = vst [vmem:[#allocation2 + $0x50] sm:$0xff] 0.0
    %30 = vst [vmem:[#allocation2 + $0x58] sm:$0xff] 0.0
    %31 = vst [vmem:[#allocation2 + $0x60] sm:$0xff] 0.0
    %32 = vst [vmem:[#allocation2 + $0x68] sm:$0xff] 0.0
    %33 = vst [vmem:[#allocation2 + $0x70] sm:$0xff] 0.0
    %34 = vst [vmem:[#allocation2 + $0x78] sm:$0xff] 0.0
  $region17: #{videogpt_forward.13} parent=0 // pred_fallthru
    _
  %v35 = vld [vmem:[%s0] sm:$0xf]
  %v36 = vld [vmem:[%s0 + $0x4] sm:$0xf]
  %v37 = vld [vmem:[%s0 + $0x8] sm:$0xf]
  %v38 = vld [vmem:[%s0 + $0xc] sm:$0xf]
  %v39 = vld [vmem:[%s0 + $0x10] sm:$0xf]
  %v40 = vld [vmem:[%s0 + $0x14] sm:$0xf]
  %v41 = vld [vmem:[%s0 + $0x18] sm:$0xf]
  %v42 = vld [vmem:[%s0 + $0x1c] sm:$0xf]
  %v43 = vld [vmem:[%s0 + $0x20] sm:$0xf]
  %v44 = vld [vmem:[%s0 + $0x24] sm:$0xf]
  %v45 = vld [vmem:[%s0 + $0x28] sm:$0xf]
  %v46 = vld [vmem:[%s0 + $0x2c] sm:$0xf]
  %v47 = vld [vmem:[%s0 + $0x30] sm:$0xf]
  %v48 = vld [vmem:[%s0 + $0x34] sm:$0xf]
  %v49 = vld [vmem:[%s0 + $0x38] sm:$0xf]
  %v50 = vld [vmem:[%s0 + $0x3c] sm:$0xf]
  %v51 = vld [vmem:[#allocation2] sm:$0xff]
  %v52 = vld [vmem:[#allocation2 + $0x8] sm:$0xff]
  %v53 = vld [vmem:[#allocation2 + $0x10] sm:$0xff]
  %v54 = vld [vmem:[#allocation2 + $0x18] sm:$0xff]
  %v55 = vld [vmem:[#allocation2 + $0x20] sm:$0xff]
  %v56 = vld [vmem:[#allocation2 + $0x28] sm:$0xff]
  %v57 = vld [vmem:[#allocation2 + $0x30] sm:$0xff]
  %v58 = vld [vmem:[#allocation2 + $0x38] sm:$0xff]
  %v59 = vld [vmem:[#allocation2 + $0x40] sm:$0xff]
  %v60 = vld [vmem:[#allocation2 + $0x48] sm:$0xff]
  %v61 = vld [vmem:[#allocation2 + $0x50] sm:$0xff]
  %v62 = vld [vmem:[#allocation2 + $0x58] sm:$0xff]
  %v63 = vld [vmem:[#allocation2 + $0x60] sm:$0xff]
  %v64 = vld [vmem:[#allocation2 + $0x68] sm:$0xff]
  %v65 = vld [vmem:[#allocation2 + $0x70] sm:$0xff]
  %v66 = vld [vmem:[#allocation2 + $0x78] sm:$0xff]
  %v67 = vld [vmem:[%s1] sm:$0xf]
  %v68 = vld [vmem:[%s1 + $0x4] sm:$0xf]
  %v69 = vld [vmem:[%s1 + $0x8] sm:$0xf]
  %v70 = vld [vmem:[%s1 + $0xc] sm:$0xf]
  %v71 = vld [vmem:[%s1 + $0x10] sm:$0xf]
  %v72 = vld [vmem:[%s1 + $0x14] sm:$0xf]
  %v73 = vld [vmem:[%s1 + $0x18] sm:$0xf]
  %v74 = vld [vmem:[%s1 + $0x1c] sm:$0xf]
  %v75 = vld [vmem:[%s1 + $0x20] sm:$0xf]
  %v76 = vld [vmem:[%s1 + $0x24] sm:$0xf]
  %v77 = vld [vmem:[%s1 + $0x28] sm:$0xf]
  %v78 = vld [vmem:[%s1 + $0x2c] sm:$0xf]
  %v79 = vld [vmem:[%s1 + $0x30] sm:$0xf]
  %v80 = vld [vmem:[%s1 + $0x34] sm:$0xf]
  %v81 = vld [vmem:[%s1 + $0x38] sm:$0xf]
  %v82 = vld [vmem:[%s1 + $0x3c] sm:$0xf]
  %v99 = vunpack.c.l.b16 %v35
  %v100 = vunpack.c.l.b16 %v36
  %v101 = vunpack.c.l.b16 %v37
  %v102 = vunpack.c.l.b16 %v38
  %v103 = vunpack.c.l.b16 %v39
  %v104 = vunpack.c.l.b16 %v40
  %v105 = vunpack.c.l.b16 %v41
  %v106 = vunpack.c.l.b16 %v42
  %v107 = vunpack.c.l.b16 %v43
  %v108 = vunpack.c.l.b16 %v44
  %v109 = vunpack.c.l.b16 %v45
  %v110 = vunpack.c.l.b16 %v46
  %v111 = vunpack.c.l.b16 %v47
  %v112 = vunpack.c.l.b16 %v48
  %v113 = vunpack.c.l.b16 %v49
  %v114 = vunpack.c.l.b16 %v50
  %v115 = vpack.c.b16 %v100, %v99
  %v116 = vpack.c.b16 %v102, %v101
  %v117 = vpack.c.b16 %v104, %v103
  %v118 = vpack.c.b16 %v106, %v105
  %v119 = vpack.c.b16 %v108, %v107
  %v120 = vpack.c.b16 %v110, %v109
  %v121 = vpack.c.b16 %v112, %v111
  %v122 = vpack.c.b16 %v114, %v113
  %v147 = vunpack.c.l.b16 %v67
  %v148 = vunpack.c.l.b16 %v68
  %v149 = vunpack.c.l.b16 %v69
  %v150 = vunpack.c.l.b16 %v70
  %v151 = vunpack.c.l.b16 %v71
  %v152 = vunpack.c.l.b16 %v72
  %v153 = vunpack.c.l.b16 %v73
  %v154 = vunpack.c.l.b16 %v74
  %v155 = vunpack.c.l.b16 %v75
  %v156 = vunpack.c.l.b16 %v76
  %v157 = vunpack.c.l.b16 %v77
  %v158 = vunpack.c.l.b16 %v78
  %v159 = vunpack.c.l.b16 %v79
  %v160 = vunpack.c.l.b16 %v80
  %v161 = vunpack.c.l.b16 %v81
  %v162 = vunpack.c.l.b16 %v82
  %v163 = vpack.c.b16 %v148, %v147
  %v164 = vpack.c.b16 %v150, %v149
  %v165 = vpack.c.b16 %v152, %v151
  %v166 = vpack.c.b16 %v154, %v153
  %v167 = vpack.c.b16 %v156, %v155
  %v168 = vpack.c.b16 %v158, %v157
  %v169 = vpack.c.b16 %v160, %v159
  %v170 = vpack.c.b16 %v162, %v161
  %179 = vmatprep.subr.bf16.mxu0 0
  %180 = vmatpush1.bf16.msra.mxu0 %v163
  %181 = vmatprep.subr.bf16.mxu0 0
  %182 = vmatpush1.bf16.msra.mxu0 %v164
  %183 = vmatprep.subr.bf16.mxu0 0
  %184 = vmatpush1.bf16.msra.mxu0 %v165
  %185 = vmatprep.subr.bf16.mxu0 0
  %186 = vmatpush1.bf16.msra.mxu0 %v166
  %187 = vmatprep.subr.bf16.mxu0 0
  %188 = vmatpush1.bf16.msra.mxu0 %v167
  %189 = vmatprep.subr.bf16.mxu0 0
  %190 = vmatpush1.bf16.msra.mxu0 %v168
  %191 = vmatprep.subr.bf16.mxu0 0
  %192 = vmatpush1.bf16.msra.mxu0 %v169
  %193 = vmatprep.subr.bf16.mxu0 0
  %194 = vmatpush1.bf16.msra.mxu0 %v170
  %195 = vmatprep.subr.bf16.mxu0 0
  %196 = vmatpush1.bf16.msra.mxu0 0
  %197 = vmatprep.subr.bf16.mxu0 0
  %198 = vmatpush1.bf16.msra.mxu0 0
  %199 = vmatprep.subr.bf16.mxu0 0
  %200 = vmatpush1.bf16.msra.mxu0 0
  %201 = vmatprep.subr.bf16.mxu0 0
  %202 = vmatpush1.bf16.msra.mxu0 0
  %203 = vmatprep.subr.bf16.mxu0 0
  %204 = vmatpush1.bf16.msra.mxu0 0
  %205 = vmatprep.subr.bf16.mxu0 0
  %206 = vmatpush1.bf16.msra.mxu0 0
  %207 = vmatprep.subr.bf16.mxu0 0
  %208 = vmatpush1.bf16.msra.mxu0 0
  %209 = vmatprep.subr.bf16.mxu0 0
  %210 = vmatpush1.bf16.msra.mxu0 0
  %211 = vmatprep.mubr.bf16.mxu0 0
  %212 = vmatmul.mubr.bf16.gmra.mrb[0].mxu0 %v115
  %v213 = vpop.f32.mrb[0].mxu0
  %v214 = vadd.f32 0.0, %v213
  %v215 = vpop.f32.mrb[0].mxu0
  %v216 = vpop.f32.mrb[0].mxu0
  %v217 = vadd.f32 0.0, %v216
  %v218 = vpop.f32.mrb[0].mxu0
  %219 = vmatprep.mubr.bf16.mxu0 0
  %220 = vmatmul.mubr.bf16.gmra.mrb[0].mxu0 %v116
  %v221 = vpop.f32.mrb[0].mxu0
  %v222 = vadd.f32 0.0, %v221
  %v223 = vpop.f32.mrb[0].mxu0
  %v224 = vpop.f32.mrb[0].mxu0
  %v225 = vadd.f32 0.0, %v224
  %v226 = vpop.f32.mrb[0].mxu0
  %227 = vmatprep.mubr.bf16.mxu0 0
  %228 = vmatmul.mubr.bf16.gmra.mrb[0].mxu0 %v117
  %v229 = vpop.f32.mrb[0].mxu0
  %v230 = vadd.f32 0.0, %v229
  %v231 = vpop.f32.mrb[0].mxu0
  %v232 = vpop.f32.mrb[0].mxu0
  %v233 = vadd.f32 0.0, %v232
  %v234 = vpop.f32.mrb[0].mxu0
  %235 = vmatprep.mubr.bf16.mxu0 0
  %236 = vmatmul.mubr.bf16.gmra.mrb[0].mxu0 %v118
  %v237 = vpop.f32.mrb[0].mxu0
  %v238 = vadd.f32 0.0, %v237
  %v239 = vpop.f32.mrb[0].mxu0
  %v240 = vpop.f32.mrb[0].mxu0
  %v241 = vadd.f32 0.0, %v240
  %v242 = vpop.f32.mrb[0].mxu0
  %243 = vmatprep.mubr.bf16.mxu0 0
  %244 = vmatmul.mubr.bf16.gmra.mrb[0].mxu0 %v119
  %v245 = vpop.f32.mrb[0].mxu0
  %v246 = vadd.f32 0.0, %v245
  %v247 = vpop.f32.mrb[0].mxu0
  %v248 = vpop.f32.mrb[0].mxu0
  %v249 = vadd.f32 0.0, %v248
  %v250 = vpop.f32.mrb[0].mxu0
  %251 = vmatprep.mubr.bf16.mxu0 0
  %252 = vmatmul.mubr.bf16.gmra.mrb[0].mxu0 %v120
  %v253 = vpop.f32.mrb[0].mxu0
  %v254 = vadd.f32 0.0, %v253
  %v255 = vpop.f32.mrb[0].mxu0
  %v256 = vpop.f32.mrb[0].mxu0
  %v257 = vadd.f32 0.0, %v256
  %v258 = vpop.f32.mrb[0].mxu0
  %259 = vmatprep.mubr.bf16.mxu0 0
  %260 = vmatmul.mubr.bf16.gmra.mrb[0].mxu0 %v121
  %v261 = vpop.f32.mrb[0].mxu0
  %v262 = vadd.f32 0.0, %v261
  %v263 = vpop.f32.mrb[0].mxu0
  %v264 = vpop.f32.mrb[0].mxu0
  %v265 = vadd.f32 0.0, %v264
  %v266 = vpop.f32.mrb[0].mxu0
  %267 = vmatprep.mubr.bf16.mxu0 0
  %268 = vmatmul.mubr.bf16.gmra.mrb[0].mxu0 %v122
  %v269 = vpop.f32.mrb[0].mxu0
  %v270 = vadd.f32 0.0, %v269
  %v271 = vpop.f32.mrb[0].mxu0
  %v272 = vpop.f32.mrb[0].mxu0
  %v273 = vadd.f32 0.0, %v272
  %v274 = vpop.f32.mrb[0].mxu0
  %275 = vdwg.mxu0
  %v276 = vadd.f32 %v51, %v214
  %v277 = vadd.f32 %v52, %v217
  %v278 = vadd.f32 %v53, %v222
  %v279 = vadd.f32 %v54, %v225
  %v280 = vadd.f32 %v55, %v230
  %v281 = vadd.f32 %v56, %v233
  %v282 = vadd.f32 %v57, %v238
  %v283 = vadd.f32 %v58, %v241
  %v284 = vadd.f32 %v59, %v246
  %v285 = vadd.f32 %v60, %v249
  %v286 = vadd.f32 %v61, %v254
  %v287 = vadd.f32 %v62, %v257
  %v288 = vadd.f32 %v63, %v262
  %v289 = vadd.f32 %v64, %v265
  %v290 = vadd.f32 %v65, %v270
  %v291 = vadd.f32 %v66, %v273
  %292 = vst [vmem:[#allocation2] sm:$0xff] %v276
  %293 = vst [vmem:[#allocation2 + $0x8] sm:$0xff] %v277
  %294 = vst [vmem:[#allocation2 + $0x10] sm:$0xff] %v278
  %295 = vst [vmem:[#allocation2 + $0x18] sm:$0xff] %v279
  %296 = vst [vmem:[#allocation2 + $0x20] sm:$0xff] %v280
  %297 = vst [vmem:[#allocation2 + $0x28] sm:$0xff] %v281
  %298 = vst [vmem:[#allocation2 + $0x30] sm:$0xff] %v282
  %299 = vst [vmem:[#allocation2 + $0x38] sm:$0xff] %v283
  %300 = vst [vmem:[#allocation2 + $0x40] sm:$0xff] %v284
  %301 = vst [vmem:[#allocation2 + $0x48] sm:$0xff] %v285
  %302 = vst [vmem:[#allocation2 + $0x50] sm:$0xff] %v286
  %303 = vst [vmem:[#allocation2 + $0x58] sm:$0xff] %v287
  %304 = vst [vmem:[#allocation2 + $0x60] sm:$0xff] %v288
  %305 = vst [vmem:[#allocation2 + $0x68] sm:$0xff] %v289
  %306 = vst [vmem:[#allocation2 + $0x70] sm:$0xff] %v290
  %307 = vst [vmem:[#allocation2 + $0x78] sm:$0xff] %v291
  // Predicated region
  $region18: #{videogpt_forward.13} parent=0 // pred_check
    %p308 = pneg %p15
  $region19: #{videogpt_forward.13} parent=0 // pred_check_branch
    %310 = sbr.rel (%p308) target = $region21
  $region20: #{videogpt_forward.13} parent=0 // pred_region
    %v311 = vld [vmem:[#allocation2] sm:$0xff]
    %v312 = vld [vmem:[#allocation2 + $0x8] sm:$0xff]
    %v313 = vld [vmem:[#allocation2 + $0x10] sm:$0xff]
    %v314 = vld [vmem:[#allocation2 + $0x18] sm:$0xff]
    %v315 = vld [vmem:[#allocation2 + $0x20] sm:$0xff]
    %v316 = vld [vmem:[#allocation2 + $0x28] sm:$0xff]
    %v317 = vld [vmem:[#allocation2 + $0x30] sm:$0xff]
    %v318 = vld [vmem:[#allocation2 + $0x38] sm:$0xff]
    %v319 = vld [vmem:[#allocation2 + $0x40] sm:$0xff]
    %v320 = vld [vmem:[#allocation2 + $0x48] sm:$0xff]
    %v321 = vld [vmem:[#allocation2 + $0x50] sm:$0xff]
    %v322 = vld [vmem:[#allocation2 + $0x58] sm:$0xff]
    %v323 = vld [vmem:[#allocation2 + $0x60] sm:$0xff]
    %v324 = vld [vmem:[#allocation2 + $0x68] sm:$0xff]
    %v325 = vld [vmem:[#allocation2 + $0x70] sm:$0xff]
    %v326 = vld [vmem:[#allocation2 + $0x78] sm:$0xff]
    %v327 = vld [vmem:[%s2] sm:$0x1]
    %v329 = vlaneseq
    %v330 = vshrl.u32 %v329, 7
    %v331 = vsub.s32 0, %v330
    %v332 = vrot.slane %v327, %v331
    %v334 = vadd.f32 %v311, %v332
    %v335 = vadd.f32 %v312, %v332
    %v336 = vadd.f32 %v313, %v332
    %v337 = vadd.f32 %v314, %v332
    %v338 = vadd.f32 %v315, %v332
    %v339 = vadd.f32 %v316, %v332
    %v340 = vadd.f32 %v317, %v332
    %v341 = vadd.f32 %v318, %v332
    %v342 = vadd.f32 %v319, %v332
    %v343 = vadd.f32 %v320, %v332
    %v344 = vadd.f32 %v321, %v332
    %v345 = vadd.f32 %v322, %v332
    %v346 = vadd.f32 %v323, %v332
    %v347 = vadd.f32 %v324, %v332
    %v348 = vadd.f32 %v325, %v332
    %v349 = vadd.f32 %v326, %v332
    %v350 = vpack.c.bf16 %v335, %v334
    %v351 = vpack.c.bf16 %v337, %v336
    %v352 = vpack.c.bf16 %v339, %v338
    %v353 = vpack.c.bf16 %v341, %v340
    %v354 = vpack.c.bf16 %v343, %v342
    %v355 = vpack.c.bf16 %v345, %v344
    %v356 = vpack.c.bf16 %v347, %v346
    %v357 = vpack.c.bf16 %v349, %v348
    %v366 = vunpack.c.l.b16 %v350
    %v367 = vunpack.c.h.b16 %v350
    %v368 = vunpack.c.l.b16 %v351
    %v369 = vunpack.c.h.b16 %v351
    %v370 = vunpack.c.l.b16 %v352
    %v371 = vunpack.c.h.b16 %v352
    %v372 = vunpack.c.l.b16 %v353
    %v373 = vunpack.c.h.b16 %v353
    %v374 = vunpack.c.l.b16 %v354
    %v375 = vunpack.c.h.b16 %v354
    %v376 = vunpack.c.l.b16 %v355
    %v377 = vunpack.c.h.b16 %v355
    %v378 = vunpack.c.l.b16 %v356
    %v379 = vunpack.c.h.b16 %v356
    %v380 = vunpack.c.l.b16 %v357
    %v381 = vunpack.c.h.b16 %v357
    %v382 = vpack.c.b16 %v366, %v366
    %v383 = vpack.c.b16 %v367, %v367
    %v384 = vpack.c.b16 %v368, %v368
    %v385 = vpack.c.b16 %v369, %v369
    %v386 = vpack.c.b16 %v370, %v370
    %v387 = vpack.c.b16 %v371, %v371
    %v388 = vpack.c.b16 %v372, %v372
    %v389 = vpack.c.b16 %v373, %v373
    %v390 = vpack.c.b16 %v374, %v374
    %v391 = vpack.c.b16 %v375, %v375
    %v392 = vpack.c.b16 %v376, %v376
    %v393 = vpack.c.b16 %v377, %v377
    %v394 = vpack.c.b16 %v378, %v378
    %v395 = vpack.c.b16 %v379, %v379
    %v396 = vpack.c.b16 %v380, %v380
    %v397 = vpack.c.b16 %v381, %v381
    %414 = vst [vmem:[%s3] sm:$0xf] %v382
    %415 = vst [vmem:[%s3 + $0x4] sm:$0xf] %v383
    %416 = vst [vmem:[%s3 + $0x8] sm:$0xf] %v384
    %417 = vst [vmem:[%s3 + $0xc] sm:$0xf] %v385
    %418 = vst [vmem:[%s3 + $0x10] sm:$0xf] %v386
    %419 = vst [vmem:[%s3 + $0x14] sm:$0xf] %v387
    %420 = vst [vmem:[%s3 + $0x18] sm:$0xf] %v388
    %421 = vst [vmem:[%s3 + $0x1c] sm:$0xf] %v389
    %422 = vst [vmem:[%s3 + $0x20] sm:$0xf] %v390
    %423 = vst [vmem:[%s3 + $0x24] sm:$0xf] %v391
    %424 = vst [vmem:[%s3 + $0x28] sm:$0xf] %v392
    %425 = vst [vmem:[%s3 + $0x2c] sm:$0xf] %v393
    %426 = vst [vmem:[%s3 + $0x30] sm:$0xf] %v394
    %427 = vst [vmem:[%s3 + $0x34] sm:$0xf] %v395
    %428 = vst [vmem:[%s3 + $0x38] sm:$0xf] %v396
    %429 = vst [vmem:[%s3 + $0x3c] sm:$0xf] %v397
  $region21: #{videogpt_forward.13} parent=0 // pred_fallthru
    _
  // Predicated region
  $region22: #{videogpt_forward.13} parent=0 // pred_check
    _
  $region23: #{videogpt_forward.13} parent=0 // pred_check_branch
    %431 = sbr.rel (0) target = $region25
  $region24: #{videogpt_forward.13} parent=0 // pred_region
    _
  $region25: #{videogpt_forward.13} parent=0 // pred_fallthru
    _
  // Predicated region
  $region26: #{videogpt_forward.13} parent=0 // pred_check
    _
  $region27: #{videogpt_forward.13} parent=0 // pred_check_branch
    %433 = sbr.rel (0) target = $region29
  $region28: #{videogpt_forward.13} parent=0 // pred_region
    _
  $region29: #{videogpt_forward.13} parent=0 // pred_fallthru
    _

// kernel: videogpt_forward.15
$region0: #{videogpt_forward.15}
  #allocation0 [shape = 'u32[]', space=smem, size = 0x4, offset = 0x4, fixed_abs, tag = 'smem constant byte address 0x4 - core index']
  #allocation1 [shape = 'u32[144,128]{1,0:T(1,128)}', space=vmem, size = 0x12000, scoped, tag = 'internal scratch']
  #allocation2 [shape = 'f32[128,256]{1,0:T(8,128)}', space=vmem, size = 0x20000, scoped, tag = 'scratch operand']
  %s0 = inlined_call_operand.vmem [shape: bf16[128,64], index: 0, kind: input, shape index: {}]
  %s1 = inlined_call_operand.vmem [shape: bf16[64,256], index: 1, kind: input, shape index: {}]
  %s2 = inlined_call_operand.vmem [shape: f32[1,256], index: 2, kind: input, shape index: {}]
  %s3 = inlined_call_operand.vmem [shape: f32[1,64], index: 3, kind: input, shape index: {}]
  %s4 = inlined_call_operand.vmem [shape: f32[1,64], index: 4, kind: input, shape index: {}]
  %s5 = inlined_call_operand.vmem [shape: bf16[128,256], index: 5, kind: output, shape index: {}]
  %s6 = sld [smem:[#allocation0]]
  $region38: #{videogpt_forward.15} parent=0
    _
  %s8 = ssub.s32 1, %s6
  %s9 = scalar_select 0, %s8, %s6
  // Predicated region
  $region2: #{videogpt_forward.15} parent=0 // pred_check
    _
  $region3: #{videogpt_forward.15} parent=0 // pred_check_branch
    %11 = sbr.rel (0) target = $region5
  $region4: #{videogpt_forward.15} parent=0 // pred_region
    _
  $region5: #{videogpt_forward.15} parent=0 // pred_fallthru
    _
  // Predicated region
  $region6: #{videogpt_forward.15} parent=0 // pred_check
    _
  $region7: #{videogpt_forward.15} parent=0 // pred_check_branch
    %13 = sbr.rel (0) target = $region9
  $region8: #{videogpt_forward.15} parent=0 // pred_region
    _
  $region9: #{videogpt_forward.15} parent=0 // pred_fallthru
    _
  // Predicated region
  $region10: #{videogpt_forward.15} parent=0 // pred_check
    _
  $region11: #{videogpt_forward.15} parent=0 // pred_check_branch
    %15 = sbr.rel (0) target = $region13
  $region12: #{videogpt_forward.15} parent=0 // pred_region
    _
  $region13: #{videogpt_forward.15} parent=0 // pred_fallthru
    _
  // Predicated region
  $region14: #{videogpt_forward.15} parent=0 // pred_check
    _
  $region15: #{videogpt_forward.15} parent=0 // pred_check_branch
    %17 = sbr.rel (0) target = $region17
  $region16: #{videogpt_forward.15} parent=0 // pred_region
    _
  $region17: #{videogpt_forward.15} parent=0 // pred_fallthru
    _
  // Predicated region
  $region18: #{videogpt_forward.15} parent=0 // pred_check
    _
  $region19: #{videogpt_forward.15} parent=0 // pred_check_branch
    %19 = sbr.rel (0) target = $region21
  $region20: #{videogpt_forward.15} parent=0 // pred_region
    _
  $region21: #{videogpt_forward.15} parent=0 // pred_fallthru
    _
  %p21 = scmp.eq.s32.totalorder 0, 0
  // Predicated region
  $region22: #{videogpt_forward.15} parent=0 // pred_check
    %p22 = pneg %p21
  $region23: #{videogpt_forward.15} parent=0 // pred_check_branch
    %24 = sbr.rel (%p22) target = $region25
  $region24: #{videogpt_forward.15} parent=0 // pred_region
    %25 = vst [vmem:[#allocation2] sm:$0xff] 0.0
    %26 = vst [vmem:[#allocation2 + $0x8] sm:$0xff] 0.0
    %27 = vst [vmem:[#allocation2 + $0x10] sm:$0xff] 0.0
    %28 = vst [vmem:[#allocation2 + $0x18] sm:$0xff] 0.0
    %29 = vst [vmem:[#allocation2 + $0x20] sm:$0xff] 0.0
    %30 = vst [vmem:[#allocation2 + $0x28] sm:$0xff] 0.0
    %31 = vst [vmem:[#allocation2 + $0x30] sm:$0xff] 0.0
    %32 = vst [vmem:[#allocation2 + $0x38] sm:$0xff] 0.0
    %33 = vst [vmem:[#allocation2 + $0x40] sm:$0xff] 0.0
    %34 = vst [vmem:[#allocation2 + $0x48] sm:$0xff] 0.0
    %35 = vst [vmem:[#allocation2 + $0x50] sm:$0xff] 0.0
    %36 = vst [vmem:[#allocation2 + $0x58] sm:$0xff] 0.0
    %37 = vst [vmem:[#allocation2 + $0x60] sm:$0xff] 0.0
    %38 = vst [vmem:[#allocation2 + $0x68] sm:$0xff] 0.0
    %39 = vst [vmem:[#allocation2 + $0x70] sm:$0xff] 0.0
    %40 = vst [vmem:[#allocation2 + $0x78] sm:$0xff] 0.0
    %41 = vst [vmem:[#allocation2 + $0x80] sm:$0xff] 0.0
    %42 = vst [vmem:[#allocation2 + $0x88] sm:$0xff] 0.0
    %43 = vst [vmem:[#allocation2 + $0x90] sm:$0xff] 0.0
    %44 = vst [vmem:[#allocation2 + $0x98] sm:$0xff] 0.0
    %45 = vst [vmem:[#allocation2 + $0xa0] sm:$0xff] 0.0
    %46 = vst [vmem:[#allocation2 + $0xa8] sm:$0xff] 0.0
    %47 = vst [vmem:[#allocation2 + $0xb0] sm:$0xff] 0.0
    %48 = vst [vmem:[#allocation2 + $0xb8] sm:$0xff] 0.0
    %49 = vst [vmem:[#allocation2 + $0xc0] sm:$0xff] 0.0
    %50 = vst [vmem:[#allocation2 + $0xc8] sm:$0xff] 0.0
    %51 = vst [vmem:[#allocation2 + $0xd0] sm:$0xff] 0.0
    %52 = vst [vmem:[#allocation2 + $0xd8] sm:$0xff] 0.0
    %53 = vst [vmem:[#allocation2 + $0xe0] sm:$0xff] 0.0
    %54 = vst [vmem:[#allocation2 + $0xe8] sm:$0xff] 0.0
    %55 = vst [vmem:[#allocation2 + $0xf0] sm:$0xff] 0.0
    %56 = vst [vmem:[#allocation2 + $0xf8] sm:$0xff] 0.0
  $region25: #{videogpt_forward.15} parent=0 // pred_fallthru
    _
  %v57 = vld [vmem:[%s0] sm:$0xf]
  %v58 = vld [vmem:[%s0 + $0x4] sm:$0xf]
  %v59 = vld [vmem:[%s0 + $0x8] sm:$0xf]
  %v60 = vld [vmem:[%s0 + $0xc] sm:$0xf]
  %v61 = vld [vmem:[%s0 + $0x10] sm:$0xf]
  %v62 = vld [vmem:[%s0 + $0x14] sm:$0xf]
  %v63 = vld [vmem:[%s0 + $0x18] sm:$0xf]
  %v64 = vld [vmem:[%s0 + $0x1c] sm:$0xf]
  %v65 = vld [vmem:[%s0 + $0x20] sm:$0xf]
  %v66 = vld [vmem:[%s0 + $0x24] sm:$0xf]
  %v67 = vld [vmem:[%s0 + $0x28] sm:$0xf]
  %v68 = vld [vmem:[%s0 + $0x2c] sm:$0xf]
  %v69 = vld [vmem:[%s0 + $0x30] sm:$0xf]
  %v70 = vld [vmem:[%s0 + $0x34] sm:$0xf]
  %v71 = vld [vmem:[%s0 + $0x38] sm:$0xf]
  %v72 = vld [vmem:[%s0 + $0x3c] sm:$0xf]
  %v73 = vunpack.c.l.bf16 %v57
  %v74 = vunpack.c.l.bf16 %v58
  %v75 = vunpack.c.l.bf16 %v59
  %v76 = vunpack.c.l.bf16 %v60
  %v77 = vunpack.c.l.bf16 %v61
  %v78 = vunpack.c.l.bf16 %v62
  %v79 = vunpack.c.l.bf16 %v63
  %v80 = vunpack.c.l.bf16 %v64
  %v81 = vunpack.c.l.bf16 %v65
  %v82 = vunpack.c.l.bf16 %v66
  %v83 = vunpack.c.l.bf16 %v67
  %v84 = vunpack.c.l.bf16 %v68
  %v85 = vunpack.c.l.bf16 %v69
  %v86 = vunpack.c.l.bf16 %v70
  %v87 = vunpack.c.l.bf16 %v71
  %v88 = vunpack.c.l.bf16 %v72
  %vm89 = vcmask 523264
  %v90 = vsel %vm89, %v73, 0.0
  %91 = vadd.xlane.f32.xlu0 %v90
  %v92 = vpop.xlane.xlu0 %91
  %v93 = vsel %vm89, %v74, 0.0
  %94 = vadd.xlane.f32.xlu0 %v93
  %v95 = vpop.xlane.xlu0 %94
  %v96 = vsel %vm89, %v75, 0.0
  %97 = vadd.xlane.f32.xlu0 %v96
  %v98 = vpop.xlane.xlu0 %97
  %v99 = vsel %vm89, %v76, 0.0
  %100 = vadd.xlane.f32.xlu0 %v99
  %v101 = vpop.xlane.xlu0 %100
  %v102 = vsel %vm89, %v77, 0.0
  %103 = vadd.xlane.f32.xlu0 %v102
  %v104 = vpop.xlane.xlu0 %103
  %v105 = vsel %vm89, %v78, 0.0
  %106 = vadd.xlane.f32.xlu0 %v105
  %v107 = vpop.xlane.xlu0 %106
  %v108 = vsel %vm89, %v79, 0.0
  %109 = vadd.xlane.f32.xlu0 %v108
  %v110 = vpop.xlane.xlu0 %109
  %v111 = vsel %vm89, %v80, 0.0
  %112 = vadd.xlane.f32.xlu0 %v111
  %v113 = vpop.xlane.xlu0 %112
  %v114 = vsel %vm89, %v81, 0.0
  %115 = vadd.xlane.f32.xlu0 %v114
  %v116 = vpop.xlane.xlu0 %115
  %v117 = vsel %vm89, %v82, 0.0
  %118 = vadd.xlane.f32.xlu0 %v117
  %v119 = vpop.xlane.xlu0 %118
  %v120 = vsel %vm89, %v83, 0.0
  %121 = vadd.xlane.f32.xlu0 %v120
  %v122 = vpop.xlane.xlu0 %121
  %v123 = vsel %vm89, %v84, 0.0
  %124 = vadd.xlane.f32.xlu0 %v123
  %v125 = vpop.xlane.xlu0 %124
  %v126 = vsel %vm89, %v85, 0.0
  %127 = vadd.xlane.f32.xlu0 %v126
  %v128 = vpop.xlane.xlu0 %127
  %v129 = vsel %vm89, %v86, 0.0
  %130 = vadd.xlane.f32.xlu0 %v129
  %v131 = vpop.xlane.xlu0 %130
  %v132 = vsel %vm89, %v87, 0.0
  %133 = vadd.xlane.f32.xlu0 %v132
  %v134 = vpop.xlane.xlu0 %133
  %v135 = vsel %vm89, %v88, 0.0
  %136 = vadd.xlane.f32.xlu0 %v135
  %v137 = vpop.xlane.xlu0 %136
  %v138 = vrcp.pop 64.0
  %v139 = vmul.f32 %v92, %v138
  %v140 = vmul.f32 %v95, %v138
  %v141 = vmul.f32 %v98, %v138
  %v142 = vmul.f32 %v101, %v138
  %v143 = vmul.f32 %v104, %v138
  %v144 = vmul.f32 %v107, %v138
  %v145 = vmul.f32 %v110, %v138
  %v146 = vmul.f32 %v113, %v138
  %v147 = vmul.f32 %v116, %v138
  %v148 = vmul.f32 %v119, %v138
  %v149 = vmul.f32 %v122, %v138
  %v150 = vmul.f32 %v125, %v138
  %v151 = vmul.f32 %v128, %v138
  %v152 = vmul.f32 %v131, %v138
  %v153 = vmul.f32 %v134, %v138
  %v154 = vmul.f32 %v137, %v138
  %v155 = vsub.f32 %v73, %v139
  %v156 = vsub.f32 %v74, %v140
  %v157 = vsub.f32 %v75, %v141
  %v158 = vsub.f32 %v76, %v142
  %v159 = vsub.f32 %v77, %v143
  %v160 = vsub.f32 %v78, %v144
  %v161 = vsub.f32 %v79, %v145
  %v162 = vsub.f32 %v80, %v146
  %v163 = vsub.f32 %v81, %v147
  %v164 = vsub.f32 %v82, %v148
  %v165 = vsub.f32 %v83, %v149
  %v166 = vsub.f32 %v84, %v150
  %v167 = vsub.f32 %v85, %v151
  %v168 = vsub.f32 %v86, %v152
  %v169 = vsub.f32 %v87, %v153
  %v170 = vsub.f32 %v88, %v154
  %v171 = vmul.f32 %v155, %v155
  %v172 = vmul.f32 %v156, %v156
  %v173 = vmul.f32 %v157, %v157
  %v174 = vmul.f32 %v158, %v158
  %v175 = vmul.f32 %v159, %v159
  %v176 = vmul.f32 %v160, %v160
  %v177 = vmul.f32 %v161, %v161
  %v178 = vmul.f32 %v162, %v162
  %v179 = vmul.f32 %v163, %v163
  %v180 = vmul.f32 %v164, %v164
  %v181 = vmul.f32 %v165, %v165
  %v182 = vmul.f32 %v166, %v166
  %v183 = vmul.f32 %v167, %v167
  %v184 = vmul.f32 %v168, %v168
  %v185 = vmul.f32 %v169, %v169
  %v186 = vmul.f32 %v170, %v170
  %v187 = vsel %vm89, %v171, 0.0
  %188 = vadd.xlane.f32.xlu0 %v187
  %v189 = vpop.xlane.xlu0 %188
  %v190 = vsel %vm89, %v172, 0.0
  %191 = vadd.xlane.f32.xlu0 %v190
  %v192 = vpop.xlane.xlu0 %191
  %v193 = vsel %vm89, %v173, 0.0
  %194 = vadd.xlane.f32.xlu0 %v193
  %v195 = vpop.xlane.xlu0 %194
  %v196 = vsel %vm89, %v174, 0.0
  %197 = vadd.xlane.f32.xlu0 %v196
  %v198 = vpop.xlane.xlu0 %197
  %v199 = vsel %vm89, %v175, 0.0
  %200 = vadd.xlane.f32.xlu0 %v199
  %v201 = vpop.xlane.xlu0 %200
  %v202 = vsel %vm89, %v176, 0.0
  %203 = vadd.xlane.f32.xlu0 %v202
  %v204 = vpop.xlane.xlu0 %203
  %v205 = vsel %vm89, %v177, 0.0
  %206 = vadd.xlane.f32.xlu0 %v205
  %v207 = vpop.xlane.xlu0 %206
  %v208 = vsel %vm89, %v178, 0.0
  %209 = vadd.xlane.f32.xlu0 %v208
  %v210 = vpop.xlane.xlu0 %209
  %v211 = vsel %vm89, %v179, 0.0
  %212 = vadd.xlane.f32.xlu0 %v211
  %v213 = vpop.xlane.xlu0 %212
  %v214 = vsel %vm89, %v180, 0.0
  %215 = vadd.xlane.f32.xlu0 %v214
  %v216 = vpop.xlane.xlu0 %215
  %v217 = vsel %vm89, %v181, 0.0
  %218 = vadd.xlane.f32.xlu0 %v217
  %v219 = vpop.xlane.xlu0 %218
  %v220 = vsel %vm89, %v182, 0.0
  %221 = vadd.xlane.f32.xlu0 %v220
  %v222 = vpop.xlane.xlu0 %221
  %v223 = vsel %vm89, %v183, 0.0
  %224 = vadd.xlane.f32.xlu0 %v223
  %v225 = vpop.xlane.xlu0 %224
  %v226 = vsel %vm89, %v184, 0.0
  %227 = vadd.xlane.f32.xlu0 %v226
  %v228 = vpop.xlane.xlu0 %227
  %v229 = vsel %vm89, %v185, 0.0
  %230 = vadd.xlane.f32.xlu0 %v229
  %v231 = vpop.xlane.xlu0 %230
  %v232 = vsel %vm89, %v186, 0.0
  %233 = vadd.xlane.f32.xlu0 %v232
  %v234 = vpop.xlane.xlu0 %233
  %v235 = vmul.f32 %v189, %v138
  %v236 = vmul.f32 %v192, %v138
  %v237 = vmul.f32 %v195, %v138
  %v238 = vmul.f32 %v198, %v138
  %v239 = vmul.f32 %v201, %v138
  %v240 = vmul.f32 %v204, %v138
  %v241 = vmul.f32 %v207, %v138
  %v242 = vmul.f32 %v210, %v138
  %v243 = vmul.f32 %v213, %v138
  %v244 = vmul.f32 %v216, %v138
  %v245 = vmul.f32 %v219, %v138
  %v246 = vmul.f32 %v222, %v138
  %v247 = vmul.f32 %v225, %v138
  %v248 = vmul.f32 %v228, %v138
  %v249 = vmul.f32 %v231, %v138
  %v250 = vmul.f32 %v234, %v138
  %v251 = vadd.f32 %v235, 1e-05
  %v252 = vadd.f32 %v236, 1e-05
  %v253 = vadd.f32 %v237, 1e-05
  %v254 = vadd.f32 %v238, 1e-05
  %v255 = vadd.f32 %v239, 1e-05
  %v256 = vadd.f32 %v240, 1e-05
  %v257 = vadd.f32 %v241, 1e-05
  %v258 = vadd.f32 %v242, 1e-05
  %v259 = vadd.f32 %v243, 1e-05
  %v260 = vadd.f32 %v244, 1e-05
  %v261 = vadd.f32 %v245, 1e-05
  %v262 = vadd.f32 %v246, 1e-05
  %v263 = vadd.f32 %v247, 1e-05
  %v264 = vadd.f32 %v248, 1e-05
  %v265 = vadd.f32 %v249, 1e-05
  %v266 = vadd.f32 %v250, 1e-05
  %v267 = vrsqrt.pop %v251
  %v268 = vrsqrt.pop %v252
  %v269 = vrsqrt.pop %v253
  %v270 = vrsqrt.pop %v254
  %v271 = vrsqrt.pop %v255
  %v272 = vrsqrt.pop %v256
  %v273 = vrsqrt.pop %v257
  %v274 = vrsqrt.pop %v258
  %v275 = vrsqrt.pop %v259
  %v276 = vrsqrt.pop %v260
  %v277 = vrsqrt.pop %v261
  %v278 = vrsqrt.pop %v262
  %v279 = vrsqrt.pop %v263
  %v280 = vrsqrt.pop %v264
  %v281 = vrsqrt.pop %v265
  %v282 = vrsqrt.pop %v266
  %v283 = vmul.f32 %v155, %v267
  %v284 = vmul.f32 %v156, %v268
  %v285 = vmul.f32 %v157, %v269
  %v286 = vmul.f32 %v158, %v270
  %v287 = vmul.f32 %v159, %v271
  %v288 = vmul.f32 %v160, %v272
  %v289 = vmul.f32 %v161, %v273
  %v290 = vmul.f32 %v162, %v274
  %v291 = vmul.f32 %v163, %v275
  %v292 = vmul.f32 %v164, %v276
  %v293 = vmul.f32 %v165, %v277
  %v294 = vmul.f32 %v166, %v278
  %v295 = vmul.f32 %v167, %v279
  %v296 = vmul.f32 %v168, %v280
  %v297 = vmul.f32 %v169, %v281
  %v298 = vmul.f32 %v170, %v282
  %v299 = vld [vmem:[%s3] sm:$0x1]
  %v301 = vlaneseq
  %v302 = vshrl.u32 %v301, 7
  %v303 = vsub.s32 0, %v302
  %v304 = vrot.slane %v299, %v303
  %v306 = vmul.f32 %v283, %v304
  %v307 = vmul.f32 %v284, %v304
  %v308 = vmul.f32 %v285, %v304
  %v309 = vmul.f32 %v286, %v304
  %v310 = vmul.f32 %v287, %v304
  %v311 = vmul.f32 %v288, %v304
  %v312 = vmul.f32 %v289, %v304
  %v313 = vmul.f32 %v290, %v304
  %v314 = vmul.f32 %v291, %v304
  %v315 = vmul.f32 %v292, %v304
  %v316 = vmul.f32 %v293, %v304
  %v317 = vmul.f32 %v294, %v304
  %v318 = vmul.f32 %v295, %v304
  %v319 = vmul.f32 %v296, %v304
  %v320 = vmul.f32 %v297, %v304
  %v321 = vmul.f32 %v298, %v304
  %v322 = vld [vmem:[%s4] sm:$0x1]
  %v324 = vlaneseq
  %v325 = vshrl.u32 %v324, 7
  %v326 = vsub.s32 0, %v325
  %v327 = vrot.slane %v322, %v326
  %v329 = vadd.f32 %v306, %v327
  %v330 = vadd.f32 %v307, %v327
  %v331 = vadd.f32 %v308, %v327
  %v332 = vadd.f32 %v309, %v327
  %v333 = vadd.f32 %v310, %v327
  %v334 = vadd.f32 %v311, %v327
  %v335 = vadd.f32 %v312, %v327
  %v336 = vadd.f32 %v313, %v327
  %v337 = vadd.f32 %v314, %v327
  %v338 = vadd.f32 %v315, %v327
  %v339 = vadd.f32 %v316, %v327
  %v340 = vadd.f32 %v317, %v327
  %v341 = vadd.f32 %v318, %v327
  %v342 = vadd.f32 %v319, %v327
  %v343 = vadd.f32 %v320, %v327
  %v344 = vadd.f32 %v321, %v327
  %v345 = vpack.c.bf16 %v330, %v329
  %v346 = vpack.c.bf16 %v332, %v331
  %v347 = vpack.c.bf16 %v334, %v333
  %v348 = vpack.c.bf16 %v336, %v335
  %v349 = vpack.c.bf16 %v338, %v337
  %v350 = vpack.c.bf16 %v340, %v339
  %v351 = vpack.c.bf16 %v342, %v341
  %v352 = vpack.c.bf16 %v344, %v343
  %v353 = vld [vmem:[#allocation2] sm:$0xff]
  %v354 = vld [vmem:[#allocation2 + $0x8] sm:$0xff]
  %v355 = vld [vmem:[#allocation2 + $0x10] sm:$0xff]
  %v356 = vld [vmem:[#allocation2 + $0x18] sm:$0xff]
  %v357 = vld [vmem:[#allocation2 + $0x20] sm:$0xff]
  %v358 = vld [vmem:[#allocation2 + $0x28] sm:$0xff]
  %v359 = vld [vmem:[#allocation2 + $0x30] sm:$0xff]
  %v360 = vld [vmem:[#allocation2 + $0x38] sm:$0xff]
  %v361 = vld [vmem:[#allocation2 + $0x40] sm:$0xff]
  %v362 = vld [vmem:[#allocation2 + $0x48] sm:$0xff]
  %v363 = vld [vmem:[#allocation2 + $0x50] sm:$0xff]
  %v364 = vld [vmem:[#allocation2 + $0x58] sm:$0xff]
  %v365 = vld [vmem:[#allocation2 + $0x60] sm:$0xff]
  %v366 = vld [vmem:[#allocation2 + $0x68] sm:$0xff]
  %v367 = vld [vmem:[#allocation2 + $0x70] sm:$0xff]
  %v368 = vld [vmem:[#allocation2 + $0x78] sm:$0xff]
  %v369 = vld [vmem:[#allocation2 + $0x80] sm:$0xff]
  %v370 = vld [vmem:[#allocation2 + $0x88] sm:$0xff]
  %v371 = vld [vmem:[#allocation2 + $0x90] sm:$0xff]
  %v372 = vld [vmem:[#allocation2 + $0x98] sm:$0xff]
  %v373 = vld [vmem:[#allocation2 + $0xa0] sm:$0xff]
  %v374 = vld [vmem:[#allocation2 + $0xa8] sm:$0xff]
  %v375 = vld [vmem:[#allocation2 + $0xb0] sm:$0xff]
  %v376 = vld [vmem:[#allocation2 + $0xb8] sm:$0xff]
  %v377 = vld [vmem:[#allocation2 + $0xc0] sm:$0xff]
  %v378 = vld [vmem:[#allocation2 + $0xc8] sm:$0xff]
  %v379 = vld [vmem:[#allocation2 + $0xd0] sm:$0xff]
  %v380 = vld [vmem:[#allocation2 + $0xd8] sm:$0xff]
  %v381 = vld [vmem:[#allocation2 + $0xe0] sm:$0xff]
  %v382 = vld [vmem:[#allocation2 + $0xe8] sm:$0xff]
  %v383 = vld [vmem:[#allocation2 + $0xf0] sm:$0xff]
  %v384 = vld [vmem:[#allocation2 + $0xf8] sm:$0xff]
  %v385 = vld [vmem:[%s1] sm:$0xff]
  %v386 = vld [vmem:[%s1 + $0x8] sm:$0xff]
  %v387 = vld [vmem:[%s1 + $0x10] sm:$0xff]
  %v388 = vld [vmem:[%s1 + $0x18] sm:$0xff]
  %v389 = vld [vmem:[%s1 + $0x20] sm:$0xff]
  %v390 = vld [vmem:[%s1 + $0x28] sm:$0xff]
  %v391 = vld [vmem:[%s1 + $0x30] sm:$0xff]
  %v392 = vld [vmem:[%s1 + $0x38] sm:$0xff]
  %v401 = vunpack.c.l.b16 %v385
  %v402 = vunpack.c.h.b16 %v385
  %v403 = vunpack.c.l.b16 %v386
  %v404 = vunpack.c.h.b16 %v386
  %v405 = vunpack.c.l.b16 %v387
  %v406 = vunpack.c.h.b16 %v387
  %v407 = vunpack.c.l.b16 %v388
  %v408 = vunpack.c.h.b16 %v388
  %v409 = vunpack.c.l.b16 %v389
  %v410 = vunpack.c.h.b16 %v389
  %v411 = vunpack.c.l.b16 %v390
  %v412 = vunpack.c.h.b16 %v390
  %v413 = vunpack.c.l.b16 %v391
  %v414 = vunpack.c.h.b16 %v391
  %v415 = vunpack.c.l.b16 %v392
  %v416 = vunpack.c.h.b16 %v392
  %v417 = vpack.c.b16 %v403, %v401
  %v418 = vpack.c.b16 %v404, %v402
  %v419 = vpack.c.b16 %v407, %v405
  %v420 = vpack.c.b16 %v408, %v406
  %v421 = vpack.c.b16 %v411, %v409
  %v422 = vpack.c.b16 %v412, %v410
  %v423 = vpack.c.b16 %v415, %v413
  %v424 = vpack.c.b16 %v416, %v414
  %v434 = vsel %vm89, %v345, 0
  %v437 = vsel %vm89, %v346, 0
  %v440 = vsel %vm89, %v347, 0
  %v443 = vsel %vm89, %v348, 0
  %v446 = vsel %vm89, %v349, 0
  %v449 = vsel %vm89, %v350, 0
  %v452 = vsel %vm89, %v351, 0
  %v455 = vsel %vm89, %v352, 0
  %457 = vmatprep.subr.bf16.mxu0 %v418
  %458 = vmatpush1.bf16.msra.mxu0 %v417
  %459 = vmatprep.subr.bf16.mxu0 %v420
  %460 = vmatpush1.bf16.msra.mxu0 %v419
  %461 = vmatprep.subr.bf16.mxu0 %v422
  %462 = vmatpush1.bf16.msra.mxu0 %v421
  %463 = vmatprep.subr.bf16.mxu0 %v424
  %464 = vmatpush1.bf16.msra.mxu0 %v423
  %465 = vmatprep.subr.bf16.mxu0 0
  %466 = vmatpush1.bf16.msra.mxu0 0
  %467 = vmatprep.subr.bf16.mxu0 0
  %468 = vmatpush1.bf16.msra.mxu0 0
  %469 = vmatprep.subr.bf16.mxu0 0
  %470 = vmatpush1.bf16.msra.mxu0 0
  %471 = vmatprep.subr.bf16.mxu0 0
  %472 = vmatpush1.bf16.msra.mxu0 0
  %473 = vmatprep.subr.bf16.mxu0 0
  %474 = vmatpush1.bf16.msra.mxu0 0
  %475 = vmatprep.subr.bf16.mxu0 0
  %476 = vmatpush1.bf16.msra.mxu0 0
  %477 = vmatprep.subr.bf16.mxu0 0
  %478 = vmatpush1.bf16.msra.mxu0 0
  %479 = vmatprep.subr.bf16.mxu0 0
  %480 = vmatpush1.bf16.msra.mxu0 0
  %481 = vmatprep.subr.bf16.mxu0 0
  %482 = vmatpush1.bf16.msra.mxu0 0
  %483 = vmatprep.subr.bf16.mxu0 0
  %484 = vmatpush1.bf16.msra.mxu0 0
  %485 = vmatprep.subr.bf16.mxu0 0
  %486 = vmatpush1.bf16.msra.mxu0 0
  %487 = vmatprep.subr.bf16.mxu0 0
  %488 = vmatpush1.bf16.msra.mxu0 0
  %489 = vmatprep.mubr.bf16.mxu0 0
  %490 = vmatmul.mubr.bf16.gmra.mrb[0].mxu0 %v434
  %v491 = vpop.f32.mrb[0].mxu0
  %v492 = vadd.f32 0.0, %v491
  %v493 = vpop.f32.mrb[0].mxu0
  %v494 = vadd.f32 0.0, %v493
  %v495 = vpop.f32.mrb[0].mxu0
  %v496 = vadd.f32 0.0, %v495
  %v497 = vpop.f32.mrb[0].mxu0
  %v498 = vadd.f32 0.0, %v497
  %499 = vmatprep.mubr.bf16.mxu0 0
  %500 = vmatmul.mubr.bf16.gmra.mrb[0].mxu0 %v437
  %v501 = vpop.f32.mrb[0].mxu0
  %v502 = vadd.f32 0.0, %v501
  %v503 = vpop.f32.mrb[0].mxu0
  %v504 = vadd.f32 0.0, %v503
  %v505 = vpop.f32.mrb[0].mxu0
  %v506 = vadd.f32 0.0, %v505
  %v507 = vpop.f32.mrb[0].mxu0
  %v508 = vadd.f32 0.0, %v507
  %509 = vmatprep.mubr.bf16.mxu0 0
  %510 = vmatmul.mubr.bf16.gmra.mrb[0].mxu0 %v440
  %v511 = vpop.f32.mrb[0].mxu0
  %v512 = vadd.f32 0.0, %v511
  %v513 = vpop.f32.mrb[0].mxu0
  %v514 = vadd.f32 0.0, %v513
  %v515 = vpop.f32.mrb[0].mxu0
  %v516 = vadd.f32 0.0, %v515
  %v517 = vpop.f32.mrb[0].mxu0
  %v518 = vadd.f32 0.0, %v517
  %519 = vmatprep.mubr.bf16.mxu0 0
  %520 = vmatmul.mubr.bf16.gmra.mrb[0].mxu0 %v443
  %v521 = vpop.f32.mrb[0].mxu0
  %v522 = vadd.f32 0.0, %v521
  %v523 = vpop.f32.mrb[0].mxu0
  %v524 = vadd.f32 0.0, %v523
  %v525 = vpop.f32.mrb[0].mxu0
  %v526 = vadd.f32 0.0, %v525
  %v527 = vpop.f32.mrb[0].mxu0
  %v528 = vadd.f32 0.0, %v527
  %529 = vmatprep.mubr.bf16.mxu0 0
  %530 = vmatmul.mubr.bf16.gmra.mrb[0].mxu0 %v446
  %v531 = vpop.f32.mrb[0].mxu0
  %v532 = vadd.f32 0.0, %v531
  %v533 = vpop.f32.mrb[0].mxu0
  %v534 = vadd.f32 0.0, %v533
  %v535 = vpop.f32.mrb[0].mxu0
  %v536 = vadd.f32 0.0, %v535
  %v537 = vpop.f32.mrb[0].mxu0
  %v538 = vadd.f32 0.0, %v537
  %539 = vmatprep.mubr.bf16.mxu0 0
  %540 = vmatmul.mubr.bf16.gmra.mrb[0].mxu0 %v449
  %v541 = vpop.f32.mrb[0].mxu0
  %v542 = vadd.f32 0.0, %v541
  %v543 = vpop.f32.mrb[0].mxu0
  %v544 = vadd.f32 0.0, %v543
  %v545 = vpop.f32.mrb[0].mxu0
  %v546 = vadd.f32 0.0, %v545
  %v547 = vpop.f32.mrb[0].mxu0
  %v548 = vadd.f32 0.0, %v547
  %549 = vmatprep.mubr.bf16.mxu0 0
  %550 = vmatmul.mubr.bf16.gmra.mrb[0].mxu0 %v452
  %v551 = vpop.f32.mrb[0].mxu0
  %v552 = vadd.f32 0.0, %v551
  %v553 = vpop.f32.mrb[0].mxu0
  %v554 = vadd.f32 0.0, %v553
  %v555 = vpop.f32.mrb[0].mxu0
  %v556 = vadd.f32 0.0, %v555
  %v557 = vpop.f32.mrb[0].mxu0
  %v558 = vadd.f32 0.0, %v557
  %559 = vmatprep.mubr.bf16.mxu0 0
  %560 = vmatmul.mubr.bf16.gmra.mrb[0].mxu0 %v455
  %v561 = vpop.f32.mrb[0].mxu0
  %v562 = vadd.f32 0.0, %v561
  %v563 = vpop.f32.mrb[0].mxu0
  %v564 = vadd.f32 0.0, %v563
  %v565 = vpop.f32.mrb[0].mxu0
  %v566 = vadd.f32 0.0, %v565
  %v567 = vpop.f32.mrb[0].mxu0
  %v568 = vadd.f32 0.0, %v567
  %569 = vdwg.mxu0
  %v570 = vadd.f32 %v353, %v492
  %v571 = vadd.f32 %v354, %v494
  %v572 = vadd.f32 %v355, %v496
  %v573 = vadd.f32 %v356, %v498
  %v574 = vadd.f32 %v357, %v502
  %v575 = vadd.f32 %v358, %v504
  %v576 = vadd.f32 %v359, %v506
  %v577 = vadd.f32 %v360, %v508
  %v578 = vadd.f32 %v361, %v512
  %v579 = vadd.f32 %v362, %v514
  %v580 = vadd.f32 %v363, %v516
  %v581 = vadd.f32 %v364, %v518
  %v582 = vadd.f32 %v365, %v522
  %v583 = vadd.f32 %v366, %v524
  %v584 = vadd.f32 %v367, %v526
  %v585 = vadd.f32 %v368, %v528
  %v586 = vadd.f32 %v369, %v532
  %v587 = vadd.f32 %v370, %v534
  %v588 = vadd.f32 %v371, %v536
  %v589 = vadd.f32 %v372, %v538
  %v590 = vadd.f32 %v373, %v542
  %v591 = vadd.f32 %v374, %v544
  %v592 = vadd.f32 %v375, %v546
  %v593 = vadd.f32 %v376, %v548
  %v594 = vadd.f32 %v377, %v552
  %v595 = vadd.f32 %v378, %v554
  %v596 = vadd.f32 %v379, %v556
  %v597 = vadd.f32 %v380, %v558
  %v598 = vadd.f32 %v381, %v562
  %v599 = vadd.f32 %v382, %v564
  %v600 = vadd.f32 %v383, %v566
  %v601 = vadd.f32 %v384, %v568
  %602 = vst [vmem:[#allocation2] sm:$0xff] %v570
  %603 = vst [vmem:[#allocation2 + $0x8] sm:$0xff] %v571
  %604 = vst [vmem:[#allocation2 + $0x10] sm:$0xff] %v572
  %605 = vst [vmem:[#allocation2 + $0x18] sm:$0xff] %v573
  %606 = vst [vmem:[#allocation2 + $0x20] sm:$0xff] %v574
  %607 = vst [vmem:[#allocation2 + $0x28] sm:$0xff] %v575
  %608 = vst [vmem:[#allocation2 + $0x30] sm:$0xff] %v576
  %609 = vst [vmem:[#allocation2 + $0x38] sm:$0xff] %v577
  %610 = vst [vmem:[#allocation2 + $0x40] sm:$0xff] %v578
  %611 = vst [vmem:[#allocation2 + $0x48] sm:$0xff] %v579
  %612 = vst [vmem:[#allocation2 + $0x50] sm:$0xff] %v580
  %613 = vst [vmem:[#allocation2 + $0x58] sm:$0xff] %v581
  %614 = vst [vmem:[#allocation2 + $0x60] sm:$0xff] %v582
  %615 = vst [vmem:[#allocation2 + $0x68] sm:$0xff] %v583
  %616 = vst [vmem:[#allocation2 + $0x70] sm:$0xff] %v584
  %617 = vst [vmem:[#allocation2 + $0x78] sm:$0xff] %v585
  %618 = vst [vmem:[#allocation2 + $0x80] sm:$0xff] %v586
  %619 = vst [vmem:[#allocation2 + $0x88] sm:$0xff] %v587
  %620 = vst [vmem:[#allocation2 + $0x90] sm:$0xff] %v588
  %621 = vst [vmem:[#allocation2 + $0x98] sm:$0xff] %v589
  %622 = vst [vmem:[#allocation2 + $0xa0] sm:$0xff] %v590
  %623 = vst [vmem:[#allocation2 + $0xa8] sm:$0xff] %v591
  %624 = vst [vmem:[#allocation2 + $0xb0] sm:$0xff] %v592
  %625 = vst [vmem:[#allocation2 + $0xb8] sm:$0xff] %v593
  %626 = vst [vmem:[#allocation2 + $0xc0] sm:$0xff] %v594
  %627 = vst [vmem:[#allocation2 + $0xc8] sm:$0xff] %v595
  %628 = vst [vmem:[#allocation2 + $0xd0] sm:$0xff] %v596
  %629 = vst [vmem:[#allocation2 + $0xd8] sm:$0xff] %v597
  %630 = vst [vmem:[#allocation2 + $0xe0] sm:$0xff] %v598
  %631 = vst [vmem:[#allocation2 + $0xe8] sm:$0xff] %v599
  %632 = vst [vmem:[#allocation2 + $0xf0] sm:$0xff] %v600
  %633 = vst [vmem:[#allocation2 + $0xf8] sm:$0xff] %v601
  // Predicated region
  $region26: #{videogpt_forward.15} parent=0 // pred_check
    %p634 = pneg %p21
  $region27: #{videogpt_forward.15} parent=0 // pred_check_branch
    %636 = sbr.rel (%p634) target = $region29
  $region28: #{videogpt_forward.15} parent=0 // pred_region
    %v637 = vld [vmem:[#allocation2] sm:$0xff]
    %v638 = vld [vmem:[#allocation2 + $0x8] sm:$0xff]
    %v639 = vld [vmem:[#allocation2 + $0x10] sm:$0xff]
    %v640 = vld [vmem:[#allocation2 + $0x18] sm:$0xff]
    %v641 = vld [vmem:[#allocation2 + $0x20] sm:$0xff]
    %v642 = vld [vmem:[#allocation2 + $0x28] sm:$0xff]
    %v643 = vld [vmem:[#allocation2 + $0x30] sm:$0xff]
    %v644 = vld [vmem:[#allocation2 + $0x38] sm:$0xff]
    %v645 = vld [vmem:[#allocation2 + $0x40] sm:$0xff]
    %v646 = vld [vmem:[#allocation2 + $0x48] sm:$0xff]
    %v647 = vld [vmem:[#allocation2 + $0x50] sm:$0xff]
    %v648 = vld [vmem:[#allocation2 + $0x58] sm:$0xff]
    %v649 = vld [vmem:[#allocation2 + $0x60] sm:$0xff]
    %v650 = vld [vmem:[#allocation2 + $0x68] sm:$0xff]
    %v651 = vld [vmem:[#allocation2 + $0x70] sm:$0xff]
    %v652 = vld [vmem:[#allocation2 + $0x78] sm:$0xff]
    %v653 = vld [vmem:[#allocation2 + $0x80] sm:$0xff]
    %v654 = vld [vmem:[#allocation2 + $0x88] sm:$0xff]
    %v655 = vld [vmem:[#allocation2 + $0x90] sm:$0xff]
    %v656 = vld [vmem:[#allocation2 + $0x98] sm:$0xff]
    %v657 = vld [vmem:[#allocation2 + $0xa0] sm:$0xff]
    %v658 = vld [vmem:[#allocation2 + $0xa8] sm:$0xff]
    %v659 = vld [vmem:[#allocation2 + $0xb0] sm:$0xff]
    %v660 = vld [vmem:[#allocation2 + $0xb8] sm:$0xff]
    %v661 = vld [vmem:[#allocation2 + $0xc0] sm:$0xff]
    %v662 = vld [vmem:[#allocation2 + $0xc8] sm:$0xff]
    %v663 = vld [vmem:[#allocation2 + $0xd0] sm:$0xff]
    %v664 = vld [vmem:[#allocation2 + $0xd8] sm:$0xff]
    %v665 = vld [vmem:[#allocation2 + $0xe0] sm:$0xff]
    %v666 = vld [vmem:[#allocation2 + $0xe8] sm:$0xff]
    %v667 = vld [vmem:[#allocation2 + $0xf0] sm:$0xff]
    %v668 = vld [vmem:[#allocation2 + $0xf8] sm:$0xff]
    %v669 = vld [vmem:[%s2] sm:$0x3]
    %v671 = vlaneseq
    %v672 = vshrl.u32 %v671, 7
    %v673 = vsub.s32 0, %v672
    %v674 = vrot.slane %v669, %v673
    %v675 = vlaneseq
    %v676 = vshrl.u32 %v675, 7
    %v677 = vsub.s32 1, %v676
    %v678 = vrot.slane %v669, %v677
    %v681 = vadd.f32 %v637, %v674
    %v682 = vadd.f32 %v638, %v678
    %v683 = vadd.f32 %v639, %v674
    %v684 = vadd.f32 %v640, %v678
    %v685 = vadd.f32 %v641, %v674
    %v686 = vadd.f32 %v642, %v678
    %v687 = vadd.f32 %v643, %v674
    %v688 = vadd.f32 %v644, %v678
    %v689 = vadd.f32 %v645, %v674
    %v690 = vadd.f32 %v646, %v678
    %v691 = vadd.f32 %v647, %v674
    %v692 = vadd.f32 %v648, %v678
    %v693 = vadd.f32 %v649, %v674
    %v694 = vadd.f32 %v650, %v678
    %v695 = vadd.f32 %v651, %v674
    %v696 = vadd.f32 %v652, %v678
    %v697 = vadd.f32 %v653, %v674
    %v698 = vadd.f32 %v654, %v678
    %v699 = vadd.f32 %v655, %v674
    %v700 = vadd.f32 %v656, %v678
    %v701 = vadd.f32 %v657, %v674
    %v702 = vadd.f32 %v658, %v678
    %v703 = vadd.f32 %v659, %v674
    %v704 = vadd.f32 %v660, %v678
    %v705 = vadd.f32 %v661, %v674
    %v706 = vadd.f32 %v662, %v678
    %v707 = vadd.f32 %v663, %v674
    %v708 = vadd.f32 %v664, %v678
    %v709 = vadd.f32 %v665, %v674
    %v710 = vadd.f32 %v666, %v678
    %v711 = vadd.f32 %v667, %v674
    %v712 = vadd.f32 %v668, %v678
    %v713 = vpack.c.bf16 %v683, %v681
    %v714 = vpack.c.bf16 %v684, %v682
    %v715 = vpack.c.bf16 %v687, %v685
    %v716 = vpack.c.bf16 %v688, %v686
    %v717 = vpack.c.bf16 %v691, %v689
    %v718 = vpack.c.bf16 %v692, %v690
    %v719 = vpack.c.bf16 %v695, %v693
    %v720 = vpack.c.bf16 %v696, %v694
    %v721 = vpack.c.bf16 %v699, %v697
    %v722 = vpack.c.bf16 %v700, %v698
    %v723 = vpack.c.bf16 %v703, %v701
    %v724 = vpack.c.bf16 %v704, %v702
    %v725 = vpack.c.bf16 %v707, %v705
    %v726 = vpack.c.bf16 %v708, %v706
    %v727 = vpack.c.bf16 %v711, %v709
    %v728 = vpack.c.bf16 %v712, %v710
    %v745 = vunpack.c.l.b16 %v713
    %v746 = vunpack.c.l.b16 %v714
    %v747 = vunpack.c.h.b16 %v713
    %v748 = vunpack.c.h.b16 %v714
    %v749 = vunpack.c.l.b16 %v715
    %v750 = vunpack.c.l.b16 %v716
    %v751 = vunpack.c.h.b16 %v715
    %v752 = vunpack.c.h.b16 %v716
    %v753 = vunpack.c.l.b16 %v717
    %v754 = vunpack.c.l.b16 %v718
    %v755 = vunpack.c.h.b16 %v717
    %v756 = vunpack.c.h.b16 %v718
    %v757 = vunpack.c.l.b16 %v719
    %v758 = vunpack.c.l.b16 %v720
    %v759 = vunpack.c.h.b16 %v719
    %v760 = vunpack.c.h.b16 %v720
    %v761 = vunpack.c.l.b16 %v721
    %v762 = vunpack.c.l.b16 %v722
    %v763 = vunpack.c.h.b16 %v721
    %v764 = vunpack.c.h.b16 %v722
    %v765 = vunpack.c.l.b16 %v723
    %v766 = vunpack.c.l.b16 %v724
    %v767 = vunpack.c.h.b16 %v723
    %v768 = vunpack.c.h.b16 %v724
    %v769 = vunpack.c.l.b16 %v725
    %v770 = vunpack.c.l.b16 %v726
    %v771 = vunpack.c.h.b16 %v725
    %v772 = vunpack.c.h.b16 %v726
    %v773 = vunpack.c.l.b16 %v727
    %v774 = vunpack.c.l.b16 %v728
    %v775 = vunpack.c.h.b16 %v727
    %v776 = vunpack.c.h.b16 %v728
    %v777 = vpack.c.b16 %v746, %v745
    %v778 = vpack.c.b16 %v748, %v747
    %v779 = vpack.c.b16 %v750, %v749
    %v780 = vpack.c.b16 %v752, %v751
    %v781 = vpack.c.b16 %v754, %v753
    %v782 = vpack.c.b16 %v756, %v755
    %v783 = vpack.c.b16 %v758, %v757
    %v784 = vpack.c.b16 %v760, %v759
    %v785 = vpack.c.b16 %v762, %v761
    %v786 = vpack.c.b16 %v764, %v763
    %v787 = vpack.c.b16 %v766, %v765
    %v788 = vpack.c.b16 %v768, %v767
    %v789 = vpack.c.b16 %v770, %v769
    %v790 = vpack.c.b16 %v772, %v771
    %v791 = vpack.c.b16 %v774, %v773
    %v792 = vpack.c.b16 %v776, %v775
    %809 = vst [vmem:[%s5] sm:$0xff] %v777
    %810 = vst [vmem:[%s5 + $0x8] sm:$0xff] %v778
    %811 = vst [vmem:[%s5 + $0x10] sm:$0xff] %v779
    %812 = vst [vmem:[%s5 + $0x18] sm:$0xff] %v780
    %813 = vst [vmem:[%s5 + $0x20] sm:$0xff] %v781
    %814 = vst [vmem:[%s5 + $0x28] sm:$0xff] %v782
    %815 = vst [vmem:[%s5 + $0x30] sm:$0xff] %v783
    %816 = vst [vmem:[%s5 + $0x38] sm:$0xff] %v784
    %817 = vst [vmem:[%s5 + $0x40] sm:$0xff] %v785
    %818 = vst [vmem:[%s5 + $0x48] sm:$0xff] %v786
    %819 = vst [vmem:[%s5 + $0x50] sm:$0xff] %v787
    %820 = vst [vmem:[%s5 + $0x58] sm:$0xff] %v788
    %821 = vst [vmem:[%s5 + $0x60] sm:$0xff] %v789
    %822 = vst [vmem:[%s5 + $0x68] sm:$0xff] %v790
    %823 = vst [vmem:[%s5 + $0x70] sm:$0xff] %v791
    %824 = vst [vmem:[%s5 + $0x78] sm:$0xff] %v792
  $region29: #{videogpt_forward.15} parent=0 // pred_fallthru
    _
  // Predicated region
  $region30: #{videogpt_forward.15} parent=0 // pred_check
    _
  $region31: #{videogpt_forward.15} parent=0 // pred_check_branch
    %826 = sbr.rel (0) target = $region33
  $region32: #{videogpt_forward.15} parent=0 // pred_region
    _
  $region33: #{videogpt_forward.15} parent=0 // pred_fallthru
    _
  // Predicated region
  $region34: #{videogpt_forward.15} parent=0 // pred_check
    _
  $region35: #{videogpt_forward.15} parent=0 // pred_check_branch
    %828 = sbr.rel (0) target = $region37
  $region36: #{videogpt_forward.15} parent=0 // pred_region
    _
  $region37: #{videogpt_forward.15} parent=0 // pred_fallthru
    _

// kernel: videogpt_forward.17
$region0: #{videogpt_forward.17}
  #allocation0 [shape = 'u32[]', space=smem, size = 0x4, offset = 0x4, fixed_abs, tag = 'smem constant byte address 0x4 - core index']
  #allocation1 [shape = 'u32[144,128]{1,0:T(1,128)}', space=vmem, size = 0x12000, scoped, tag = 'internal scratch']
  #allocation2 [shape = 'f32[128,128]{1,0:T(8,128)}', space=vmem, size = 0x10000, scoped, tag = 'scratch operand']
  %s0 = inlined_call_operand.vmem [shape: bf16[128,128], index: 0, kind: input, shape index: {}]
  %s1 = inlined_call_operand.vmem [shape: bf16[128,128], index: 1, kind: input, shape index: {}]
  %s2 = inlined_call_operand.vmem [shape: f32[1,128], index: 2, kind: input, shape index: {}]
  %s3 = inlined_call_operand.vmem [shape: bf16[128,128], index: 3, kind: input, shape index: {}]
  %s4 = inlined_call_operand.vmem [shape: bf16[128,128], index: 4, kind: output, shape index: {}]
  %s5 = sld [smem:[#allocation0]]
  $region34: #{videogpt_forward.17} parent=0
    _
  %s7 = ssub.s32 1, %s5
  %s8 = scalar_select 0, %s7, %s5
  // Predicated region
  $region2: #{videogpt_forward.17} parent=0 // pred_check
    _
  $region3: #{videogpt_forward.17} parent=0 // pred_check_branch
    %10 = sbr.rel (0) target = $region5
  $region4: #{videogpt_forward.17} parent=0 // pred_region
    _
  $region5: #{videogpt_forward.17} parent=0 // pred_fallthru
    _
  // Predicated region
  $region6: #{videogpt_forward.17} parent=0 // pred_check
    _
  $region7: #{videogpt_forward.17} parent=0 // pred_check_branch
    %12 = sbr.rel (0) target = $region9
  $region8: #{videogpt_forward.17} parent=0 // pred_region
    _
  $region9: #{videogpt_forward.17} parent=0 // pred_fallthru
    _
  // Predicated region
  $region10: #{videogpt_forward.17} parent=0 // pred_check
    _
  $region11: #{videogpt_forward.17} parent=0 // pred_check_branch
    %14 = sbr.rel (0) target = $region13
  $region12: #{videogpt_forward.17} parent=0 // pred_region
    _
  $region13: #{videogpt_forward.17} parent=0 // pred_fallthru
    _
  // Predicated region
  $region14: #{videogpt_forward.17} parent=0 // pred_check
    _
  $region15: #{videogpt_forward.17} parent=0 // pred_check_branch
    %16 = sbr.rel (0) target = $region17
  $region16: #{videogpt_forward.17} parent=0 // pred_region
    _
  $region17: #{videogpt_forward.17} parent=0 // pred_fallthru
    _
  %p18 = scmp.eq.s32.totalorder 0, 0
  // Predicated region
  $region18: #{videogpt_forward.17} parent=0 // pred_check
    %p19 = pneg %p18
  $region19: #{videogpt_forward.17} parent=0 // pred_check_branch
    %21 = sbr.rel (%p19) target = $region21
  $region20: #{videogpt_forward.17} parent=0 // pred_region
    %22 = vst [vmem:[#allocation2] sm:$0xff] 0.0
    %23 = vst [vmem:[#allocation2 + $0x8] sm:$0xff] 0.0
    %24 = vst [vmem:[#allocation2 + $0x10] sm:$0xff] 0.0
    %25 = vst [vmem:[#allocation2 + $0x18] sm:$0xff] 0.0
    %26 = vst [vmem:[#allocation2 + $0x20] sm:$0xff] 0.0
    %27 = vst [vmem:[#allocation2 + $0x28] sm:$0xff] 0.0
    %28 = vst [vmem:[#allocation2 + $0x30] sm:$0xff] 0.0
    %29 = vst [vmem:[#allocation2 + $0x38] sm:$0xff] 0.0
    %30 = vst [vmem:[#allocation2 + $0x40] sm:$0xff] 0.0
    %31 = vst [vmem:[#allocation2 + $0x48] sm:$0xff] 0.0
    %32 = vst [vmem:[#allocation2 + $0x50] sm:$0xff] 0.0
    %33 = vst [vmem:[#allocation2 + $0x58] sm:$0xff] 0.0
    %34 = vst [vmem:[#allocation2 + $0x60] sm:$0xff] 0.0
    %35 = vst [vmem:[#allocation2 + $0x68] sm:$0xff] 0.0
    %36 = vst [vmem:[#allocation2 + $0x70] sm:$0xff] 0.0
    %37 = vst [vmem:[#allocation2 + $0x78] sm:$0xff] 0.0
  $region21: #{videogpt_forward.17} parent=0 // pred_fallthru
    _
  %v38 = vld [vmem:[%s0] sm:$0xf]
  %v39 = vld [vmem:[%s0 + $0x4] sm:$0xf]
  %v40 = vld [vmem:[%s0 + $0x8] sm:$0xf]
  %v41 = vld [vmem:[%s0 + $0xc] sm:$0xf]
  %v42 = vld [vmem:[%s0 + $0x10] sm:$0xf]
  %v43 = vld [vmem:[%s0 + $0x14] sm:$0xf]
  %v44 = vld [vmem:[%s0 + $0x18] sm:$0xf]
  %v45 = vld [vmem:[%s0 + $0x1c] sm:$0xf]
  %v46 = vld [vmem:[%s0 + $0x20] sm:$0xf]
  %v47 = vld [vmem:[%s0 + $0x24] sm:$0xf]
  %v48 = vld [vmem:[%s0 + $0x28] sm:$0xf]
  %v49 = vld [vmem:[%s0 + $0x2c] sm:$0xf]
  %v50 = vld [vmem:[%s0 + $0x30] sm:$0xf]
  %v51 = vld [vmem:[%s0 + $0x34] sm:$0xf]
  %v52 = vld [vmem:[%s0 + $0x38] sm:$0xf]
  %v53 = vld [vmem:[%s0 + $0x3c] sm:$0xf]
  %v54 = vld [vmem:[#allocation2] sm:$0xff]
  %v55 = vld [vmem:[#allocation2 + $0x8] sm:$0xff]
  %v56 = vld [vmem:[#allocation2 + $0x10] sm:$0xff]
  %v57 = vld [vmem:[#allocation2 + $0x18] sm:$0xff]
  %v58 = vld [vmem:[#allocation2 + $0x20] sm:$0xff]
  %v59 = vld [vmem:[#allocation2 + $0x28] sm:$0xff]
  %v60 = vld [vmem:[#allocation2 + $0x30] sm:$0xff]
  %v61 = vld [vmem:[#allocation2 + $0x38] sm:$0xff]
  %v62 = vld [vmem:[#allocation2 + $0x40] sm:$0xff]
  %v63 = vld [vmem:[#allocation2 + $0x48] sm:$0xff]
  %v64 = vld [vmem:[#allocation2 + $0x50] sm:$0xff]
  %v65 = vld [vmem:[#allocation2 + $0x58] sm:$0xff]
  %v66 = vld [vmem:[#allocation2 + $0x60] sm:$0xff]
  %v67 = vld [vmem:[#allocation2 + $0x68] sm:$0xff]
  %v68 = vld [vmem:[#allocation2 + $0x70] sm:$0xff]
  %v69 = vld [vmem:[#allocation2 + $0x78] sm:$0xff]
  %v70 = vld [vmem:[%s1] sm:$0xf]
  %v71 = vld [vmem:[%s1 + $0x4] sm:$0xf]
  %v72 = vld [vmem:[%s1 + $0x8] sm:$0xf]
  %v73 = vld [vmem:[%s1 + $0xc] sm:$0xf]
  %v74 = vld [vmem:[%s1 + $0x10] sm:$0xf]
  %v75 = vld [vmem:[%s1 + $0x14] sm:$0xf]
  %v76 = vld [vmem:[%s1 + $0x18] sm:$0xf]
  %v77 = vld [vmem:[%s1 + $0x1c] sm:$0xf]
  %v78 = vld [vmem:[%s1 + $0x20] sm:$0xf]
  %v79 = vld [vmem:[%s1 + $0x24] sm:$0xf]
  %v80 = vld [vmem:[%s1 + $0x28] sm:$0xf]
  %v81 = vld [vmem:[%s1 + $0x2c] sm:$0xf]
  %v82 = vld [vmem:[%s1 + $0x30] sm:$0xf]
  %v83 = vld [vmem:[%s1 + $0x34] sm:$0xf]
  %v84 = vld [vmem:[%s1 + $0x38] sm:$0xf]
  %v85 = vld [vmem:[%s1 + $0x3c] sm:$0xf]
  %v102 = vunpack.c.l.b16 %v38
  %v103 = vunpack.c.l.b16 %v39
  %v104 = vunpack.c.l.b16 %v40
  %v105 = vunpack.c.l.b16 %v41
  %v106 = vunpack.c.l.b16 %v42
  %v107 = vunpack.c.l.b16 %v43
  %v108 = vunpack.c.l.b16 %v44
  %v109 = vunpack.c.l.b16 %v45
  %v110 = vunpack.c.l.b16 %v46
  %v111 = vunpack.c.l.b16 %v47
  %v112 = vunpack.c.l.b16 %v48
  %v113 = vunpack.c.l.b16 %v49
  %v114 = vunpack.c.l.b16 %v50
  %v115 = vunpack.c.l.b16 %v51
  %v116 = vunpack.c.l.b16 %v52
  %v117 = vunpack.c.l.b16 %v53
  %v118 = vpack.c.b16 %v103, %v102
  %v119 = vpack.c.b16 %v105, %v104
  %v120 = vpack.c.b16 %v107, %v106
  %v121 = vpack.c.b16 %v109, %v108
  %v122 = vpack.c.b16 %v111, %v110
  %v123 = vpack.c.b16 %v113, %v112
  %v124 = vpack.c.b16 %v115, %v114
  %v125 = vpack.c.b16 %v117, %v116
  %v150 = vunpack.c.l.b16 %v70
  %v151 = vunpack.c.l.b16 %v71
  %v152 = vunpack.c.l.b16 %v72
  %v153 = vunpack.c.l.b16 %v73
  %v154 = vunpack.c.l.b16 %v74
  %v155 = vunpack.c.l.b16 %v75
  %v156 = vunpack.c.l.b16 %v76
  %v157 = vunpack.c.l.b16 %v77
  %v158 = vunpack.c.l.b16 %v78
  %v159 = vunpack.c.l.b16 %v79
  %v160 = vunpack.c.l.b16 %v80
  %v161 = vunpack.c.l.b16 %v81
  %v162 = vunpack.c.l.b16 %v82
  %v163 = vunpack.c.l.b16 %v83
  %v164 = vunpack.c.l.b16 %v84
  %v165 = vunpack.c.l.b16 %v85
  %v166 = vpack.c.b16 %v151, %v150
  %v167 = vpack.c.b16 %v153, %v152
  %v168 = vpack.c.b16 %v155, %v154
  %v169 = vpack.c.b16 %v157, %v156
  %v170 = vpack.c.b16 %v159, %v158
  %v171 = vpack.c.b16 %v161, %v160
  %v172 = vpack.c.b16 %v163, %v162
  %v173 = vpack.c.b16 %v165, %v164
  %182 = vmatprep.subr.bf16.mxu0 0
  %183 = vmatpush1.bf16.msra.mxu0 %v166
  %184 = vmatprep.subr.bf16.mxu0 0
  %185 = vmatpush1.bf16.msra.mxu0 %v167
  %186 = vmatprep.subr.bf16.mxu0 0
  %187 = vmatpush1.bf16.msra.mxu0 %v168
  %188 = vmatprep.subr.bf16.mxu0 0
  %189 = vmatpush1.bf16.msra.mxu0 %v169
  %190 = vmatprep.subr.bf16.mxu0 0
  %191 = vmatpush1.bf16.msra.mxu0 %v170
  %192 = vmatprep.subr.bf16.mxu0 0
  %193 = vmatpush1.bf16.msra.mxu0 %v171
  %194 = vmatprep.subr.bf16.mxu0 0
  %195 = vmatpush1.bf16.msra.mxu0 %v172
  %196 = vmatprep.subr.bf16.mxu0 0
  %197 = vmatpush1.bf16.msra.mxu0 %v173
  %198 = vmatprep.subr.bf16.mxu0 0
  %199 = vmatpush1.bf16.msra.mxu0 0
  %200 = vmatprep.subr.bf16.mxu0 0
  %201 = vmatpush1.bf16.msra.mxu0 0
  %202 = vmatprep.subr.bf16.mxu0 0
  %203 = vmatpush1.bf16.msra.mxu0 0
  %204 = vmatprep.subr.bf16.mxu0 0
  %205 = vmatpush1.bf16.msra.mxu0 0
  %206 = vmatprep.subr.bf16.mxu0 0
  %207 = vmatpush1.bf16.msra.mxu0 0
  %208 = vmatprep.subr.bf16.mxu0 0
  %209 = vmatpush1.bf16.msra.mxu0 0
  %210 = vmatprep.subr.bf16.mxu0 0
  %211 = vmatpush1.bf16.msra.mxu0 0
  %212 = vmatprep.subr.bf16.mxu0 0
  %213 = vmatpush1.bf16.msra.mxu0 0
  %214 = vmatprep.mubr.bf16.mxu0 0
  %215 = vmatmul.mubr.bf16.gmra.mrb[0].mxu0 %v118
  %v216 = vpop.f32.mrb[0].mxu0
  %v217 = vadd.f32 0.0, %v216
  %v218 = vpop.f32.mrb[0].mxu0
  %v219 = vpop.f32.mrb[0].mxu0
  %v220 = vadd.f32 0.0, %v219
  %v221 = vpop.f32.mrb[0].mxu0
  %222 = vmatprep.mubr.bf16.mxu0 0
  %223 = vmatmul.mubr.bf16.gmra.mrb[0].mxu0 %v119
  %v224 = vpop.f32.mrb[0].mxu0
  %v225 = vadd.f32 0.0, %v224
  %v226 = vpop.f32.mrb[0].mxu0
  %v227 = vpop.f32.mrb[0].mxu0
  %v228 = vadd.f32 0.0, %v227
  %v229 = vpop.f32.mrb[0].mxu0
  %230 = vmatprep.mubr.bf16.mxu0 0
  %231 = vmatmul.mubr.bf16.gmra.mrb[0].mxu0 %v120
  %v232 = vpop.f32.mrb[0].mxu0
  %v233 = vadd.f32 0.0, %v232
  %v234 = vpop.f32.mrb[0].mxu0
  %v235 = vpop.f32.mrb[0].mxu0
  %v236 = vadd.f32 0.0, %v235
  %v237 = vpop.f32.mrb[0].mxu0
  %238 = vmatprep.mubr.bf16.mxu0 0
  %239 = vmatmul.mubr.bf16.gmra.mrb[0].mxu0 %v121
  %v240 = vpop.f32.mrb[0].mxu0
  %v241 = vadd.f32 0.0, %v240
  %v242 = vpop.f32.mrb[0].mxu0
  %v243 = vpop.f32.mrb[0].mxu0
  %v244 = vadd.f32 0.0, %v243
  %v245 = vpop.f32.mrb[0].mxu0
  %246 = vmatprep.mubr.bf16.mxu0 0
  %247 = vmatmul.mubr.bf16.gmra.mrb[0].mxu0 %v122
  %v248 = vpop.f32.mrb[0].mxu0
  %v249 = vadd.f32 0.0, %v248
  %v250 = vpop.f32.mrb[0].mxu0
  %v251 = vpop.f32.mrb[0].mxu0
  %v252 = vadd.f32 0.0, %v251
  %v253 = vpop.f32.mrb[0].mxu0
  %254 = vmatprep.mubr.bf16.mxu0 0
  %255 = vmatmul.mubr.bf16.gmra.mrb[0].mxu0 %v123
  %v256 = vpop.f32.mrb[0].mxu0
  %v257 = vadd.f32 0.0, %v256
  %v258 = vpop.f32.mrb[0].mxu0
  %v259 = vpop.f32.mrb[0].mxu0
  %v260 = vadd.f32 0.0, %v259
  %v261 = vpop.f32.mrb[0].mxu0
  %262 = vmatprep.mubr.bf16.mxu0 0
  %263 = vmatmul.mubr.bf16.gmra.mrb[0].mxu0 %v124
  %v264 = vpop.f32.mrb[0].mxu0
  %v265 = vadd.f32 0.0, %v264
  %v266 = vpop.f32.mrb[0].mxu0
  %v267 = vpop.f32.mrb[0].mxu0
  %v268 = vadd.f32 0.0, %v267
  %v269 = vpop.f32.mrb[0].mxu0
  %270 = vmatprep.mubr.bf16.mxu0 0
  %271 = vmatmul.mubr.bf16.gmra.mrb[0].mxu0 %v125
  %v272 = vpop.f32.mrb[0].mxu0
  %v273 = vadd.f32 0.0, %v272
  %v274 = vpop.f32.mrb[0].mxu0
  %v275 = vpop.f32.mrb[0].mxu0
  %v276 = vadd.f32 0.0, %v275
  %v277 = vpop.f32.mrb[0].mxu0
  %278 = vdwg.mxu0
  %v279 = vadd.f32 %v54, %v217
  %v280 = vadd.f32 %v55, %v220
  %v281 = vadd.f32 %v56, %v225
  %v282 = vadd.f32 %v57, %v228
  %v283 = vadd.f32 %v58, %v233
  %v284 = vadd.f32 %v59, %v236
  %v285 = vadd.f32 %v60, %v241
  %v286 = vadd.f32 %v61, %v244
  %v287 = vadd.f32 %v62, %v249
  %v288 = vadd.f32 %v63, %v252
  %v289 = vadd.f32 %v64, %v257
  %v290 = vadd.f32 %v65, %v260
  %v291 = vadd.f32 %v66, %v265
  %v292 = vadd.f32 %v67, %v268
  %v293 = vadd.f32 %v68, %v273
  %v294 = vadd.f32 %v69, %v276
  %295 = vst [vmem:[#allocation2] sm:$0xff] %v279
  %296 = vst [vmem:[#allocation2 + $0x8] sm:$0xff] %v280
  %297 = vst [vmem:[#allocation2 + $0x10] sm:$0xff] %v281
  %298 = vst [vmem:[#allocation2 + $0x18] sm:$0xff] %v282
  %299 = vst [vmem:[#allocation2 + $0x20] sm:$0xff] %v283
  %300 = vst [vmem:[#allocation2 + $0x28] sm:$0xff] %v284
  %301 = vst [vmem:[#allocation2 + $0x30] sm:$0xff] %v285
  %302 = vst [vmem:[#allocation2 + $0x38] sm:$0xff] %v286
  %303 = vst [vmem:[#allocation2 + $0x40] sm:$0xff] %v287
  %304 = vst [vmem:[#allocation2 + $0x48] sm:$0xff] %v288
  %305 = vst [vmem:[#allocation2 + $0x50] sm:$0xff] %v289
  %306 = vst [vmem:[#allocation2 + $0x58] sm:$0xff] %v290
  %307 = vst [vmem:[#allocation2 + $0x60] sm:$0xff] %v291
  %308 = vst [vmem:[#allocation2 + $0x68] sm:$0xff] %v292
  %309 = vst [vmem:[#allocation2 + $0x70] sm:$0xff] %v293
  %310 = vst [vmem:[#allocation2 + $0x78] sm:$0xff] %v294
  // Predicated region
  $region22: #{videogpt_forward.17} parent=0 // pred_check
    %p311 = pneg %p18
  $region23: #{videogpt_forward.17} parent=0 // pred_check_branch
    %313 = sbr.rel (%p311) target = $region25
  $region24: #{videogpt_forward.17} parent=0 // pred_region
    %v314 = vld [vmem:[#allocation2] sm:$0xff]
    %v315 = vld [vmem:[#allocation2 + $0x8] sm:$0xff]
    %v316 = vld [vmem:[#allocation2 + $0x10] sm:$0xff]
    %v317 = vld [vmem:[#allocation2 + $0x18] sm:$0xff]
    %v318 = vld [vmem:[#allocation2 + $0x20] sm:$0xff]
    %v319 = vld [vmem:[#allocation2 + $0x28] sm:$0xff]
    %v320 = vld [vmem:[#allocation2 + $0x30] sm:$0xff]
    %v321 = vld [vmem:[#allocation2 + $0x38] sm:$0xff]
    %v322 = vld [vmem:[#allocation2 + $0x40] sm:$0xff]
    %v323 = vld [vmem:[#allocation2 + $0x48] sm:$0xff]
    %v324 = vld [vmem:[#allocation2 + $0x50] sm:$0xff]
    %v325 = vld [vmem:[#allocation2 + $0x58] sm:$0xff]
    %v326 = vld [vmem:[#allocation2 + $0x60] sm:$0xff]
    %v327 = vld [vmem:[#allocation2 + $0x68] sm:$0xff]
    %v328 = vld [vmem:[#allocation2 + $0x70] sm:$0xff]
    %v329 = vld [vmem:[#allocation2 + $0x78] sm:$0xff]
    %v330 = vld [vmem:[%s2] sm:$0x1]
    %v332 = vlaneseq
    %v333 = vshrl.u32 %v332, 7
    %v334 = vsub.s32 0, %v333
    %v335 = vrot.slane %v330, %v334
    %v337 = vadd.f32 %v314, %v335
    %v338 = vadd.f32 %v315, %v335
    %v339 = vadd.f32 %v316, %v335
    %v340 = vadd.f32 %v317, %v335
    %v341 = vadd.f32 %v318, %v335
    %v342 = vadd.f32 %v319, %v335
    %v343 = vadd.f32 %v320, %v335
    %v344 = vadd.f32 %v321, %v335
    %v345 = vadd.f32 %v322, %v335
    %v346 = vadd.f32 %v323, %v335
    %v347 = vadd.f32 %v324, %v335
    %v348 = vadd.f32 %v325, %v335
    %v349 = vadd.f32 %v326, %v335
    %v350 = vadd.f32 %v327, %v335
    %v351 = vadd.f32 %v328, %v335
    %v352 = vadd.f32 %v329, %v335
    %v353 = vld [vmem:[%s3] sm:$0xf]
    %v354 = vld [vmem:[%s3 + $0x4] sm:$0xf]
    %v355 = vld [vmem:[%s3 + $0x8] sm:$0xf]
    %v356 = vld [vmem:[%s3 + $0xc] sm:$0xf]
    %v357 = vld [vmem:[%s3 + $0x10] sm:$0xf]
    %v358 = vld [vmem:[%s3 + $0x14] sm:$0xf]
    %v359 = vld [vmem:[%s3 + $0x18] sm:$0xf]
    %v360 = vld [vmem:[%s3 + $0x1c] sm:$0xf]
    %v361 = vld [vmem:[%s3 + $0x20] sm:$0xf]
    %v362 = vld [vmem:[%s3 + $0x24] sm:$0xf]
    %v363 = vld [vmem:[%s3 + $0x28] sm:$0xf]
    %v364 = vld [vmem:[%s3 + $0x2c] sm:$0xf]
    %v365 = vld [vmem:[%s3 + $0x30] sm:$0xf]
    %v366 = vld [vmem:[%s3 + $0x34] sm:$0xf]
    %v367 = vld [vmem:[%s3 + $0x38] sm:$0xf]
    %v368 = vld [vmem:[%s3 + $0x3c] sm:$0xf]
    %v369 = vunpack.c.l.bf16 %v353
    %v370 = vunpack.c.l.bf16 %v354
    %v371 = vunpack.c.l.bf16 %v355
    %v372 = vunpack.c.l.bf16 %v356
    %v373 = vunpack.c.l.bf16 %v357
    %v374 = vunpack.c.l.bf16 %v358
    %v375 = vunpack.c.l.bf16 %v359
    %v376 = vunpack.c.l.bf16 %v360
    %v377 = vunpack.c.l.bf16 %v361
    %v378 = vunpack.c.l.bf16 %v362
    %v379 = vunpack.c.l.bf16 %v363
    %v380 = vunpack.c.l.bf16 %v364
    %v381 = vunpack.c.l.bf16 %v365
    %v382 = vunpack.c.l.bf16 %v366
    %v383 = vunpack.c.l.bf16 %v367
    %v384 = vunpack.c.l.bf16 %v368
    %v385 = vadd.f32 %v337, %v369
    %v386 = vadd.f32 %v338, %v370
    %v387 = vadd.f32 %v339, %v371
    %v388 = vadd.f32 %v340, %v372
    %v389 = vadd.f32 %v341, %v373
    %v390 = vadd.f32 %v342, %v374
    %v391 = vadd.f32 %v343, %v375
    %v392 = vadd.f32 %v344, %v376
    %v393 = vadd.f32 %v345, %v377
    %v394 = vadd.f32 %v346, %v378
    %v395 = vadd.f32 %v347, %v379
    %v396 = vadd.f32 %v348, %v380
    %v397 = vadd.f32 %v349, %v381
    %v398 = vadd.f32 %v350, %v382
    %v399 = vadd.f32 %v351, %v383
    %v400 = vadd.f32 %v352, %v384
    %v401 = vpack.c.bf16 %v386, %v385
    %v402 = vpack.c.bf16 %v388, %v387
    %v403 = vpack.c.bf16 %v390, %v389
    %v404 = vpack.c.bf16 %v392, %v391
    %v405 = vpack.c.bf16 %v394, %v393
    %v406 = vpack.c.bf16 %v396, %v395
    %v407 = vpack.c.bf16 %v398, %v397
    %v408 = vpack.c.bf16 %v400, %v399
    %v417 = vunpack.c.l.b16 %v401
    %v418 = vunpack.c.h.b16 %v401
    %v419 = vunpack.c.l.b16 %v402
    %v420 = vunpack.c.h.b16 %v402
    %v421 = vunpack.c.l.b16 %v403
    %v422 = vunpack.c.h.b16 %v403
    %v423 = vunpack.c.l.b16 %v404
    %v424 = vunpack.c.h.b16 %v404
    %v425 = vunpack.c.l.b16 %v405
    %v426 = vunpack.c.h.b16 %v405
    %v427 = vunpack.c.l.b16 %v406
    %v428 = vunpack.c.h.b16 %v406
    %v429 = vunpack.c.l.b16 %v407
    %v430 = vunpack.c.h.b16 %v407
    %v431 = vunpack.c.l.b16 %v408
    %v432 = vunpack.c.h.b16 %v408
    %v433 = vpack.c.b16 %v417, %v417
    %v434 = vpack.c.b16 %v418, %v418
    %v435 = vpack.c.b16 %v419, %v419
    %v436 = vpack.c.b16 %v420, %v420
    %v437 = vpack.c.b16 %v421, %v421
    %v438 = vpack.c.b16 %v422, %v422
    %v439 = vpack.c.b16 %v423, %v423
    %v440 = vpack.c.b16 %v424, %v424
    %v441 = vpack.c.b16 %v425, %v425
    %v442 = vpack.c.b16 %v426, %v426
    %v443 = vpack.c.b16 %v427, %v427
    %v444 = vpack.c.b16 %v428, %v428
    %v445 = vpack.c.b16 %v429, %v429
    %v446 = vpack.c.b16 %v430, %v430
    %v447 = vpack.c.b16 %v431, %v431
    %v448 = vpack.c.b16 %v432, %v432
    %465 = vst [vmem:[%s4] sm:$0xf] %v433
    %466 = vst [vmem:[%s4 + $0x4] sm:$0xf] %v434
    %467 = vst [vmem:[%s4 + $0x8] sm:$0xf] %v435
    %468 = vst [vmem:[%s4 + $0xc] sm:$0xf] %v436
    %469 = vst [vmem:[%s4 + $0x10] sm:$0xf] %v437
    %470 = vst [vmem:[%s4 + $0x14] sm:$0xf] %v438
    %471 = vst [vmem:[%s4 + $0x18] sm:$0xf] %v439
    %472 = vst [vmem:[%s4 + $0x1c] sm:$0xf] %v440
    %473 = vst [vmem:[%s4 + $0x20] sm:$0xf] %v441
    %474 = vst [vmem:[%s4 + $0x24] sm:$0xf] %v442
    %475 = vst [vmem:[%s4 + $0x28] sm:$0xf] %v443
    %476 = vst [vmem:[%s4 + $0x2c] sm:$0xf] %v444
    %477 = vst [vmem:[%s4 + $0x30] sm:$0xf] %v445
    %478 = vst [vmem:[%s4 + $0x34] sm:$0xf] %v446
    %479 = vst [vmem:[%s4 + $0x38] sm:$0xf] %v447
    %480 = vst [vmem:[%s4 + $0x3c] sm:$0xf] %v448
  $region25: #{videogpt_forward.17} parent=0 // pred_fallthru
    _
  // Predicated region
  $region26: #{videogpt_forward.17} parent=0 // pred_check
    _
  $region27: #{videogpt_forward.17} parent=0 // pred_check_branch
    %482 = sbr.rel (0) target = $region29
  $region28: #{videogpt_forward.17} parent=0 // pred_region
    _
  $region29: #{videogpt_forward.17} parent=0 // pred_fallthru
    _
  // Predicated region
  $region30: #{videogpt_forward.17} parent=0 // pred_check
    _
  $region31: #{videogpt_forward.17} parent=0 // pred_check_branch
    %484 = sbr.rel (0) target = $region33
  $region32: #{videogpt_forward.17} parent=0 // pred_region
    _
  $region33: #{videogpt_forward.17} parent=0 // pred_fallthru
    _

// kernel: videogpt_forward.18
$region0: #{videogpt_forward.18}
  #allocation0 [shape = 'u32[]', space=smem, size = 0x4, offset = 0x4, fixed_abs, tag = 'smem constant byte address 0x4 - core index']
  #allocation1 [shape = 'u32[144,128]{1,0:T(1,128)}', space=vmem, size = 0x12000, scoped, tag = 'internal scratch']
  #allocation2 [shape = 'f32[128,128]{1,0:T(8,128)}', space=vmem, size = 0x10000, scoped, tag = 'scratch operand']
  %s0 = inlined_call_operand.vmem [shape: bf16[128,64], index: 0, kind: input, shape index: {}]
  %s1 = inlined_call_operand.vmem [shape: bf16[64,128], index: 1, kind: input, shape index: {}]
  %s2 = inlined_call_operand.vmem [shape: f32[1,128], index: 2, kind: input, shape index: {}]
  %s3 = inlined_call_operand.vmem [shape: f32[1,64], index: 3, kind: input, shape index: {}]
  %s4 = inlined_call_operand.vmem [shape: f32[1,64], index: 4, kind: input, shape index: {}]
  %s5 = inlined_call_operand.vmem [shape: bf16[128,128], index: 5, kind: output, shape index: {}]
  %s6 = sld [smem:[#allocation0]]
  $region38: #{videogpt_forward.18} parent=0
    _
  %s8 = ssub.s32 1, %s6
  %s9 = scalar_select 0, %s8, %s6
  // Predicated region
  $region2: #{videogpt_forward.18} parent=0 // pred_check
    _
  $region3: #{videogpt_forward.18} parent=0 // pred_check_branch
    %11 = sbr.rel (0) target = $region5
  $region4: #{videogpt_forward.18} parent=0 // pred_region
    _
  $region5: #{videogpt_forward.18} parent=0 // pred_fallthru
    _
  // Predicated region
  $region6: #{videogpt_forward.18} parent=0 // pred_check
    _
  $region7: #{videogpt_forward.18} parent=0 // pred_check_branch
    %13 = sbr.rel (0) target = $region9
  $region8: #{videogpt_forward.18} parent=0 // pred_region
    _
  $region9: #{videogpt_forward.18} parent=0 // pred_fallthru
    _
  // Predicated region
  $region10: #{videogpt_forward.18} parent=0 // pred_check
    _
  $region11: #{videogpt_forward.18} parent=0 // pred_check_branch
    %15 = sbr.rel (0) target = $region13
  $region12: #{videogpt_forward.18} parent=0 // pred_region
    _
  $region13: #{videogpt_forward.18} parent=0 // pred_fallthru
    _
  // Predicated region
  $region14: #{videogpt_forward.18} parent=0 // pred_check
    _
  $region15: #{videogpt_forward.18} parent=0 // pred_check_branch
    %17 = sbr.rel (0) target = $region17
  $region16: #{videogpt_forward.18} parent=0 // pred_region
    _
  $region17: #{videogpt_forward.18} parent=0 // pred_fallthru
    _
  // Predicated region
  $region18: #{videogpt_forward.18} parent=0 // pred_check
    _
  $region19: #{videogpt_forward.18} parent=0 // pred_check_branch
    %19 = sbr.rel (0) target = $region21
  $region20: #{videogpt_forward.18} parent=0 // pred_region
    _
  $region21: #{videogpt_forward.18} parent=0 // pred_fallthru
    _
  %p21 = scmp.eq.s32.totalorder 0, 0
  // Predicated region
  $region22: #{videogpt_forward.18} parent=0 // pred_check
    %p22 = pneg %p21
  $region23: #{videogpt_forward.18} parent=0 // pred_check_branch
    %24 = sbr.rel (%p22) target = $region25
  $region24: #{videogpt_forward.18} parent=0 // pred_region
    %25 = vst [vmem:[#allocation2] sm:$0xff] 0.0
    %26 = vst [vmem:[#allocation2 + $0x8] sm:$0xff] 0.0
    %27 = vst [vmem:[#allocation2 + $0x10] sm:$0xff] 0.0
    %28 = vst [vmem:[#allocation2 + $0x18] sm:$0xff] 0.0
    %29 = vst [vmem:[#allocation2 + $0x20] sm:$0xff] 0.0
    %30 = vst [vmem:[#allocation2 + $0x28] sm:$0xff] 0.0
    %31 = vst [vmem:[#allocation2 + $0x30] sm:$0xff] 0.0
    %32 = vst [vmem:[#allocation2 + $0x38] sm:$0xff] 0.0
    %33 = vst [vmem:[#allocation2 + $0x40] sm:$0xff] 0.0
    %34 = vst [vmem:[#allocation2 + $0x48] sm:$0xff] 0.0
    %35 = vst [vmem:[#allocation2 + $0x50] sm:$0xff] 0.0
    %36 = vst [vmem:[#allocation2 + $0x58] sm:$0xff] 0.0
    %37 = vst [vmem:[#allocation2 + $0x60] sm:$0xff] 0.0
    %38 = vst [vmem:[#allocation2 + $0x68] sm:$0xff] 0.0
    %39 = vst [vmem:[#allocation2 + $0x70] sm:$0xff] 0.0
    %40 = vst [vmem:[#allocation2 + $0x78] sm:$0xff] 0.0
  $region25: #{videogpt_forward.18} parent=0 // pred_fallthru
    _
  %v41 = vld [vmem:[%s0] sm:$0xf]
  %v42 = vld [vmem:[%s0 + $0x4] sm:$0xf]
  %v43 = vld [vmem:[%s0 + $0x8] sm:$0xf]
  %v44 = vld [vmem:[%s0 + $0xc] sm:$0xf]
  %v45 = vld [vmem:[%s0 + $0x10] sm:$0xf]
  %v46 = vld [vmem:[%s0 + $0x14] sm:$0xf]
  %v47 = vld [vmem:[%s0 + $0x18] sm:$0xf]
  %v48 = vld [vmem:[%s0 + $0x1c] sm:$0xf]
  %v49 = vld [vmem:[%s0 + $0x20] sm:$0xf]
  %v50 = vld [vmem:[%s0 + $0x24] sm:$0xf]
  %v51 = vld [vmem:[%s0 + $0x28] sm:$0xf]
  %v52 = vld [vmem:[%s0 + $0x2c] sm:$0xf]
  %v53 = vld [vmem:[%s0 + $0x30] sm:$0xf]
  %v54 = vld [vmem:[%s0 + $0x34] sm:$0xf]
  %v55 = vld [vmem:[%s0 + $0x38] sm:$0xf]
  %v56 = vld [vmem:[%s0 + $0x3c] sm:$0xf]
  %v57 = vunpack.c.l.bf16 %v41
  %v58 = vunpack.c.l.bf16 %v42
  %v59 = vunpack.c.l.bf16 %v43
  %v60 = vunpack.c.l.bf16 %v44
  %v61 = vunpack.c.l.bf16 %v45
  %v62 = vunpack.c.l.bf16 %v46
  %v63 = vunpack.c.l.bf16 %v47
  %v64 = vunpack.c.l.bf16 %v48
  %v65 = vunpack.c.l.bf16 %v49
  %v66 = vunpack.c.l.bf16 %v50
  %v67 = vunpack.c.l.bf16 %v51
  %v68 = vunpack.c.l.bf16 %v52
  %v69 = vunpack.c.l.bf16 %v53
  %v70 = vunpack.c.l.bf16 %v54
  %v71 = vunpack.c.l.bf16 %v55
  %v72 = vunpack.c.l.bf16 %v56
  %vm73 = vcmask 523264
  %v74 = vsel %vm73, %v57, 0.0
  %75 = vadd.xlane.f32.xlu0 %v74
  %v76 = vpop.xlane.xlu0 %75
  %v77 = vsel %vm73, %v58, 0.0
  %78 = vadd.xlane.f32.xlu0 %v77
  %v79 = vpop.xlane.xlu0 %78
  %v80 = vsel %vm73, %v59, 0.0
  %81 = vadd.xlane.f32.xlu0 %v80
  %v82 = vpop.xlane.xlu0 %81
  %v83 = vsel %vm73, %v60, 0.0
  %84 = vadd.xlane.f32.xlu0 %v83
  %v85 = vpop.xlane.xlu0 %84
  %v86 = vsel %vm73, %v61, 0.0
  %87 = vadd.xlane.f32.xlu0 %v86
  %v88 = vpop.xlane.xlu0 %87
  %v89 = vsel %vm73, %v62, 0.0
  %90 = vadd.xlane.f32.xlu0 %v89
  %v91 = vpop.xlane.xlu0 %90
  %v92 = vsel %vm73, %v63, 0.0
  %93 = vadd.xlane.f32.xlu0 %v92
  %v94 = vpop.xlane.xlu0 %93
  %v95 = vsel %vm73, %v64, 0.0
  %96 = vadd.xlane.f32.xlu0 %v95
  %v97 = vpop.xlane.xlu0 %96
  %v98 = vsel %vm73, %v65, 0.0
  %99 = vadd.xlane.f32.xlu0 %v98
  %v100 = vpop.xlane.xlu0 %99
  %v101 = vsel %vm73, %v66, 0.0
  %102 = vadd.xlane.f32.xlu0 %v101
  %v103 = vpop.xlane.xlu0 %102
  %v104 = vsel %vm73, %v67, 0.0
  %105 = vadd.xlane.f32.xlu0 %v104
  %v106 = vpop.xlane.xlu0 %105
  %v107 = vsel %vm73, %v68, 0.0
  %108 = vadd.xlane.f32.xlu0 %v107
  %v109 = vpop.xlane.xlu0 %108
  %v110 = vsel %vm73, %v69, 0.0
  %111 = vadd.xlane.f32.xlu0 %v110
  %v112 = vpop.xlane.xlu0 %111
  %v113 = vsel %vm73, %v70, 0.0
  %114 = vadd.xlane.f32.xlu0 %v113
  %v115 = vpop.xlane.xlu0 %114
  %v116 = vsel %vm73, %v71, 0.0
  %117 = vadd.xlane.f32.xlu0 %v116
  %v118 = vpop.xlane.xlu0 %117
  %v119 = vsel %vm73, %v72, 0.0
  %120 = vadd.xlane.f32.xlu0 %v119
  %v121 = vpop.xlane.xlu0 %120
  %v122 = vrcp.pop 64.0
  %v123 = vmul.f32 %v76, %v122
  %v124 = vmul.f32 %v79, %v122
  %v125 = vmul.f32 %v82, %v122
  %v126 = vmul.f32 %v85, %v122
  %v127 = vmul.f32 %v88, %v122
  %v128 = vmul.f32 %v91, %v122
  %v129 = vmul.f32 %v94, %v122
  %v130 = vmul.f32 %v97, %v122
  %v131 = vmul.f32 %v100, %v122
  %v132 = vmul.f32 %v103, %v122
  %v133 = vmul.f32 %v106, %v122
  %v134 = vmul.f32 %v109, %v122
  %v135 = vmul.f32 %v112, %v122
  %v136 = vmul.f32 %v115, %v122
  %v137 = vmul.f32 %v118, %v122
  %v138 = vmul.f32 %v121, %v122
  %v139 = vsub.f32 %v57, %v123
  %v140 = vsub.f32 %v58, %v124
  %v141 = vsub.f32 %v59, %v125
  %v142 = vsub.f32 %v60, %v126
  %v143 = vsub.f32 %v61, %v127
  %v144 = vsub.f32 %v62, %v128
  %v145 = vsub.f32 %v63, %v129
  %v146 = vsub.f32 %v64, %v130
  %v147 = vsub.f32 %v65, %v131
  %v148 = vsub.f32 %v66, %v132
  %v149 = vsub.f32 %v67, %v133
  %v150 = vsub.f32 %v68, %v134
  %v151 = vsub.f32 %v69, %v135
  %v152 = vsub.f32 %v70, %v136
  %v153 = vsub.f32 %v71, %v137
  %v154 = vsub.f32 %v72, %v138
  %v155 = vmul.f32 %v139, %v139
  %v156 = vmul.f32 %v140, %v140
  %v157 = vmul.f32 %v141, %v141
  %v158 = vmul.f32 %v142, %v142
  %v159 = vmul.f32 %v143, %v143
  %v160 = vmul.f32 %v144, %v144
  %v161 = vmul.f32 %v145, %v145
  %v162 = vmul.f32 %v146, %v146
  %v163 = vmul.f32 %v147, %v147
  %v164 = vmul.f32 %v148, %v148
  %v165 = vmul.f32 %v149, %v149
  %v166 = vmul.f32 %v150, %v150
  %v167 = vmul.f32 %v151, %v151
  %v168 = vmul.f32 %v152, %v152
  %v169 = vmul.f32 %v153, %v153
  %v170 = vmul.f32 %v154, %v154
  %v171 = vsel %vm73, %v155, 0.0
  %172 = vadd.xlane.f32.xlu0 %v171
  %v173 = vpop.xlane.xlu0 %172
  %v174 = vsel %vm73, %v156, 0.0
  %175 = vadd.xlane.f32.xlu0 %v174
  %v176 = vpop.xlane.xlu0 %175
  %v177 = vsel %vm73, %v157, 0.0
  %178 = vadd.xlane.f32.xlu0 %v177
  %v179 = vpop.xlane.xlu0 %178
  %v180 = vsel %vm73, %v158, 0.0
  %181 = vadd.xlane.f32.xlu0 %v180
  %v182 = vpop.xlane.xlu0 %181
  %v183 = vsel %vm73, %v159, 0.0
  %184 = vadd.xlane.f32.xlu0 %v183
  %v185 = vpop.xlane.xlu0 %184
  %v186 = vsel %vm73, %v160, 0.0
  %187 = vadd.xlane.f32.xlu0 %v186
  %v188 = vpop.xlane.xlu0 %187
  %v189 = vsel %vm73, %v161, 0.0
  %190 = vadd.xlane.f32.xlu0 %v189
  %v191 = vpop.xlane.xlu0 %190
  %v192 = vsel %vm73, %v162, 0.0
  %193 = vadd.xlane.f32.xlu0 %v192
  %v194 = vpop.xlane.xlu0 %193
  %v195 = vsel %vm73, %v163, 0.0
  %196 = vadd.xlane.f32.xlu0 %v195
  %v197 = vpop.xlane.xlu0 %196
  %v198 = vsel %vm73, %v164, 0.0
  %199 = vadd.xlane.f32.xlu0 %v198
  %v200 = vpop.xlane.xlu0 %199
  %v201 = vsel %vm73, %v165, 0.0
  %202 = vadd.xlane.f32.xlu0 %v201
  %v203 = vpop.xlane.xlu0 %202
  %v204 = vsel %vm73, %v166, 0.0
  %205 = vadd.xlane.f32.xlu0 %v204
  %v206 = vpop.xlane.xlu0 %205
  %v207 = vsel %vm73, %v167, 0.0
  %208 = vadd.xlane.f32.xlu0 %v207
  %v209 = vpop.xlane.xlu0 %208
  %v210 = vsel %vm73, %v168, 0.0
  %211 = vadd.xlane.f32.xlu0 %v210
  %v212 = vpop.xlane.xlu0 %211
  %v213 = vsel %vm73, %v169, 0.0
  %214 = vadd.xlane.f32.xlu0 %v213
  %v215 = vpop.xlane.xlu0 %214
  %v216 = vsel %vm73, %v170, 0.0
  %217 = vadd.xlane.f32.xlu0 %v216
  %v218 = vpop.xlane.xlu0 %217
  %v219 = vmul.f32 %v173, %v122
  %v220 = vmul.f32 %v176, %v122
  %v221 = vmul.f32 %v179, %v122
  %v222 = vmul.f32 %v182, %v122
  %v223 = vmul.f32 %v185, %v122
  %v224 = vmul.f32 %v188, %v122
  %v225 = vmul.f32 %v191, %v122
  %v226 = vmul.f32 %v194, %v122
  %v227 = vmul.f32 %v197, %v122
  %v228 = vmul.f32 %v200, %v122
  %v229 = vmul.f32 %v203, %v122
  %v230 = vmul.f32 %v206, %v122
  %v231 = vmul.f32 %v209, %v122
  %v232 = vmul.f32 %v212, %v122
  %v233 = vmul.f32 %v215, %v122
  %v234 = vmul.f32 %v218, %v122
  %v235 = vadd.f32 %v219, 1e-05
  %v236 = vadd.f32 %v220, 1e-05
  %v237 = vadd.f32 %v221, 1e-05
  %v238 = vadd.f32 %v222, 1e-05
  %v239 = vadd.f32 %v223, 1e-05
  %v240 = vadd.f32 %v224, 1e-05
  %v241 = vadd.f32 %v225, 1e-05
  %v242 = vadd.f32 %v226, 1e-05
  %v243 = vadd.f32 %v227, 1e-05
  %v244 = vadd.f32 %v228, 1e-05
  %v245 = vadd.f32 %v229, 1e-05
  %v246 = vadd.f32 %v230, 1e-05
  %v247 = vadd.f32 %v231, 1e-05
  %v248 = vadd.f32 %v232, 1e-05
  %v249 = vadd.f32 %v233, 1e-05
  %v250 = vadd.f32 %v234, 1e-05
  %v251 = vrsqrt.pop %v235
  %v252 = vrsqrt.pop %v236
  %v253 = vrsqrt.pop %v237
  %v254 = vrsqrt.pop %v238
  %v255 = vrsqrt.pop %v239
  %v256 = vrsqrt.pop %v240
  %v257 = vrsqrt.pop %v241
  %v258 = vrsqrt.pop %v242
  %v259 = vrsqrt.pop %v243
  %v260 = vrsqrt.pop %v244
  %v261 = vrsqrt.pop %v245
  %v262 = vrsqrt.pop %v246
  %v263 = vrsqrt.pop %v247
  %v264 = vrsqrt.pop %v248
  %v265 = vrsqrt.pop %v249
  %v266 = vrsqrt.pop %v250
  %v267 = vmul.f32 %v139, %v251
  %v268 = vmul.f32 %v140, %v252
  %v269 = vmul.f32 %v141, %v253
  %v270 = vmul.f32 %v142, %v254
  %v271 = vmul.f32 %v143, %v255
  %v272 = vmul.f32 %v144, %v256
  %v273 = vmul.f32 %v145, %v257
  %v274 = vmul.f32 %v146, %v258
  %v275 = vmul.f32 %v147, %v259
  %v276 = vmul.f32 %v148, %v260
  %v277 = vmul.f32 %v149, %v261
  %v278 = vmul.f32 %v150, %v262
  %v279 = vmul.f32 %v151, %v263
  %v280 = vmul.f32 %v152, %v264
  %v281 = vmul.f32 %v153, %v265
  %v282 = vmul.f32 %v154, %v266
  %v283 = vld [vmem:[%s3] sm:$0x1]
  %v285 = vlaneseq
  %v286 = vshrl.u32 %v285, 7
  %v287 = vsub.s32 0, %v286
  %v288 = vrot.slane %v283, %v287
  %v290 = vmul.f32 %v267, %v288
  %v291 = vmul.f32 %v268, %v288
  %v292 = vmul.f32 %v269, %v288
  %v293 = vmul.f32 %v270, %v288
  %v294 = vmul.f32 %v271, %v288
  %v295 = vmul.f32 %v272, %v288
  %v296 = vmul.f32 %v273, %v288
  %v297 = vmul.f32 %v274, %v288
  %v298 = vmul.f32 %v275, %v288
  %v299 = vmul.f32 %v276, %v288
  %v300 = vmul.f32 %v277, %v288
  %v301 = vmul.f32 %v278, %v288
  %v302 = vmul.f32 %v279, %v288
  %v303 = vmul.f32 %v280, %v288
  %v304 = vmul.f32 %v281, %v288
  %v305 = vmul.f32 %v282, %v288
  %v306 = vld [vmem:[%s4] sm:$0x1]
  %v308 = vlaneseq
  %v309 = vshrl.u32 %v308, 7
  %v310 = vsub.s32 0, %v309
  %v311 = vrot.slane %v306, %v310
  %v313 = vadd.f32 %v290, %v311
  %v314 = vadd.f32 %v291, %v311
  %v315 = vadd.f32 %v292, %v311
  %v316 = vadd.f32 %v293, %v311
  %v317 = vadd.f32 %v294, %v311
  %v318 = vadd.f32 %v295, %v311
  %v319 = vadd.f32 %v296, %v311
  %v320 = vadd.f32 %v297, %v311
  %v321 = vadd.f32 %v298, %v311
  %v322 = vadd.f32 %v299, %v311
  %v323 = vadd.f32 %v300, %v311
  %v324 = vadd.f32 %v301, %v311
  %v325 = vadd.f32 %v302, %v311
  %v326 = vadd.f32 %v303, %v311
  %v327 = vadd.f32 %v304, %v311
  %v328 = vadd.f32 %v305, %v311
  %v329 = vpack.c.bf16 %v314, %v313
  %v330 = vpack.c.bf16 %v316, %v315
  %v331 = vpack.c.bf16 %v318, %v317
  %v332 = vpack.c.bf16 %v320, %v319
  %v333 = vpack.c.bf16 %v322, %v321
  %v334 = vpack.c.bf16 %v324, %v323
  %v335 = vpack.c.bf16 %v326, %v325
  %v336 = vpack.c.bf16 %v328, %v327
  %v337 = vld [vmem:[#allocation2] sm:$0xff]
  %v338 = vld [vmem:[#allocation2 + $0x8] sm:$0xff]
  %v339 = vld [vmem:[#allocation2 + $0x10] sm:$0xff]
  %v340 = vld [vmem:[#allocation2 + $0x18] sm:$0xff]
  %v341 = vld [vmem:[#allocation2 + $0x20] sm:$0xff]
  %v342 = vld [vmem:[#allocation2 + $0x28] sm:$0xff]
  %v343 = vld [vmem:[#allocation2 + $0x30] sm:$0xff]
  %v344 = vld [vmem:[#allocation2 + $0x38] sm:$0xff]
  %v345 = vld [vmem:[#allocation2 + $0x40] sm:$0xff]
  %v346 = vld [vmem:[#allocation2 + $0x48] sm:$0xff]
  %v347 = vld [vmem:[#allocation2 + $0x50] sm:$0xff]
  %v348 = vld [vmem:[#allocation2 + $0x58] sm:$0xff]
  %v349 = vld [vmem:[#allocation2 + $0x60] sm:$0xff]
  %v350 = vld [vmem:[#allocation2 + $0x68] sm:$0xff]
  %v351 = vld [vmem:[#allocation2 + $0x70] sm:$0xff]
  %v352 = vld [vmem:[#allocation2 + $0x78] sm:$0xff]
  %v353 = vld [vmem:[%s1] sm:$0xf]
  %v354 = vld [vmem:[%s1 + $0x4] sm:$0xf]
  %v355 = vld [vmem:[%s1 + $0x8] sm:$0xf]
  %v356 = vld [vmem:[%s1 + $0xc] sm:$0xf]
  %v357 = vld [vmem:[%s1 + $0x10] sm:$0xf]
  %v358 = vld [vmem:[%s1 + $0x14] sm:$0xf]
  %v359 = vld [vmem:[%s1 + $0x18] sm:$0xf]
  %v360 = vld [vmem:[%s1 + $0x1c] sm:$0xf]
  %v369 = vunpack.c.l.b16 %v353
  %v370 = vunpack.c.l.b16 %v354
  %v371 = vunpack.c.l.b16 %v355
  %v372 = vunpack.c.l.b16 %v356
  %v373 = vunpack.c.l.b16 %v357
  %v374 = vunpack.c.l.b16 %v358
  %v375 = vunpack.c.l.b16 %v359
  %v376 = vunpack.c.l.b16 %v360
  %v377 = vpack.c.b16 %v370, %v369
  %v378 = vpack.c.b16 %v372, %v371
  %v379 = vpack.c.b16 %v374, %v373
  %v380 = vpack.c.b16 %v376, %v375
  %v386 = vsel %vm73, %v329, 0
  %v389 = vsel %vm73, %v330, 0
  %v392 = vsel %vm73, %v331, 0
  %v395 = vsel %vm73, %v332, 0
  %v398 = vsel %vm73, %v333, 0
  %v401 = vsel %vm73, %v334, 0
  %v404 = vsel %vm73, %v335, 0
  %v407 = vsel %vm73, %v336, 0
  %409 = vmatprep.subr.bf16.mxu0 0
  %410 = vmatpush1.bf16.msra.mxu0 %v377
  %411 = vmatprep.subr.bf16.mxu0 0
  %412 = vmatpush1.bf16.msra.mxu0 %v378
  %413 = vmatprep.subr.bf16.mxu0 0
  %414 = vmatpush1.bf16.msra.mxu0 %v379
  %415 = vmatprep.subr.bf16.mxu0 0
  %416 = vmatpush1.bf16.msra.mxu0 %v380
  %417 = vmatprep.subr.bf16.mxu0 0
  %418 = vmatpush1.bf16.msra.mxu0 0
  %419 = vmatprep.subr.bf16.mxu0 0
  %420 = vmatpush1.bf16.msra.mxu0 0
  %421 = vmatprep.subr.bf16.mxu0 0
  %422 = vmatpush1.bf16.msra.mxu0 0
  %423 = vmatprep.subr.bf16.mxu0 0
  %424 = vmatpush1.bf16.msra.mxu0 0
  %425 = vmatprep.subr.bf16.mxu0 0
  %426 = vmatpush1.bf16.msra.mxu0 0
  %427 = vmatprep.subr.bf16.mxu0 0
  %428 = vmatpush1.bf16.msra.mxu0 0
  %429 = vmatprep.subr.bf16.mxu0 0
  %430 = vmatpush1.bf16.msra.mxu0 0
  %431 = vmatprep.subr.bf16.mxu0 0
  %432 = vmatpush1.bf16.msra.mxu0 0
  %433 = vmatprep.subr.bf16.mxu0 0
  %434 = vmatpush1.bf16.msra.mxu0 0
  %435 = vmatprep.subr.bf16.mxu0 0
  %436 = vmatpush1.bf16.msra.mxu0 0
  %437 = vmatprep.subr.bf16.mxu0 0
  %438 = vmatpush1.bf16.msra.mxu0 0
  %439 = vmatprep.subr.bf16.mxu0 0
  %440 = vmatpush1.bf16.msra.mxu0 0
  %441 = vmatprep.mubr.bf16.mxu0 0
  %442 = vmatmul.mubr.bf16.gmra.mrb[0].mxu0 %v386
  %v443 = vpop.f32.mrb[0].mxu0
  %v444 = vadd.f32 0.0, %v443
  %v445 = vpop.f32.mrb[0].mxu0
  %v446 = vpop.f32.mrb[0].mxu0
  %v447 = vadd.f32 0.0, %v446
  %v448 = vpop.f32.mrb[0].mxu0
  %449 = vmatprep.mubr.bf16.mxu0 0
  %450 = vmatmul.mubr.bf16.gmra.mrb[0].mxu0 %v389
  %v451 = vpop.f32.mrb[0].mxu0
  %v452 = vadd.f32 0.0, %v451
  %v453 = vpop.f32.mrb[0].mxu0
  %v454 = vpop.f32.mrb[0].mxu0
  %v455 = vadd.f32 0.0, %v454
  %v456 = vpop.f32.mrb[0].mxu0
  %457 = vmatprep.mubr.bf16.mxu0 0
  %458 = vmatmul.mubr.bf16.gmra.mrb[0].mxu0 %v392
  %v459 = vpop.f32.mrb[0].mxu0
  %v460 = vadd.f32 0.0, %v459
  %v461 = vpop.f32.mrb[0].mxu0
  %v462 = vpop.f32.mrb[0].mxu0
  %v463 = vadd.f32 0.0, %v462
  %v464 = vpop.f32.mrb[0].mxu0
  %465 = vmatprep.mubr.bf16.mxu0 0
  %466 = vmatmul.mubr.bf16.gmra.mrb[0].mxu0 %v395
  %v467 = vpop.f32.mrb[0].mxu0
  %v468 = vadd.f32 0.0, %v467
  %v469 = vpop.f32.mrb[0].mxu0
  %v470 = vpop.f32.mrb[0].mxu0
  %v471 = vadd.f32 0.0, %v470
  %v472 = vpop.f32.mrb[0].mxu0
  %473 = vmatprep.mubr.bf16.mxu0 0
  %474 = vmatmul.mubr.bf16.gmra.mrb[0].mxu0 %v398
  %v475 = vpop.f32.mrb[0].mxu0
  %v476 = vadd.f32 0.0, %v475
  %v477 = vpop.f32.mrb[0].mxu0
  %v478 = vpop.f32.mrb[0].mxu0
  %v479 = vadd.f32 0.0, %v478
  %v480 = vpop.f32.mrb[0].mxu0
  %481 = vmatprep.mubr.bf16.mxu0 0
  %482 = vmatmul.mubr.bf16.gmra.mrb[0].mxu0 %v401
  %v483 = vpop.f32.mrb[0].mxu0
  %v484 = vadd.f32 0.0, %v483
  %v485 = vpop.f32.mrb[0].mxu0
  %v486 = vpop.f32.mrb[0].mxu0
  %v487 = vadd.f32 0.0, %v486
  %v488 = vpop.f32.mrb[0].mxu0
  %489 = vmatprep.mubr.bf16.mxu0 0
  %490 = vmatmul.mubr.bf16.gmra.mrb[0].mxu0 %v404
  %v491 = vpop.f32.mrb[0].mxu0
  %v492 = vadd.f32 0.0, %v491
  %v493 = vpop.f32.mrb[0].mxu0
  %v494 = vpop.f32.mrb[0].mxu0
  %v495 = vadd.f32 0.0, %v494
  %v496 = vpop.f32.mrb[0].mxu0
  %497 = vmatprep.mubr.bf16.mxu0 0
  %498 = vmatmul.mubr.bf16.gmra.mrb[0].mxu0 %v407
  %v499 = vpop.f32.mrb[0].mxu0
  %v500 = vadd.f32 0.0, %v499
  %v501 = vpop.f32.mrb[0].mxu0
  %v502 = vpop.f32.mrb[0].mxu0
  %v503 = vadd.f32 0.0, %v502
  %v504 = vpop.f32.mrb[0].mxu0
  %505 = vdwg.mxu0
  %v506 = vadd.f32 %v337, %v444
  %v507 = vadd.f32 %v338, %v447
  %v508 = vadd.f32 %v339, %v452
  %v509 = vadd.f32 %v340, %v455
  %v510 = vadd.f32 %v341, %v460
  %v511 = vadd.f32 %v342, %v463
  %v512 = vadd.f32 %v343, %v468
  %v513 = vadd.f32 %v344, %v471
  %v514 = vadd.f32 %v345, %v476
  %v515 = vadd.f32 %v346, %v479
  %v516 = vadd.f32 %v347, %v484
  %v517 = vadd.f32 %v348, %v487
  %v518 = vadd.f32 %v349, %v492
  %v519 = vadd.f32 %v350, %v495
  %v520 = vadd.f32 %v351, %v500
  %v521 = vadd.f32 %v352, %v503
  %522 = vst [vmem:[#allocation2] sm:$0xff] %v506
  %523 = vst [vmem:[#allocation2 + $0x8] sm:$0xff] %v507
  %524 = vst [vmem:[#allocation2 + $0x10] sm:$0xff] %v508
  %525 = vst [vmem:[#allocation2 + $0x18] sm:$0xff] %v509
  %526 = vst [vmem:[#allocation2 + $0x20] sm:$0xff] %v510
  %527 = vst [vmem:[#allocation2 + $0x28] sm:$0xff] %v511
  %528 = vst [vmem:[#allocation2 + $0x30] sm:$0xff] %v512
  %529 = vst [vmem:[#allocation2 + $0x38] sm:$0xff] %v513
  %530 = vst [vmem:[#allocation2 + $0x40] sm:$0xff] %v514
  %531 = vst [vmem:[#allocation2 + $0x48] sm:$0xff] %v515
  %532 = vst [vmem:[#allocation2 + $0x50] sm:$0xff] %v516
  %533 = vst [vmem:[#allocation2 + $0x58] sm:$0xff] %v517
  %534 = vst [vmem:[#allocation2 + $0x60] sm:$0xff] %v518
  %535 = vst [vmem:[#allocation2 + $0x68] sm:$0xff] %v519
  %536 = vst [vmem:[#allocation2 + $0x70] sm:$0xff] %v520
  %537 = vst [vmem:[#allocation2 + $0x78] sm:$0xff] %v521
  // Predicated region
  $region26: #{videogpt_forward.18} parent=0 // pred_check
    %p538 = pneg %p21
  $region27: #{videogpt_forward.18} parent=0 // pred_check_branch
    %540 = sbr.rel (%p538) target = $region29
  $region28: #{videogpt_forward.18} parent=0 // pred_region
    %v541 = vld [vmem:[#allocation2] sm:$0xff]
    %v542 = vld [vmem:[#allocation2 + $0x8] sm:$0xff]
    %v543 = vld [vmem:[#allocation2 + $0x10] sm:$0xff]
    %v544 = vld [vmem:[#allocation2 + $0x18] sm:$0xff]
    %v545 = vld [vmem:[#allocation2 + $0x20] sm:$0xff]
    %v546 = vld [vmem:[#allocation2 + $0x28] sm:$0xff]
    %v547 = vld [vmem:[#allocation2 + $0x30] sm:$0xff]
    %v548 = vld [vmem:[#allocation2 + $0x38] sm:$0xff]
    %v549 = vld [vmem:[#allocation2 + $0x40] sm:$0xff]
    %v550 = vld [vmem:[#allocation2 + $0x48] sm:$0xff]
    %v551 = vld [vmem:[#allocation2 + $0x50] sm:$0xff]
    %v552 = vld [vmem:[#allocation2 + $0x58] sm:$0xff]
    %v553 = vld [vmem:[#allocation2 + $0x60] sm:$0xff]
    %v554 = vld [vmem:[#allocation2 + $0x68] sm:$0xff]
    %v555 = vld [vmem:[#allocation2 + $0x70] sm:$0xff]
    %v556 = vld [vmem:[#allocation2 + $0x78] sm:$0xff]
    %v557 = vld [vmem:[%s2] sm:$0x1]
    %v559 = vlaneseq
    %v560 = vshrl.u32 %v559, 7
    %v561 = vsub.s32 0, %v560
    %v562 = vrot.slane %v557, %v561
    %v564 = vadd.f32 %v541, %v562
    %v565 = vadd.f32 %v542, %v562
    %v566 = vadd.f32 %v543, %v562
    %v567 = vadd.f32 %v544, %v562
    %v568 = vadd.f32 %v545, %v562
    %v569 = vadd.f32 %v546, %v562
    %v570 = vadd.f32 %v547, %v562
    %v571 = vadd.f32 %v548, %v562
    %v572 = vadd.f32 %v549, %v562
    %v573 = vadd.f32 %v550, %v562
    %v574 = vadd.f32 %v551, %v562
    %v575 = vadd.f32 %v552, %v562
    %v576 = vadd.f32 %v553, %v562
    %v577 = vadd.f32 %v554, %v562
    %v578 = vadd.f32 %v555, %v562
    %v579 = vadd.f32 %v556, %v562
    %v580 = vmul.f32 %v564, %v564
    %v581 = vmul.f32 %v565, %v565
    %v582 = vmul.f32 %v566, %v566
    %v583 = vmul.f32 %v567, %v567
    %v584 = vmul.f32 %v568, %v568
    %v585 = vmul.f32 %v569, %v569
    %v586 = vmul.f32 %v570, %v570
    %v587 = vmul.f32 %v571, %v571
    %v588 = vmul.f32 %v572, %v572
    %v589 = vmul.f32 %v573, %v573
    %v590 = vmul.f32 %v574, %v574
    %v591 = vmul.f32 %v575, %v575
    %v592 = vmul.f32 %v576, %v576
    %v593 = vmul.f32 %v577, %v577
    %v594 = vmul.f32 %v578, %v578
    %v595 = vmul.f32 %v579, %v579
    %v596 = vmul.f32 %v564, %v580
    %v597 = vmul.f32 %v565, %v581
    %v598 = vmul.f32 %v566, %v582
    %v599 = vmul.f32 %v567, %v583
    %v600 = vmul.f32 %v568, %v584
    %v601 = vmul.f32 %v569, %v585
    %v602 = vmul.f32 %v570, %v586
    %v603 = vmul.f32 %v571, %v587
    %v604 = vmul.f32 %v572, %v588
    %v605 = vmul.f32 %v573, %v589
    %v606 = vmul.f32 %v574, %v590
    %v607 = vmul.f32 %v575, %v591
    %v608 = vmul.f32 %v576, %v592
    %v609 = vmul.f32 %v577, %v593
    %v610 = vmul.f32 %v578, %v594
    %v611 = vmul.f32 %v579, %v595
    %v612 = vmul.f32 %v596, 0.044715
    %v613 = vmul.f32 %v597, 0.044715
    %v614 = vmul.f32 %v598, 0.044715
    %v615 = vmul.f32 %v599, 0.044715
    %v616 = vmul.f32 %v600, 0.044715
    %v617 = vmul.f32 %v601, 0.044715
    %v618 = vmul.f32 %v602, 0.044715
    %v619 = vmul.f32 %v603, 0.044715
    %v620 = vmul.f32 %v604, 0.044715
    %v621 = vmul.f32 %v605, 0.044715
    %v622 = vmul.f32 %v606, 0.044715
    %v623 = vmul.f32 %v607, 0.044715
    %v624 = vmul.f32 %v608, 0.044715
    %v625 = vmul.f32 %v609, 0.044715
    %v626 = vmul.f32 %v610, 0.044715
    %v627 = vmul.f32 %v611, 0.044715
    %v628 = vadd.f32 %v564, %v612
    %v629 = vadd.f32 %v565, %v613
    %v630 = vadd.f32 %v566, %v614
    %v631 = vadd.f32 %v567, %v615
    %v632 = vadd.f32 %v568, %v616
    %v633 = vadd.f32 %v569, %v617
    %v634 = vadd.f32 %v570, %v618
    %v635 = vadd.f32 %v571, %v619
    %v636 = vadd.f32 %v572, %v620
    %v637 = vadd.f32 %v573, %v621
    %v638 = vadd.f32 %v574, %v622
    %v639 = vadd.f32 %v575, %v623
    %v640 = vadd.f32 %v576, %v624
    %v641 = vadd.f32 %v577, %v625
    %v642 = vadd.f32 %v578, %v626
    %v643 = vadd.f32 %v579, %v627
    %v644 = vmul.f32 %v628, 0.7978846
    %v645 = vmul.f32 %v629, 0.7978846
    %v646 = vmul.f32 %v630, 0.7978846
    %v647 = vmul.f32 %v631, 0.7978846
    %v648 = vmul.f32 %v632, 0.7978846
    %v649 = vmul.f32 %v633, 0.7978846
    %v650 = vmul.f32 %v634, 0.7978846
    %v651 = vmul.f32 %v635, 0.7978846
    %v652 = vmul.f32 %v636, 0.7978846
    %v653 = vmul.f32 %v637, 0.7978846
    %v654 = vmul.f32 %v638, 0.7978846
    %v655 = vmul.f32 %v639, 0.7978846
    %v656 = vmul.f32 %v640, 0.7978846
    %v657 = vmul.f32 %v641, 0.7978846
    %v658 = vmul.f32 %v642, 0.7978846
    %v659 = vmul.f32 %v643, 0.7978846
    %v660 = vtanh.pop %v644
    %v661 = vtanh.pop %v645
    %v662 = vtanh.pop %v646
    %v663 = vtanh.pop %v647
    %v664 = vtanh.pop %v648
    %v665 = vtanh.pop %v649
    %v666 = vtanh.pop %v650
    %v667 = vtanh.pop %v651
    %v668 = vtanh.pop %v652
    %v669 = vtanh.pop %v653
    %v670 = vtanh.pop %v654
    %v671 = vtanh.pop %v655
    %v672 = vtanh.pop %v656
    %v673 = vtanh.pop %v657
    %v674 = vtanh.pop %v658
    %v675 = vtanh.pop %v659
    %v676 = vadd.f32 %v660, 1.0
    %v677 = vadd.f32 %v661, 1.0
    %v678 = vadd.f32 %v662, 1.0
    %v679 = vadd.f32 %v663, 1.0
    %v680 = vadd.f32 %v664, 1.0
    %v681 = vadd.f32 %v665, 1.0
    %v682 = vadd.f32 %v666, 1.0
    %v683 = vadd.f32 %v667, 1.0
    %v684 = vadd.f32 %v668, 1.0
    %v685 = vadd.f32 %v669, 1.0
    %v686 = vadd.f32 %v670, 1.0
    %v687 = vadd.f32 %v671, 1.0
    %v688 = vadd.f32 %v672, 1.0
    %v689 = vadd.f32 %v673, 1.0
    %v690 = vadd.f32 %v674, 1.0
    %v691 = vadd.f32 %v675, 1.0
    %v692 = vmul.f32 %v676, 0.5
    %v693 = vmul.f32 %v677, 0.5
    %v694 = vmul.f32 %v678, 0.5
    %v695 = vmul.f32 %v679, 0.5
    %v696 = vmul.f32 %v680, 0.5
    %v697 = vmul.f32 %v681, 0.5
    %v698 = vmul.f32 %v682, 0.5
    %v699 = vmul.f32 %v683, 0.5
    %v700 = vmul.f32 %v684, 0.5
    %v701 = vmul.f32 %v685, 0.5
    %v702 = vmul.f32 %v686, 0.5
    %v703 = vmul.f32 %v687, 0.5
    %v704 = vmul.f32 %v688, 0.5
    %v705 = vmul.f32 %v689, 0.5
    %v706 = vmul.f32 %v690, 0.5
    %v707 = vmul.f32 %v691, 0.5
    %v708 = vmul.f32 %v564, %v692
    %v709 = vmul.f32 %v565, %v693
    %v710 = vmul.f32 %v566, %v694
    %v711 = vmul.f32 %v567, %v695
    %v712 = vmul.f32 %v568, %v696
    %v713 = vmul.f32 %v569, %v697
    %v714 = vmul.f32 %v570, %v698
    %v715 = vmul.f32 %v571, %v699
    %v716 = vmul.f32 %v572, %v700
    %v717 = vmul.f32 %v573, %v701
    %v718 = vmul.f32 %v574, %v702
    %v719 = vmul.f32 %v575, %v703
    %v720 = vmul.f32 %v576, %v704
    %v721 = vmul.f32 %v577, %v705
    %v722 = vmul.f32 %v578, %v706
    %v723 = vmul.f32 %v579, %v707
    %v724 = vpack.c.bf16 %v709, %v708
    %v725 = vpack.c.bf16 %v711, %v710
    %v726 = vpack.c.bf16 %v713, %v712
    %v727 = vpack.c.bf16 %v715, %v714
    %v728 = vpack.c.bf16 %v717, %v716
    %v729 = vpack.c.bf16 %v719, %v718
    %v730 = vpack.c.bf16 %v721, %v720
    %v731 = vpack.c.bf16 %v723, %v722
    %v740 = vunpack.c.l.b16 %v724
    %v741 = vunpack.c.h.b16 %v724
    %v742 = vunpack.c.l.b16 %v725
    %v743 = vunpack.c.h.b16 %v725
    %v744 = vunpack.c.l.b16 %v726
    %v745 = vunpack.c.h.b16 %v726
    %v746 = vunpack.c.l.b16 %v727
    %v747 = vunpack.c.h.b16 %v727
    %v748 = vunpack.c.l.b16 %v728
    %v749 = vunpack.c.h.b16 %v728
    %v750 = vunpack.c.l.b16 %v729
    %v751 = vunpack.c.h.b16 %v729
    %v752 = vunpack.c.l.b16 %v730
    %v753 = vunpack.c.h.b16 %v730
    %v754 = vunpack.c.l.b16 %v731
    %v755 = vunpack.c.h.b16 %v731
    %v756 = vpack.c.b16 %v740, %v740
    %v757 = vpack.c.b16 %v741, %v741
    %v758 = vpack.c.b16 %v742, %v742
    %v759 = vpack.c.b16 %v743, %v743
    %v760 = vpack.c.b16 %v744, %v744
    %v761 = vpack.c.b16 %v745, %v745
    %v762 = vpack.c.b16 %v746, %v746
    %v763 = vpack.c.b16 %v747, %v747
    %v764 = vpack.c.b16 %v748, %v748
    %v765 = vpack.c.b16 %v749, %v749
    %v766 = vpack.c.b16 %v750, %v750
    %v767 = vpack.c.b16 %v751, %v751
    %v768 = vpack.c.b16 %v752, %v752
    %v769 = vpack.c.b16 %v753, %v753
    %v770 = vpack.c.b16 %v754, %v754
    %v771 = vpack.c.b16 %v755, %v755
    %788 = vst [vmem:[%s5] sm:$0xf] %v756
    %789 = vst [vmem:[%s5 + $0x4] sm:$0xf] %v757
    %790 = vst [vmem:[%s5 + $0x8] sm:$0xf] %v758
    %791 = vst [vmem:[%s5 + $0xc] sm:$0xf] %v759
    %792 = vst [vmem:[%s5 + $0x10] sm:$0xf] %v760
    %793 = vst [vmem:[%s5 + $0x14] sm:$0xf] %v761
    %794 = vst [vmem:[%s5 + $0x18] sm:$0xf] %v762
    %795 = vst [vmem:[%s5 + $0x1c] sm:$0xf] %v763
    %796 = vst [vmem:[%s5 + $0x20] sm:$0xf] %v764
    %797 = vst [vmem:[%s5 + $0x24] sm:$0xf] %v765
    %798 = vst [vmem:[%s5 + $0x28] sm:$0xf] %v766
    %799 = vst [vmem:[%s5 + $0x2c] sm:$0xf] %v767
    %800 = vst [vmem:[%s5 + $0x30] sm:$0xf] %v768
    %801 = vst [vmem:[%s5 + $0x34] sm:$0xf] %v769
    %802 = vst [vmem:[%s5 + $0x38] sm:$0xf] %v770
    %803 = vst [vmem:[%s5 + $0x3c] sm:$0xf] %v771
  $region29: #{videogpt_forward.18} parent=0 // pred_fallthru
    _
  // Predicated region
  $region30: #{videogpt_forward.18} parent=0 // pred_check
    _
  $region31: #{videogpt_forward.18} parent=0 // pred_check_branch
    %805 = sbr.rel (0) target = $region33
  $region32: #{videogpt_forward.18} parent=0 // pred_region
    _
  $region33: #{videogpt_forward.18} parent=0 // pred_fallthru
    _
  // Predicated region
  $region34: #{videogpt_forward.18} parent=0 // pred_check
    _
  $region35: #{videogpt_forward.18} parent=0 // pred_check_branch
    %807 = sbr.rel (0) target = $region37
  $region36: #{videogpt_forward.18} parent=0 // pred_region
    _
  $region37: #{videogpt_forward.18} parent=0 // pred_fallthru
    _

// kernel: videogpt_forward.25
$region0: #{videogpt_forward.25}
  #allocation0 [shape = 'u32[]', space=smem, size = 0x4, offset = 0x4, fixed_abs, tag = 'smem constant byte address 0x4 - core index']
  #allocation1 [shape = 'u32[144,128]{1,0:T(1,128)}', space=vmem, size = 0x12000, scoped, tag = 'internal scratch']
  #allocation2 [shape = 'f32[128,128]{1,0:T(8,128)}', space=vmem, size = 0x10000, scoped, tag = 'scratch operand']
  %s0 = inlined_call_operand.vmem [shape: bf16[128,64], index: 0, kind: input, shape index: {}]
  %s1 = inlined_call_operand.vmem [shape: bf16[64,128], index: 1, kind: input, shape index: {}]
  %s2 = inlined_call_operand.vmem [shape: f32[1,128], index: 2, kind: input, shape index: {}]
  %s3 = inlined_call_operand.vmem [shape: f32[1,64], index: 3, kind: input, shape index: {}]
  %s4 = inlined_call_operand.vmem [shape: f32[1,64], index: 4, kind: input, shape index: {}]
  %s5 = inlined_call_operand.hbm [shape: f32[128,128], index: 5, kind: output, shape index: {}]
  %s6 = sld [smem:[#allocation0]]
  $region38: #{videogpt_forward.25} parent=0
    _
  %s8 = ssub.s32 1, %s6
  %s9 = scalar_select 0, %s8, %s6
  $region1: #{videogpt_forward.25} parent=0
    #allocation3 [shape = 'u8[65536]{0}', space=vmem, size = 0x10000, scoped, tag = 'output window, operand 0, single buffered']
    #allocation4 [shape = 's32[1]{0}', space=sflag, size = 0x4, scoped, tag = 'scoped memory for videogpt_forward.25']
    %10 = vsyncpa [#allocation4], 0
    // Predicated region
    $region2: #{videogpt_forward.25} parent=1 // pred_check
      _
    $region3: #{videogpt_forward.25} parent=1 // pred_check_branch
      %12 = sbr.rel (0) target = $region5
    $region4: #{videogpt_forward.25} parent=1 // pred_region
      _
    $region5: #{videogpt_forward.25} parent=1 // pred_fallthru
      _
    // Predicated region
    $region6: #{videogpt_forward.25} parent=1 // pred_check
      _
    $region7: #{videogpt_forward.25} parent=1 // pred_check_branch
      %14 = sbr.rel (0) target = $region9
    $region8: #{videogpt_forward.25} parent=1 // pred_region
      _
    $region9: #{videogpt_forward.25} parent=1 // pred_fallthru
      _
    // Predicated region
    $region10: #{videogpt_forward.25} parent=1 // pred_check
      _
    $region11: #{videogpt_forward.25} parent=1 // pred_check_branch
      %16 = sbr.rel (0) target = $region13
    $region12: #{videogpt_forward.25} parent=1 // pred_region
      _
    $region13: #{videogpt_forward.25} parent=1 // pred_fallthru
      _
    // Predicated region
    $region14: #{videogpt_forward.25} parent=1 // pred_check
      _
    $region15: #{videogpt_forward.25} parent=1 // pred_check_branch
      %18 = sbr.rel (0) target = $region17
    $region16: #{videogpt_forward.25} parent=1 // pred_region
      _
    $region17: #{videogpt_forward.25} parent=1 // pred_fallthru
      _
    // Predicated region
    $region18: #{videogpt_forward.25} parent=1 // pred_check
      _
    $region19: #{videogpt_forward.25} parent=1 // pred_check_branch
      %20 = sbr.rel (0) target = $region21
    $region20: #{videogpt_forward.25} parent=1 // pred_region
      _
    $region21: #{videogpt_forward.25} parent=1 // pred_fallthru
      _
    %p22 = scmp.eq.s32.totalorder 0, 0
    // Predicated region
    $region22: #{videogpt_forward.25} parent=1 // pred_check
      %p23 = pneg %p22
    $region23: #{videogpt_forward.25} parent=1 // pred_check_branch
      %25 = sbr.rel (%p23) target = $region25
    $region24: #{videogpt_forward.25} parent=1 // pred_region
      %26 = vst [vmem:[#allocation2] sm:$0xff] 0.0
      %27 = vst [vmem:[#allocation2 + $0x8] sm:$0xff] 0.0
      %28 = vst [vmem:[#allocation2 + $0x10] sm:$0xff] 0.0
      %29 = vst [vmem:[#allocation2 + $0x18] sm:$0xff] 0.0
      %30 = vst [vmem:[#allocation2 + $0x20] sm:$0xff] 0.0
      %31 = vst [vmem:[#allocation2 + $0x28] sm:$0xff] 0.0
      %32 = vst [vmem:[#allocation2 + $0x30] sm:$0xff] 0.0
      %33 = vst [vmem:[#allocation2 + $0x38] sm:$0xff] 0.0
      %34 = vst [vmem:[#allocation2 + $0x40] sm:$0xff] 0.0
      %35 = vst [vmem:[#allocation2 + $0x48] sm:$0xff] 0.0
      %36 = vst [vmem:[#allocation2 + $0x50] sm:$0xff] 0.0
      %37 = vst [vmem:[#allocation2 + $0x58] sm:$0xff] 0.0
      %38 = vst [vmem:[#allocation2 + $0x60] sm:$0xff] 0.0
      %39 = vst [vmem:[#allocation2 + $0x68] sm:$0xff] 0.0
      %40 = vst [vmem:[#allocation2 + $0x70] sm:$0xff] 0.0
      %41 = vst [vmem:[#allocation2 + $0x78] sm:$0xff] 0.0
    $region25: #{videogpt_forward.25} parent=1 // pred_fallthru
      _
    %v42 = vld [vmem:[%s0] sm:$0xf]
    %v43 = vld [vmem:[%s0 + $0x4] sm:$0xf]
    %v44 = vld [vmem:[%s0 + $0x8] sm:$0xf]
    %v45 = vld [vmem:[%s0 + $0xc] sm:$0xf]
    %v46 = vld [vmem:[%s0 + $0x10] sm:$0xf]
    %v47 = vld [vmem:[%s0 + $0x14] sm:$0xf]
    %v48 = vld [vmem:[%s0 + $0x18] sm:$0xf]
    %v49 = vld [vmem:[%s0 + $0x1c] sm:$0xf]
    %v50 = vld [vmem:[%s0 + $0x20] sm:$0xf]
    %v51 = vld [vmem:[%s0 + $0x24] sm:$0xf]
    %v52 = vld [vmem:[%s0 + $0x28] sm:$0xf]
    %v53 = vld [vmem:[%s0 + $0x2c] sm:$0xf]
    %v54 = vld [vmem:[%s0 + $0x30] sm:$0xf]
    %v55 = vld [vmem:[%s0 + $0x34] sm:$0xf]
    %v56 = vld [vmem:[%s0 + $0x38] sm:$0xf]
    %v57 = vld [vmem:[%s0 + $0x3c] sm:$0xf]
    %v58 = vunpack.c.l.bf16 %v42
    %v59 = vunpack.c.l.bf16 %v43
    %v60 = vunpack.c.l.bf16 %v44
    %v61 = vunpack.c.l.bf16 %v45
    %v62 = vunpack.c.l.bf16 %v46
    %v63 = vunpack.c.l.bf16 %v47
    %v64 = vunpack.c.l.bf16 %v48
    %v65 = vunpack.c.l.bf16 %v49
    %v66 = vunpack.c.l.bf16 %v50
    %v67 = vunpack.c.l.bf16 %v51
    %v68 = vunpack.c.l.bf16 %v52
    %v69 = vunpack.c.l.bf16 %v53
    %v70 = vunpack.c.l.bf16 %v54
    %v71 = vunpack.c.l.bf16 %v55
    %v72 = vunpack.c.l.bf16 %v56
    %v73 = vunpack.c.l.bf16 %v57
    %vm74 = vcmask 523264
    %v75 = vsel %vm74, %v58, 0.0
    %76 = vadd.xlane.f32.xlu0 %v75
    %v77 = vpop.xlane.xlu0 %76
    %v78 = vsel %vm74, %v59, 0.0
    %79 = vadd.xlane.f32.xlu0 %v78
    %v80 = vpop.xlane.xlu0 %79
    %v81 = vsel %vm74, %v60, 0.0
    %82 = vadd.xlane.f32.xlu0 %v81
    %v83 = vpop.xlane.xlu0 %82
    %v84 = vsel %vm74, %v61, 0.0
    %85 = vadd.xlane.f32.xlu0 %v84
    %v86 = vpop.xlane.xlu0 %85
    %v87 = vsel %vm74, %v62, 0.0
    %88 = vadd.xlane.f32.xlu0 %v87
    %v89 = vpop.xlane.xlu0 %88
    %v90 = vsel %vm74, %v63, 0.0
    %91 = vadd.xlane.f32.xlu0 %v90
    %v92 = vpop.xlane.xlu0 %91
    %v93 = vsel %vm74, %v64, 0.0
    %94 = vadd.xlane.f32.xlu0 %v93
    %v95 = vpop.xlane.xlu0 %94
    %v96 = vsel %vm74, %v65, 0.0
    %97 = vadd.xlane.f32.xlu0 %v96
    %v98 = vpop.xlane.xlu0 %97
    %v99 = vsel %vm74, %v66, 0.0
    %100 = vadd.xlane.f32.xlu0 %v99
    %v101 = vpop.xlane.xlu0 %100
    %v102 = vsel %vm74, %v67, 0.0
    %103 = vadd.xlane.f32.xlu0 %v102
    %v104 = vpop.xlane.xlu0 %103
    %v105 = vsel %vm74, %v68, 0.0
    %106 = vadd.xlane.f32.xlu0 %v105
    %v107 = vpop.xlane.xlu0 %106
    %v108 = vsel %vm74, %v69, 0.0
    %109 = vadd.xlane.f32.xlu0 %v108
    %v110 = vpop.xlane.xlu0 %109
    %v111 = vsel %vm74, %v70, 0.0
    %112 = vadd.xlane.f32.xlu0 %v111
    %v113 = vpop.xlane.xlu0 %112
    %v114 = vsel %vm74, %v71, 0.0
    %115 = vadd.xlane.f32.xlu0 %v114
    %v116 = vpop.xlane.xlu0 %115
    %v117 = vsel %vm74, %v72, 0.0
    %118 = vadd.xlane.f32.xlu0 %v117
    %v119 = vpop.xlane.xlu0 %118
    %v120 = vsel %vm74, %v73, 0.0
    %121 = vadd.xlane.f32.xlu0 %v120
    %v122 = vpop.xlane.xlu0 %121
    %v123 = vrcp.pop 64.0
    %v124 = vmul.f32 %v77, %v123
    %v125 = vmul.f32 %v80, %v123
    %v126 = vmul.f32 %v83, %v123
    %v127 = vmul.f32 %v86, %v123
    %v128 = vmul.f32 %v89, %v123
    %v129 = vmul.f32 %v92, %v123
    %v130 = vmul.f32 %v95, %v123
    %v131 = vmul.f32 %v98, %v123
    %v132 = vmul.f32 %v101, %v123
    %v133 = vmul.f32 %v104, %v123
    %v134 = vmul.f32 %v107, %v123
    %v135 = vmul.f32 %v110, %v123
    %v136 = vmul.f32 %v113, %v123
    %v137 = vmul.f32 %v116, %v123
    %v138 = vmul.f32 %v119, %v123
    %v139 = vmul.f32 %v122, %v123
    %v140 = vsub.f32 %v58, %v124
    %v141 = vsub.f32 %v59, %v125
    %v142 = vsub.f32 %v60, %v126
    %v143 = vsub.f32 %v61, %v127
    %v144 = vsub.f32 %v62, %v128
    %v145 = vsub.f32 %v63, %v129
    %v146 = vsub.f32 %v64, %v130
    %v147 = vsub.f32 %v65, %v131
    %v148 = vsub.f32 %v66, %v132
    %v149 = vsub.f32 %v67, %v133
    %v150 = vsub.f32 %v68, %v134
    %v151 = vsub.f32 %v69, %v135
    %v152 = vsub.f32 %v70, %v136
    %v153 = vsub.f32 %v71, %v137
    %v154 = vsub.f32 %v72, %v138
    %v155 = vsub.f32 %v73, %v139
    %v156 = vmul.f32 %v140, %v140
    %v157 = vmul.f32 %v141, %v141
    %v158 = vmul.f32 %v142, %v142
    %v159 = vmul.f32 %v143, %v143
    %v160 = vmul.f32 %v144, %v144
    %v161 = vmul.f32 %v145, %v145
    %v162 = vmul.f32 %v146, %v146
    %v163 = vmul.f32 %v147, %v147
    %v164 = vmul.f32 %v148, %v148
    %v165 = vmul.f32 %v149, %v149
    %v166 = vmul.f32 %v150, %v150
    %v167 = vmul.f32 %v151, %v151
    %v168 = vmul.f32 %v152, %v152
    %v169 = vmul.f32 %v153, %v153
    %v170 = vmul.f32 %v154, %v154
    %v171 = vmul.f32 %v155, %v155
    %v172 = vsel %vm74, %v156, 0.0
    %173 = vadd.xlane.f32.xlu0 %v172
    %v174 = vpop.xlane.xlu0 %173
    %v175 = vsel %vm74, %v157, 0.0
    %176 = vadd.xlane.f32.xlu0 %v175
    %v177 = vpop.xlane.xlu0 %176
    %v178 = vsel %vm74, %v158, 0.0
    %179 = vadd.xlane.f32.xlu0 %v178
    %v180 = vpop.xlane.xlu0 %179
    %v181 = vsel %vm74, %v159, 0.0
    %182 = vadd.xlane.f32.xlu0 %v181
    %v183 = vpop.xlane.xlu0 %182
    %v184 = vsel %vm74, %v160, 0.0
    %185 = vadd.xlane.f32.xlu0 %v184
    %v186 = vpop.xlane.xlu0 %185
    %v187 = vsel %vm74, %v161, 0.0
    %188 = vadd.xlane.f32.xlu0 %v187
    %v189 = vpop.xlane.xlu0 %188
    %v190 = vsel %vm74, %v162, 0.0
    %191 = vadd.xlane.f32.xlu0 %v190
    %v192 = vpop.xlane.xlu0 %191
    %v193 = vsel %vm74, %v163, 0.0
    %194 = vadd.xlane.f32.xlu0 %v193
    %v195 = vpop.xlane.xlu0 %194
    %v196 = vsel %vm74, %v164, 0.0
    %197 = vadd.xlane.f32.xlu0 %v196
    %v198 = vpop.xlane.xlu0 %197
    %v199 = vsel %vm74, %v165, 0.0
    %200 = vadd.xlane.f32.xlu0 %v199
    %v201 = vpop.xlane.xlu0 %200
    %v202 = vsel %vm74, %v166, 0.0
    %203 = vadd.xlane.f32.xlu0 %v202
    %v204 = vpop.xlane.xlu0 %203
    %v205 = vsel %vm74, %v167, 0.0
    %206 = vadd.xlane.f32.xlu0 %v205
    %v207 = vpop.xlane.xlu0 %206
    %v208 = vsel %vm74, %v168, 0.0
    %209 = vadd.xlane.f32.xlu0 %v208
    %v210 = vpop.xlane.xlu0 %209
    %v211 = vsel %vm74, %v169, 0.0
    %212 = vadd.xlane.f32.xlu0 %v211
    %v213 = vpop.xlane.xlu0 %212
    %v214 = vsel %vm74, %v170, 0.0
    %215 = vadd.xlane.f32.xlu0 %v214
    %v216 = vpop.xlane.xlu0 %215
    %v217 = vsel %vm74, %v171, 0.0
    %218 = vadd.xlane.f32.xlu0 %v217
    %v219 = vpop.xlane.xlu0 %218
    %v220 = vmul.f32 %v174, %v123
    %v221 = vmul.f32 %v177, %v123
    %v222 = vmul.f32 %v180, %v123
    %v223 = vmul.f32 %v183, %v123
    %v224 = vmul.f32 %v186, %v123
    %v225 = vmul.f32 %v189, %v123
    %v226 = vmul.f32 %v192, %v123
    %v227 = vmul.f32 %v195, %v123
    %v228 = vmul.f32 %v198, %v123
    %v229 = vmul.f32 %v201, %v123
    %v230 = vmul.f32 %v204, %v123
    %v231 = vmul.f32 %v207, %v123
    %v232 = vmul.f32 %v210, %v123
    %v233 = vmul.f32 %v213, %v123
    %v234 = vmul.f32 %v216, %v123
    %v235 = vmul.f32 %v219, %v123
    %v236 = vadd.f32 %v220, 1e-05
    %v237 = vadd.f32 %v221, 1e-05
    %v238 = vadd.f32 %v222, 1e-05
    %v239 = vadd.f32 %v223, 1e-05
    %v240 = vadd.f32 %v224, 1e-05
    %v241 = vadd.f32 %v225, 1e-05
    %v242 = vadd.f32 %v226, 1e-05
    %v243 = vadd.f32 %v227, 1e-05
    %v244 = vadd.f32 %v228, 1e-05
    %v245 = vadd.f32 %v229, 1e-05
    %v246 = vadd.f32 %v230, 1e-05
    %v247 = vadd.f32 %v231, 1e-05
    %v248 = vadd.f32 %v232, 1e-05
    %v249 = vadd.f32 %v233, 1e-05
    %v250 = vadd.f32 %v234, 1e-05
    %v251 = vadd.f32 %v235, 1e-05
    %v252 = vrsqrt.pop %v236
    %v253 = vrsqrt.pop %v237
    %v254 = vrsqrt.pop %v238
    %v255 = vrsqrt.pop %v239
    %v256 = vrsqrt.pop %v240
    %v257 = vrsqrt.pop %v241
    %v258 = vrsqrt.pop %v242
    %v259 = vrsqrt.pop %v243
    %v260 = vrsqrt.pop %v244
    %v261 = vrsqrt.pop %v245
    %v262 = vrsqrt.pop %v246
    %v263 = vrsqrt.pop %v247
    %v264 = vrsqrt.pop %v248
    %v265 = vrsqrt.pop %v249
    %v266 = vrsqrt.pop %v250
    %v267 = vrsqrt.pop %v251
    %v268 = vmul.f32 %v140, %v252
    %v269 = vmul.f32 %v141, %v253
    %v270 = vmul.f32 %v142, %v254
    %v271 = vmul.f32 %v143, %v255
    %v272 = vmul.f32 %v144, %v256
    %v273 = vmul.f32 %v145, %v257
    %v274 = vmul.f32 %v146, %v258
    %v275 = vmul.f32 %v147, %v259
    %v276 = vmul.f32 %v148, %v260
    %v277 = vmul.f32 %v149, %v261
    %v278 = vmul.f32 %v150, %v262
    %v279 = vmul.f32 %v151, %v263
    %v280 = vmul.f32 %v152, %v264
    %v281 = vmul.f32 %v153, %v265
    %v282 = vmul.f32 %v154, %v266
    %v283 = vmul.f32 %v155, %v267
    %v284 = vld [vmem:[%s3] sm:$0x1]
    %v286 = vlaneseq
    %v287 = vshrl.u32 %v286, 7
    %v288 = vsub.s32 0, %v287
    %v289 = vrot.slane %v284, %v288
    %v291 = vmul.f32 %v268, %v289
    %v292 = vmul.f32 %v269, %v289
    %v293 = vmul.f32 %v270, %v289
    %v294 = vmul.f32 %v271, %v289
    %v295 = vmul.f32 %v272, %v289
    %v296 = vmul.f32 %v273, %v289
    %v297 = vmul.f32 %v274, %v289
    %v298 = vmul.f32 %v275, %v289
    %v299 = vmul.f32 %v276, %v289
    %v300 = vmul.f32 %v277, %v289
    %v301 = vmul.f32 %v278, %v289
    %v302 = vmul.f32 %v279, %v289
    %v303 = vmul.f32 %v280, %v289
    %v304 = vmul.f32 %v281, %v289
    %v305 = vmul.f32 %v282, %v289
    %v306 = vmul.f32 %v283, %v289
    %v307 = vld [vmem:[%s4] sm:$0x1]
    %v309 = vlaneseq
    %v310 = vshrl.u32 %v309, 7
    %v311 = vsub.s32 0, %v310
    %v312 = vrot.slane %v307, %v311
    %v314 = vadd.f32 %v291, %v312
    %v315 = vadd.f32 %v292, %v312
    %v316 = vadd.f32 %v293, %v312
    %v317 = vadd.f32 %v294, %v312
    %v318 = vadd.f32 %v295, %v312
    %v319 = vadd.f32 %v296, %v312
    %v320 = vadd.f32 %v297, %v312
    %v321 = vadd.f32 %v298, %v312
    %v322 = vadd.f32 %v299, %v312
    %v323 = vadd.f32 %v300, %v312
    %v324 = vadd.f32 %v301, %v312
    %v325 = vadd.f32 %v302, %v312
    %v326 = vadd.f32 %v303, %v312
    %v327 = vadd.f32 %v304, %v312
    %v328 = vadd.f32 %v305, %v312
    %v329 = vadd.f32 %v306, %v312
    %v330 = vpack.c.bf16 %v315, %v314
    %v331 = vpack.c.bf16 %v317, %v316
    %v332 = vpack.c.bf16 %v319, %v318
    %v333 = vpack.c.bf16 %v321, %v320
    %v334 = vpack.c.bf16 %v323, %v322
    %v335 = vpack.c.bf16 %v325, %v324
    %v336 = vpack.c.bf16 %v327, %v326
    %v337 = vpack.c.bf16 %v329, %v328
    %v338 = vld [vmem:[#allocation2] sm:$0xff]
    %v339 = vld [vmem:[#allocation2 + $0x8] sm:$0xff]
    %v340 = vld [vmem:[#allocation2 + $0x10] sm:$0xff]
    %v341 = vld [vmem:[#allocation2 + $0x18] sm:$0xff]
    %v342 = vld [vmem:[#allocation2 + $0x20] sm:$0xff]
    %v343 = vld [vmem:[#allocation2 + $0x28] sm:$0xff]
    %v344 = vld [vmem:[#allocation2 + $0x30] sm:$0xff]
    %v345 = vld [vmem:[#allocation2 + $0x38] sm:$0xff]
    %v346 = vld [vmem:[#allocation2 + $0x40] sm:$0xff]
    %v347 = vld [vmem:[#allocation2 + $0x48] sm:$0xff]
    %v348 = vld [vmem:[#allocation2 + $0x50] sm:$0xff]
    %v349 = vld [vmem:[#allocation2 + $0x58] sm:$0xff]
    %v350 = vld [vmem:[#allocation2 + $0x60] sm:$0xff]
    %v351 = vld [vmem:[#allocation2 + $0x68] sm:$0xff]
    %v352 = vld [vmem:[#allocation2 + $0x70] sm:$0xff]
    %v353 = vld [vmem:[#allocation2 + $0x78] sm:$0xff]
    %v354 = vld [vmem:[%s1] sm:$0xf]
    %v355 = vld [vmem:[%s1 + $0x4] sm:$0xf]
    %v356 = vld [vmem:[%s1 + $0x8] sm:$0xf]
    %v357 = vld [vmem:[%s1 + $0xc] sm:$0xf]
    %v358 = vld [vmem:[%s1 + $0x10] sm:$0xf]
    %v359 = vld [vmem:[%s1 + $0x14] sm:$0xf]
    %v360 = vld [vmem:[%s1 + $0x18] sm:$0xf]
    %v361 = vld [vmem:[%s1 + $0x1c] sm:$0xf]
    %v370 = vunpack.c.l.b16 %v354
    %v371 = vunpack.c.l.b16 %v355
    %v372 = vunpack.c.l.b16 %v356
    %v373 = vunpack.c.l.b16 %v357
    %v374 = vunpack.c.l.b16 %v358
    %v375 = vunpack.c.l.b16 %v359
    %v376 = vunpack.c.l.b16 %v360
    %v377 = vunpack.c.l.b16 %v361
    %v378 = vpack.c.b16 %v371, %v370
    %v379 = vpack.c.b16 %v373, %v372
    %v380 = vpack.c.b16 %v375, %v374
    %v381 = vpack.c.b16 %v377, %v376
    %v387 = vsel %vm74, %v330, 0
    %v390 = vsel %vm74, %v331, 0
    %v393 = vsel %vm74, %v332, 0
    %v396 = vsel %vm74, %v333, 0
    %v399 = vsel %vm74, %v334, 0
    %v402 = vsel %vm74, %v335, 0
    %v405 = vsel %vm74, %v336, 0
    %v408 = vsel %vm74, %v337, 0
    %410 = vmatprep.subr.bf16.mxu0 0
    %411 = vmatpush1.bf16.msra.mxu0 %v378
    %412 = vmatprep.subr.bf16.mxu0 0
    %413 = vmatpush1.bf16.msra.mxu0 %v379
    %414 = vmatprep.subr.bf16.mxu0 0
    %415 = vmatpush1.bf16.msra.mxu0 %v380
    %416 = vmatprep.subr.bf16.mxu0 0
    %417 = vmatpush1.bf16.msra.mxu0 %v381
    %418 = vmatprep.subr.bf16.mxu0 0
    %419 = vmatpush1.bf16.msra.mxu0 0
    %420 = vmatprep.subr.bf16.mxu0 0
    %421 = vmatpush1.bf16.msra.mxu0 0
    %422 = vmatprep.subr.bf16.mxu0 0
    %423 = vmatpush1.bf16.msra.mxu0 0
    %424 = vmatprep.subr.bf16.mxu0 0
    %425 = vmatpush1.bf16.msra.mxu0 0
    %426 = vmatprep.subr.bf16.mxu0 0
    %427 = vmatpush1.bf16.msra.mxu0 0
    %428 = vmatprep.subr.bf16.mxu0 0
    %429 = vmatpush1.bf16.msra.mxu0 0
    %430 = vmatprep.subr.bf16.mxu0 0
    %431 = vmatpush1.bf16.msra.mxu0 0
    %432 = vmatprep.subr.bf16.mxu0 0
    %433 = vmatpush1.bf16.msra.mxu0 0
    %434 = vmatprep.subr.bf16.mxu0 0
    %435 = vmatpush1.bf16.msra.mxu0 0
    %436 = vmatprep.subr.bf16.mxu0 0
    %437 = vmatpush1.bf16.msra.mxu0 0
    %438 = vmatprep.subr.bf16.mxu0 0
    %439 = vmatpush1.bf16.msra.mxu0 0
    %440 = vmatprep.subr.bf16.mxu0 0
    %441 = vmatpush1.bf16.msra.mxu0 0
    %442 = vmatprep.mubr.bf16.mxu0 0
    %443 = vmatmul.mubr.bf16.gmra.mrb[0].mxu0 %v387
    %v444 = vpop.f32.mrb[0].mxu0
    %v445 = vadd.f32 0.0, %v444
    %v446 = vpop.f32.mrb[0].mxu0
    %v447 = vpop.f32.mrb[0].mxu0
    %v448 = vadd.f32 0.0, %v447
    %v449 = vpop.f32.mrb[0].mxu0
    %450 = vmatprep.mubr.bf16.mxu0 0
    %451 = vmatmul.mubr.bf16.gmra.mrb[0].mxu0 %v390
    %v452 = vpop.f32.mrb[0].mxu0
    %v453 = vadd.f32 0.0, %v452
    %v454 = vpop.f32.mrb[0].mxu0
    %v455 = vpop.f32.mrb[0].mxu0
    %v456 = vadd.f32 0.0, %v455
    %v457 = vpop.f32.mrb[0].mxu0
    %458 = vmatprep.mubr.bf16.mxu0 0
    %459 = vmatmul.mubr.bf16.gmra.mrb[0].mxu0 %v393
    %v460 = vpop.f32.mrb[0].mxu0
    %v461 = vadd.f32 0.0, %v460
    %v462 = vpop.f32.mrb[0].mxu0
    %v463 = vpop.f32.mrb[0].mxu0
    %v464 = vadd.f32 0.0, %v463
    %v465 = vpop.f32.mrb[0].mxu0
    %466 = vmatprep.mubr.bf16.mxu0 0
    %467 = vmatmul.mubr.bf16.gmra.mrb[0].mxu0 %v396
    %v468 = vpop.f32.mrb[0].mxu0
    %v469 = vadd.f32 0.0, %v468
    %v470 = vpop.f32.mrb[0].mxu0
    %v471 = vpop.f32.mrb[0].mxu0
    %v472 = vadd.f32 0.0, %v471
    %v473 = vpop.f32.mrb[0].mxu0
    %474 = vmatprep.mubr.bf16.mxu0 0
    %475 = vmatmul.mubr.bf16.gmra.mrb[0].mxu0 %v399
    %v476 = vpop.f32.mrb[0].mxu0
    %v477 = vadd.f32 0.0, %v476
    %v478 = vpop.f32.mrb[0].mxu0
    %v479 = vpop.f32.mrb[0].mxu0
    %v480 = vadd.f32 0.0, %v479
    %v481 = vpop.f32.mrb[0].mxu0
    %482 = vmatprep.mubr.bf16.mxu0 0
    %483 = vmatmul.mubr.bf16.gmra.mrb[0].mxu0 %v402
    %v484 = vpop.f32.mrb[0].mxu0
    %v485 = vadd.f32 0.0, %v484
    %v486 = vpop.f32.mrb[0].mxu0
    %v487 = vpop.f32.mrb[0].mxu0
    %v488 = vadd.f32 0.0, %v487
    %v489 = vpop.f32.mrb[0].mxu0
    %490 = vmatprep.mubr.bf16.mxu0 0
    %491 = vmatmul.mubr.bf16.gmra.mrb[0].mxu0 %v405
    %v492 = vpop.f32.mrb[0].mxu0
    %v493 = vadd.f32 0.0, %v492
    %v494 = vpop.f32.mrb[0].mxu0
    %v495 = vpop.f32.mrb[0].mxu0
    %v496 = vadd.f32 0.0, %v495
    %v497 = vpop.f32.mrb[0].mxu0
    %498 = vmatprep.mubr.bf16.mxu0 0
    %499 = vmatmul.mubr.bf16.gmra.mrb[0].mxu0 %v408
    %v500 = vpop.f32.mrb[0].mxu0
    %v501 = vadd.f32 0.0, %v500
    %v502 = vpop.f32.mrb[0].mxu0
    %v503 = vpop.f32.mrb[0].mxu0
    %v504 = vadd.f32 0.0, %v503
    %v505 = vpop.f32.mrb[0].mxu0
    %506 = vdwg.mxu0
    %v507 = vadd.f32 %v338, %v445
    %v508 = vadd.f32 %v339, %v448
    %v509 = vadd.f32 %v340, %v453
    %v510 = vadd.f32 %v341, %v456
    %v511 = vadd.f32 %v342, %v461
    %v512 = vadd.f32 %v343, %v464
    %v513 = vadd.f32 %v344, %v469
    %v514 = vadd.f32 %v345, %v472
    %v515 = vadd.f32 %v346, %v477
    %v516 = vadd.f32 %v347, %v480
    %v517 = vadd.f32 %v348, %v485
    %v518 = vadd.f32 %v349, %v488
    %v519 = vadd.f32 %v350, %v493
    %v520 = vadd.f32 %v351, %v496
    %v521 = vadd.f32 %v352, %v501
    %v522 = vadd.f32 %v353, %v504
    %523 = vst [vmem:[#allocation2] sm:$0xff] %v507
    %524 = vst [vmem:[#allocation2 + $0x8] sm:$0xff] %v508
    %525 = vst [vmem:[#allocation2 + $0x10] sm:$0xff] %v509
    %526 = vst [vmem:[#allocation2 + $0x18] sm:$0xff] %v510
    %527 = vst [vmem:[#allocation2 + $0x20] sm:$0xff] %v511
    %528 = vst [vmem:[#allocation2 + $0x28] sm:$0xff] %v512
    %529 = vst [vmem:[#allocation2 + $0x30] sm:$0xff] %v513
    %530 = vst [vmem:[#allocation2 + $0x38] sm:$0xff] %v514
    %531 = vst [vmem:[#allocation2 + $0x40] sm:$0xff] %v515
    %532 = vst [vmem:[#allocation2 + $0x48] sm:$0xff] %v516
    %533 = vst [vmem:[#allocation2 + $0x50] sm:$0xff] %v517
    %534 = vst [vmem:[#allocation2 + $0x58] sm:$0xff] %v518
    %535 = vst [vmem:[#allocation2 + $0x60] sm:$0xff] %v519
    %536 = vst [vmem:[#allocation2 + $0x68] sm:$0xff] %v520
    %537 = vst [vmem:[#allocation2 + $0x70] sm:$0xff] %v521
    %538 = vst [vmem:[#allocation2 + $0x78] sm:$0xff] %v522
    // Predicated region
    $region26: #{videogpt_forward.25} parent=1 // pred_check
      %p539 = pneg %p22
    $region27: #{videogpt_forward.25} parent=1 // pred_check_branch
      %541 = sbr.rel (%p539) target = $region29
    $region28: #{videogpt_forward.25} parent=1 // pred_region
      %v542 = vld [vmem:[#allocation2] sm:$0xff]
      %v543 = vld [vmem:[#allocation2 + $0x8] sm:$0xff]
      %v544 = vld [vmem:[#allocation2 + $0x10] sm:$0xff]
      %v545 = vld [vmem:[#allocation2 + $0x18] sm:$0xff]
      %v546 = vld [vmem:[#allocation2 + $0x20] sm:$0xff]
      %v547 = vld [vmem:[#allocation2 + $0x28] sm:$0xff]
      %v548 = vld [vmem:[#allocation2 + $0x30] sm:$0xff]
      %v549 = vld [vmem:[#allocation2 + $0x38] sm:$0xff]
      %v550 = vld [vmem:[#allocation2 + $0x40] sm:$0xff]
      %v551 = vld [vmem:[#allocation2 + $0x48] sm:$0xff]
      %v552 = vld [vmem:[#allocation2 + $0x50] sm:$0xff]
      %v553 = vld [vmem:[#allocation2 + $0x58] sm:$0xff]
      %v554 = vld [vmem:[#allocation2 + $0x60] sm:$0xff]
      %v555 = vld [vmem:[#allocation2 + $0x68] sm:$0xff]
      %v556 = vld [vmem:[#allocation2 + $0x70] sm:$0xff]
      %v557 = vld [vmem:[#allocation2 + $0x78] sm:$0xff]
      %v558 = vld [vmem:[%s2] sm:$0x1]
      %v560 = vlaneseq
      %v561 = vshrl.u32 %v560, 7
      %v562 = vsub.s32 0, %v561
      %v563 = vrot.slane %v558, %v562
      %v565 = vadd.f32 %v542, %v563
      %v566 = vadd.f32 %v543, %v563
      %v567 = vadd.f32 %v544, %v563
      %v568 = vadd.f32 %v545, %v563
      %v569 = vadd.f32 %v546, %v563
      %v570 = vadd.f32 %v547, %v563
      %v571 = vadd.f32 %v548, %v563
      %v572 = vadd.f32 %v549, %v563
      %v573 = vadd.f32 %v550, %v563
      %v574 = vadd.f32 %v551, %v563
      %v575 = vadd.f32 %v552, %v563
      %v576 = vadd.f32 %v553, %v563
      %v577 = vadd.f32 %v554, %v563
      %v578 = vadd.f32 %v555, %v563
      %v579 = vadd.f32 %v556, %v563
      %v580 = vadd.f32 %v557, %v563
      %581 = vst [vmem:[#allocation3] sm:$0xff] %v565
      %582 = vst [vmem:[#allocation3 + $0x8] sm:$0xff] %v566
      %583 = vst [vmem:[#allocation3 + $0x10] sm:$0xff] %v567
      %584 = vst [vmem:[#allocation3 + $0x18] sm:$0xff] %v568
      %585 = vst [vmem:[#allocation3 + $0x20] sm:$0xff] %v569
      %586 = vst [vmem:[#allocation3 + $0x28] sm:$0xff] %v570
      %587 = vst [vmem:[#allocation3 + $0x30] sm:$0xff] %v571
      %588 = vst [vmem:[#allocation3 + $0x38] sm:$0xff] %v572
      %589 = vst [vmem:[#allocation3 + $0x40] sm:$0xff] %v573
      %590 = vst [vmem:[#allocation3 + $0x48] sm:$0xff] %v574
      %591 = vst [vmem:[#allocation3 + $0x50] sm:$0xff] %v575
      %592 = vst [vmem:[#allocation3 + $0x58] sm:$0xff] %v576
      %593 = vst [vmem:[#allocation3 + $0x60] sm:$0xff] %v577
      %594 = vst [vmem:[#allocation3 + $0x68] sm:$0xff] %v578
      %595 = vst [vmem:[#allocation3 + $0x70] sm:$0xff] %v579
      %596 = vst [vmem:[#allocation3 + $0x78] sm:$0xff] %v580
    $region29: #{videogpt_forward.25} parent=1 // pred_fallthru
      _
    // Predicated region
    $region30: #{videogpt_forward.25} parent=1 // pred_check
      _
    $region31: #{videogpt_forward.25} parent=1 // pred_check_branch
      %598 = sbr.rel (0) target = $region33
    $region32: #{videogpt_forward.25} parent=1 // pred_region
      %s600 = ssub.s32 2048, 2048
      %601 = vsyncadd [#allocation4], %s600
      %s602 = sshll.u32 [#allocation3], 4
      %s603 = int_to_ptr.vmem [resolvable:$true] %s602
      %608 = dma.vmem_to_hbm [thread:$0]  %s603, 2048, %s5, [#allocation4], 128, 128, 8
    $region33: #{videogpt_forward.25} parent=1 // pred_fallthru
      _
    // Predicated region
    $region34: #{videogpt_forward.25} parent=1 // pred_check
      _
    $region35: #{videogpt_forward.25} parent=1 // pred_check_branch
      %610 = sbr.rel (0) target = $region37
    $region36: #{videogpt_forward.25} parent=1 // pred_region
      %611 = dma.done [#allocation4], 2048
    $region37: #{videogpt_forward.25} parent=1 // pred_fallthru
      _
    %612 = vsyncpa [#allocation4], 1

// kernel: videogpt_forward.16
$region0: #{videogpt_forward.16}
  #allocation0 [shape = 'u32[]', space=smem, size = 0x4, offset = 0x4, fixed_abs, tag = 'smem constant byte address 0x4 - core index']
  #allocation1 [shape = 'u32[144,128]{1,0:T(1,128)}', space=vmem, size = 0x12000, scoped, tag = 'internal scratch']
  #allocation2 [shape = 'f32[4,64,1]{2,1,0:T(8,128)}', space=vmem, size = 0x20000, scoped, tag = 'scratch operand']
  #allocation3 [shape = 'f32[4,64,1]{2,1,0:T(8,128)}', space=vmem, size = 0x20000, scoped, tag = 'scratch operand']
  #allocation4 [shape = 'f32[4,64,32]{2,1,0:T(8,128)}', space=vmem, size = 0x20000, scoped, tag = 'scratch operand']
  %s0 = inlined_call_operand.vmem [shape: bf16[4,64,32], index: 0, kind: input, shape index: {}]
  %s1 = inlined_call_operand.vmem [shape: bf16[4,64,32], index: 1, kind: input, shape index: {}]
  %s2 = inlined_call_operand.vmem [shape: bf16[4,64,32], index: 2, kind: input, shape index: {}]
  %s3 = inlined_call_operand.vmem [shape: bf16[4,64,32], index: 3, kind: output, shape index: {}]
  %s4 = sld [smem:[#allocation0]]
  $region34: #{videogpt_forward.16} parent=0
    _
  %s6 = ssub.s32 1, %s4
  %s7 = scalar_select 0, %s6, %s4
  // Predicated region
  $region2: #{videogpt_forward.16} parent=0 // pred_check
    _
  $region3: #{videogpt_forward.16} parent=0 // pred_check_branch
    %9 = sbr.rel (0) target = $region5
  $region4: #{videogpt_forward.16} parent=0 // pred_region
    _
  $region5: #{videogpt_forward.16} parent=0 // pred_fallthru
    _
  // Predicated region
  $region6: #{videogpt_forward.16} parent=0 // pred_check
    _
  $region7: #{videogpt_forward.16} parent=0 // pred_check_branch
    %11 = sbr.rel (0) target = $region9
  $region8: #{videogpt_forward.16} parent=0 // pred_region
    _
  $region9: #{videogpt_forward.16} parent=0 // pred_fallthru
    _
  // Predicated region
  $region10: #{videogpt_forward.16} parent=0 // pred_check
    _
  $region11: #{videogpt_forward.16} parent=0 // pred_check_branch
    %13 = sbr.rel (0) target = $region13
  $region12: #{videogpt_forward.16} parent=0 // pred_region
    _
  $region13: #{videogpt_forward.16} parent=0 // pred_fallthru
    _
  %p15 = scmp.eq.s32.totalorder 0, 0
  // Predicated region
  $region14: #{videogpt_forward.16} parent=0 // pred_check
    %p16 = pneg %p15
  $region15: #{videogpt_forward.16} parent=0 // pred_check_branch
    %18 = sbr.rel (%p16) target = $region17
  $region16: #{videogpt_forward.16} parent=0 // pred_region
    %vm19 = vcmask 7168
    %20 = vst.msk [vmem:[#allocation2] sm:$0xff] %vm19, -inf
    %21 = vst.msk [vmem:[#allocation2 + $0x8] sm:$0xff] %vm19, -inf
    %22 = vst.msk [vmem:[#allocation2 + $0x10] sm:$0xff] %vm19, -inf
    %23 = vst.msk [vmem:[#allocation2 + $0x18] sm:$0xff] %vm19, -inf
    %24 = vst.msk [vmem:[#allocation2 + $0x20] sm:$0xff] %vm19, -inf
    %25 = vst.msk [vmem:[#allocation2 + $0x28] sm:$0xff] %vm19, -inf
    %26 = vst.msk [vmem:[#allocation2 + $0x30] sm:$0xff] %vm19, -inf
    %27 = vst.msk [vmem:[#allocation2 + $0x38] sm:$0xff] %vm19, -inf
    %28 = vst.msk [vmem:[#allocation2 + $0x40] sm:$0xff] %vm19, -inf
    %29 = vst.msk [vmem:[#allocation2 + $0x48] sm:$0xff] %vm19, -inf
    %30 = vst.msk [vmem:[#allocation2 + $0x50] sm:$0xff] %vm19, -inf
    %31 = vst.msk [vmem:[#allocation2 + $0x58] sm:$0xff] %vm19, -inf
    %32 = vst.msk [vmem:[#allocation2 + $0x60] sm:$0xff] %vm19, -inf
    %33 = vst.msk [vmem:[#allocation2 + $0x68] sm:$0xff] %vm19, -inf
    %34 = vst.msk [vmem:[#allocation2 + $0x70] sm:$0xff] %vm19, -inf
    %35 = vst.msk [vmem:[#allocation2 + $0x78] sm:$0xff] %vm19, -inf
    %36 = vst.msk [vmem:[#allocation2 + $0x80] sm:$0xff] %vm19, -inf
    %37 = vst.msk [vmem:[#allocation2 + $0x88] sm:$0xff] %vm19, -inf
    %38 = vst.msk [vmem:[#allocation2 + $0x90] sm:$0xff] %vm19, -inf
    %39 = vst.msk [vmem:[#allocation2 + $0x98] sm:$0xff] %vm19, -inf
    %40 = vst.msk [vmem:[#allocation2 + $0xa0] sm:$0xff] %vm19, -inf
    %41 = vst.msk [vmem:[#allocation2 + $0xa8] sm:$0xff] %vm19, -inf
    %42 = vst.msk [vmem:[#allocation2 + $0xb0] sm:$0xff] %vm19, -inf
    %43 = vst.msk [vmem:[#allocation2 + $0xb8] sm:$0xff] %vm19, -inf
    %44 = vst.msk [vmem:[#allocation2 + $0xc0] sm:$0xff] %vm19, -inf
    %45 = vst.msk [vmem:[#allocation2 + $0xc8] sm:$0xff] %vm19, -inf
    %46 = vst.msk [vmem:[#allocation2 + $0xd0] sm:$0xff] %vm19, -inf
    %47 = vst.msk [vmem:[#allocation2 + $0xd8] sm:$0xff] %vm19, -inf
    %48 = vst.msk [vmem:[#allocation2 + $0xe0] sm:$0xff] %vm19, -inf
    %49 = vst.msk [vmem:[#allocation2 + $0xe8] sm:$0xff] %vm19, -inf
    %50 = vst.msk [vmem:[#allocation2 + $0xf0] sm:$0xff] %vm19, -inf
    %51 = vst.msk [vmem:[#allocation2 + $0xf8] sm:$0xff] %vm19, -inf
    %52 = vst.msk [vmem:[#allocation3] sm:$0xff] %vm19, 0.0
    %53 = vst.msk [vmem:[#allocation3 + $0x8] sm:$0xff] %vm19, 0.0
    %54 = vst.msk [vmem:[#allocation3 + $0x10] sm:$0xff] %vm19, 0.0
    %55 = vst.msk [vmem:[#allocation3 + $0x18] sm:$0xff] %vm19, 0.0
    %56 = vst.msk [vmem:[#allocation3 + $0x20] sm:$0xff] %vm19, 0.0
    %57 = vst.msk [vmem:[#allocation3 + $0x28] sm:$0xff] %vm19, 0.0
    %58 = vst.msk [vmem:[#allocation3 + $0x30] sm:$0xff] %vm19, 0.0
    %59 = vst.msk [vmem:[#allocation3 + $0x38] sm:$0xff] %vm19, 0.0
    %60 = vst.msk [vmem:[#allocation3 + $0x40] sm:$0xff] %vm19, 0.0
    %61 = vst.msk [vmem:[#allocation3 + $0x48] sm:$0xff] %vm19, 0.0
    %62 = vst.msk [vmem:[#allocation3 + $0x50] sm:$0xff] %vm19, 0.0
    %63 = vst.msk [vmem:[#allocation3 + $0x58] sm:$0xff] %vm19, 0.0
    %64 = vst.msk [vmem:[#allocation3 + $0x60] sm:$0xff] %vm19, 0.0
    %65 = vst.msk [vmem:[#allocation3 + $0x68] sm:$0xff] %vm19, 0.0
    %66 = vst.msk [vmem:[#allocation3 + $0x70] sm:$0xff] %vm19, 0.0
    %67 = vst.msk [vmem:[#allocation3 + $0x78] sm:$0xff] %vm19, 0.0
    %68 = vst.msk [vmem:[#allocation3 + $0x80] sm:$0xff] %vm19, 0.0
    %69 = vst.msk [vmem:[#allocation3 + $0x88] sm:$0xff] %vm19, 0.0
    %70 = vst.msk [vmem:[#allocation3 + $0x90] sm:$0xff] %vm19, 0.0
    %71 = vst.msk [vmem:[#allocation3 + $0x98] sm:$0xff] %vm19, 0.0
    %72 = vst.msk [vmem:[#allocation3 + $0xa0] sm:$0xff] %vm19, 0.0
    %73 = vst.msk [vmem:[#allocation3 + $0xa8] sm:$0xff] %vm19, 0.0
    %74 = vst.msk [vmem:[#allocation3 + $0xb0] sm:$0xff] %vm19, 0.0
    %75 = vst.msk [vmem:[#allocation3 + $0xb8] sm:$0xff] %vm19, 0.0
    %76 = vst.msk [vmem:[#allocation3 + $0xc0] sm:$0xff] %vm19, 0.0
    %77 = vst.msk [vmem:[#allocation3 + $0xc8] sm:$0xff] %vm19, 0.0
    %78 = vst.msk [vmem:[#allocation3 + $0xd0] sm:$0xff] %vm19, 0.0
    %79 = vst.msk [vmem:[#allocation3 + $0xd8] sm:$0xff] %vm19, 0.0
    %80 = vst.msk [vmem:[#allocation3 + $0xe0] sm:$0xff] %vm19, 0.0
    %81 = vst.msk [vmem:[#allocation3 + $0xe8] sm:$0xff] %vm19, 0.0
    %82 = vst.msk [vmem:[#allocation3 + $0xf0] sm:$0xff] %vm19, 0.0
    %83 = vst.msk [vmem:[#allocation3 + $0xf8] sm:$0xff] %vm19, 0.0
    %vm84 = vcmask 261120
    %85 = vst.msk [vmem:[#allocation4] sm:$0xff] %vm84, 0.0
    %86 = vst.msk [vmem:[#allocation4 + $0x8] sm:$0xff] %vm84, 0.0
    %87 = vst.msk [vmem:[#allocation4 + $0x10] sm:$0xff] %vm84, 0.0
    %88 = vst.msk [vmem:[#allocation4 + $0x18] sm:$0xff] %vm84, 0.0
    %89 = vst.msk [vmem:[#allocation4 + $0x20] sm:$0xff] %vm84, 0.0
    %90 = vst.msk [vmem:[#allocation4 + $0x28] sm:$0xff] %vm84, 0.0
    %91 = vst.msk [vmem:[#allocation4 + $0x30] sm:$0xff] %vm84, 0.0
    %92 = vst.msk [vmem:[#allocation4 + $0x38] sm:$0xff] %vm84, 0.0
    %93 = vst.msk [vmem:[#allocation4 + $0x40] sm:$0xff] %vm84, 0.0
    %94 = vst.msk [vmem:[#allocation4 + $0x48] sm:$0xff] %vm84, 0.0
    %95 = vst.msk [vmem:[#allocation4 + $0x50] sm:$0xff] %vm84, 0.0
    %96 = vst.msk [vmem:[#allocation4 + $0x58] sm:$0xff] %vm84, 0.0
    %97 = vst.msk [vmem:[#allocation4 + $0x60] sm:$0xff] %vm84, 0.0
    %98 = vst.msk [vmem:[#allocation4 + $0x68] sm:$0xff] %vm84, 0.0
    %99 = vst.msk [vmem:[#allocation4 + $0x70] sm:$0xff] %vm84, 0.0
    %100 = vst.msk [vmem:[#allocation4 + $0x78] sm:$0xff] %vm84, 0.0
    %101 = vst.msk [vmem:[#allocation4 + $0x80] sm:$0xff] %vm84, 0.0
    %102 = vst.msk [vmem:[#allocation4 + $0x88] sm:$0xff] %vm84, 0.0
    %103 = vst.msk [vmem:[#allocation4 + $0x90] sm:$0xff] %vm84, 0.0
    %104 = vst.msk [vmem:[#allocation4 + $0x98] sm:$0xff] %vm84, 0.0
    %105 = vst.msk [vmem:[#allocation4 + $0xa0] sm:$0xff] %vm84, 0.0
    %106 = vst.msk [vmem:[#allocation4 + $0xa8] sm:$0xff] %vm84, 0.0
    %107 = vst.msk [vmem:[#allocation4 + $0xb0] sm:$0xff] %vm84, 0.0
    %108 = vst.msk [vmem:[#allocation4 + $0xb8] sm:$0xff] %vm84, 0.0
    %109 = vst.msk [vmem:[#allocation4 + $0xc0] sm:$0xff] %vm84, 0.0
    %110 = vst.msk [vmem:[#allocation4 + $0xc8] sm:$0xff] %vm84, 0.0
    %111 = vst.msk [vmem:[#allocation4 + $0xd0] sm:$0xff] %vm84, 0.0
    %112 = vst.msk [vmem:[#allocation4 + $0xd8] sm:$0xff] %vm84, 0.0
    %113 = vst.msk [vmem:[#allocation4 + $0xe0] sm:$0xff] %vm84, 0.0
    %114 = vst.msk [vmem:[#allocation4 + $0xe8] sm:$0xff] %vm84, 0.0
    %115 = vst.msk [vmem:[#allocation4 + $0xf0] sm:$0xff] %vm84, 0.0
    %116 = vst.msk [vmem:[#allocation4 + $0xf8] sm:$0xff] %vm84, 0.0
  $region17: #{videogpt_forward.16} parent=0 // pred_fallthru
    _
  %p117 = scmp.le.s32.totalorder 0, 0
  // Predicated region
  $region18: #{videogpt_forward.16} parent=0 // pred_check
    %p118 = pneg %p117
  $region19: #{videogpt_forward.16} parent=0 // pred_check_branch
    %120 = sbr.rel (%p118) target = $region21
  $region20: #{videogpt_forward.16} parent=0 // pred_region
    %v121 = vld [vmem:[%s0] sm:$0xf]
    %v122 = vld [vmem:[%s0 + $0x4] sm:$0xf]
    %v123 = vld [vmem:[%s0 + $0x8] sm:$0xf]
    %v124 = vld [vmem:[%s0 + $0xc] sm:$0xf]
    %v125 = vld [vmem:[%s0 + $0x10] sm:$0xf]
    %v126 = vld [vmem:[%s0 + $0x14] sm:$0xf]
    %v127 = vld [vmem:[%s0 + $0x18] sm:$0xf]
    %v128 = vld [vmem:[%s0 + $0x1c] sm:$0xf]
    %v129 = vld [vmem:[%s0 + $0x20] sm:$0xf]
    %v130 = vld [vmem:[%s0 + $0x24] sm:$0xf]
    %v131 = vld [vmem:[%s0 + $0x28] sm:$0xf]
    %v132 = vld [vmem:[%s0 + $0x2c] sm:$0xf]
    %v133 = vld [vmem:[%s0 + $0x30] sm:$0xf]
    %v134 = vld [vmem:[%s0 + $0x34] sm:$0xf]
    %v135 = vld [vmem:[%s0 + $0x38] sm:$0xf]
    %v136 = vld [vmem:[%s0 + $0x3c] sm:$0xf]
    %v137 = vld [vmem:[%s0 + $0x40] sm:$0xf]
    %v138 = vld [vmem:[%s0 + $0x44] sm:$0xf]
    %v139 = vld [vmem:[%s0 + $0x48] sm:$0xf]
    %v140 = vld [vmem:[%s0 + $0x4c] sm:$0xf]
    %v141 = vld [vmem:[%s0 + $0x50] sm:$0xf]
    %v142 = vld [vmem:[%s0 + $0x54] sm:$0xf]
    %v143 = vld [vmem:[%s0 + $0x58] sm:$0xf]
    %v144 = vld [vmem:[%s0 + $0x5c] sm:$0xf]
    %v145 = vld [vmem:[%s0 + $0x60] sm:$0xf]
    %v146 = vld [vmem:[%s0 + $0x64] sm:$0xf]
    %v147 = vld [vmem:[%s0 + $0x68] sm:$0xf]
    %v148 = vld [vmem:[%s0 + $0x6c] sm:$0xf]
    %v149 = vld [vmem:[%s0 + $0x70] sm:$0xf]
    %v150 = vld [vmem:[%s0 + $0x74] sm:$0xf]
    %v151 = vld [vmem:[%s0 + $0x78] sm:$0xf]
    %v152 = vld [vmem:[%s0 + $0x7c] sm:$0xf]
    %v153 = vld [vmem:[%s1] sm:$0xf]
    %v154 = vld [vmem:[%s1 + $0x4] sm:$0xf]
    %v155 = vld [vmem:[%s1 + $0x8] sm:$0xf]
    %v156 = vld [vmem:[%s1 + $0xc] sm:$0xf]
    %v157 = vld [vmem:[%s1 + $0x10] sm:$0xf]
    %v158 = vld [vmem:[%s1 + $0x14] sm:$0xf]
    %v159 = vld [vmem:[%s1 + $0x18] sm:$0xf]
    %v160 = vld [vmem:[%s1 + $0x1c] sm:$0xf]
    %v161 = vld [vmem:[%s1 + $0x20] sm:$0xf]
    %v162 = vld [vmem:[%s1 + $0x24] sm:$0xf]
    %v163 = vld [vmem:[%s1 + $0x28] sm:$0xf]
    %v164 = vld [vmem:[%s1 + $0x2c] sm:$0xf]
    %v165 = vld [vmem:[%s1 + $0x30] sm:$0xf]
    %v166 = vld [vmem:[%s1 + $0x34] sm:$0xf]
    %v167 = vld [vmem:[%s1 + $0x38] sm:$0xf]
    %v168 = vld [vmem:[%s1 + $0x3c] sm:$0xf]
    %v169 = vld [vmem:[%s1 + $0x40] sm:$0xf]
    %v170 = vld [vmem:[%s1 + $0x44] sm:$0xf]
    %v171 = vld [vmem:[%s1 + $0x48] sm:$0xf]
    %v172 = vld [vmem:[%s1 + $0x4c] sm:$0xf]
    %v173 = vld [vmem:[%s1 + $0x50] sm:$0xf]
    %v174 = vld [vmem:[%s1 + $0x54] sm:$0xf]
    %v175 = vld [vmem:[%s1 + $0x58] sm:$0xf]
    %v176 = vld [vmem:[%s1 + $0x5c] sm:$0xf]
    %v177 = vld [vmem:[%s1 + $0x60] sm:$0xf]
    %v178 = vld [vmem:[%s1 + $0x64] sm:$0xf]
    %v179 = vld [vmem:[%s1 + $0x68] sm:$0xf]
    %v180 = vld [vmem:[%s1 + $0x6c] sm:$0xf]
    %v181 = vld [vmem:[%s1 + $0x70] sm:$0xf]
    %v182 = vld [vmem:[%s1 + $0x74] sm:$0xf]
    %v183 = vld [vmem:[%s1 + $0x78] sm:$0xf]
    %v184 = vld [vmem:[%s1 + $0x7c] sm:$0xf]
    %v193 = vunpack.c.l.b16 %v121
    %v194 = vunpack.c.l.b16 %v122
    %v195 = vunpack.c.l.b16 %v123
    %v196 = vunpack.c.l.b16 %v124
    %v197 = vunpack.c.l.b16 %v125
    %v198 = vunpack.c.l.b16 %v126
    %v199 = vunpack.c.l.b16 %v127
    %v200 = vunpack.c.l.b16 %v128
    %v201 = vpack.c.b16 %v194, %v193
    %v202 = vpack.c.b16 %v196, %v195
    %v203 = vpack.c.b16 %v198, %v197
    %v204 = vpack.c.b16 %v200, %v199
    %v213 = vunpack.c.l.b16 %v153
    %v214 = vunpack.c.l.b16 %v154
    %v215 = vunpack.c.l.b16 %v155
    %v216 = vunpack.c.l.b16 %v156
    %v217 = vunpack.c.l.b16 %v157
    %v218 = vunpack.c.l.b16 %v158
    %v219 = vunpack.c.l.b16 %v159
    %v220 = vunpack.c.l.b16 %v160
    %v221 = vpack.c.b16 %v214, %v213
    %v222 = vpack.c.b16 %v216, %v215
    %v223 = vpack.c.b16 %v218, %v217
    %v224 = vpack.c.b16 %v220, %v219
    %vm225 = vcmask 261120
    %v227 = vsel %vm225, %v201, 0
    %v230 = vsel %vm225, %v202, 0
    %v233 = vsel %vm225, %v203, 0
    %v236 = vsel %vm225, %v204, 0
    %v239 = vsel %vm225, %v221, 0
    %v242 = vsel %vm225, %v222, 0
    %v245 = vsel %vm225, %v223, 0
    %v248 = vsel %vm225, %v224, 0
    %250 = vmatprep.subr.bf16.mxu0 0
    %251 = vmatpush1.bf16.xpose.msra.mxu0 %v239
    %252 = vmatprep.subr.bf16.mxu0 0
    %253 = vmatpush1.bf16.xpose.msra.mxu0 %v242
    %254 = vmatprep.subr.bf16.mxu0 0
    %255 = vmatpush1.bf16.xpose.msra.mxu0 %v245
    %256 = vmatprep.subr.bf16.mxu0 0
    %257 = vmatpush1.bf16.xpose.msra.mxu0 %v248
    %258 = vmatprep.subr.bf16.mxu0 0
    %259 = vmatpush1.bf16.xpose.msra.mxu0 0
    %260 = vmatprep.subr.bf16.mxu0 0
    %261 = vmatpush1.bf16.xpose.msra.mxu0 0
    %262 = vmatprep.subr.bf16.mxu0 0
    %263 = vmatpush1.bf16.xpose.msra.mxu0 0
    %264 = vmatprep.subr.bf16.mxu0 0
    %265 = vmatpush1.bf16.xpose.msra.mxu0 0
    %266 = vmatprep.subr.bf16.mxu0 0
    %267 = vmatpush1.bf16.xpose.msra.mxu0 0
    %268 = vmatprep.subr.bf16.mxu0 0
    %269 = vmatpush1.bf16.xpose.msra.mxu0 0
    %270 = vmatprep.subr.bf16.mxu0 0
    %271 = vmatpush1.bf16.xpose.msra.mxu0 0
    %272 = vmatprep.subr.bf16.mxu0 0
    %273 = vmatpush1.bf16.xpose.msra.mxu0 0
    %274 = vmatprep.subr.bf16.mxu0 0
    %275 = vmatpush1.bf16.xpose.msra.mxu0 0
    %276 = vmatprep.subr.bf16.mxu0 0
    %277 = vmatpush1.bf16.xpose.msra.mxu0 0
    %278 = vmatprep.subr.bf16.mxu0 0
    %279 = vmatpush1.bf16.xpose.msra.mxu0 0
    %280 = vmatprep.subr.bf16.mxu0 0
    %281 = vmatpush1.bf16.xpose.msra.mxu0 0
    %282 = vmatprep.mubr.bf16.mxu0 0
    %283 = vmatmul.mubr.bf16.gmra.mrb[0].mxu0 %v227
    %v284 = vpop.f32.mrb[0].mxu0
    %v285 = vadd.f32 0.0, %v284
    %v286 = vpop.f32.mrb[0].mxu0
    %v287 = vpop.f32.mrb[0].mxu0
    %v288 = vadd.f32 0.0, %v287
    %v289 = vpop.f32.mrb[0].mxu0
    %290 = vmatprep.mubr.bf16.mxu0 0
    %291 = vmatmul.mubr.bf16.gmra.mrb[0].mxu0 %v230
    %v292 = vpop.f32.mrb[0].mxu0
    %v293 = vadd.f32 0.0, %v292
    %v294 = vpop.f32.mrb[0].mxu0
    %v295 = vpop.f32.mrb[0].mxu0
    %v296 = vadd.f32 0.0, %v295
    %v297 = vpop.f32.mrb[0].mxu0
    %298 = vmatprep.mubr.bf16.mxu0 0
    %299 = vmatmul.mubr.bf16.gmra.mrb[0].mxu0 %v233
    %v300 = vpop.f32.mrb[0].mxu0
    %v301 = vadd.f32 0.0, %v300
    %v302 = vpop.f32.mrb[0].mxu0
    %v303 = vpop.f32.mrb[0].mxu0
    %v304 = vadd.f32 0.0, %v303
    %v305 = vpop.f32.mrb[0].mxu0
    %306 = vmatprep.mubr.bf16.mxu0 0
    %307 = vmatmul.mubr.bf16.gmra.mrb[0].mxu0 %v236
    %v308 = vpop.f32.mrb[0].mxu0
    %v309 = vadd.f32 0.0, %v308
    %v310 = vpop.f32.mrb[0].mxu0
    %v311 = vpop.f32.mrb[0].mxu0
    %v312 = vadd.f32 0.0, %v311
    %v313 = vpop.f32.mrb[0].mxu0
    %314 = vdwg.mxu0
    %v323 = vunpack.c.l.b16 %v129
    %v324 = vunpack.c.l.b16 %v130
    %v325 = vunpack.c.l.b16 %v131
    %v326 = vunpack.c.l.b16 %v132
    %v327 = vunpack.c.l.b16 %v133
    %v328 = vunpack.c.l.b16 %v134
    %v329 = vunpack.c.l.b16 %v135
    %v330 = vunpack.c.l.b16 %v136
    %v331 = vpack.c.b16 %v324, %v323
    %v332 = vpack.c.b16 %v326, %v325
    %v333 = vpack.c.b16 %v328, %v327
    %v334 = vpack.c.b16 %v330, %v329
    %v343 = vunpack.c.l.b16 %v161
    %v344 = vunpack.c.l.b16 %v162
    %v345 = vunpack.c.l.b16 %v163
    %v346 = vunpack.c.l.b16 %v164
    %v347 = vunpack.c.l.b16 %v165
    %v348 = vunpack.c.l.b16 %v166
    %v349 = vunpack.c.l.b16 %v167
    %v350 = vunpack.c.l.b16 %v168
    %v351 = vpack.c.b16 %v344, %v343
    %v352 = vpack.c.b16 %v346, %v345
    %v353 = vpack.c.b16 %v348, %v347
    %v354 = vpack.c.b16 %v350, %v349
    %v356 = vsel %vm225, %v331, 0
    %v359 = vsel %vm225, %v332, 0
    %v362 = vsel %vm225, %v333, 0
    %v365 = vsel %vm225, %v334, 0
    %v368 = vsel %vm225, %v351, 0
    %v371 = vsel %vm225, %v352, 0
    %v374 = vsel %vm225, %v353, 0
    %v377 = vsel %vm225, %v354, 0
    %379 = vmatprep.subr.bf16.mxu0 0
    %380 = vmatpush1.bf16.xpose.msra.mxu0 %v368
    %381 = vmatprep.subr.bf16.mxu0 0
    %382 = vmatpush1.bf16.xpose.msra.mxu0 %v371
    %383 = vmatprep.subr.bf16.mxu0 0
    %384 = vmatpush1.bf16.xpose.msra.mxu0 %v374
    %385 = vmatprep.subr.bf16.mxu0 0
    %386 = vmatpush1.bf16.xpose.msra.mxu0 %v377
    %387 = vmatprep.subr.bf16.mxu0 0
    %388 = vmatpush1.bf16.xpose.msra.mxu0 0
    %389 = vmatprep.subr.bf16.mxu0 0
    %390 = vmatpush1.bf16.xpose.msra.mxu0 0
    %391 = vmatprep.subr.bf16.mxu0 0
    %392 = vmatpush1.bf16.xpose.msra.mxu0 0
    %393 = vmatprep.subr.bf16.mxu0 0
    %394 = vmatpush1.bf16.xpose.msra.mxu0 0
    %395 = vmatprep.subr.bf16.mxu0 0
    %396 = vmatpush1.bf16.xpose.msra.mxu0 0
    %397 = vmatprep.subr.bf16.mxu0 0
    %398 = vmatpush1.bf16.xpose.msra.mxu0 0
    %399 = vmatprep.subr.bf16.mxu0 0
    %400 = vmatpush1.bf16.xpose.msra.mxu0 0
    %401 = vmatprep.subr.bf16.mxu0 0
    %402 = vmatpush1.bf16.xpose.msra.mxu0 0
    %403 = vmatprep.subr.bf16.mxu0 0
    %404 = vmatpush1.bf16.xpose.msra.mxu0 0
    %405 = vmatprep.subr.bf16.mxu0 0
    %406 = vmatpush1.bf16.xpose.msra.mxu0 0
    %407 = vmatprep.subr.bf16.mxu0 0
    %408 = vmatpush1.bf16.xpose.msra.mxu0 0
    %409 = vmatprep.subr.bf16.mxu0 0
    %410 = vmatpush1.bf16.xpose.msra.mxu0 0
    %411 = vmatprep.mubr.bf16.mxu0 0
    %412 = vmatmul.mubr.bf16.gmra.mrb[0].mxu0 %v356
    %v413 = vpop.f32.mrb[0].mxu0
    %v414 = vadd.f32 0.0, %v413
    %v415 = vpop.f32.mrb[0].mxu0
    %v416 = vpop.f32.mrb[0].mxu0
    %v417 = vadd.f32 0.0, %v416
    %v418 = vpop.f32.mrb[0].mxu0
    %419 = vmatprep.mubr.bf16.mxu0 0
    %420 = vmatmul.mubr.bf16.gmra.mrb[0].mxu0 %v359
    %v421 = vpop.f32.mrb[0].mxu0
    %v422 = vadd.f32 0.0, %v421
    %v423 = vpop.f32.mrb[0].mxu0
    %v424 = vpop.f32.mrb[0].mxu0
    %v425 = vadd.f32 0.0, %v424
    %v426 = vpop.f32.mrb[0].mxu0
    %427 = vmatprep.mubr.bf16.mxu0 0
    %428 = vmatmul.mubr.bf16.gmra.mrb[0].mxu0 %v362
    %v429 = vpop.f32.mrb[0].mxu0
    %v430 = vadd.f32 0.0, %v429
    %v431 = vpop.f32.mrb[0].mxu0
    %v432 = vpop.f32.mrb[0].mxu0
    %v433 = vadd.f32 0.0, %v432
    %v434 = vpop.f32.mrb[0].mxu0
    %435 = vmatprep.mubr.bf16.mxu0 0
    %436 = vmatmul.mubr.bf16.gmra.mrb[0].mxu0 %v365
    %v437 = vpop.f32.mrb[0].mxu0
    %v438 = vadd.f32 0.0, %v437
    %v439 = vpop.f32.mrb[0].mxu0
    %v440 = vpop.f32.mrb[0].mxu0
    %v441 = vadd.f32 0.0, %v440
    %v442 = vpop.f32.mrb[0].mxu0
    %443 = vdwg.mxu0
    %v452 = vunpack.c.l.b16 %v137
    %v453 = vunpack.c.l.b16 %v138
    %v454 = vunpack.c.l.b16 %v139
    %v455 = vunpack.c.l.b16 %v140
    %v456 = vunpack.c.l.b16 %v141
    %v457 = vunpack.c.l.b16 %v142
    %v458 = vunpack.c.l.b16 %v143
    %v459 = vunpack.c.l.b16 %v144
    %v460 = vpack.c.b16 %v453, %v452
    %v461 = vpack.c.b16 %v455, %v454
    %v462 = vpack.c.b16 %v457, %v456
    %v463 = vpack.c.b16 %v459, %v458
    %v472 = vunpack.c.l.b16 %v169
    %v473 = vunpack.c.l.b16 %v170
    %v474 = vunpack.c.l.b16 %v171
    %v475 = vunpack.c.l.b16 %v172
    %v476 = vunpack.c.l.b16 %v173
    %v477 = vunpack.c.l.b16 %v174
    %v478 = vunpack.c.l.b16 %v175
    %v479 = vunpack.c.l.b16 %v176
    %v480 = vpack.c.b16 %v473, %v472
    %v481 = vpack.c.b16 %v475, %v474
    %v482 = vpack.c.b16 %v477, %v476
    %v483 = vpack.c.b16 %v479, %v478
    %v485 = vsel %vm225, %v460, 0
    %v488 = vsel %vm225, %v461, 0
    %v491 = vsel %vm225, %v462, 0
    %v494 = vsel %vm225, %v463, 0
    %v497 = vsel %vm225, %v480, 0
    %v500 = vsel %vm225, %v481, 0
    %v503 = vsel %vm225, %v482, 0
    %v506 = vsel %vm225, %v483, 0
    %508 = vmatprep.subr.bf16.mxu0 0
    %509 = vmatpush1.bf16.xpose.msra.mxu0 %v497
    %510 = vmatprep.subr.bf16.mxu0 0
    %511 = vmatpush1.bf16.xpose.msra.mxu0 %v500
    %512 = vmatprep.subr.bf16.mxu0 0
    %513 = vmatpush1.bf16.xpose.msra.mxu0 %v503
    %514 = vmatprep.subr.bf16.mxu0 0
    %515 = vmatpush1.bf16.xpose.msra.mxu0 %v506
    %516 = vmatprep.subr.bf16.mxu0 0
    %517 = vmatpush1.bf16.xpose.msra.mxu0 0
    %518 = vmatprep.subr.bf16.mxu0 0
    %519 = vmatpush1.bf16.xpose.msra.mxu0 0
    %520 = vmatprep.subr.bf16.mxu0 0
    %521 = vmatpush1.bf16.xpose.msra.mxu0 0
    %522 = vmatprep.subr.bf16.mxu0 0
    %523 = vmatpush1.bf16.xpose.msra.mxu0 0
    %524 = vmatprep.subr.bf16.mxu0 0
    %525 = vmatpush1.bf16.xpose.msra.mxu0 0
    %526 = vmatprep.subr.bf16.mxu0 0
    %527 = vmatpush1.bf16.xpose.msra.mxu0 0
    %528 = vmatprep.subr.bf16.mxu0 0
    %529 = vmatpush1.bf16.xpose.msra.mxu0 0
    %530 = vmatprep.subr.bf16.mxu0 0
    %531 = vmatpush1.bf16.xpose.msra.mxu0 0
    %532 = vmatprep.subr.bf16.mxu0 0
    %533 = vmatpush1.bf16.xpose.msra.mxu0 0
    %534 = vmatprep.subr.bf16.mxu0 0
    %535 = vmatpush1.bf16.xpose.msra.mxu0 0
    %536 = vmatprep.subr.bf16.mxu0 0
    %537 = vmatpush1.bf16.xpose.msra.mxu0 0
    %538 = vmatprep.subr.bf16.mxu0 0
    %539 = vmatpush1.bf16.xpose.msra.mxu0 0
    %540 = vmatprep.mubr.bf16.mxu0 0
    %541 = vmatmul.mubr.bf16.gmra.mrb[0].mxu0 %v485
    %v542 = vpop.f32.mrb[0].mxu0
    %v543 = vadd.f32 0.0, %v542
    %v544 = vpop.f32.mrb[0].mxu0
    %v545 = vpop.f32.mrb[0].mxu0
    %v546 = vadd.f32 0.0, %v545
    %v547 = vpop.f32.mrb[0].mxu0
    %548 = vmatprep.mubr.bf16.mxu0 0
    %549 = vmatmul.mubr.bf16.gmra.mrb[0].mxu0 %v488
    %v550 = vpop.f32.mrb[0].mxu0
    %v551 = vadd.f32 0.0, %v550
    %v552 = vpop.f32.mrb[0].mxu0
    %v553 = vpop.f32.mrb[0].mxu0
    %v554 = vadd.f32 0.0, %v553
    %v555 = vpop.f32.mrb[0].mxu0
    %556 = vmatprep.mubr.bf16.mxu0 0
    %557 = vmatmul.mubr.bf16.gmra.mrb[0].mxu0 %v491
    %v558 = vpop.f32.mrb[0].mxu0
    %v559 = vadd.f32 0.0, %v558
    %v560 = vpop.f32.mrb[0].mxu0
    %v561 = vpop.f32.mrb[0].mxu0
    %v562 = vadd.f32 0.0, %v561
    %v563 = vpop.f32.mrb[0].mxu0
    %564 = vmatprep.mubr.bf16.mxu0 0
    %565 = vmatmul.mubr.bf16.gmra.mrb[0].mxu0 %v494
    %v566 = vpop.f32.mrb[0].mxu0
    %v567 = vadd.f32 0.0, %v566
    %v568 = vpop.f32.mrb[0].mxu0
    %v569 = vpop.f32.mrb[0].mxu0
    %v570 = vadd.f32 0.0, %v569
    %v571 = vpop.f32.mrb[0].mxu0
    %572 = vdwg.mxu0
    %v581 = vunpack.c.l.b16 %v145
    %v582 = vunpack.c.l.b16 %v146
    %v583 = vunpack.c.l.b16 %v147
    %v584 = vunpack.c.l.b16 %v148
    %v585 = vunpack.c.l.b16 %v149
    %v586 = vunpack.c.l.b16 %v150
    %v587 = vunpack.c.l.b16 %v151
    %v588 = vunpack.c.l.b16 %v152
    %v589 = vpack.c.b16 %v582, %v581
    %v590 = vpack.c.b16 %v584, %v583
    %v591 = vpack.c.b16 %v586, %v585
    %v592 = vpack.c.b16 %v588, %v587
    %v601 = vunpack.c.l.b16 %v177
    %v602 = vunpack.c.l.b16 %v178
    %v603 = vunpack.c.l.b16 %v179
    %v604 = vunpack.c.l.b16 %v180
    %v605 = vunpack.c.l.b16 %v181
    %v606 = vunpack.c.l.b16 %v182
    %v607 = vunpack.c.l.b16 %v183
    %v608 = vunpack.c.l.b16 %v184
    %v609 = vpack.c.b16 %v602, %v601
    %v610 = vpack.c.b16 %v604, %v603
    %v611 = vpack.c.b16 %v606, %v605
    %v612 = vpack.c.b16 %v608, %v607
    %v614 = vsel %vm225, %v589, 0
    %v617 = vsel %vm225, %v590, 0
    %v620 = vsel %vm225, %v591, 0
    %v623 = vsel %vm225, %v592, 0
    %v626 = vsel %vm225, %v609, 0
    %v629 = vsel %vm225, %v610, 0
    %v632 = vsel %vm225, %v611, 0
    %v635 = vsel %vm225, %v612, 0
    %637 = vmatprep.subr.bf16.mxu0 0
    %638 = vmatpush1.bf16.xpose.msra.mxu0 %v626
    %639 = vmatprep.subr.bf16.mxu0 0
    %640 = vmatpush1.bf16.xpose.msra.mxu0 %v629
    %641 = vmatprep.subr.bf16.mxu0 0
    %642 = vmatpush1.bf16.xpose.msra.mxu0 %v632
    %643 = vmatprep.subr.bf16.mxu0 0
    %644 = vmatpush1.bf16.xpose.msra.mxu0 %v635
    %645 = vmatprep.subr.bf16.mxu0 0
    %646 = vmatpush1.bf16.xpose.msra.mxu0 0
    %647 = vmatprep.subr.bf16.mxu0 0
    %648 = vmatpush1.bf16.xpose.msra.mxu0 0
    %649 = vmatprep.subr.bf16.mxu0 0
    %650 = vmatpush1.bf16.xpose.msra.mxu0 0
    %651 = vmatprep.subr.bf16.mxu0 0
    %652 = vmatpush1.bf16.xpose.msra.mxu0 0
    %653 = vmatprep.subr.bf16.mxu0 0
    %654 = vmatpush1.bf16.xpose.msra.mxu0 0
    %655 = vmatprep.subr.bf16.mxu0 0
    %656 = vmatpush1.bf16.xpose.msra.mxu0 0
    %657 = vmatprep.subr.bf16.mxu0 0
    %658 = vmatpush1.bf16.xpose.msra.mxu0 0
    %659 = vmatprep.subr.bf16.mxu0 0
    %660 = vmatpush1.bf16.xpose.msra.mxu0 0
    %661 = vmatprep.subr.bf16.mxu0 0
    %662 = vmatpush1.bf16.xpose.msra.mxu0 0
    %663 = vmatprep.subr.bf16.mxu0 0
    %664 = vmatpush1.bf16.xpose.msra.mxu0 0
    %665 = vmatprep.subr.bf16.mxu0 0
    %666 = vmatpush1.bf16.xpose.msra.mxu0 0
    %667 = vmatprep.subr.bf16.mxu0 0
    %668 = vmatpush1.bf16.xpose.msra.mxu0 0
    %669 = vmatprep.mubr.bf16.mxu0 0
    %670 = vmatmul.mubr.bf16.gmra.mrb[0].mxu0 %v614
    %v671 = vpop.f32.mrb[0].mxu0
    %v672 = vadd.f32 0.0, %v671
    %v673 = vpop.f32.mrb[0].mxu0
    %v674 = vpop.f32.mrb[0].mxu0
    %v675 = vadd.f32 0.0, %v674
    %v676 = vpop.f32.mrb[0].mxu0
    %677 = vmatprep.mubr.bf16.mxu0 0
    %678 = vmatmul.mubr.bf16.gmra.mrb[0].mxu0 %v617
    %v679 = vpop.f32.mrb[0].mxu0
    %v680 = vadd.f32 0.0, %v679
    %v681 = vpop.f32.mrb[0].mxu0
    %v682 = vpop.f32.mrb[0].mxu0
    %v683 = vadd.f32 0.0, %v682
    %v684 = vpop.f32.mrb[0].mxu0
    %685 = vmatprep.mubr.bf16.mxu0 0
    %686 = vmatmul.mubr.bf16.gmra.mrb[0].mxu0 %v620
    %v687 = vpop.f32.mrb[0].mxu0
    %v688 = vadd.f32 0.0, %v687
    %v689 = vpop.f32.mrb[0].mxu0
    %v690 = vpop.f32.mrb[0].mxu0
    %v691 = vadd.f32 0.0, %v690
    %v692 = vpop.f32.mrb[0].mxu0
    %693 = vmatprep.mubr.bf16.mxu0 0
    %694 = vmatmul.mubr.bf16.gmra.mrb[0].mxu0 %v623
    %v695 = vpop.f32.mrb[0].mxu0
    %v696 = vadd.f32 0.0, %v695
    %v697 = vpop.f32.mrb[0].mxu0
    %v698 = vpop.f32.mrb[0].mxu0
    %v699 = vadd.f32 0.0, %v698
    %v700 = vpop.f32.mrb[0].mxu0
    %701 = vdwg.mxu0
    %s702 = smul.u32 0, 64
    %v703 = vlaneseq
    %v704 = vshrl.u32 %v703, 7
    %v705 = vadd.s32 %v704, 8
    %v706 = vadd.s32 %v704, 16
    %v707 = vadd.s32 %v704, 24
    %v708 = vadd.s32 %v704, 32
    %v709 = vadd.s32 %v704, 40
    %v710 = vadd.s32 %v704, 48
    %v711 = vadd.s32 %v704, 56
    %v712 = vstv %s702
    %v713 = vadd.s32 %v712, %v704
    %v714 = vadd.s32 %v712, %v705
    %v715 = vadd.s32 %v712, %v706
    %v716 = vadd.s32 %v712, %v707
    %v717 = vadd.s32 %v712, %v708
    %v718 = vadd.s32 %v712, %v709
    %v719 = vadd.s32 %v712, %v710
    %v720 = vadd.s32 %v712, %v711
    %s721 = smul.u32 0, 64
    %v722 = vlaneseq
    %v723 = vand.u32 %v722, 127
    %v724 = vstv %s721
    %v725 = vadd.s32 %v724, %v723
    %vm726 = vcmp.le.s32.totalorder %v725, %v713
    %vm727 = vcmp.le.s32.totalorder %v725, %v714
    %vm728 = vcmp.le.s32.totalorder %v725, %v715
    %vm729 = vcmp.le.s32.totalorder %v725, %v716
    %vm730 = vcmp.le.s32.totalorder %v725, %v717
    %vm731 = vcmp.le.s32.totalorder %v725, %v718
    %vm732 = vcmp.le.s32.totalorder %v725, %v719
    %vm733 = vcmp.le.s32.totalorder %v725, %v720
    %v734 = vsel %vm726, 1, 0
    %v735 = vsel %vm727, 1, 0
    %v736 = vsel %vm728, 1, 0
    %v737 = vsel %vm729, 1, 0
    %v738 = vsel %vm730, 1, 0
    %v739 = vsel %vm731, 1, 0
    %v740 = vsel %vm732, 1, 0
    %v741 = vsel %vm733, 1, 0
    %vm742 = vcmp.eq.s32.totalorder %v734, 1
    %vm743 = vcmp.eq.s32.totalorder %v735, 1
    %vm744 = vcmp.eq.s32.totalorder %v736, 1
    %vm745 = vcmp.eq.s32.totalorder %v737, 1
    %vm746 = vcmp.eq.s32.totalorder %v738, 1
    %vm747 = vcmp.eq.s32.totalorder %v739, 1
    %vm748 = vcmp.eq.s32.totalorder %v740, 1
    %vm749 = vcmp.eq.s32.totalorder %v741, 1
    %v750 = vsel %vm742, %v285, -inf
    %v751 = vsel %vm743, %v288, -inf
    %v752 = vsel %vm744, %v293, -inf
    %v753 = vsel %vm745, %v296, -inf
    %v754 = vsel %vm746, %v301, -inf
    %v755 = vsel %vm747, %v304, -inf
    %v756 = vsel %vm748, %v309, -inf
    %v757 = vsel %vm749, %v312, -inf
    %v758 = vsel %vm742, %v414, -inf
    %v759 = vsel %vm743, %v417, -inf
    %v760 = vsel %vm744, %v422, -inf
    %v761 = vsel %vm745, %v425, -inf
    %v762 = vsel %vm746, %v430, -inf
    %v763 = vsel %vm747, %v433, -inf
    %v764 = vsel %vm748, %v438, -inf
    %v765 = vsel %vm749, %v441, -inf
    %v766 = vsel %vm742, %v543, -inf
    %v767 = vsel %vm743, %v546, -inf
    %v768 = vsel %vm744, %v551, -inf
    %v769 = vsel %vm745, %v554, -inf
    %v770 = vsel %vm746, %v559, -inf
    %v771 = vsel %vm747, %v562, -inf
    %v772 = vsel %vm748, %v567, -inf
    %v773 = vsel %vm749, %v570, -inf
    %v774 = vsel %vm742, %v672, -inf
    %v775 = vsel %vm743, %v675, -inf
    %v776 = vsel %vm744, %v680, -inf
    %v777 = vsel %vm745, %v683, -inf
    %v778 = vsel %vm746, %v688, -inf
    %v779 = vsel %vm747, %v691, -inf
    %v780 = vsel %vm748, %v696, -inf
    %v781 = vsel %vm749, %v699, -inf
    %v782 = vld [vmem:[#allocation2] sm:$0xff]
    %v783 = vld [vmem:[#allocation2 + $0x8] sm:$0xff]
    %v784 = vld [vmem:[#allocation2 + $0x10] sm:$0xff]
    %v785 = vld [vmem:[#allocation2 + $0x18] sm:$0xff]
    %v786 = vld [vmem:[#allocation2 + $0x20] sm:$0xff]
    %v787 = vld [vmem:[#allocation2 + $0x28] sm:$0xff]
    %v788 = vld [vmem:[#allocation2 + $0x30] sm:$0xff]
    %v789 = vld [vmem:[#allocation2 + $0x38] sm:$0xff]
    %v790 = vld [vmem:[#allocation2 + $0x40] sm:$0xff]
    %v791 = vld [vmem:[#allocation2 + $0x48] sm:$0xff]
    %v792 = vld [vmem:[#allocation2 + $0x50] sm:$0xff]
    %v793 = vld [vmem:[#allocation2 + $0x58] sm:$0xff]
    %v794 = vld [vmem:[#allocation2 + $0x60] sm:$0xff]
    %v795 = vld [vmem:[#allocation2 + $0x68] sm:$0xff]
    %v796 = vld [vmem:[#allocation2 + $0x70] sm:$0xff]
    %v797 = vld [vmem:[#allocation2 + $0x78] sm:$0xff]
    %v798 = vld [vmem:[#allocation2 + $0x80] sm:$0xff]
    %v799 = vld [vmem:[#allocation2 + $0x88] sm:$0xff]
    %v800 = vld [vmem:[#allocation2 + $0x90] sm:$0xff]
    %v801 = vld [vmem:[#allocation2 + $0x98] sm:$0xff]
    %v802 = vld [vmem:[#allocation2 + $0xa0] sm:$0xff]
    %v803 = vld [vmem:[#allocation2 + $0xa8] sm:$0xff]
    %v804 = vld [vmem:[#allocation2 + $0xb0] sm:$0xff]
    %v805 = vld [vmem:[#allocation2 + $0xb8] sm:$0xff]
    %v806 = vld [vmem:[#allocation2 + $0xc0] sm:$0xff]
    %v807 = vld [vmem:[#allocation2 + $0xc8] sm:$0xff]
    %v808 = vld [vmem:[#allocation2 + $0xd0] sm:$0xff]
    %v809 = vld [vmem:[#allocation2 + $0xd8] sm:$0xff]
    %v810 = vld [vmem:[#allocation2 + $0xe0] sm:$0xff]
    %v811 = vld [vmem:[#allocation2 + $0xe8] sm:$0xff]
    %v812 = vld [vmem:[#allocation2 + $0xf0] sm:$0xff]
    %v813 = vld [vmem:[#allocation2 + $0xf8] sm:$0xff]
    %vm814 = vcmask 523264
    %v815 = vsel %vm814, %v750, -inf
    %816 = vmax.xlane.f32.xlu0 %v815
    %v817 = vpop.xlane.xlu0 %816
    %v818 = vsel %vm814, %v751, -inf
    %819 = vmax.xlane.f32.xlu0 %v818
    %v820 = vpop.xlane.xlu0 %819
    %v821 = vsel %vm814, %v752, -inf
    %822 = vmax.xlane.f32.xlu0 %v821
    %v823 = vpop.xlane.xlu0 %822
    %v824 = vsel %vm814, %v753, -inf
    %825 = vmax.xlane.f32.xlu0 %v824
    %v826 = vpop.xlane.xlu0 %825
    %v827 = vsel %vm814, %v754, -inf
    %828 = vmax.xlane.f32.xlu0 %v827
    %v829 = vpop.xlane.xlu0 %828
    %v830 = vsel %vm814, %v755, -inf
    %831 = vmax.xlane.f32.xlu0 %v830
    %v832 = vpop.xlane.xlu0 %831
    %v833 = vsel %vm814, %v756, -inf
    %834 = vmax.xlane.f32.xlu0 %v833
    %v835 = vpop.xlane.xlu0 %834
    %v836 = vsel %vm814, %v757, -inf
    %837 = vmax.xlane.f32.xlu0 %v836
    %v838 = vpop.xlane.xlu0 %837
    %v839 = vsel %vm814, %v758, -inf
    %840 = vmax.xlane.f32.xlu0 %v839
    %v841 = vpop.xlane.xlu0 %840
    %v842 = vsel %vm814, %v759, -inf
    %843 = vmax.xlane.f32.xlu0 %v842
    %v844 = vpop.xlane.xlu0 %843
    %v845 = vsel %vm814, %v760, -inf
    %846 = vmax.xlane.f32.xlu0 %v845
    %v847 = vpop.xlane.xlu0 %846
    %v848 = vsel %vm814, %v761, -inf
    %849 = vmax.xlane.f32.xlu0 %v848
    %v850 = vpop.xlane.xlu0 %849
    %v851 = vsel %vm814, %v762, -inf
    %852 = vmax.xlane.f32.xlu0 %v851
    %v853 = vpop.xlane.xlu0 %852
    %v854 = vsel %vm814, %v763, -inf
    %855 = vmax.xlane.f32.xlu0 %v854
    %v856 = vpop.xlane.xlu0 %855
    %v857 = vsel %vm814, %v764, -inf
    %858 = vmax.xlane.f32.xlu0 %v857
    %v859 = vpop.xlane.xlu0 %858
    %v860 = vsel %vm814, %v765, -inf
    %861 = vmax.xlane.f32.xlu0 %v860
    %v862 = vpop.xlane.xlu0 %861
    %v863 = vsel %vm814, %v766, -inf
    %864 = vmax.xlane.f32.xlu0 %v863
    %v865 = vpop.xlane.xlu0 %864
    %v866 = vsel %vm814, %v767, -inf
    %867 = vmax.xlane.f32.xlu0 %v866
    %v868 = vpop.xlane.xlu0 %867
    %v869 = vsel %vm814, %v768, -inf
    %870 = vmax.xlane.f32.xlu0 %v869
    %v871 = vpop.xlane.xlu0 %870
    %v872 = vsel %vm814, %v769, -inf
    %873 = vmax.xlane.f32.xlu0 %v872
    %v874 = vpop.xlane.xlu0 %873
    %v875 = vsel %vm814, %v770, -inf
    %876 = vmax.xlane.f32.xlu0 %v875
    %v877 = vpop.xlane.xlu0 %876
    %v878 = vsel %vm814, %v771, -inf
    %879 = vmax.xlane.f32.xlu0 %v878
    %v880 = vpop.xlane.xlu0 %879
    %v881 = vsel %vm814, %v772, -inf
    %882 = vmax.xlane.f32.xlu0 %v881
    %v883 = vpop.xlane.xlu0 %882
    %v884 = vsel %vm814, %v773, -inf
    %885 = vmax.xlane.f32.xlu0 %v884
    %v886 = vpop.xlane.xlu0 %885
    %v887 = vsel %vm814, %v774, -inf
    %888 = vmax.xlane.f32.xlu0 %v887
    %v889 = vpop.xlane.xlu0 %888
    %v890 = vsel %vm814, %v775, -inf
    %891 = vmax.xlane.f32.xlu0 %v890
    %v892 = vpop.xlane.xlu0 %891
    %v893 = vsel %vm814, %v776, -inf
    %894 = vmax.xlane.f32.xlu0 %v893
    %v895 = vpop.xlane.xlu0 %894
    %v896 = vsel %vm814, %v777, -inf
    %897 = vmax.xlane.f32.xlu0 %v896
    %v898 = vpop.xlane.xlu0 %897
    %v899 = vsel %vm814, %v778, -inf
    %900 = vmax.xlane.f32.xlu0 %v899
    %v901 = vpop.xlane.xlu0 %900
    %v902 = vsel %vm814, %v779, -inf
    %903 = vmax.xlane.f32.xlu0 %v902
    %v904 = vpop.xlane.xlu0 %903
    %v905 = vsel %vm814, %v780, -inf
    %906 = vmax.xlane.f32.xlu0 %v905
    %v907 = vpop.xlane.xlu0 %906
    %v908 = vsel %vm814, %v781, -inf
    %909 = vmax.xlane.f32.xlu0 %v908
    %v910 = vpop.xlane.xlu0 %909
    %v911 = vmax.f32 %v782, %v817
    %v912 = vmax.f32 %v783, %v820
    %v913 = vmax.f32 %v784, %v823
    %v914 = vmax.f32 %v785, %v826
    %v915 = vmax.f32 %v786, %v829
    %v916 = vmax.f32 %v787, %v832
    %v917 = vmax.f32 %v788, %v835
    %v918 = vmax.f32 %v789, %v838
    %v919 = vmax.f32 %v790, %v841
    %v920 = vmax.f32 %v791, %v844
    %v921 = vmax.f32 %v792, %v847
    %v922 = vmax.f32 %v793, %v850
    %v923 = vmax.f32 %v794, %v853
    %v924 = vmax.f32 %v795, %v856
    %v925 = vmax.f32 %v796, %v859
    %v926 = vmax.f32 %v797, %v862
    %v927 = vmax.f32 %v798, %v865
    %v928 = vmax.f32 %v799, %v868
    %v929 = vmax.f32 %v800, %v871
    %v930 = vmax.f32 %v801, %v874
    %v931 = vmax.f32 %v802, %v877
    %v932 = vmax.f32 %v803, %v880
    %v933 = vmax.f32 %v804, %v883
    %v934 = vmax.f32 %v805, %v886
    %v935 = vmax.f32 %v806, %v889
    %v936 = vmax.f32 %v807, %v892
    %v937 = vmax.f32 %v808, %v895
    %v938 = vmax.f32 %v809, %v898
    %v939 = vmax.f32 %v810, %v901
    %v940 = vmax.f32 %v811, %v904
    %v941 = vmax.f32 %v812, %v907
    %v942 = vmax.f32 %v813, %v910
    %v943 = vsub.f32 %v782, %v911
    %v944 = vsub.f32 %v783, %v912
    %v945 = vsub.f32 %v784, %v913
    %v946 = vsub.f32 %v785, %v914
    %v947 = vsub.f32 %v786, %v915
    %v948 = vsub.f32 %v787, %v916
    %v949 = vsub.f32 %v788, %v917
    %v950 = vsub.f32 %v789, %v918
    %v951 = vsub.f32 %v790, %v919
    %v952 = vsub.f32 %v791, %v920
    %v953 = vsub.f32 %v792, %v921
    %v954 = vsub.f32 %v793, %v922
    %v955 = vsub.f32 %v794, %v923
    %v956 = vsub.f32 %v795, %v924
    %v957 = vsub.f32 %v796, %v925
    %v958 = vsub.f32 %v797, %v926
    %v959 = vsub.f32 %v798, %v927
    %v960 = vsub.f32 %v799, %v928
    %v961 = vsub.f32 %v800, %v929
    %v962 = vsub.f32 %v801, %v930
    %v963 = vsub.f32 %v802, %v931
    %v964 = vsub.f32 %v803, %v932
    %v965 = vsub.f32 %v804, %v933
    %v966 = vsub.f32 %v805, %v934
    %v967 = vsub.f32 %v806, %v935
    %v968 = vsub.f32 %v807, %v936
    %v969 = vsub.f32 %v808, %v937
    %v970 = vsub.f32 %v809, %v938
    %v971 = vsub.f32 %v810, %v939
    %v972 = vsub.f32 %v811, %v940
    %v973 = vsub.f32 %v812, %v941
    %v974 = vsub.f32 %v813, %v942
    %v975 = vmul.f32 %v943, 1.442695
    %v976 = vpow.pop %v975
    %v977 = vmul.f32 %v944, 1.442695
    %v978 = vpow.pop %v977
    %v979 = vmul.f32 %v945, 1.442695
    %v980 = vpow.pop %v979
    %v981 = vmul.f32 %v946, 1.442695
    %v982 = vpow.pop %v981
    %v983 = vmul.f32 %v947, 1.442695
    %v984 = vpow.pop %v983
    %v985 = vmul.f32 %v948, 1.442695
    %v986 = vpow.pop %v985
    %v987 = vmul.f32 %v949, 1.442695
    %v988 = vpow.pop %v987
    %v989 = vmul.f32 %v950, 1.442695
    %v990 = vpow.pop %v989
    %v991 = vmul.f32 %v951, 1.442695
    %v992 = vpow.pop %v991
    %v993 = vmul.f32 %v952, 1.442695
    %v994 = vpow.pop %v993
    %v995 = vmul.f32 %v953, 1.442695
    %v996 = vpow.pop %v995
    %v997 = vmul.f32 %v954, 1.442695
    %v998 = vpow.pop %v997
    %v999 = vmul.f32 %v955, 1.442695
    %v1000 = vpow.pop %v999
    %v1001 = vmul.f32 %v956, 1.442695
    %v1002 = vpow.pop %v1001
    %v1003 = vmul.f32 %v957, 1.442695
    %v1004 = vpow.pop %v1003
    %v1005 = vmul.f32 %v958, 1.442695
    %v1006 = vpow.pop %v1005
    %v1007 = vmul.f32 %v959, 1.442695
    %v1008 = vpow.pop %v1007
    %v1009 = vmul.f32 %v960, 1.442695
    %v1010 = vpow.pop %v1009
    %v1011 = vmul.f32 %v961, 1.442695
    %v1012 = vpow.pop %v1011
    %v1013 = vmul.f32 %v962, 1.442695
    %v1014 = vpow.pop %v1013
    %v1015 = vmul.f32 %v963, 1.442695
    %v1016 = vpow.pop %v1015
    %v1017 = vmul.f32 %v964, 1.442695
    %v1018 = vpow.pop %v1017
    %v1019 = vmul.f32 %v965, 1.442695
    %v1020 = vpow.pop %v1019
    %v1021 = vmul.f32 %v966, 1.442695
    %v1022 = vpow.pop %v1021
    %v1023 = vmul.f32 %v967, 1.442695
    %v1024 = vpow.pop %v1023
    %v1025 = vmul.f32 %v968, 1.442695
    %v1026 = vpow.pop %v1025
    %v1027 = vmul.f32 %v969, 1.442695
    %v1028 = vpow.pop %v1027
    %v1029 = vmul.f32 %v970, 1.442695
    %v1030 = vpow.pop %v1029
    %v1031 = vmul.f32 %v971, 1.442695
    %v1032 = vpow.pop %v1031
    %v1033 = vmul.f32 %v972, 1.442695
    %v1034 = vpow.pop %v1033
    %v1035 = vmul.f32 %v973, 1.442695
    %v1036 = vpow.pop %v1035
    %v1037 = vmul.f32 %v974, 1.442695
    %v1038 = vpow.pop %v1037
    %1040 = vset.pattern.permute.xlu0 0
    %1041 = vperm.xlu0 %1040, %v911
    %v1042 = vpop.permute.xlu0 %1041
    %1045 = vset.pattern.permute.xlu0 0
    %1046 = vperm.xlu0 %1045, %v912
    %v1047 = vpop.permute.xlu0 %1046
    %1050 = vset.pattern.permute.xlu0 0
    %1051 = vperm.xlu0 %1050, %v913
    %v1052 = vpop.permute.xlu0 %1051
    %1055 = vset.pattern.permute.xlu0 0
    %1056 = vperm.xlu0 %1055, %v914
    %v1057 = vpop.permute.xlu0 %1056
    %1060 = vset.pattern.permute.xlu0 0
    %1061 = vperm.xlu0 %1060, %v915
    %v1062 = vpop.permute.xlu0 %1061
    %1065 = vset.pattern.permute.xlu0 0
    %1066 = vperm.xlu0 %1065, %v916
    %v1067 = vpop.permute.xlu0 %1066
    %1070 = vset.pattern.permute.xlu0 0
    %1071 = vperm.xlu0 %1070, %v917
    %v1072 = vpop.permute.xlu0 %1071
    %1075 = vset.pattern.permute.xlu0 0
    %1076 = vperm.xlu0 %1075, %v918
    %v1077 = vpop.permute.xlu0 %1076
    %1080 = vset.pattern.permute.xlu0 0
    %1081 = vperm.xlu0 %1080, %v919
    %v1082 = vpop.permute.xlu0 %1081
    %1085 = vset.pattern.permute.xlu0 0
    %1086 = vperm.xlu0 %1085, %v920
    %v1087 = vpop.permute.xlu0 %1086
    %1090 = vset.pattern.permute.xlu0 0
    %1091 = vperm.xlu0 %1090, %v921
    %v1092 = vpop.permute.xlu0 %1091
    %1095 = vset.pattern.permute.xlu0 0
    %1096 = vperm.xlu0 %1095, %v922
    %v1097 = vpop.permute.xlu0 %1096
    %1100 = vset.pattern.permute.xlu0 0
    %1101 = vperm.xlu0 %1100, %v923
    %v1102 = vpop.permute.xlu0 %1101
    %1105 = vset.pattern.permute.xlu0 0
    %1106 = vperm.xlu0 %1105, %v924
    %v1107 = vpop.permute.xlu0 %1106
    %1110 = vset.pattern.permute.xlu0 0
    %1111 = vperm.xlu0 %1110, %v925
    %v1112 = vpop.permute.xlu0 %1111
    %1115 = vset.pattern.permute.xlu0 0
    %1116 = vperm.xlu0 %1115, %v926
    %v1117 = vpop.permute.xlu0 %1116
    %1120 = vset.pattern.permute.xlu0 0
    %1121 = vperm.xlu0 %1120, %v927
    %v1122 = vpop.permute.xlu0 %1121
    %1125 = vset.pattern.permute.xlu0 0
    %1126 = vperm.xlu0 %1125, %v928
    %v1127 = vpop.permute.xlu0 %1126
    %1130 = vset.pattern.permute.xlu0 0
    %1131 = vperm.xlu0 %1130, %v929
    %v1132 = vpop.permute.xlu0 %1131
    %1135 = vset.pattern.permute.xlu0 0
    %1136 = vperm.xlu0 %1135, %v930
    %v1137 = vpop.permute.xlu0 %1136
    %1140 = vset.pattern.permute.xlu0 0
    %1141 = vperm.xlu0 %1140, %v931
    %v1142 = vpop.permute.xlu0 %1141
    %1145 = vset.pattern.permute.xlu0 0
    %1146 = vperm.xlu0 %1145, %v932
    %v1147 = vpop.permute.xlu0 %1146
    %1150 = vset.pattern.permute.xlu0 0
    %1151 = vperm.xlu0 %1150, %v933
    %v1152 = vpop.permute.xlu0 %1151
    %1155 = vset.pattern.permute.xlu0 0
    %1156 = vperm.xlu0 %1155, %v934
    %v1157 = vpop.permute.xlu0 %1156
    %1160 = vset.pattern.permute.xlu0 0
    %1161 = vperm.xlu0 %1160, %v935
    %v1162 = vpop.permute.xlu0 %1161
    %1165 = vset.pattern.permute.xlu0 0
    %1166 = vperm.xlu0 %1165, %v936
    %v1167 = vpop.permute.xlu0 %1166
    %1170 = vset.pattern.permute.xlu0 0
    %1171 = vperm.xlu0 %1170, %v937
    %v1172 = vpop.permute.xlu0 %1171
    %1175 = vset.pattern.permute.xlu0 0
    %1176 = vperm.xlu0 %1175, %v938
    %v1177 = vpop.permute.xlu0 %1176
    %1180 = vset.pattern.permute.xlu0 0
    %1181 = vperm.xlu0 %1180, %v939
    %v1182 = vpop.permute.xlu0 %1181
    %1185 = vset.pattern.permute.xlu0 0
    %1186 = vperm.xlu0 %1185, %v940
    %v1187 = vpop.permute.xlu0 %1186
    %1190 = vset.pattern.permute.xlu0 0
    %1191 = vperm.xlu0 %1190, %v941
    %v1192 = vpop.permute.xlu0 %1191
    %1195 = vset.pattern.permute.xlu0 0
    %1196 = vperm.xlu0 %1195, %v942
    %v1197 = vpop.permute.xlu0 %1196
    %v1199 = vsub.f32 %v750, %v1042
    %v1200 = vsub.f32 %v751, %v1047
    %v1201 = vsub.f32 %v752, %v1052
    %v1202 = vsub.f32 %v753, %v1057
    %v1203 = vsub.f32 %v754, %v1062
    %v1204 = vsub.f32 %v755, %v1067
    %v1205 = vsub.f32 %v756, %v1072
    %v1206 = vsub.f32 %v757, %v1077
    %v1207 = vsub.f32 %v758, %v1082
    %v1208 = vsub.f32 %v759, %v1087
    %v1209 = vsub.f32 %v760, %v1092
    %v1210 = vsub.f32 %v761, %v1097
    %v1211 = vsub.f32 %v762, %v1102
    %v1212 = vsub.f32 %v763, %v1107
    %v1213 = vsub.f32 %v764, %v1112
    %v1214 = vsub.f32 %v765, %v1117
    %v1215 = vsub.f32 %v766, %v1122
    %v1216 = vsub.f32 %v767, %v1127
    %v1217 = vsub.f32 %v768, %v1132
    %v1218 = vsub.f32 %v769, %v1137
    %v1219 = vsub.f32 %v770, %v1142
    %v1220 = vsub.f32 %v771, %v1147
    %v1221 = vsub.f32 %v772, %v1152
    %v1222 = vsub.f32 %v773, %v1157
    %v1223 = vsub.f32 %v774, %v1162
    %v1224 = vsub.f32 %v775, %v1167
    %v1225 = vsub.f32 %v776, %v1172
    %v1226 = vsub.f32 %v777, %v1177
    %v1227 = vsub.f32 %v778, %v1182
    %v1228 = vsub.f32 %v779, %v1187
    %v1229 = vsub.f32 %v780, %v1192
    %v1230 = vsub.f32 %v781, %v1197
    %v1231 = vmul.f32 %v1199, 1.442695
    %v1232 = vpow.pop %v1231
    %v1233 = vmul.f32 %v1200, 1.442695
    %v1234 = vpow.pop %v1233
    %v1235 = vmul.f32 %v1201, 1.442695
    %v1236 = vpow.pop %v1235
    %v1237 = vmul.f32 %v1202, 1.442695
    %v1238 = vpow.pop %v1237
    %v1239 = vmul.f32 %v1203, 1.442695
    %v1240 = vpow.pop %v1239
    %v1241 = vmul.f32 %v1204, 1.442695
    %v1242 = vpow.pop %v1241
    %v1243 = vmul.f32 %v1205, 1.442695
    %v1244 = vpow.pop %v1243
    %v1245 = vmul.f32 %v1206, 1.442695
    %v1246 = vpow.pop %v1245
    %v1247 = vmul.f32 %v1207, 1.442695
    %v1248 = vpow.pop %v1247
    %v1249 = vmul.f32 %v1208, 1.442695
    %v1250 = vpow.pop %v1249
    %v1251 = vmul.f32 %v1209, 1.442695
    %v1252 = vpow.pop %v1251
    %v1253 = vmul.f32 %v1210, 1.442695
    %v1254 = vpow.pop %v1253
    %v1255 = vmul.f32 %v1211, 1.442695
    %v1256 = vpow.pop %v1255
    %v1257 = vmul.f32 %v1212, 1.442695
    %v1258 = vpow.pop %v1257
    %v1259 = vmul.f32 %v1213, 1.442695
    %v1260 = vpow.pop %v1259
    %v1261 = vmul.f32 %v1214, 1.442695
    %v1262 = vpow.pop %v1261
    %v1263 = vmul.f32 %v1215, 1.442695
    %v1264 = vpow.pop %v1263
    %v1265 = vmul.f32 %v1216, 1.442695
    %v1266 = vpow.pop %v1265
    %v1267 = vmul.f32 %v1217, 1.442695
    %v1268 = vpow.pop %v1267
    %v1269 = vmul.f32 %v1218, 1.442695
    %v1270 = vpow.pop %v1269
    %v1271 = vmul.f32 %v1219, 1.442695
    %v1272 = vpow.pop %v1271
    %v1273 = vmul.f32 %v1220, 1.442695
    %v1274 = vpow.pop %v1273
    %v1275 = vmul.f32 %v1221, 1.442695
    %v1276 = vpow.pop %v1275
    %v1277 = vmul.f32 %v1222, 1.442695
    %v1278 = vpow.pop %v1277
    %v1279 = vmul.f32 %v1223, 1.442695
    %v1280 = vpow.pop %v1279
    %v1281 = vmul.f32 %v1224, 1.442695
    %v1282 = vpow.pop %v1281
    %v1283 = vmul.f32 %v1225, 1.442695
    %v1284 = vpow.pop %v1283
    %v1285 = vmul.f32 %v1226, 1.442695
    %v1286 = vpow.pop %v1285
    %v1287 = vmul.f32 %v1227, 1.442695
    %v1288 = vpow.pop %v1287
    %v1289 = vmul.f32 %v1228, 1.442695
    %v1290 = vpow.pop %v1289
    %v1291 = vmul.f32 %v1229, 1.442695
    %v1292 = vpow.pop %v1291
    %v1293 = vmul.f32 %v1230, 1.442695
    %v1294 = vpow.pop %v1293
    %v1295 = vld [vmem:[#allocation3] sm:$0xff]
    %v1296 = vld [vmem:[#allocation3 + $0x8] sm:$0xff]
    %v1297 = vld [vmem:[#allocation3 + $0x10] sm:$0xff]
    %v1298 = vld [vmem:[#allocation3 + $0x18] sm:$0xff]
    %v1299 = vld [vmem:[#allocation3 + $0x20] sm:$0xff]
    %v1300 = vld [vmem:[#allocation3 + $0x28] sm:$0xff]
    %v1301 = vld [vmem:[#allocation3 + $0x30] sm:$0xff]
    %v1302 = vld [vmem:[#allocation3 + $0x38] sm:$0xff]
    %v1303 = vld [vmem:[#allocation3 + $0x40] sm:$0xff]
    %v1304 = vld [vmem:[#allocation3 + $0x48] sm:$0xff]
    %v1305 = vld [vmem:[#allocation3 + $0x50] sm:$0xff]
    %v1306 = vld [vmem:[#allocation3 + $0x58] sm:$0xff]
    %v1307 = vld [vmem:[#allocation3 + $0x60] sm:$0xff]
    %v1308 = vld [vmem:[#allocation3 + $0x68] sm:$0xff]
    %v1309 = vld [vmem:[#allocation3 + $0x70] sm:$0xff]
    %v1310 = vld [vmem:[#allocation3 + $0x78] sm:$0xff]
    %v1311 = vld [vmem:[#allocation3 + $0x80] sm:$0xff]
    %v1312 = vld [vmem:[#allocation3 + $0x88] sm:$0xff]
    %v1313 = vld [vmem:[#allocation3 + $0x90] sm:$0xff]
    %v1314 = vld [vmem:[#allocation3 + $0x98] sm:$0xff]
    %v1315 = vld [vmem:[#allocation3 + $0xa0] sm:$0xff]
    %v1316 = vld [vmem:[#allocation3 + $0xa8] sm:$0xff]
    %v1317 = vld [vmem:[#allocation3 + $0xb0] sm:$0xff]
    %v1318 = vld [vmem:[#allocation3 + $0xb8] sm:$0xff]
    %v1319 = vld [vmem:[#allocation3 + $0xc0] sm:$0xff]
    %v1320 = vld [vmem:[#allocation3 + $0xc8] sm:$0xff]
    %v1321 = vld [vmem:[#allocation3 + $0xd0] sm:$0xff]
    %v1322 = vld [vmem:[#allocation3 + $0xd8] sm:$0xff]
    %v1323 = vld [vmem:[#allocation3 + $0xe0] sm:$0xff]
    %v1324 = vld [vmem:[#allocation3 + $0xe8] sm:$0xff]
    %v1325 = vld [vmem:[#allocation3 + $0xf0] sm:$0xff]
    %v1326 = vld [vmem:[#allocation3 + $0xf8] sm:$0xff]
    %v1327 = vmul.f32 %v976, %v1295
    %v1328 = vmul.f32 %v978, %v1296
    %v1329 = vmul.f32 %v980, %v1297
    %v1330 = vmul.f32 %v982, %v1298
    %v1331 = vmul.f32 %v984, %v1299
    %v1332 = vmul.f32 %v986, %v1300
    %v1333 = vmul.f32 %v988, %v1301
    %v1334 = vmul.f32 %v990, %v1302
    %v1335 = vmul.f32 %v992, %v1303
    %v1336 = vmul.f32 %v994, %v1304
    %v1337 = vmul.f32 %v996, %v1305
    %v1338 = vmul.f32 %v998, %v1306
    %v1339 = vmul.f32 %v1000, %v1307
    %v1340 = vmul.f32 %v1002, %v1308
    %v1341 = vmul.f32 %v1004, %v1309
    %v1342 = vmul.f32 %v1006, %v1310
    %v1343 = vmul.f32 %v1008, %v1311
    %v1344 = vmul.f32 %v1010, %v1312
    %v1345 = vmul.f32 %v1012, %v1313
    %v1346 = vmul.f32 %v1014, %v1314
    %v1347 = vmul.f32 %v1016, %v1315
    %v1348 = vmul.f32 %v1018, %v1316
    %v1349 = vmul.f32 %v1020, %v1317
    %v1350 = vmul.f32 %v1022, %v1318
    %v1351 = vmul.f32 %v1024, %v1319
    %v1352 = vmul.f32 %v1026, %v1320
    %v1353 = vmul.f32 %v1028, %v1321
    %v1354 = vmul.f32 %v1030, %v1322
    %v1355 = vmul.f32 %v1032, %v1323
    %v1356 = vmul.f32 %v1034, %v1324
    %v1357 = vmul.f32 %v1036, %v1325
    %v1358 = vmul.f32 %v1038, %v1326
    %v1359 = vsel %vm814, %v1232, 0.0
    %1360 = vadd.xlane.f32.xlu0 %v1359
    %v1361 = vpop.xlane.xlu0 %1360
    %v1362 = vsel %vm814, %v1234, 0.0
    %1363 = vadd.xlane.f32.xlu0 %v1362
    %v1364 = vpop.xlane.xlu0 %1363
    %v1365 = vsel %vm814, %v1236, 0.0
    %1366 = vadd.xlane.f32.xlu0 %v1365
    %v1367 = vpop.xlane.xlu0 %1366
    %v1368 = vsel %vm814, %v1238, 0.0
    %1369 = vadd.xlane.f32.xlu0 %v1368
    %v1370 = vpop.xlane.xlu0 %1369
    %v1371 = vsel %vm814, %v1240, 0.0
    %1372 = vadd.xlane.f32.xlu0 %v1371
    %v1373 = vpop.xlane.xlu0 %1372
    %v1374 = vsel %vm814, %v1242, 0.0
    %1375 = vadd.xlane.f32.xlu0 %v1374
    %v1376 = vpop.xlane.xlu0 %1375
    %v1377 = vsel %vm814, %v1244, 0.0
    %1378 = vadd.xlane.f32.xlu0 %v1377
    %v1379 = vpop.xlane.xlu0 %1378
    %v1380 = vsel %vm814, %v1246, 0.0
    %1381 = vadd.xlane.f32.xlu0 %v1380
    %v1382 = vpop.xlane.xlu0 %1381
    %v1383 = vsel %vm814, %v1248, 0.0
    %1384 = vadd.xlane.f32.xlu0 %v1383
    %v1385 = vpop.xlane.xlu0 %1384
    %v1386 = vsel %vm814, %v1250, 0.0
    %1387 = vadd.xlane.f32.xlu0 %v1386
    %v1388 = vpop.xlane.xlu0 %1387
    %v1389 = vsel %vm814, %v1252, 0.0
    %1390 = vadd.xlane.f32.xlu0 %v1389
    %v1391 = vpop.xlane.xlu0 %1390
    %v1392 = vsel %vm814, %v1254, 0.0
    %1393 = vadd.xlane.f32.xlu0 %v1392
    %v1394 = vpop.xlane.xlu0 %1393
    %v1395 = vsel %vm814, %v1256, 0.0
    %1396 = vadd.xlane.f32.xlu0 %v1395
    %v1397 = vpop.xlane.xlu0 %1396
    %v1398 = vsel %vm814, %v1258, 0.0
    %1399 = vadd.xlane.f32.xlu0 %v1398
    %v1400 = vpop.xlane.xlu0 %1399
    %v1401 = vsel %vm814, %v1260, 0.0
    %1402 = vadd.xlane.f32.xlu0 %v1401
    %v1403 = vpop.xlane.xlu0 %1402
    %v1404 = vsel %vm814, %v1262, 0.0
    %1405 = vadd.xlane.f32.xlu0 %v1404
    %v1406 = vpop.xlane.xlu0 %1405
    %v1407 = vsel %vm814, %v1264, 0.0
    %1408 = vadd.xlane.f32.xlu0 %v1407
    %v1409 = vpop.xlane.xlu0 %1408
    %v1410 = vsel %vm814, %v1266, 0.0
    %1411 = vadd.xlane.f32.xlu0 %v1410
    %v1412 = vpop.xlane.xlu0 %1411
    %v1413 = vsel %vm814, %v1268, 0.0
    %1414 = vadd.xlane.f32.xlu0 %v1413
    %v1415 = vpop.xlane.xlu0 %1414
    %v1416 = vsel %vm814, %v1270, 0.0
    %1417 = vadd.xlane.f32.xlu0 %v1416
    %v1418 = vpop.xlane.xlu0 %1417
    %v1419 = vsel %vm814, %v1272, 0.0
    %1420 = vadd.xlane.f32.xlu0 %v1419
    %v1421 = vpop.xlane.xlu0 %1420
    %v1422 = vsel %vm814, %v1274, 0.0
    %1423 = vadd.xlane.f32.xlu0 %v1422
    %v1424 = vpop.xlane.xlu0 %1423
    %v1425 = vsel %vm814, %v1276, 0.0
    %1426 = vadd.xlane.f32.xlu0 %v1425
    %v1427 = vpop.xlane.xlu0 %1426
    %v1428 = vsel %vm814, %v1278, 0.0
    %1429 = vadd.xlane.f32.xlu0 %v1428
    %v1430 = vpop.xlane.xlu0 %1429
    %v1431 = vsel %vm814, %v1280, 0.0
    %1432 = vadd.xlane.f32.xlu0 %v1431
    %v1433 = vpop.xlane.xlu0 %1432
    %v1434 = vsel %vm814, %v1282, 0.0
    %1435 = vadd.xlane.f32.xlu0 %v1434
    %v1436 = vpop.xlane.xlu0 %1435
    %v1437 = vsel %vm814, %v1284, 0.0
    %1438 = vadd.xlane.f32.xlu0 %v1437
    %v1439 = vpop.xlane.xlu0 %1438
    %v1440 = vsel %vm814, %v1286, 0.0
    %1441 = vadd.xlane.f32.xlu0 %v1440
    %v1442 = vpop.xlane.xlu0 %1441
    %v1443 = vsel %vm814, %v1288, 0.0
    %1444 = vadd.xlane.f32.xlu0 %v1443
    %v1445 = vpop.xlane.xlu0 %1444
    %v1446 = vsel %vm814, %v1290, 0.0
    %1447 = vadd.xlane.f32.xlu0 %v1446
    %v1448 = vpop.xlane.xlu0 %1447
    %v1449 = vsel %vm814, %v1292, 0.0
    %1450 = vadd.xlane.f32.xlu0 %v1449
    %v1451 = vpop.xlane.xlu0 %1450
    %v1452 = vsel %vm814, %v1294, 0.0
    %1453 = vadd.xlane.f32.xlu0 %v1452
    %v1454 = vpop.xlane.xlu0 %1453
    %v1455 = vadd.f32 %v1327, %v1361
    %v1456 = vadd.f32 %v1328, %v1364
    %v1457 = vadd.f32 %v1329, %v1367
    %v1458 = vadd.f32 %v1330, %v1370
    %v1459 = vadd.f32 %v1331, %v1373
    %v1460 = vadd.f32 %v1332, %v1376
    %v1461 = vadd.f32 %v1333, %v1379
    %v1462 = vadd.f32 %v1334, %v1382
    %v1463 = vadd.f32 %v1335, %v1385
    %v1464 = vadd.f32 %v1336, %v1388
    %v1465 = vadd.f32 %v1337, %v1391
    %v1466 = vadd.f32 %v1338, %v1394
    %v1467 = vadd.f32 %v1339, %v1397
    %v1468 = vadd.f32 %v1340, %v1400
    %v1469 = vadd.f32 %v1341, %v1403
    %v1470 = vadd.f32 %v1342, %v1406
    %v1471 = vadd.f32 %v1343, %v1409
    %v1472 = vadd.f32 %v1344, %v1412
    %v1473 = vadd.f32 %v1345, %v1415
    %v1474 = vadd.f32 %v1346, %v1418
    %v1475 = vadd.f32 %v1347, %v1421
    %v1476 = vadd.f32 %v1348, %v1424
    %v1477 = vadd.f32 %v1349, %v1427
    %v1478 = vadd.f32 %v1350, %v1430
    %v1479 = vadd.f32 %v1351, %v1433
    %v1480 = vadd.f32 %v1352, %v1436
    %v1481 = vadd.f32 %v1353, %v1439
    %v1482 = vadd.f32 %v1354, %v1442
    %v1483 = vadd.f32 %v1355, %v1445
    %v1484 = vadd.f32 %v1356, %v1448
    %v1485 = vadd.f32 %v1357, %v1451
    %v1486 = vadd.f32 %v1358, %v1454
    %vm1487 = vcmask 7168
    %1488 = vst.msk [vmem:[#allocation3] sm:$0xff] %vm1487, %v1455
    %1489 = vst.msk [vmem:[#allocation3 + $0x8] sm:$0xff] %vm1487, %v1456
    %1490 = vst.msk [vmem:[#allocation3 + $0x10] sm:$0xff] %vm1487, %v1457
    %1491 = vst.msk [vmem:[#allocation3 + $0x18] sm:$0xff] %vm1487, %v1458
    %1492 = vst.msk [vmem:[#allocation3 + $0x20] sm:$0xff] %vm1487, %v1459
    %1493 = vst.msk [vmem:[#allocation3 + $0x28] sm:$0xff] %vm1487, %v1460
    %1494 = vst.msk [vmem:[#allocation3 + $0x30] sm:$0xff] %vm1487, %v1461
    %1495 = vst.msk [vmem:[#allocation3 + $0x38] sm:$0xff] %vm1487, %v1462
    %1496 = vst.msk [vmem:[#allocation3 + $0x40] sm:$0xff] %vm1487, %v1463
    %1497 = vst.msk [vmem:[#allocation3 + $0x48] sm:$0xff] %vm1487, %v1464
    %1498 = vst.msk [vmem:[#allocation3 + $0x50] sm:$0xff] %vm1487, %v1465
    %1499 = vst.msk [vmem:[#allocation3 + $0x58] sm:$0xff] %vm1487, %v1466
    %1500 = vst.msk [vmem:[#allocation3 + $0x60] sm:$0xff] %vm1487, %v1467
    %1501 = vst.msk [vmem:[#allocation3 + $0x68] sm:$0xff] %vm1487, %v1468
    %1502 = vst.msk [vmem:[#allocation3 + $0x70] sm:$0xff] %vm1487, %v1469
    %1503 = vst.msk [vmem:[#allocation3 + $0x78] sm:$0xff] %vm1487, %v1470
    %1504 = vst.msk [vmem:[#allocation3 + $0x80] sm:$0xff] %vm1487, %v1471
    %1505 = vst.msk [vmem:[#allocation3 + $0x88] sm:$0xff] %vm1487, %v1472
    %1506 = vst.msk [vmem:[#allocation3 + $0x90] sm:$0xff] %vm1487, %v1473
    %1507 = vst.msk [vmem:[#allocation3 + $0x98] sm:$0xff] %vm1487, %v1474
    %1508 = vst.msk [vmem:[#allocation3 + $0xa0] sm:$0xff] %vm1487, %v1475
    %1509 = vst.msk [vmem:[#allocation3 + $0xa8] sm:$0xff] %vm1487, %v1476
    %1510 = vst.msk [vmem:[#allocation3 + $0xb0] sm:$0xff] %vm1487, %v1477
    %1511 = vst.msk [vmem:[#allocation3 + $0xb8] sm:$0xff] %vm1487, %v1478
    %1512 = vst.msk [vmem:[#allocation3 + $0xc0] sm:$0xff] %vm1487, %v1479
    %1513 = vst.msk [vmem:[#allocation3 + $0xc8] sm:$0xff] %vm1487, %v1480
    %1514 = vst.msk [vmem:[#allocation3 + $0xd0] sm:$0xff] %vm1487, %v1481
    %1515 = vst.msk [vmem:[#allocation3 + $0xd8] sm:$0xff] %vm1487, %v1482
    %1516 = vst.msk [vmem:[#allocation3 + $0xe0] sm:$0xff] %vm1487, %v1483
    %1517 = vst.msk [vmem:[#allocation3 + $0xe8] sm:$0xff] %vm1487, %v1484
    %1518 = vst.msk [vmem:[#allocation3 + $0xf0] sm:$0xff] %vm1487, %v1485
    %1519 = vst.msk [vmem:[#allocation3 + $0xf8] sm:$0xff] %vm1487, %v1486
    %v1520 = vld [vmem:[#allocation4] sm:$0xff]
    %v1521 = vld [vmem:[#allocation4 + $0x8] sm:$0xff]
    %v1522 = vld [vmem:[#allocation4 + $0x10] sm:$0xff]
    %v1523 = vld [vmem:[#allocation4 + $0x18] sm:$0xff]
    %v1524 = vld [vmem:[#allocation4 + $0x20] sm:$0xff]
    %v1525 = vld [vmem:[#allocation4 + $0x28] sm:$0xff]
    %v1526 = vld [vmem:[#allocation4 + $0x30] sm:$0xff]
    %v1527 = vld [vmem:[#allocation4 + $0x38] sm:$0xff]
    %v1528 = vld [vmem:[#allocation4 + $0x40] sm:$0xff]
    %v1529 = vld [vmem:[#allocation4 + $0x48] sm:$0xff]
    %v1530 = vld [vmem:[#allocation4 + $0x50] sm:$0xff]
    %v1531 = vld [vmem:[#allocation4 + $0x58] sm:$0xff]
    %v1532 = vld [vmem:[#allocation4 + $0x60] sm:$0xff]
    %v1533 = vld [vmem:[#allocation4 + $0x68] sm:$0xff]
    %v1534 = vld [vmem:[#allocation4 + $0x70] sm:$0xff]
    %v1535 = vld [vmem:[#allocation4 + $0x78] sm:$0xff]
    %v1536 = vld [vmem:[#allocation4 + $0x80] sm:$0xff]
    %v1537 = vld [vmem:[#allocation4 + $0x88] sm:$0xff]
    %v1538 = vld [vmem:[#allocation4 + $0x90] sm:$0xff]
    %v1539 = vld [vmem:[#allocation4 + $0x98] sm:$0xff]
    %v1540 = vld [vmem:[#allocation4 + $0xa0] sm:$0xff]
    %v1541 = vld [vmem:[#allocation4 + $0xa8] sm:$0xff]
    %v1542 = vld [vmem:[#allocation4 + $0xb0] sm:$0xff]
    %v1543 = vld [vmem:[#allocation4 + $0xb8] sm:$0xff]
    %v1544 = vld [vmem:[#allocation4 + $0xc0] sm:$0xff]
    %v1545 = vld [vmem:[#allocation4 + $0xc8] sm:$0xff]
    %v1546 = vld [vmem:[#allocation4 + $0xd0] sm:$0xff]
    %v1547 = vld [vmem:[#allocation4 + $0xd8] sm:$0xff]
    %v1548 = vld [vmem:[#allocation4 + $0xe0] sm:$0xff]
    %v1549 = vld [vmem:[#allocation4 + $0xe8] sm:$0xff]
    %v1550 = vld [vmem:[#allocation4 + $0xf0] sm:$0xff]
    %v1551 = vld [vmem:[#allocation4 + $0xf8] sm:$0xff]
    %1553 = vset.pattern.permute.xlu0 0
    %1554 = vperm.xlu0 %1553, %v976
    %v1555 = vpop.permute.xlu0 %1554
    %1558 = vset.pattern.permute.xlu0 0
    %1559 = vperm.xlu0 %1558, %v978
    %v1560 = vpop.permute.xlu0 %1559
    %1563 = vset.pattern.permute.xlu0 0
    %1564 = vperm.xlu0 %1563, %v980
    %v1565 = vpop.permute.xlu0 %1564
    %1568 = vset.pattern.permute.xlu0 0
    %1569 = vperm.xlu0 %1568, %v982
    %v1570 = vpop.permute.xlu0 %1569
    %1573 = vset.pattern.permute.xlu0 0
    %1574 = vperm.xlu0 %1573, %v984
    %v1575 = vpop.permute.xlu0 %1574
    %1578 = vset.pattern.permute.xlu0 0
    %1579 = vperm.xlu0 %1578, %v986
    %v1580 = vpop.permute.xlu0 %1579
    %1583 = vset.pattern.permute.xlu0 0
    %1584 = vperm.xlu0 %1583, %v988
    %v1585 = vpop.permute.xlu0 %1584
    %1588 = vset.pattern.permute.xlu0 0
    %1589 = vperm.xlu0 %1588, %v990
    %v1590 = vpop.permute.xlu0 %1589
    %1593 = vset.pattern.permute.xlu0 0
    %1594 = vperm.xlu0 %1593, %v992
    %v1595 = vpop.permute.xlu0 %1594
    %1598 = vset.pattern.permute.xlu0 0
    %1599 = vperm.xlu0 %1598, %v994
    %v1600 = vpop.permute.xlu0 %1599
    %1603 = vset.pattern.permute.xlu0 0
    %1604 = vperm.xlu0 %1603, %v996
    %v1605 = vpop.permute.xlu0 %1604
    %1608 = vset.pattern.permute.xlu0 0
    %1609 = vperm.xlu0 %1608, %v998
    %v1610 = vpop.permute.xlu0 %1609
    %1613 = vset.pattern.permute.xlu0 0
    %1614 = vperm.xlu0 %1613, %v1000
    %v1615 = vpop.permute.xlu0 %1614
    %1618 = vset.pattern.permute.xlu0 0
    %1619 = vperm.xlu0 %1618, %v1002
    %v1620 = vpop.permute.xlu0 %1619
    %1623 = vset.pattern.permute.xlu0 0
    %1624 = vperm.xlu0 %1623, %v1004
    %v1625 = vpop.permute.xlu0 %1624
    %1628 = vset.pattern.permute.xlu0 0
    %1629 = vperm.xlu0 %1628, %v1006
    %v1630 = vpop.permute.xlu0 %1629
    %1633 = vset.pattern.permute.xlu0 0
    %1634 = vperm.xlu0 %1633, %v1008
    %v1635 = vpop.permute.xlu0 %1634
    %1638 = vset.pattern.permute.xlu0 0
    %1639 = vperm.xlu0 %1638, %v1010
    %v1640 = vpop.permute.xlu0 %1639
    %1643 = vset.pattern.permute.xlu0 0
    %1644 = vperm.xlu0 %1643, %v1012
    %v1645 = vpop.permute.xlu0 %1644
    %1648 = vset.pattern.permute.xlu0 0
    %1649 = vperm.xlu0 %1648, %v1014
    %v1650 = vpop.permute.xlu0 %1649
    %1653 = vset.pattern.permute.xlu0 0
    %1654 = vperm.xlu0 %1653, %v1016
    %v1655 = vpop.permute.xlu0 %1654
    %1658 = vset.pattern.permute.xlu0 0
    %1659 = vperm.xlu0 %1658, %v1018
    %v1660 = vpop.permute.xlu0 %1659
    %1663 = vset.pattern.permute.xlu0 0
    %1664 = vperm.xlu0 %1663, %v1020
    %v1665 = vpop.permute.xlu0 %1664
    %1668 = vset.pattern.permute.xlu0 0
    %1669 = vperm.xlu0 %1668, %v1022
    %v1670 = vpop.permute.xlu0 %1669
    %1673 = vset.pattern.permute.xlu0 0
    %1674 = vperm.xlu0 %1673, %v1024
    %v1675 = vpop.permute.xlu0 %1674
    %1678 = vset.pattern.permute.xlu0 0
    %1679 = vperm.xlu0 %1678, %v1026
    %v1680 = vpop.permute.xlu0 %1679
    %1683 = vset.pattern.permute.xlu0 0
    %1684 = vperm.xlu0 %1683, %v1028
    %v1685 = vpop.permute.xlu0 %1684
    %1688 = vset.pattern.permute.xlu0 0
    %1689 = vperm.xlu0 %1688, %v1030
    %v1690 = vpop.permute.xlu0 %1689
    %1693 = vset.pattern.permute.xlu0 0
    %1694 = vperm.xlu0 %1693, %v1032
    %v1695 = vpop.permute.xlu0 %1694
    %1698 = vset.pattern.permute.xlu0 0
    %1699 = vperm.xlu0 %1698, %v1034
    %v1700 = vpop.permute.xlu0 %1699
    %1703 = vset.pattern.permute.xlu0 0
    %1704 = vperm.xlu0 %1703, %v1036
    %v1705 = vpop.permute.xlu0 %1704
    %1708 = vset.pattern.permute.xlu0 0
    %1709 = vperm.xlu0 %1708, %v1038
    %v1710 = vpop.permute.xlu0 %1709
    %v1712 = vmul.f32 %v1555, %v1520
    %v1713 = vmul.f32 %v1560, %v1521
    %v1714 = vmul.f32 %v1565, %v1522
    %v1715 = vmul.f32 %v1570, %v1523
    %v1716 = vmul.f32 %v1575, %v1524
    %v1717 = vmul.f32 %v1580, %v1525
    %v1718 = vmul.f32 %v1585, %v1526
    %v1719 = vmul.f32 %v1590, %v1527
    %v1720 = vmul.f32 %v1595, %v1528
    %v1721 = vmul.f32 %v1600, %v1529
    %v1722 = vmul.f32 %v1605, %v1530
    %v1723 = vmul.f32 %v1610, %v1531
    %v1724 = vmul.f32 %v1615, %v1532
    %v1725 = vmul.f32 %v1620, %v1533
    %v1726 = vmul.f32 %v1625, %v1534
    %v1727 = vmul.f32 %v1630, %v1535
    %v1728 = vmul.f32 %v1635, %v1536
    %v1729 = vmul.f32 %v1640, %v1537
    %v1730 = vmul.f32 %v1645, %v1538
    %v1731 = vmul.f32 %v1650, %v1539
    %v1732 = vmul.f32 %v1655, %v1540
    %v1733 = vmul.f32 %v1660, %v1541
    %v1734 = vmul.f32 %v1665, %v1542
    %v1735 = vmul.f32 %v1670, %v1543
    %v1736 = vmul.f32 %v1675, %v1544
    %v1737 = vmul.f32 %v1680, %v1545
    %v1738 = vmul.f32 %v1685, %v1546
    %v1739 = vmul.f32 %v1690, %v1547
    %v1740 = vmul.f32 %v1695, %v1548
    %v1741 = vmul.f32 %v1700, %v1549
    %v1742 = vmul.f32 %v1705, %v1550
    %v1743 = vmul.f32 %v1710, %v1551
    %v1744 = vpack.c.bf16 %v1234, %v1232
    %v1745 = vpack.c.bf16 %v1238, %v1236
    %v1746 = vpack.c.bf16 %v1242, %v1240
    %v1747 = vpack.c.bf16 %v1246, %v1244
    %v1748 = vpack.c.bf16 %v1250, %v1248
    %v1749 = vpack.c.bf16 %v1254, %v1252
    %v1750 = vpack.c.bf16 %v1258, %v1256
    %v1751 = vpack.c.bf16 %v1262, %v1260
    %v1752 = vpack.c.bf16 %v1266, %v1264
    %v1753 = vpack.c.bf16 %v1270, %v1268
    %v1754 = vpack.c.bf16 %v1274, %v1272
    %v1755 = vpack.c.bf16 %v1278, %v1276
    %v1756 = vpack.c.bf16 %v1282, %v1280
    %v1757 = vpack.c.bf16 %v1286, %v1284
    %v1758 = vpack.c.bf16 %v1290, %v1288
    %v1759 = vpack.c.bf16 %v1294, %v1292
    %v1760 = vld [vmem:[%s2] sm:$0xf]
    %v1761 = vld [vmem:[%s2 + $0x4] sm:$0xf]
    %v1762 = vld [vmem:[%s2 + $0x8] sm:$0xf]
    %v1763 = vld [vmem:[%s2 + $0xc] sm:$0xf]
    %v1764 = vld [vmem:[%s2 + $0x10] sm:$0xf]
    %v1765 = vld [vmem:[%s2 + $0x14] sm:$0xf]
    %v1766 = vld [vmem:[%s2 + $0x18] sm:$0xf]
    %v1767 = vld [vmem:[%s2 + $0x1c] sm:$0xf]
    %v1768 = vld [vmem:[%s2 + $0x20] sm:$0xf]
    %v1769 = vld [vmem:[%s2 + $0x24] sm:$0xf]
    %v1770 = vld [vmem:[%s2 + $0x28] sm:$0xf]
    %v1771 = vld [vmem:[%s2 + $0x2c] sm:$0xf]
    %v1772 = vld [vmem:[%s2 + $0x30] sm:$0xf]
    %v1773 = vld [vmem:[%s2 + $0x34] sm:$0xf]
    %v1774 = vld [vmem:[%s2 + $0x38] sm:$0xf]
    %v1775 = vld [vmem:[%s2 + $0x3c] sm:$0xf]
    %v1776 = vld [vmem:[%s2 + $0x40] sm:$0xf]
    %v1777 = vld [vmem:[%s2 + $0x44] sm:$0xf]
    %v1778 = vld [vmem:[%s2 + $0x48] sm:$0xf]
    %v1779 = vld [vmem:[%s2 + $0x4c] sm:$0xf]
    %v1780 = vld [vmem:[%s2 + $0x50] sm:$0xf]
    %v1781 = vld [vmem:[%s2 + $0x54] sm:$0xf]
    %v1782 = vld [vmem:[%s2 + $0x58] sm:$0xf]
    %v1783 = vld [vmem:[%s2 + $0x5c] sm:$0xf]
    %v1784 = vld [vmem:[%s2 + $0x60] sm:$0xf]
    %v1785 = vld [vmem:[%s2 + $0x64] sm:$0xf]
    %v1786 = vld [vmem:[%s2 + $0x68] sm:$0xf]
    %v1787 = vld [vmem:[%s2 + $0x6c] sm:$0xf]
    %v1788 = vld [vmem:[%s2 + $0x70] sm:$0xf]
    %v1789 = vld [vmem:[%s2 + $0x74] sm:$0xf]
    %v1790 = vld [vmem:[%s2 + $0x78] sm:$0xf]
    %v1791 = vld [vmem:[%s2 + $0x7c] sm:$0xf]
    %v1800 = vunpack.c.l.b16 %v1760
    %v1801 = vunpack.c.l.b16 %v1761
    %v1802 = vunpack.c.l.b16 %v1762
    %v1803 = vunpack.c.l.b16 %v1763
    %v1804 = vunpack.c.l.b16 %v1764
    %v1805 = vunpack.c.l.b16 %v1765
    %v1806 = vunpack.c.l.b16 %v1766
    %v1807 = vunpack.c.l.b16 %v1767
    %v1808 = vpack.c.b16 %v1801, %v1800
    %v1809 = vpack.c.b16 %v1803, %v1802
    %v1810 = vpack.c.b16 %v1805, %v1804
    %v1811 = vpack.c.b16 %v1807, %v1806
    %v1817 = vsel %vm814, %v1744, 0
    %v1820 = vsel %vm814, %v1745, 0
    %v1823 = vsel %vm814, %v1746, 0
    %v1826 = vsel %vm814, %v1747, 0
    %1828 = vmatprep.subr.bf16.mxu0 0
    %1829 = vmatpush1.bf16.msra.mxu0 %v1808
    %1830 = vmatprep.subr.bf16.mxu0 0
    %1831 = vmatpush1.bf16.msra.mxu0 %v1809
    %1832 = vmatprep.subr.bf16.mxu0 0
    %1833 = vmatpush1.bf16.msra.mxu0 %v1810
    %1834 = vmatprep.subr.bf16.mxu0 0
    %1835 = vmatpush1.bf16.msra.mxu0 %v1811
    %1836 = vmatprep.subr.bf16.mxu0 0
    %1837 = vmatpush1.bf16.msra.mxu0 0
    %1838 = vmatprep.subr.bf16.mxu0 0
    %1839 = vmatpush1.bf16.msra.mxu0 0
    %1840 = vmatprep.subr.bf16.mxu0 0
    %1841 = vmatpush1.bf16.msra.mxu0 0
    %1842 = vmatprep.subr.bf16.mxu0 0
    %1843 = vmatpush1.bf16.msra.mxu0 0
    %1844 = vmatprep.subr.bf16.mxu0 0
    %1845 = vmatpush1.bf16.msra.mxu0 0
    %1846 = vmatprep.subr.bf16.mxu0 0
    %1847 = vmatpush1.bf16.msra.mxu0 0
    %1848 = vmatprep.subr.bf16.mxu0 0
    %1849 = vmatpush1.bf16.msra.mxu0 0
    %1850 = vmatprep.subr.bf16.mxu0 0
    %1851 = vmatpush1.bf16.msra.mxu0 0
    %1852 = vmatprep.subr.bf16.mxu0 0
    %1853 = vmatpush1.bf16.msra.mxu0 0
    %1854 = vmatprep.subr.bf16.mxu0 0
    %1855 = vmatpush1.bf16.msra.mxu0 0
    %1856 = vmatprep.subr.bf16.mxu0 0
    %1857 = vmatpush1.bf16.msra.mxu0 0
    %1858 = vmatprep.subr.bf16.mxu0 0
    %1859 = vmatpush1.bf16.msra.mxu0 0
    %1860 = vmatprep.mubr.bf16.mxu0 0
    %1861 = vmatmul.mubr.bf16.gmra.mrb[0].mxu0 %v1817
    %v1862 = vpop.f32.mrb[0].mxu0
    %v1863 = vadd.f32 0.0, %v1862
    %v1864 = vpop.f32.mrb[0].mxu0
    %v1865 = vpop.f32.mrb[0].mxu0
    %v1866 = vadd.f32 0.0, %v1865
    %v1867 = vpop.f32.mrb[0].mxu0
    %1868 = vmatprep.mubr.bf16.mxu0 0
    %1869 = vmatmul.mubr.bf16.gmra.mrb[0].mxu0 %v1820
    %v1870 = vpop.f32.mrb[0].mxu0
    %v1871 = vadd.f32 0.0, %v1870
    %v1872 = vpop.f32.mrb[0].mxu0
    %v1873 = vpop.f32.mrb[0].mxu0
    %v1874 = vadd.f32 0.0, %v1873
    %v1875 = vpop.f32.mrb[0].mxu0
    %1876 = vmatprep.mubr.bf16.mxu0 0
    %1877 = vmatmul.mubr.bf16.gmra.mrb[0].mxu0 %v1823
    %v1878 = vpop.f32.mrb[0].mxu0
    %v1879 = vadd.f32 0.0, %v1878
    %v1880 = vpop.f32.mrb[0].mxu0
    %v1881 = vpop.f32.mrb[0].mxu0
    %v1882 = vadd.f32 0.0, %v1881
    %v1883 = vpop.f32.mrb[0].mxu0
    %1884 = vmatprep.mubr.bf16.mxu0 0
    %1885 = vmatmul.mubr.bf16.gmra.mrb[0].mxu0 %v1826
    %v1886 = vpop.f32.mrb[0].mxu0
    %v1887 = vadd.f32 0.0, %v1886
    %v1888 = vpop.f32.mrb[0].mxu0
    %v1889 = vpop.f32.mrb[0].mxu0
    %v1890 = vadd.f32 0.0, %v1889
    %v1891 = vpop.f32.mrb[0].mxu0
    %1892 = vdwg.mxu0
    %v1901 = vunpack.c.l.b16 %v1768
    %v1902 = vunpack.c.l.b16 %v1769
    %v1903 = vunpack.c.l.b16 %v1770
    %v1904 = vunpack.c.l.b16 %v1771
    %v1905 = vunpack.c.l.b16 %v1772
    %v1906 = vunpack.c.l.b16 %v1773
    %v1907 = vunpack.c.l.b16 %v1774
    %v1908 = vunpack.c.l.b16 %v1775
    %v1909 = vpack.c.b16 %v1902, %v1901
    %v1910 = vpack.c.b16 %v1904, %v1903
    %v1911 = vpack.c.b16 %v1906, %v1905
    %v1912 = vpack.c.b16 %v1908, %v1907
    %v1918 = vsel %vm814, %v1748, 0
    %v1921 = vsel %vm814, %v1749, 0
    %v1924 = vsel %vm814, %v1750, 0
    %v1927 = vsel %vm814, %v1751, 0
    %1929 = vmatprep.subr.bf16.mxu0 0
    %1930 = vmatpush1.bf16.msra.mxu0 %v1909
    %1931 = vmatprep.subr.bf16.mxu0 0
    %1932 = vmatpush1.bf16.msra.mxu0 %v1910
    %1933 = vmatprep.subr.bf16.mxu0 0
    %1934 = vmatpush1.bf16.msra.mxu0 %v1911
    %1935 = vmatprep.subr.bf16.mxu0 0
    %1936 = vmatpush1.bf16.msra.mxu0 %v1912
    %1937 = vmatprep.subr.bf16.mxu0 0
    %1938 = vmatpush1.bf16.msra.mxu0 0
    %1939 = vmatprep.subr.bf16.mxu0 0
    %1940 = vmatpush1.bf16.msra.mxu0 0
    %1941 = vmatprep.subr.bf16.mxu0 0
    %1942 = vmatpush1.bf16.msra.mxu0 0
    %1943 = vmatprep.subr.bf16.mxu0 0
    %1944 = vmatpush1.bf16.msra.mxu0 0
    %1945 = vmatprep.subr.bf16.mxu0 0
    %1946 = vmatpush1.bf16.msra.mxu0 0
    %1947 = vmatprep.subr.bf16.mxu0 0
    %1948 = vmatpush1.bf16.msra.mxu0 0
    %1949 = vmatprep.subr.bf16.mxu0 0
    %1950 = vmatpush1.bf16.msra.mxu0 0
    %1951 = vmatprep.subr.bf16.mxu0 0
    %1952 = vmatpush1.bf16.msra.mxu0 0
    %1953 = vmatprep.subr.bf16.mxu0 0
    %1954 = vmatpush1.bf16.msra.mxu0 0
    %1955 = vmatprep.subr.bf16.mxu0 0
    %1956 = vmatpush1.bf16.msra.mxu0 0
    %1957 = vmatprep.subr.bf16.mxu0 0
    %1958 = vmatpush1.bf16.msra.mxu0 0
    %1959 = vmatprep.subr.bf16.mxu0 0
    %1960 = vmatpush1.bf16.msra.mxu0 0
    %1961 = vmatprep.mubr.bf16.mxu0 0
    %1962 = vmatmul.mubr.bf16.gmra.mrb[0].mxu0 %v1918
    %v1963 = vpop.f32.mrb[0].mxu0
    %v1964 = vadd.f32 0.0, %v1963
    %v1965 = vpop.f32.mrb[0].mxu0
    %v1966 = vpop.f32.mrb[0].mxu0
    %v1967 = vadd.f32 0.0, %v1966
    %v1968 = vpop.f32.mrb[0].mxu0
    %1969 = vmatprep.mubr.bf16.mxu0 0
    %1970 = vmatmul.mubr.bf16.gmra.mrb[0].mxu0 %v1921
    %v1971 = vpop.f32.mrb[0].mxu0
    %v1972 = vadd.f32 0.0, %v1971
    %v1973 = vpop.f32.mrb[0].mxu0
    %v1974 = vpop.f32.mrb[0].mxu0
    %v1975 = vadd.f32 0.0, %v1974
    %v1976 = vpop.f32.mrb[0].mxu0
    %1977 = vmatprep.mubr.bf16.mxu0 0
    %1978 = vmatmul.mubr.bf16.gmra.mrb[0].mxu0 %v1924
    %v1979 = vpop.f32.mrb[0].mxu0
    %v1980 = vadd.f32 0.0, %v1979
    %v1981 = vpop.f32.mrb[0].mxu0
    %v1982 = vpop.f32.mrb[0].mxu0
    %v1983 = vadd.f32 0.0, %v1982
    %v1984 = vpop.f32.mrb[0].mxu0
    %1985 = vmatprep.mubr.bf16.mxu0 0
    %1986 = vmatmul.mubr.bf16.gmra.mrb[0].mxu0 %v1927
    %v1987 = vpop.f32.mrb[0].mxu0
    %v1988 = vadd.f32 0.0, %v1987
    %v1989 = vpop.f32.mrb[0].mxu0
    %v1990 = vpop.f32.mrb[0].mxu0
    %v1991 = vadd.f32 0.0, %v1990
    %v1992 = vpop.f32.mrb[0].mxu0
    %1993 = vdwg.mxu0
    %v2002 = vunpack.c.l.b16 %v1776
    %v2003 = vunpack.c.l.b16 %v1777
    %v2004 = vunpack.c.l.b16 %v1778
    %v2005 = vunpack.c.l.b16 %v1779
    %v2006 = vunpack.c.l.b16 %v1780
    %v2007 = vunpack.c.l.b16 %v1781
    %v2008 = vunpack.c.l.b16 %v1782
    %v2009 = vunpack.c.l.b16 %v1783
    %v2010 = vpack.c.b16 %v2003, %v2002
    %v2011 = vpack.c.b16 %v2005, %v2004
    %v2012 = vpack.c.b16 %v2007, %v2006
    %v2013 = vpack.c.b16 %v2009, %v2008
    %v2019 = vsel %vm814, %v1752, 0
    %v2022 = vsel %vm814, %v1753, 0
    %v2025 = vsel %vm814, %v1754, 0
    %v2028 = vsel %vm814, %v1755, 0
    %2030 = vmatprep.subr.bf16.mxu0 0
    %2031 = vmatpush1.bf16.msra.mxu0 %v2010
    %2032 = vmatprep.subr.bf16.mxu0 0
    %2033 = vmatpush1.bf16.msra.mxu0 %v2011
    %2034 = vmatprep.subr.bf16.mxu0 0
    %2035 = vmatpush1.bf16.msra.mxu0 %v2012
    %2036 = vmatprep.subr.bf16.mxu0 0
    %2037 = vmatpush1.bf16.msra.mxu0 %v2013
    %2038 = vmatprep.subr.bf16.mxu0 0
    %2039 = vmatpush1.bf16.msra.mxu0 0
    %2040 = vmatprep.subr.bf16.mxu0 0
    %2041 = vmatpush1.bf16.msra.mxu0 0
    %2042 = vmatprep.subr.bf16.mxu0 0
    %2043 = vmatpush1.bf16.msra.mxu0 0
    %2044 = vmatprep.subr.bf16.mxu0 0
    %2045 = vmatpush1.bf16.msra.mxu0 0
    %2046 = vmatprep.subr.bf16.mxu0 0
    %2047 = vmatpush1.bf16.msra.mxu0 0
    %2048 = vmatprep.subr.bf16.mxu0 0
    %2049 = vmatpush1.bf16.msra.mxu0 0
    %2050 = vmatprep.subr.bf16.mxu0 0
    %2051 = vmatpush1.bf16.msra.mxu0 0
    %2052 = vmatprep.subr.bf16.mxu0 0
    %2053 = vmatpush1.bf16.msra.mxu0 0
    %2054 = vmatprep.subr.bf16.mxu0 0
    %2055 = vmatpush1.bf16.msra.mxu0 0
    %2056 = vmatprep.subr.bf16.mxu0 0
    %2057 = vmatpush1.bf16.msra.mxu0 0
    %2058 = vmatprep.subr.bf16.mxu0 0
    %2059 = vmatpush1.bf16.msra.mxu0 0
    %2060 = vmatprep.subr.bf16.mxu0 0
    %2061 = vmatpush1.bf16.msra.mxu0 0
    %2062 = vmatprep.mubr.bf16.mxu0 0
    %2063 = vmatmul.mubr.bf16.gmra.mrb[0].mxu0 %v2019
    %v2064 = vpop.f32.mrb[0].mxu0
    %v2065 = vadd.f32 0.0, %v2064
    %v2066 = vpop.f32.mrb[0].mxu0
    %v2067 = vpop.f32.mrb[0].mxu0
    %v2068 = vadd.f32 0.0, %v2067
    %v2069 = vpop.f32.mrb[0].mxu0
    %2070 = vmatprep.mubr.bf16.mxu0 0
    %2071 = vmatmul.mubr.bf16.gmra.mrb[0].mxu0 %v2022
    %v2072 = vpop.f32.mrb[0].mxu0
    %v2073 = vadd.f32 0.0, %v2072
    %v2074 = vpop.f32.mrb[0].mxu0
    %v2075 = vpop.f32.mrb[0].mxu0
    %v2076 = vadd.f32 0.0, %v2075
    %v2077 = vpop.f32.mrb[0].mxu0
    %2078 = vmatprep.mubr.bf16.mxu0 0
    %2079 = vmatmul.mubr.bf16.gmra.mrb[0].mxu0 %v2025
    %v2080 = vpop.f32.mrb[0].mxu0
    %v2081 = vadd.f32 0.0, %v2080
    %v2082 = vpop.f32.mrb[0].mxu0
    %v2083 = vpop.f32.mrb[0].mxu0
    %v2084 = vadd.f32 0.0, %v2083
    %v2085 = vpop.f32.mrb[0].mxu0
    %2086 = vmatprep.mubr.bf16.mxu0 0
    %2087 = vmatmul.mubr.bf16.gmra.mrb[0].mxu0 %v2028
    %v2088 = vpop.f32.mrb[0].mxu0
    %v2089 = vadd.f32 0.0, %v2088
    %v2090 = vpop.f32.mrb[0].mxu0
    %v2091 = vpop.f32.mrb[0].mxu0
    %v2092 = vadd.f32 0.0, %v2091
    %v2093 = vpop.f32.mrb[0].mxu0
    %2094 = vdwg.mxu0
    %v2103 = vunpack.c.l.b16 %v1784
    %v2104 = vunpack.c.l.b16 %v1785
    %v2105 = vunpack.c.l.b16 %v1786
    %v2106 = vunpack.c.l.b16 %v1787
    %v2107 = vunpack.c.l.b16 %v1788
    %v2108 = vunpack.c.l.b16 %v1789
    %v2109 = vunpack.c.l.b16 %v1790
    %v2110 = vunpack.c.l.b16 %v1791
    %v2111 = vpack.c.b16 %v2104, %v2103
    %v2112 = vpack.c.b16 %v2106, %v2105
    %v2113 = vpack.c.b16 %v2108, %v2107
    %v2114 = vpack.c.b16 %v2110, %v2109
    %v2120 = vsel %vm814, %v1756, 0
    %v2123 = vsel %vm814, %v1757, 0
    %v2126 = vsel %vm814, %v1758, 0
    %v2129 = vsel %vm814, %v1759, 0
    %2131 = vmatprep.subr.bf16.mxu0 0
    %2132 = vmatpush1.bf16.msra.mxu0 %v2111
    %2133 = vmatprep.subr.bf16.mxu0 0
    %2134 = vmatpush1.bf16.msra.mxu0 %v2112
    %2135 = vmatprep.subr.bf16.mxu0 0
    %2136 = vmatpush1.bf16.msra.mxu0 %v2113
    %2137 = vmatprep.subr.bf16.mxu0 0
    %2138 = vmatpush1.bf16.msra.mxu0 %v2114
    %2139 = vmatprep.subr.bf16.mxu0 0
    %2140 = vmatpush1.bf16.msra.mxu0 0
    %2141 = vmatprep.subr.bf16.mxu0 0
    %2142 = vmatpush1.bf16.msra.mxu0 0
    %2143 = vmatprep.subr.bf16.mxu0 0
    %2144 = vmatpush1.bf16.msra.mxu0 0
    %2145 = vmatprep.subr.bf16.mxu0 0
    %2146 = vmatpush1.bf16.msra.mxu0 0
    %2147 = vmatprep.subr.bf16.mxu0 0
    %2148 = vmatpush1.bf16.msra.mxu0 0
    %2149 = vmatprep.subr.bf16.mxu0 0
    %2150 = vmatpush1.bf16.msra.mxu0 0
    %2151 = vmatprep.subr.bf16.mxu0 0
    %2152 = vmatpush1.bf16.msra.mxu0 0
    %2153 = vmatprep.subr.bf16.mxu0 0
    %2154 = vmatpush1.bf16.msra.mxu0 0
    %2155 = vmatprep.subr.bf16.mxu0 0
    %2156 = vmatpush1.bf16.msra.mxu0 0
    %2157 = vmatprep.subr.bf16.mxu0 0
    %2158 = vmatpush1.bf16.msra.mxu0 0
    %2159 = vmatprep.subr.bf16.mxu0 0
    %2160 = vmatpush1.bf16.msra.mxu0 0
    %2161 = vmatprep.subr.bf16.mxu0 0
    %2162 = vmatpush1.bf16.msra.mxu0 0
    %2163 = vmatprep.mubr.bf16.mxu0 0
    %2164 = vmatmul.mubr.bf16.gmra.mrb[0].mxu0 %v2120
    %v2165 = vpop.f32.mrb[0].mxu0
    %v2166 = vadd.f32 0.0, %v2165
    %v2167 = vpop.f32.mrb[0].mxu0
    %v2168 = vpop.f32.mrb[0].mxu0
    %v2169 = vadd.f32 0.0, %v2168
    %v2170 = vpop.f32.mrb[0].mxu0
    %2171 = vmatprep.mubr.bf16.mxu0 0
    %2172 = vmatmul.mubr.bf16.gmra.mrb[0].mxu0 %v2123
    %v2173 = vpop.f32.mrb[0].mxu0
    %v2174 = vadd.f32 0.0, %v2173
    %v2175 = vpop.f32.mrb[0].mxu0
    %v2176 = vpop.f32.mrb[0].mxu0
    %v2177 = vadd.f32 0.0, %v2176
    %v2178 = vpop.f32.mrb[0].mxu0
    %2179 = vmatprep.mubr.bf16.mxu0 0
    %2180 = vmatmul.mubr.bf16.gmra.mrb[0].mxu0 %v2126
    %v2181 = vpop.f32.mrb[0].mxu0
    %v2182 = vadd.f32 0.0, %v2181
    %v2183 = vpop.f32.mrb[0].mxu0
    %v2184 = vpop.f32.mrb[0].mxu0
    %v2185 = vadd.f32 0.0, %v2184
    %v2186 = vpop.f32.mrb[0].mxu0
    %2187 = vmatprep.mubr.bf16.mxu0 0
    %2188 = vmatmul.mubr.bf16.gmra.mrb[0].mxu0 %v2129
    %v2189 = vpop.f32.mrb[0].mxu0
    %v2190 = vadd.f32 0.0, %v2189
    %v2191 = vpop.f32.mrb[0].mxu0
    %v2192 = vpop.f32.mrb[0].mxu0
    %v2193 = vadd.f32 0.0, %v2192
    %v2194 = vpop.f32.mrb[0].mxu0
    %2195 = vdwg.mxu0
    %v2196 = vadd.f32 %v1712, %v1863
    %v2197 = vadd.f32 %v1713, %v1866
    %v2198 = vadd.f32 %v1714, %v1871
    %v2199 = vadd.f32 %v1715, %v1874
    %v2200 = vadd.f32 %v1716, %v1879
    %v2201 = vadd.f32 %v1717, %v1882
    %v2202 = vadd.f32 %v1718, %v1887
    %v2203 = vadd.f32 %v1719, %v1890
    %v2204 = vadd.f32 %v1720, %v1964
    %v2205 = vadd.f32 %v1721, %v1967
    %v2206 = vadd.f32 %v1722, %v1972
    %v2207 = vadd.f32 %v1723, %v1975
    %v2208 = vadd.f32 %v1724, %v1980
    %v2209 = vadd.f32 %v1725, %v1983
    %v2210 = vadd.f32 %v1726, %v1988
    %v2211 = vadd.f32 %v1727, %v1991
    %v2212 = vadd.f32 %v1728, %v2065
    %v2213 = vadd.f32 %v1729, %v2068
    %v2214 = vadd.f32 %v1730, %v2073
    %v2215 = vadd.f32 %v1731, %v2076
    %v2216 = vadd.f32 %v1732, %v2081
    %v2217 = vadd.f32 %v1733, %v2084
    %v2218 = vadd.f32 %v1734, %v2089
    %v2219 = vadd.f32 %v1735, %v2092
    %v2220 = vadd.f32 %v1736, %v2166
    %v2221 = vadd.f32 %v1737, %v2169
    %v2222 = vadd.f32 %v1738, %v2174
    %v2223 = vadd.f32 %v1739, %v2177
    %v2224 = vadd.f32 %v1740, %v2182
    %v2225 = vadd.f32 %v1741, %v2185
    %v2226 = vadd.f32 %v1742, %v2190
    %v2227 = vadd.f32 %v1743, %v2193
    %2228 = vst.msk [vmem:[#allocation4] sm:$0xff] %vm225, %v2196
    %2229 = vst.msk [vmem:[#allocation4 + $0x8] sm:$0xff] %vm225, %v2197
    %2230 = vst.msk [vmem:[#allocation4 + $0x10] sm:$0xff] %vm225, %v2198
    %2231 = vst.msk [vmem:[#allocation4 + $0x18] sm:$0xff] %vm225, %v2199
    %2232 = vst.msk [vmem:[#allocation4 + $0x20] sm:$0xff] %vm225, %v2200
    %2233 = vst.msk [vmem:[#allocation4 + $0x28] sm:$0xff] %vm225, %v2201
    %2234 = vst.msk [vmem:[#allocation4 + $0x30] sm:$0xff] %vm225, %v2202
    %2235 = vst.msk [vmem:[#allocation4 + $0x38] sm:$0xff] %vm225, %v2203
    %2236 = vst.msk [vmem:[#allocation4 + $0x40] sm:$0xff] %vm225, %v2204
    %2237 = vst.msk [vmem:[#allocation4 + $0x48] sm:$0xff] %vm225, %v2205
    %2238 = vst.msk [vmem:[#allocation4 + $0x50] sm:$0xff] %vm225, %v2206
    %2239 = vst.msk [vmem:[#allocation4 + $0x58] sm:$0xff] %vm225, %v2207
    %2240 = vst.msk [vmem:[#allocation4 + $0x60] sm:$0xff] %vm225, %v2208
    %2241 = vst.msk [vmem:[#allocation4 + $0x68] sm:$0xff] %vm225, %v2209
    %2242 = vst.msk [vmem:[#allocation4 + $0x70] sm:$0xff] %vm225, %v2210
    %2243 = vst.msk [vmem:[#allocation4 + $0x78] sm:$0xff] %vm225, %v2211
    %2244 = vst.msk [vmem:[#allocation4 + $0x80] sm:$0xff] %vm225, %v2212
    %2245 = vst.msk [vmem:[#allocation4 + $0x88] sm:$0xff] %vm225, %v2213
    %2246 = vst.msk [vmem:[#allocation4 + $0x90] sm:$0xff] %vm225, %v2214
    %2247 = vst.msk [vmem:[#allocation4 + $0x98] sm:$0xff] %vm225, %v2215
    %2248 = vst.msk [vmem:[#allocation4 + $0xa0] sm:$0xff] %vm225, %v2216
    %2249 = vst.msk [vmem:[#allocation4 + $0xa8] sm:$0xff] %vm225, %v2217
    %2250 = vst.msk [vmem:[#allocation4 + $0xb0] sm:$0xff] %vm225, %v2218
    %2251 = vst.msk [vmem:[#allocation4 + $0xb8] sm:$0xff] %vm225, %v2219
    %2252 = vst.msk [vmem:[#allocation4 + $0xc0] sm:$0xff] %vm225, %v2220
    %2253 = vst.msk [vmem:[#allocation4 + $0xc8] sm:$0xff] %vm225, %v2221
    %2254 = vst.msk [vmem:[#allocation4 + $0xd0] sm:$0xff] %vm225, %v2222
    %2255 = vst.msk [vmem:[#allocation4 + $0xd8] sm:$0xff] %vm225, %v2223
    %2256 = vst.msk [vmem:[#allocation4 + $0xe0] sm:$0xff] %vm225, %v2224
    %2257 = vst.msk [vmem:[#allocation4 + $0xe8] sm:$0xff] %vm225, %v2225
    %2258 = vst.msk [vmem:[#allocation4 + $0xf0] sm:$0xff] %vm225, %v2226
    %2259 = vst.msk [vmem:[#allocation4 + $0xf8] sm:$0xff] %vm225, %v2227
    %2260 = vst.msk [vmem:[#allocation2] sm:$0xff] %vm1487, %v911
    %2261 = vst.msk [vmem:[#allocation2 + $0x8] sm:$0xff] %vm1487, %v912
    %2262 = vst.msk [vmem:[#allocation2 + $0x10] sm:$0xff] %vm1487, %v913
    %2263 = vst.msk [vmem:[#allocation2 + $0x18] sm:$0xff] %vm1487, %v914
    %2264 = vst.msk [vmem:[#allocation2 + $0x20] sm:$0xff] %vm1487, %v915
    %2265 = vst.msk [vmem:[#allocation2 + $0x28] sm:$0xff] %vm1487, %v916
    %2266 = vst.msk [vmem:[#allocation2 + $0x30] sm:$0xff] %vm1487, %v917
    %2267 = vst.msk [vmem:[#allocation2 + $0x38] sm:$0xff] %vm1487, %v918
    %2268 = vst.msk [vmem:[#allocation2 + $0x40] sm:$0xff] %vm1487, %v919
    %2269 = vst.msk [vmem:[#allocation2 + $0x48] sm:$0xff] %vm1487, %v920
    %2270 = vst.msk [vmem:[#allocation2 + $0x50] sm:$0xff] %vm1487, %v921
    %2271 = vst.msk [vmem:[#allocation2 + $0x58] sm:$0xff] %vm1487, %v922
    %2272 = vst.msk [vmem:[#allocation2 + $0x60] sm:$0xff] %vm1487, %v923
    %2273 = vst.msk [vmem:[#allocation2 + $0x68] sm:$0xff] %vm1487, %v924
    %2274 = vst.msk [vmem:[#allocation2 + $0x70] sm:$0xff] %vm1487, %v925
    %2275 = vst.msk [vmem:[#allocation2 + $0x78] sm:$0xff] %vm1487, %v926
    %2276 = vst.msk [vmem:[#allocation2 + $0x80] sm:$0xff] %vm1487, %v927
    %2277 = vst.msk [vmem:[#allocation2 + $0x88] sm:$0xff] %vm1487, %v928
    %2278 = vst.msk [vmem:[#allocation2 + $0x90] sm:$0xff] %vm1487, %v929
    %2279 = vst.msk [vmem:[#allocation2 + $0x98] sm:$0xff] %vm1487, %v930
    %2280 = vst.msk [vmem:[#allocation2 + $0xa0] sm:$0xff] %vm1487, %v931
    %2281 = vst.msk [vmem:[#allocation2 + $0xa8] sm:$0xff] %vm1487, %v932
    %2282 = vst.msk [vmem:[#allocation2 + $0xb0] sm:$0xff] %vm1487, %v933
    %2283 = vst.msk [vmem:[#allocation2 + $0xb8] sm:$0xff] %vm1487, %v934
    %2284 = vst.msk [vmem:[#allocation2 + $0xc0] sm:$0xff] %vm1487, %v935
    %2285 = vst.msk [vmem:[#allocation2 + $0xc8] sm:$0xff] %vm1487, %v936
    %2286 = vst.msk [vmem:[#allocation2 + $0xd0] sm:$0xff] %vm1487, %v937
    %2287 = vst.msk [vmem:[#allocation2 + $0xd8] sm:$0xff] %vm1487, %v938
    %2288 = vst.msk [vmem:[#allocation2 + $0xe0] sm:$0xff] %vm1487, %v939
    %2289 = vst.msk [vmem:[#allocation2 + $0xe8] sm:$0xff] %vm1487, %v940
    %2290 = vst.msk [vmem:[#allocation2 + $0xf0] sm:$0xff] %vm1487, %v941
    %2291 = vst.msk [vmem:[#allocation2 + $0xf8] sm:$0xff] %vm1487, %v942
  $region21: #{videogpt_forward.16} parent=0 // pred_fallthru
    _
  // Predicated region
  $region22: #{videogpt_forward.16} parent=0 // pred_check
    %p2292 = pneg %p15
  $region23: #{videogpt_forward.16} parent=0 // pred_check_branch
    %2294 = sbr.rel (%p2292) target = $region25
  $region24: #{videogpt_forward.16} parent=0 // pred_region
    %v2295 = vld [vmem:[#allocation4] sm:$0xff]
    %v2296 = vld [vmem:[#allocation4 + $0x8] sm:$0xff]
    %v2297 = vld [vmem:[#allocation4 + $0x10] sm:$0xff]
    %v2298 = vld [vmem:[#allocation4 + $0x18] sm:$0xff]
    %v2299 = vld [vmem:[#allocation4 + $0x20] sm:$0xff]
    %v2300 = vld [vmem:[#allocation4 + $0x28] sm:$0xff]
    %v2301 = vld [vmem:[#allocation4 + $0x30] sm:$0xff]
    %v2302 = vld [vmem:[#allocation4 + $0x38] sm:$0xff]
    %v2303 = vld [vmem:[#allocation4 + $0x40] sm:$0xff]
    %v2304 = vld [vmem:[#allocation4 + $0x48] sm:$0xff]
    %v2305 = vld [vmem:[#allocation4 + $0x50] sm:$0xff]
    %v2306 = vld [vmem:[#allocation4 + $0x58] sm:$0xff]
    %v2307 = vld [vmem:[#allocation4 + $0x60] sm:$0xff]
    %v2308 = vld [vmem:[#allocation4 + $0x68] sm:$0xff]
    %v2309 = vld [vmem:[#allocation4 + $0x70] sm:$0xff]
    %v2310 = vld [vmem:[#allocation4 + $0x78] sm:$0xff]
    %v2311 = vld [vmem:[#allocation4 + $0x80] sm:$0xff]
    %v2312 = vld [vmem:[#allocation4 + $0x88] sm:$0xff]
    %v2313 = vld [vmem:[#allocation4 + $0x90] sm:$0xff]
    %v2314 = vld [vmem:[#allocation4 + $0x98] sm:$0xff]
    %v2315 = vld [vmem:[#allocation4 + $0xa0] sm:$0xff]
    %v2316 = vld [vmem:[#allocation4 + $0xa8] sm:$0xff]
    %v2317 = vld [vmem:[#allocation4 + $0xb0] sm:$0xff]
    %v2318 = vld [vmem:[#allocation4 + $0xb8] sm:$0xff]
    %v2319 = vld [vmem:[#allocation4 + $0xc0] sm:$0xff]
    %v2320 = vld [vmem:[#allocation4 + $0xc8] sm:$0xff]
    %v2321 = vld [vmem:[#allocation4 + $0xd0] sm:$0xff]
    %v2322 = vld [vmem:[#allocation4 + $0xd8] sm:$0xff]
    %v2323 = vld [vmem:[#allocation4 + $0xe0] sm:$0xff]
    %v2324 = vld [vmem:[#allocation4 + $0xe8] sm:$0xff]
    %v2325 = vld [vmem:[#allocation4 + $0xf0] sm:$0xff]
    %v2326 = vld [vmem:[#allocation4 + $0xf8] sm:$0xff]
    %v2327 = vld [vmem:[#allocation3] sm:$0xff]
    %v2328 = vld [vmem:[#allocation3 + $0x8] sm:$0xff]
    %v2329 = vld [vmem:[#allocation3 + $0x10] sm:$0xff]
    %v2330 = vld [vmem:[#allocation3 + $0x18] sm:$0xff]
    %v2331 = vld [vmem:[#allocation3 + $0x20] sm:$0xff]
    %v2332 = vld [vmem:[#allocation3 + $0x28] sm:$0xff]
    %v2333 = vld [vmem:[#allocation3 + $0x30] sm:$0xff]
    %v2334 = vld [vmem:[#allocation3 + $0x38] sm:$0xff]
    %v2335 = vld [vmem:[#allocation3 + $0x40] sm:$0xff]
    %v2336 = vld [vmem:[#allocation3 + $0x48] sm:$0xff]
    %v2337 = vld [vmem:[#allocation3 + $0x50] sm:$0xff]
    %v2338 = vld [vmem:[#allocation3 + $0x58] sm:$0xff]
    %v2339 = vld [vmem:[#allocation3 + $0x60] sm:$0xff]
    %v2340 = vld [vmem:[#allocation3 + $0x68] sm:$0xff]
    %v2341 = vld [vmem:[#allocation3 + $0x70] sm:$0xff]
    %v2342 = vld [vmem:[#allocation3 + $0x78] sm:$0xff]
    %v2343 = vld [vmem:[#allocation3 + $0x80] sm:$0xff]
    %v2344 = vld [vmem:[#allocation3 + $0x88] sm:$0xff]
    %v2345 = vld [vmem:[#allocation3 + $0x90] sm:$0xff]
    %v2346 = vld [vmem:[#allocation3 + $0x98] sm:$0xff]
    %v2347 = vld [vmem:[#allocation3 + $0xa0] sm:$0xff]
    %v2348 = vld [vmem:[#allocation3 + $0xa8] sm:$0xff]
    %v2349 = vld [vmem:[#allocation3 + $0xb0] sm:$0xff]
    %v2350 = vld [vmem:[#allocation3 + $0xb8] sm:$0xff]
    %v2351 = vld [vmem:[#allocation3 + $0xc0] sm:$0xff]
    %v2352 = vld [vmem:[#allocation3 + $0xc8] sm:$0xff]
    %v2353 = vld [vmem:[#allocation3 + $0xd0] sm:$0xff]
    %v2354 = vld [vmem:[#allocation3 + $0xd8] sm:$0xff]
    %v2355 = vld [vmem:[#allocation3 + $0xe0] sm:$0xff]
    %v2356 = vld [vmem:[#allocation3 + $0xe8] sm:$0xff]
    %v2357 = vld [vmem:[#allocation3 + $0xf0] sm:$0xff]
    %v2358 = vld [vmem:[#allocation3 + $0xf8] sm:$0xff]
    %v2359 = vrcp.pop %v2327
    %v2360 = vrcp.pop %v2328
    %v2361 = vrcp.pop %v2329
    %v2362 = vrcp.pop %v2330
    %v2363 = vrcp.pop %v2331
    %v2364 = vrcp.pop %v2332
    %v2365 = vrcp.pop %v2333
    %v2366 = vrcp.pop %v2334
    %v2367 = vrcp.pop %v2335
    %v2368 = vrcp.pop %v2336
    %v2369 = vrcp.pop %v2337
    %v2370 = vrcp.pop %v2338
    %v2371 = vrcp.pop %v2339
    %v2372 = vrcp.pop %v2340
    %v2373 = vrcp.pop %v2341
    %v2374 = vrcp.pop %v2342
    %v2375 = vrcp.pop %v2343
    %v2376 = vrcp.pop %v2344
    %v2377 = vrcp.pop %v2345
    %v2378 = vrcp.pop %v2346
    %v2379 = vrcp.pop %v2347
    %v2380 = vrcp.pop %v2348
    %v2381 = vrcp.pop %v2349
    %v2382 = vrcp.pop %v2350
    %v2383 = vrcp.pop %v2351
    %v2384 = vrcp.pop %v2352
    %v2385 = vrcp.pop %v2353
    %v2386 = vrcp.pop %v2354
    %v2387 = vrcp.pop %v2355
    %v2388 = vrcp.pop %v2356
    %v2389 = vrcp.pop %v2357
    %v2390 = vrcp.pop %v2358
    %2392 = vset.pattern.permute.xlu0 0
    %2393 = vperm.xlu0 %2392, %v2359
    %v2394 = vpop.permute.xlu0 %2393
    %2397 = vset.pattern.permute.xlu0 0
    %2398 = vperm.xlu0 %2397, %v2360
    %v2399 = vpop.permute.xlu0 %2398
    %2402 = vset.pattern.permute.xlu0 0
    %2403 = vperm.xlu0 %2402, %v2361
    %v2404 = vpop.permute.xlu0 %2403
    %2407 = vset.pattern.permute.xlu0 0
    %2408 = vperm.xlu0 %2407, %v2362
    %v2409 = vpop.permute.xlu0 %2408
    %2412 = vset.pattern.permute.xlu0 0
    %2413 = vperm.xlu0 %2412, %v2363
    %v2414 = vpop.permute.xlu0 %2413
    %2417 = vset.pattern.permute.xlu0 0
    %2418 = vperm.xlu0 %2417, %v2364
    %v2419 = vpop.permute.xlu0 %2418
    %2422 = vset.pattern.permute.xlu0 0
    %2423 = vperm.xlu0 %2422, %v2365
    %v2424 = vpop.permute.xlu0 %2423
    %2427 = vset.pattern.permute.xlu0 0
    %2428 = vperm.xlu0 %2427, %v2366
    %v2429 = vpop.permute.xlu0 %2428
    %2432 = vset.pattern.permute.xlu0 0
    %2433 = vperm.xlu0 %2432, %v2367
    %v2434 = vpop.permute.xlu0 %2433
    %2437 = vset.pattern.permute.xlu0 0
    %2438 = vperm.xlu0 %2437, %v2368
    %v2439 = vpop.permute.xlu0 %2438
    %2442 = vset.pattern.permute.xlu0 0
    %2443 = vperm.xlu0 %2442, %v2369
    %v2444 = vpop.permute.xlu0 %2443
    %2447 = vset.pattern.permute.xlu0 0
    %2448 = vperm.xlu0 %2447, %v2370
    %v2449 = vpop.permute.xlu0 %2448
    %2452 = vset.pattern.permute.xlu0 0
    %2453 = vperm.xlu0 %2452, %v2371
    %v2454 = vpop.permute.xlu0 %2453
    %2457 = vset.pattern.permute.xlu0 0
    %2458 = vperm.xlu0 %2457, %v2372
    %v2459 = vpop.permute.xlu0 %2458
    %2462 = vset.pattern.permute.xlu0 0
    %2463 = vperm.xlu0 %2462, %v2373
    %v2464 = vpop.permute.xlu0 %2463
    %2467 = vset.pattern.permute.xlu0 0
    %2468 = vperm.xlu0 %2467, %v2374
    %v2469 = vpop.permute.xlu0 %2468
    %2472 = vset.pattern.permute.xlu0 0
    %2473 = vperm.xlu0 %2472, %v2375
    %v2474 = vpop.permute.xlu0 %2473
    %2477 = vset.pattern.permute.xlu0 0
    %2478 = vperm.xlu0 %2477, %v2376
    %v2479 = vpop.permute.xlu0 %2478
    %2482 = vset.pattern.permute.xlu0 0
    %2483 = vperm.xlu0 %2482, %v2377
    %v2484 = vpop.permute.xlu0 %2483
    %2487 = vset.pattern.permute.xlu0 0
    %2488 = vperm.xlu0 %2487, %v2378
    %v2489 = vpop.permute.xlu0 %2488
    %2492 = vset.pattern.permute.xlu0 0
    %2493 = vperm.xlu0 %2492, %v2379
    %v2494 = vpop.permute.xlu0 %2493
    %2497 = vset.pattern.permute.xlu0 0
    %2498 = vperm.xlu0 %2497, %v2380
    %v2499 = vpop.permute.xlu0 %2498
    %2502 = vset.pattern.permute.xlu0 0
    %2503 = vperm.xlu0 %2502, %v2381
    %v2504 = vpop.permute.xlu0 %2503
    %2507 = vset.pattern.permute.xlu0 0
    %2508 = vperm.xlu0 %2507, %v2382
    %v2509 = vpop.permute.xlu0 %2508
    %2512 = vset.pattern.permute.xlu0 0
    %2513 = vperm.xlu0 %2512, %v2383
    %v2514 = vpop.permute.xlu0 %2513
    %2517 = vset.pattern.permute.xlu0 0
    %2518 = vperm.xlu0 %2517, %v2384
    %v2519 = vpop.permute.xlu0 %2518
    %2522 = vset.pattern.permute.xlu0 0
    %2523 = vperm.xlu0 %2522, %v2385
    %v2524 = vpop.permute.xlu0 %2523
    %2527 = vset.pattern.permute.xlu0 0
    %2528 = vperm.xlu0 %2527, %v2386
    %v2529 = vpop.permute.xlu0 %2528
    %2532 = vset.pattern.permute.xlu0 0
    %2533 = vperm.xlu0 %2532, %v2387
    %v2534 = vpop.permute.xlu0 %2533
    %2537 = vset.pattern.permute.xlu0 0
    %2538 = vperm.xlu0 %2537, %v2388
    %v2539 = vpop.permute.xlu0 %2538
    %2542 = vset.pattern.permute.xlu0 0
    %2543 = vperm.xlu0 %2542, %v2389
    %v2544 = vpop.permute.xlu0 %2543
    %2547 = vset.pattern.permute.xlu0 0
    %2548 = vperm.xlu0 %2547, %v2390
    %v2549 = vpop.permute.xlu0 %2548
    %v2551 = vmul.f32 %v2295, %v2394
    %v2552 = vmul.f32 %v2296, %v2399
    %v2553 = vmul.f32 %v2297, %v2404
    %v2554 = vmul.f32 %v2298, %v2409
    %v2555 = vmul.f32 %v2299, %v2414
    %v2556 = vmul.f32 %v2300, %v2419
    %v2557 = vmul.f32 %v2301, %v2424
    %v2558 = vmul.f32 %v2302, %v2429
    %v2559 = vmul.f32 %v2303, %v2434
    %v2560 = vmul.f32 %v2304, %v2439
    %v2561 = vmul.f32 %v2305, %v2444
    %v2562 = vmul.f32 %v2306, %v2449
    %v2563 = vmul.f32 %v2307, %v2454
    %v2564 = vmul.f32 %v2308, %v2459
    %v2565 = vmul.f32 %v2309, %v2464
    %v2566 = vmul.f32 %v2310, %v2469
    %v2567 = vmul.f32 %v2311, %v2474
    %v2568 = vmul.f32 %v2312, %v2479
    %v2569 = vmul.f32 %v2313, %v2484
    %v2570 = vmul.f32 %v2314, %v2489
    %v2571 = vmul.f32 %v2315, %v2494
    %v2572 = vmul.f32 %v2316, %v2499
    %v2573 = vmul.f32 %v2317, %v2504
    %v2574 = vmul.f32 %v2318, %v2509
    %v2575 = vmul.f32 %v2319, %v2514
    %v2576 = vmul.f32 %v2320, %v2519
    %v2577 = vmul.f32 %v2321, %v2524
    %v2578 = vmul.f32 %v2322, %v2529
    %v2579 = vmul.f32 %v2323, %v2534
    %v2580 = vmul.f32 %v2324, %v2539
    %v2581 = vmul.f32 %v2325, %v2544
    %v2582 = vmul.f32 %v2326, %v2549
    %v2583 = vpack.c.bf16 %v2552, %v2551
    %v2584 = vpack.c.bf16 %v2554, %v2553
    %v2585 = vpack.c.bf16 %v2556, %v2555
    %v2586 = vpack.c.bf16 %v2558, %v2557
    %v2587 = vpack.c.bf16 %v2560, %v2559
    %v2588 = vpack.c.bf16 %v2562, %v2561
    %v2589 = vpack.c.bf16 %v2564, %v2563
    %v2590 = vpack.c.bf16 %v2566, %v2565
    %v2591 = vpack.c.bf16 %v2568, %v2567
    %v2592 = vpack.c.bf16 %v2570, %v2569
    %v2593 = vpack.c.bf16 %v2572, %v2571
    %v2594 = vpack.c.bf16 %v2574, %v2573
    %v2595 = vpack.c.bf16 %v2576, %v2575
    %v2596 = vpack.c.bf16 %v2578, %v2577
    %v2597 = vpack.c.bf16 %v2580, %v2579
    %v2598 = vpack.c.bf16 %v2582, %v2581
    %v2615 = vunpack.c.l.b16 %v2583
    %v2616 = vunpack.c.h.b16 %v2583
    %v2617 = vunpack.c.l.b16 %v2584
    %v2618 = vunpack.c.h.b16 %v2584
    %v2619 = vunpack.c.l.b16 %v2585
    %v2620 = vunpack.c.h.b16 %v2585
    %v2621 = vunpack.c.l.b16 %v2586
    %v2622 = vunpack.c.h.b16 %v2586
    %v2623 = vunpack.c.l.b16 %v2587
    %v2624 = vunpack.c.h.b16 %v2587
    %v2625 = vunpack.c.l.b16 %v2588
    %v2626 = vunpack.c.h.b16 %v2588
    %v2627 = vunpack.c.l.b16 %v2589
    %v2628 = vunpack.c.h.b16 %v2589
    %v2629 = vunpack.c.l.b16 %v2590
    %v2630 = vunpack.c.h.b16 %v2590
    %v2631 = vunpack.c.l.b16 %v2591
    %v2632 = vunpack.c.h.b16 %v2591
    %v2633 = vunpack.c.l.b16 %v2592
    %v2634 = vunpack.c.h.b16 %v2592
    %v2635 = vunpack.c.l.b16 %v2593
    %v2636 = vunpack.c.h.b16 %v2593
    %v2637 = vunpack.c.l.b16 %v2594
    %v2638 = vunpack.c.h.b16 %v2594
    %v2639 = vunpack.c.l.b16 %v2595
    %v2640 = vunpack.c.h.b16 %v2595
    %v2641 = vunpack.c.l.b16 %v2596
    %v2642 = vunpack.c.h.b16 %v2596
    %v2643 = vunpack.c.l.b16 %v2597
    %v2644 = vunpack.c.h.b16 %v2597
    %v2645 = vunpack.c.l.b16 %v2598
    %v2646 = vunpack.c.h.b16 %v2598
    %v2647 = vpack.c.b16 %v2615, %v2615
    %v2648 = vpack.c.b16 %v2616, %v2616
    %v2649 = vpack.c.b16 %v2617, %v2617
    %v2650 = vpack.c.b16 %v2618, %v2618
    %v2651 = vpack.c.b16 %v2619, %v2619
    %v2652 = vpack.c.b16 %v2620, %v2620
    %v2653 = vpack.c.b16 %v2621, %v2621
    %v2654 = vpack.c.b16 %v2622, %v2622
    %v2655 = vpack.c.b16 %v2623, %v2623
    %v2656 = vpack.c.b16 %v2624, %v2624
    %v2657 = vpack.c.b16 %v2625, %v2625
    %v2658 = vpack.c.b16 %v2626, %v2626
    %v2659 = vpack.c.b16 %v2627, %v2627
    %v2660 = vpack.c.b16 %v2628, %v2628
    %v2661 = vpack.c.b16 %v2629, %v2629
    %v2662 = vpack.c.b16 %v2630, %v2630
    %v2663 = vpack.c.b16 %v2631, %v2631
    %v2664 = vpack.c.b16 %v2632, %v2632
    %v2665 = vpack.c.b16 %v2633, %v2633
    %v2666 = vpack.c.b16 %v2634, %v2634
    %v2667 = vpack.c.b16 %v2635, %v2635
    %v2668 = vpack.c.b16 %v2636, %v2636
    %v2669 = vpack.c.b16 %v2637, %v2637
    %v2670 = vpack.c.b16 %v2638, %v2638
    %v2671 = vpack.c.b16 %v2639, %v2639
    %v2672 = vpack.c.b16 %v2640, %v2640
    %v2673 = vpack.c.b16 %v2641, %v2641
    %v2674 = vpack.c.b16 %v2642, %v2642
    %v2675 = vpack.c.b16 %v2643, %v2643
    %v2676 = vpack.c.b16 %v2644, %v2644
    %v2677 = vpack.c.b16 %v2645, %v2645
    %v2678 = vpack.c.b16 %v2646, %v2646
    %vm2711 = vcmask 257024
    %2712 = vst.msk [vmem:[%s3] sm:$0xf] %vm2711, %v2647
    %2713 = vst.msk [vmem:[%s3 + $0x4] sm:$0xf] %vm2711, %v2648
    %2714 = vst.msk [vmem:[%s3 + $0x8] sm:$0xf] %vm2711, %v2649
    %2715 = vst.msk [vmem:[%s3 + $0xc] sm:$0xf] %vm2711, %v2650
    %2716 = vst.msk [vmem:[%s3 + $0x10] sm:$0xf] %vm2711, %v2651
    %2717 = vst.msk [vmem:[%s3 + $0x14] sm:$0xf] %vm2711, %v2652
    %2718 = vst.msk [vmem:[%s3 + $0x18] sm:$0xf] %vm2711, %v2653
    %2719 = vst.msk [vmem:[%s3 + $0x1c] sm:$0xf] %vm2711, %v2654
    %2720 = vst.msk [vmem:[%s3 + $0x20] sm:$0xf] %vm2711, %v2655
    %2721 = vst.msk [vmem:[%s3 + $0x24] sm:$0xf] %vm2711, %v2656
    %2722 = vst.msk [vmem:[%s3 + $0x28] sm:$0xf] %vm2711, %v2657
    %2723 = vst.msk [vmem:[%s3 + $0x2c] sm:$0xf] %vm2711, %v2658
    %2724 = vst.msk [vmem:[%s3 + $0x30] sm:$0xf] %vm2711, %v2659
    %2725 = vst.msk [vmem:[%s3 + $0x34] sm:$0xf] %vm2711, %v2660
    %2726 = vst.msk [vmem:[%s3 + $0x38] sm:$0xf] %vm2711, %v2661
    %2727 = vst.msk [vmem:[%s3 + $0x3c] sm:$0xf] %vm2711, %v2662
    %2728 = vst.msk [vmem:[%s3 + $0x40] sm:$0xf] %vm2711, %v2663
    %2729 = vst.msk [vmem:[%s3 + $0x44] sm:$0xf] %vm2711, %v2664
    %2730 = vst.msk [vmem:[%s3 + $0x48] sm:$0xf] %vm2711, %v2665
    %2731 = vst.msk [vmem:[%s3 + $0x4c] sm:$0xf] %vm2711, %v2666
    %2732 = vst.msk [vmem:[%s3 + $0x50] sm:$0xf] %vm2711, %v2667
    %2733 = vst.msk [vmem:[%s3 + $0x54] sm:$0xf] %vm2711, %v2668
    %2734 = vst.msk [vmem:[%s3 + $0x58] sm:$0xf] %vm2711, %v2669
    %2735 = vst.msk [vmem:[%s3 + $0x5c] sm:$0xf] %vm2711, %v2670
    %2736 = vst.msk [vmem:[%s3 + $0x60] sm:$0xf] %vm2711, %v2671
    %2737 = vst.msk [vmem:[%s3 + $0x64] sm:$0xf] %vm2711, %v2672
    %2738 = vst.msk [vmem:[%s3 + $0x68] sm:$0xf] %vm2711, %v2673
    %2739 = vst.msk [vmem:[%s3 + $0x6c] sm:$0xf] %vm2711, %v2674
    %2740 = vst.msk [vmem:[%s3 + $0x70] sm:$0xf] %vm2711, %v2675
    %2741 = vst.msk [vmem:[%s3 + $0x74] sm:$0xf] %vm2711, %v2676
    %2742 = vst.msk [vmem:[%s3 + $0x78] sm:$0xf] %vm2711, %v2677
    %2743 = vst.msk [vmem:[%s3 + $0x7c] sm:$0xf] %vm2711, %v2678
  $region25: #{videogpt_forward.16} parent=0 // pred_fallthru
    _
  // Predicated region
  $region26: #{videogpt_forward.16} parent=0 // pred_check
    _
  $region27: #{videogpt_forward.16} parent=0 // pred_check_branch
    %2745 = sbr.rel (0) target = $region29
  $region28: #{videogpt_forward.16} parent=0 // pred_region
    _
  $region29: #{videogpt_forward.16} parent=0 // pred_fallthru
    _
  // Predicated region
  $region30: #{videogpt_forward.16} parent=0 // pred_check
    _
  $region31: #{videogpt_forward.16} parent=0 // pred_check_branch
    %2747 = sbr.rel (0) target = $region33
  $region32: #{videogpt_forward.16} parent=0 // pred_region
    _
  $region33: #{videogpt_forward.16} parent=0 // pred_fallthru
    _

</llo_original>
